<compile_context>
chip_gen: v7x
topology: tpu7x:2x2x1
jax: 0.10.0
libtpu: 0.0.40
codegen_flags: <defaults>
</compile_context>

<pallas_src>
import numpy as np

import jax
import jax.numpy as jnp
from jax.experimental import pallas as pl
from jax.experimental.pallas import tpu as pltpu


STRIDES = (2, 2, 1, 1)          # backbone conv strides (4 -> 8 -> 16 -> 32 -> 32 ch)


# --------------------- trace-time (numpy) constants ------------------------ #

def _interp_matrix_np(out_size, in_size):
    """1-D interpolation weights matching torch bilinear, align_corners=False."""
    scale = in_size / out_size
    dst = np.arange(out_size, dtype=np.float64)
    src = np.maximum((dst + 0.5) * scale - 0.5, 0.0)
    i0 = np.clip(np.floor(src).astype(np.int64), 0, in_size - 1)
    i1 = np.minimum(i0 + 1, in_size - 1)
    lam = src - i0
    m = np.zeros((out_size, in_size), np.float32)
    m[np.arange(out_size), i0] += (1.0 - lam)
    m[np.arange(out_size), i1] += lam
    return m


def _conv3x3_gather_np(h_in, w_in, h_out, w_out, stride, pad=1):
    """(9, h_in*w_in, h_out*w_out) 0/1 tap-gather matrices (pad+stride folded in)."""
    g = np.zeros((9, h_in * w_in, h_out * w_out), np.float32)
    for kh in range(3):
        for kw in range(3):
            t = kh * 3 + kw
            for ho in range(h_out):
                hs = stride * ho + kh - pad
                if hs < 0 or hs >= h_in:
                    continue
                for wo in range(w_out):
                    ws = stride * wo + kw - pad
                    if ws < 0 or ws >= w_in:
                        continue
                    g[t, hs * w_in + ws, ho * w_out + wo] = 1.0
    return g


# ------------------------------ fused kernel ------------------------------- #

def _fused_kernel(*refs):
    """Whole forward for one batch sample; everything stays in VMEM/vregs."""
    x_ref = refs[0]                      # (1, Cin, H*W)
    conv_refs = refs[1:13]               # 4 layers x (G, Wtap, bias)
    cw_ref, cb_ref, u_ref = refs[13:16]  # classifier weight/bias, upsample matrix
    o_ref = refs[16]                     # (1, num_classes, H*W)

    h = x_ref[0]                         # (Cin, H*W) f32, channel-first / pixel-last

    # backbone: 4 x [conv3x3 (pad=1, stride s) + ReLU], as 9 unrolled tap dots
    for li in range(4):
        g_ref, w_ref, b_ref = conv_refs[3 * li:3 * li + 3]
        n_tap = g_ref.shape[0]
        hw_out = g_ref.shape[2]
        cout = w_ref.shape[1]
        acc = jnp.zeros((cout, hw_out), jnp.float32)
        for t in range(n_tap):           # static unroll (9 taps)
            patch = jnp.dot(h, g_ref[t], preferred_element_type=jnp.float32)
            acc = acc + jnp.dot(w_ref[t], patch,
                                preferred_element_type=jnp.float32)
        h = jnp.maximum(acc + b_ref[...], 0.0)      # bias (Cout,1) broadcasts

    # classifier: 1x1 conv == channel matmul
    cls = jnp.dot(cw_ref[...], h, preferred_element_type=jnp.float32) + cb_ref[...]

    # bilinear upsample (align_corners=False): one f32 dot with kron(Wh, Ww)^T
    o_ref[0] = jnp.dot(cls, u_ref[...], preferred_element_type=jnp.float32)


def _full_block_spec(arr):
    """BlockSpec covering the whole (constant) array, independent of the grid."""
    if arr.ndim == 2:
        return pl.BlockSpec(tuple(arr.shape), lambda i: (0, 0))
    assert arr.ndim == 3
    return pl.BlockSpec(tuple(arr.shape), lambda i: (0, 0, 0))


def deeplabv3_forward_pallas(prep, x):
    """x: (N, Cin, H, W) f32 -> (N, num_classes, H, W) f32, one pallas_call."""
    n, cin, hin, win = x.shape
    num_classes = prep["cls_w"].shape[0]

    # trace-time constants (numpy -> embedded, zero runtime wrapper cost)
    gathers = []
    h_l, w_l = hin, win
    for s in STRIDES:
        ho = (h_l + 2 - 3) // s + 1
        wo = (w_l + 2 - 3) // s + 1
        gathers.append(_conv3x3_gather_np(h_l, w_l, ho, wo, s))
        h_l, w_l = ho, wo
    up = np.kron(_interp_matrix_np(hin, h_l),
                 _interp_matrix_np(win, w_l)).T.astype(np.float32)  # (Hf*Wf, H*W)

    x_flat = x.reshape(n, cin, hin * win)            # metadata-only reshape

    operands = [x_flat]
    in_specs = [pl.BlockSpec((1, cin, hin * win), lambda i: (i, 0, 0))]
    for li in range(4):
        for arr in (jnp.asarray(gathers[li]), prep["conv_w"][li], prep["conv_b"][li]):
            operands.append(arr)
            in_specs.append(_full_block_spec(arr))
    for arr in (prep["cls_w"], prep["cls_b"], jnp.asarray(up)):
        operands.append(arr)
        in_specs.append(_full_block_spec(arr))

    out_flat = pl.pallas_call(
        _fused_kernel,
        out_shape=jax.ShapeDtypeStruct((n, num_classes, hin * win), jnp.float32),
        grid=(n,),
        in_specs=in_specs,
        out_specs=pl.BlockSpec((1, num_classes, hin * win), lambda i: (i, 0, 0)),
        compiler_params=pltpu.CompilerParams(
            dimension_semantics=("parallel",)),      # v7x: one sample per TC
    )(*operands)
    return out_flat.reshape(n, num_classes, hin, win)


# ----------------------- params (PyTorch layout) + prep -------------------- #

def init_params(key, cin=4, num_classes=6):
    """PyTorch-layout params: conv (Cout,Cin,3,3), cls (Cout,Cin,1,1)."""
    chans = [cin, 8, 16, 32, 32]
    keys = jax.random.split(key, 10)
    params = {"conv_w": [], "conv_b": []}
    for i in range(4):
        w = 0.1 * jax.random.normal(keys[2 * i], (chans[i + 1], chans[i], 3, 3),
                                    jnp.float32)
        b = 0.05 * jax.random.normal(keys[2 * i + 1], (chans[i + 1],), jnp.float32)
        params["conv_w"].append(w)
        params["conv_b"].append(b)
    params["cls_w"] = 0.1 * jax.random.normal(keys[8], (num_classes, chans[-1], 1, 1),
                                              jnp.float32)
    params["cls_b"] = 0.05 * jax.random.normal(keys[9], (num_classes,), jnp.float32)
    return params


def prepare_params(params):
    """One-time (outside jit) conversion PyTorch layout -> kernel layout."""
    prep = {"conv_w": [], "conv_b": []}
    for w, b in zip(params["conv_w"], params["conv_b"]):
        cout, cin = w.shape[0], w.shape[1]
        # (Cout,Cin,kh,kw) -> (kh,kw,Cout,Cin) -> (9, Cout, Cin), tap = kh*3+kw
        prep["conv_w"].append(jnp.transpose(w, (2, 3, 0, 1)).reshape(9, cout, cin))
        prep["conv_b"].append(b.reshape(cout, 1))
    prep["cls_w"] = params["cls_w"].reshape(params["cls_w"].shape[0],
                                            params["cls_w"].shape[1])
    prep["cls_b"] = params["cls_b"].reshape(-1, 1)
    return prep


# --------------------------- pure-JAX reference ---------------------------- #

def deeplabv3_forward_ref(params, x):
    hin, win = x.shape[-2:]
    h = x
    for w, b, s in zip(params["conv_w"], params["conv_b"], STRIDES):
        h = jax.lax.conv_general_dilated(
            h, w, window_strides=(s, s), padding=((1, 1), (1, 1)),
            dimension_numbers=("NCHW", "OIHW", "NCHW"),
            precision=jax.lax.Precision.HIGHEST)
        h = jnp.maximum(h + b[None, :, None, None], 0.0)
    h = jax.lax.conv_general_dilated(
        h, params["cls_w"], window_strides=(1, 1), padding=((0, 0), (0, 0)),
        dimension_numbers=("NCHW", "OIHW", "NCHW"),
        precision=jax.lax.Precision.HIGHEST)
    h = h + params["cls_b"][None, :, None, None]
    wh = jnp.asarray(_interp_matrix_np(hin, h.shape[2]))
    ww = jnp.asarray(_interp_matrix_np(win, h.shape[3]))
    return jnp.einsum("nchw,Hh,Ww->ncHW", h, wh, ww,
                      precision=jax.lax.Precision.HIGHEST)


# ------------------------------------ main ---------------------------------- #

if __name__ == "__main__":
    key = jax.random.PRNGKey(0)
    kx, kp = jax.random.split(key)
    x = jax.random.normal(kx, (2, 4, 16, 16), jnp.float32)   # NCHW, like torch
    params = init_params(kp)
    prep = prepare_params(params)                            # one-time, outside jit

    fwd = jax.jit(deeplabv3_forward_pallas)
    out = jax.block_until_ready(fwd(prep, x))
    ref = jax.block_until_ready(deeplabv3_forward_ref(params, x))

    assert out.shape == (2, 6, 16, 16), out.shape
    err = float(jnp.max(jnp.abs(out - ref)))
    assert err < 2e-2, err
    print("KERNEL_OK")
</pallas_src>

<mosaic_0001>
module attributes {stable_mosaic.version = 11 : i64} {
  func.func @_fused_kernel(%arg0: i32, %arg1: memref<1x4x256xf32, #tpu.memory_space<vmem>>, %arg2: memref<9x256x64xf32, #tpu.memory_space<vmem>>, %arg3: memref<9x8x4xf32, #tpu.memory_space<vmem>>, %arg4: memref<8x1xf32, #tpu.memory_space<vmem>>, %arg5: memref<9x64x16xf32, #tpu.memory_space<vmem>>, %arg6: memref<9x16x8xf32, #tpu.memory_space<vmem>>, %arg7: memref<16x1xf32, #tpu.memory_space<vmem>>, %arg8: memref<9x16x16xf32, #tpu.memory_space<vmem>>, %arg9: memref<9x32x16xf32, #tpu.memory_space<vmem>>, %arg10: memref<32x1xf32, #tpu.memory_space<vmem>>, %arg11: memref<9x16x16xf32, #tpu.memory_space<vmem>>, %arg12: memref<9x32x32xf32, #tpu.memory_space<vmem>>, %arg13: memref<32x1xf32, #tpu.memory_space<vmem>>, %arg14: memref<6x32xf32, #tpu.memory_space<vmem>>, %arg15: memref<6x1xf32, #tpu.memory_space<vmem>>, %arg16: memref<16x256xf32, #tpu.memory_space<vmem>>, %arg17: memref<1x6x256xf32, #tpu.memory_space<vmem>>) attributes {dimension_semantics = [#tpu.dimension_semantics<parallel>], iteration_bounds = array<i64: 2>, scalar_prefetch = 0 : i64, scratch_operands = 0 : i64, tpu.core_type = #tpu.core_type<tc>, window_params = [{transform_indices = @transform_0, window_bounds = array<i64: 1, 4, 256>}, {pipeline_mode = #tpu.pipeline_mode<synchronous>, transform_indices = @transform_1, window_bounds = array<i64: 9, 256, 64>}, {pipeline_mode = #tpu.pipeline_mode<synchronous>, transform_indices = @transform_2, window_bounds = array<i64: 9, 8, 4>}, {pipeline_mode = #tpu.pipeline_mode<synchronous>, transform_indices = @transform_3, window_bounds = array<i64: 8, 1>}, {pipeline_mode = #tpu.pipeline_mode<synchronous>, transform_indices = @transform_4, window_bounds = array<i64: 9, 64, 16>}, {pipeline_mode = #tpu.pipeline_mode<synchronous>, transform_indices = @transform_5, window_bounds = array<i64: 9, 16, 8>}, {pipeline_mode = #tpu.pipeline_mode<synchronous>, transform_indices = @transform_6, window_bounds = array<i64: 16, 1>}, {pipeline_mode = #tpu.pipeline_mode<synchronous>, transform_indices = @transform_7, window_bounds = array<i64: 9, 16, 16>}, {pipeline_mode = #tpu.pipeline_mode<synchronous>, transform_indices = @transform_8, window_bounds = array<i64: 9, 32, 16>}, {pipeline_mode = #tpu.pipeline_mode<synchronous>, transform_indices = @transform_9, window_bounds = array<i64: 32, 1>}, {pipeline_mode = #tpu.pipeline_mode<synchronous>, transform_indices = @transform_10, window_bounds = array<i64: 9, 16, 16>}, {pipeline_mode = #tpu.pipeline_mode<synchronous>, transform_indices = @transform_11, window_bounds = array<i64: 9, 32, 32>}, {pipeline_mode = #tpu.pipeline_mode<synchronous>, transform_indices = @transform_12, window_bounds = array<i64: 32, 1>}, {pipeline_mode = #tpu.pipeline_mode<synchronous>, transform_indices = @transform_13, window_bounds = array<i64: 6, 32>}, {pipeline_mode = #tpu.pipeline_mode<synchronous>, transform_indices = @transform_14, window_bounds = array<i64: 6, 1>}, {pipeline_mode = #tpu.pipeline_mode<synchronous>, transform_indices = @transform_15, window_bounds = array<i64: 16, 256>}, {transform_indices = @transform_16, window_bounds = array<i64: 1, 6, 256>}]} {
    %c0 = arith.constant 0 : index
    %c0_0 = arith.constant 0 : index
    %c0_1 = arith.constant 0 : index
    %0 = vector.load %arg1[%c0, %c0_0, %c0_1] : memref<1x4x256xf32, #tpu.memory_space<vmem>>, vector<1x4x256xf32>
    %1 = vector.shape_cast %0 : vector<1x4x256xf32> to vector<4x256xf32>
    %cst = arith.constant 0.000000e+00 : f32
    %2 = vector.broadcast %cst : f32 to vector<8x64xf32>
    %c0_2 = arith.constant 0 : index
    %c0_3 = arith.constant 0 : index
    %c0_4 = arith.constant 0 : index
    %3 = vector.load %arg2[%c0_2, %c0_3, %c0_4] : memref<9x256x64xf32, #tpu.memory_space<vmem>>, vector<1x256x64xf32>
    %4 = vector.shape_cast %3 : vector<1x256x64xf32> to vector<256x64xf32>
    %cst_5 = arith.constant dense<0.000000e+00> : vector<4x64xf32>
    %5 = tpu.matmul %1, %4, %cst_5 {dimension_numbers = #tpu.dot_dimension_numbers<[1], [0], [0], [1], [0, 0, 1, 1], [], []>} : vector<4x256xf32>, vector<256x64xf32>, vector<4x64xf32> -> vector<4x64xf32>
    %c0_6 = arith.constant 0 : index
    %c0_7 = arith.constant 0 : index
    %c0_8 = arith.constant 0 : index
    %6 = vector.load %arg3[%c0_6, %c0_7, %c0_8] : memref<9x8x4xf32, #tpu.memory_space<vmem>>, vector<1x8x4xf32>
    %7 = vector.shape_cast %6 : vector<1x8x4xf32> to vector<8x4xf32>
    %cst_9 = arith.constant dense<0.000000e+00> : vector<8x64xf32>
    %8 = tpu.matmul %7, %5, %cst_9 {dimension_numbers = #tpu.dot_dimension_numbers<[1], [0], [0], [1], [0, 0, 1, 1], [], []>} : vector<8x4xf32>, vector<4x64xf32>, vector<8x64xf32> -> vector<8x64xf32>
    %9 = arith.addf %2, %8 : vector<8x64xf32>
    %c1 = arith.constant 1 : index
    %c0_10 = arith.constant 0 : index
    %c0_11 = arith.constant 0 : index
    %10 = vector.load %arg2[%c1, %c0_10, %c0_11] : memref<9x256x64xf32, #tpu.memory_space<vmem>>, vector<1x256x64xf32>
    %11 = vector.shape_cast %10 : vector<1x256x64xf32> to vector<256x64xf32>
    %cst_12 = arith.constant dense<0.000000e+00> : vector<4x64xf32>
    %12 = tpu.matmul %1, %11, %cst_12 {dimension_numbers = #tpu.dot_dimension_numbers<[1], [0], [0], [1], [0, 0, 1, 1], [], []>} : vector<4x256xf32>, vector<256x64xf32>, vector<4x64xf32> -> vector<4x64xf32>
    %c1_13 = arith.constant 1 : index
    %c0_14 = arith.constant 0 : index
    %c0_15 = arith.constant 0 : index
    %13 = vector.load %arg3[%c1_13, %c0_14, %c0_15] : memref<9x8x4xf32, #tpu.memory_space<vmem>>, vector<1x8x4xf32>
    %14 = vector.shape_cast %13 : vector<1x8x4xf32> to vector<8x4xf32>
    %cst_16 = arith.constant dense<0.000000e+00> : vector<8x64xf32>
    %15 = tpu.matmul %14, %12, %cst_16 {dimension_numbers = #tpu.dot_dimension_numbers<[1], [0], [0], [1], [0, 0, 1, 1], [], []>} : vector<8x4xf32>, vector<4x64xf32>, vector<8x64xf32> -> vector<8x64xf32>
    %16 = arith.addf %9, %15 : vector<8x64xf32>
    %c2 = arith.constant 2 : index
    %c0_17 = arith.constant 0 : index
    %c0_18 = arith.constant 0 : index
    %17 = vector.load %arg2[%c2, %c0_17, %c0_18] : memref<9x256x64xf32, #tpu.memory_space<vmem>>, vector<1x256x64xf32>
    %18 = vector.shape_cast %17 : vector<1x256x64xf32> to vector<256x64xf32>
    %cst_19 = arith.constant dense<0.000000e+00> : vector<4x64xf32>
    %19 = tpu.matmul %1, %18, %cst_19 {dimension_numbers = #tpu.dot_dimension_numbers<[1], [0], [0], [1], [0, 0, 1, 1], [], []>} : vector<4x256xf32>, vector<256x64xf32>, vector<4x64xf32> -> vector<4x64xf32>
    %c2_20 = arith.constant 2 : index
    %c0_21 = arith.constant 0 : index
    %c0_22 = arith.constant 0 : index
    %20 = vector.load %arg3[%c2_20, %c0_21, %c0_22] : memref<9x8x4xf32, #tpu.memory_space<vmem>>, vector<1x8x4xf32>
    %21 = vector.shape_cast %20 : vector<1x8x4xf32> to vector<8x4xf32>
    %cst_23 = arith.constant dense<0.000000e+00> : vector<8x64xf32>
    %22 = tpu.matmul %21, %19, %cst_23 {dimension_numbers = #tpu.dot_dimension_numbers<[1], [0], [0], [1], [0, 0, 1, 1], [], []>} : vector<8x4xf32>, vector<4x64xf32>, vector<8x64xf32> -> vector<8x64xf32>
    %23 = arith.addf %16, %22 : vector<8x64xf32>
    %c3 = arith.constant 3 : index
    %c0_24 = arith.constant 0 : index
    %c0_25 = arith.constant 0 : index
    %24 = vector.load %arg2[%c3, %c0_24, %c0_25] : memref<9x256x64xf32, #tpu.memory_space<vmem>>, vector<1x256x64xf32>
    %25 = vector.shape_cast %24 : vector<1x256x64xf32> to vector<256x64xf32>
    %cst_26 = arith.constant dense<0.000000e+00> : vector<4x64xf32>
    %26 = tpu.matmul %1, %25, %cst_26 {dimension_numbers = #tpu.dot_dimension_numbers<[1], [0], [0], [1], [0, 0, 1, 1], [], []>} : vector<4x256xf32>, vector<256x64xf32>, vector<4x64xf32> -> vector<4x64xf32>
    %c3_27 = arith.constant 3 : index
    %c0_28 = arith.constant 0 : index
    %c0_29 = arith.constant 0 : index
    %27 = vector.load %arg3[%c3_27, %c0_28, %c0_29] : memref<9x8x4xf32, #tpu.memory_space<vmem>>, vector<1x8x4xf32>
    %28 = vector.shape_cast %27 : vector<1x8x4xf32> to vector<8x4xf32>
    %cst_30 = arith.constant dense<0.000000e+00> : vector<8x64xf32>
    %29 = tpu.matmul %28, %26, %cst_30 {dimension_numbers = #tpu.dot_dimension_numbers<[1], [0], [0], [1], [0, 0, 1, 1], [], []>} : vector<8x4xf32>, vector<4x64xf32>, vector<8x64xf32> -> vector<8x64xf32>
    %30 = arith.addf %23, %29 : vector<8x64xf32>
    %c4 = arith.constant 4 : index
    %c0_31 = arith.constant 0 : index
    %c0_32 = arith.constant 0 : index
    %31 = vector.load %arg2[%c4, %c0_31, %c0_32] : memref<9x256x64xf32, #tpu.memory_space<vmem>>, vector<1x256x64xf32>
    %32 = vector.shape_cast %31 : vector<1x256x64xf32> to vector<256x64xf32>
    %cst_33 = arith.constant dense<0.000000e+00> : vector<4x64xf32>
    %33 = tpu.matmul %1, %32, %cst_33 {dimension_numbers = #tpu.dot_dimension_numbers<[1], [0], [0], [1], [0, 0, 1, 1], [], []>} : vector<4x256xf32>, vector<256x64xf32>, vector<4x64xf32> -> vector<4x64xf32>
    %c4_34 = arith.constant 4 : index
    %c0_35 = arith.constant 0 : index
    %c0_36 = arith.constant 0 : index
    %34 = vector.load %arg3[%c4_34, %c0_35, %c0_36] : memref<9x8x4xf32, #tpu.memory_space<vmem>>, vector<1x8x4xf32>
    %35 = vector.shape_cast %34 : vector<1x8x4xf32> to vector<8x4xf32>
    %cst_37 = arith.constant dense<0.000000e+00> : vector<8x64xf32>
    %36 = tpu.matmul %35, %33, %cst_37 {dimension_numbers = #tpu.dot_dimension_numbers<[1], [0], [0], [1], [0, 0, 1, 1], [], []>} : vector<8x4xf32>, vector<4x64xf32>, vector<8x64xf32> -> vector<8x64xf32>
    %37 = arith.addf %30, %36 : vector<8x64xf32>
    %c5 = arith.constant 5 : index
    %c0_38 = arith.constant 0 : index
    %c0_39 = arith.constant 0 : index
    %38 = vector.load %arg2[%c5, %c0_38, %c0_39] : memref<9x256x64xf32, #tpu.memory_space<vmem>>, vector<1x256x64xf32>
    %39 = vector.shape_cast %38 : vector<1x256x64xf32> to vector<256x64xf32>
    %cst_40 = arith.constant dense<0.000000e+00> : vector<4x64xf32>
    %40 = tpu.matmul %1, %39, %cst_40 {dimension_numbers = #tpu.dot_dimension_numbers<[1], [0], [0], [1], [0, 0, 1, 1], [], []>} : vector<4x256xf32>, vector<256x64xf32>, vector<4x64xf32> -> vector<4x64xf32>
    %c5_41 = arith.constant 5 : index
    %c0_42 = arith.constant 0 : index
    %c0_43 = arith.constant 0 : index
    %41 = vector.load %arg3[%c5_41, %c0_42, %c0_43] : memref<9x8x4xf32, #tpu.memory_space<vmem>>, vector<1x8x4xf32>
    %42 = vector.shape_cast %41 : vector<1x8x4xf32> to vector<8x4xf32>
    %cst_44 = arith.constant dense<0.000000e+00> : vector<8x64xf32>
    %43 = tpu.matmul %42, %40, %cst_44 {dimension_numbers = #tpu.dot_dimension_numbers<[1], [0], [0], [1], [0, 0, 1, 1], [], []>} : vector<8x4xf32>, vector<4x64xf32>, vector<8x64xf32> -> vector<8x64xf32>
    %44 = arith.addf %37, %43 : vector<8x64xf32>
    %c6 = arith.constant 6 : index
    %c0_45 = arith.constant 0 : index
    %c0_46 = arith.constant 0 : index
    %45 = vector.load %arg2[%c6, %c0_45, %c0_46] : memref<9x256x64xf32, #tpu.memory_space<vmem>>, vector<1x256x64xf32>
    %46 = vector.shape_cast %45 : vector<1x256x64xf32> to vector<256x64xf32>
    %cst_47 = arith.constant dense<0.000000e+00> : vector<4x64xf32>
    %47 = tpu.matmul %1, %46, %cst_47 {dimension_numbers = #tpu.dot_dimension_numbers<[1], [0], [0], [1], [0, 0, 1, 1], [], []>} : vector<4x256xf32>, vector<256x64xf32>, vector<4x64xf32> -> vector<4x64xf32>
    %c6_48 = arith.constant 6 : index
    %c0_49 = arith.constant 0 : index
    %c0_50 = arith.constant 0 : index
    %48 = vector.load %arg3[%c6_48, %c0_49, %c0_50] : memref<9x8x4xf32, #tpu.memory_space<vmem>>, vector<1x8x4xf32>
    %49 = vector.shape_cast %48 : vector<1x8x4xf32> to vector<8x4xf32>
    %cst_51 = arith.constant dense<0.000000e+00> : vector<8x64xf32>
    %50 = tpu.matmul %49, %47, %cst_51 {dimension_numbers = #tpu.dot_dimension_numbers<[1], [0], [0], [1], [0, 0, 1, 1], [], []>} : vector<8x4xf32>, vector<4x64xf32>, vector<8x64xf32> -> vector<8x64xf32>
    %51 = arith.addf %44, %50 : vector<8x64xf32>
    %c7 = arith.constant 7 : index
    %c0_52 = arith.constant 0 : index
    %c0_53 = arith.constant 0 : index
    %52 = vector.load %arg2[%c7, %c0_52, %c0_53] : memref<9x256x64xf32, #tpu.memory_space<vmem>>, vector<1x256x64xf32>
    %53 = vector.shape_cast %52 : vector<1x256x64xf32> to vector<256x64xf32>
    %cst_54 = arith.constant dense<0.000000e+00> : vector<4x64xf32>
    %54 = tpu.matmul %1, %53, %cst_54 {dimension_numbers = #tpu.dot_dimension_numbers<[1], [0], [0], [1], [0, 0, 1, 1], [], []>} : vector<4x256xf32>, vector<256x64xf32>, vector<4x64xf32> -> vector<4x64xf32>
    %c7_55 = arith.constant 7 : index
    %c0_56 = arith.constant 0 : index
    %c0_57 = arith.constant 0 : index
    %55 = vector.load %arg3[%c7_55, %c0_56, %c0_57] : memref<9x8x4xf32, #tpu.memory_space<vmem>>, vector<1x8x4xf32>
    %56 = vector.shape_cast %55 : vector<1x8x4xf32> to vector<8x4xf32>
    %cst_58 = arith.constant dense<0.000000e+00> : vector<8x64xf32>
    %57 = tpu.matmul %56, %54, %cst_58 {dimension_numbers = #tpu.dot_dimension_numbers<[1], [0], [0], [1], [0, 0, 1, 1], [], []>} : vector<8x4xf32>, vector<4x64xf32>, vector<8x64xf32> -> vector<8x64xf32>
    %58 = arith.addf %51, %57 : vector<8x64xf32>
    %c8 = arith.constant 8 : index
    %c0_59 = arith.constant 0 : index
    %c0_60 = arith.constant 0 : index
    %59 = vector.load %arg2[%c8, %c0_59, %c0_60] : memref<9x256x64xf32, #tpu.memory_space<vmem>>, vector<1x256x64xf32>
    %60 = vector.shape_cast %59 : vector<1x256x64xf32> to vector<256x64xf32>
    %cst_61 = arith.constant dense<0.000000e+00> : vector<4x64xf32>
    %61 = tpu.matmul %1, %60, %cst_61 {dimension_numbers = #tpu.dot_dimension_numbers<[1], [0], [0], [1], [0, 0, 1, 1], [], []>} : vector<4x256xf32>, vector<256x64xf32>, vector<4x64xf32> -> vector<4x64xf32>
    %c8_62 = arith.constant 8 : index
    %c0_63 = arith.constant 0 : index
    %c0_64 = arith.constant 0 : index
    %62 = vector.load %arg3[%c8_62, %c0_63, %c0_64] : memref<9x8x4xf32, #tpu.memory_space<vmem>>, vector<1x8x4xf32>
    %63 = vector.shape_cast %62 : vector<1x8x4xf32> to vector<8x4xf32>
    %cst_65 = arith.constant dense<0.000000e+00> : vector<8x64xf32>
    %64 = tpu.matmul %63, %61, %cst_65 {dimension_numbers = #tpu.dot_dimension_numbers<[1], [0], [0], [1], [0, 0, 1, 1], [], []>} : vector<8x4xf32>, vector<4x64xf32>, vector<8x64xf32> -> vector<8x64xf32>
    %65 = arith.addf %58, %64 : vector<8x64xf32>
    %c0_66 = arith.constant 0 : index
    %c0_67 = arith.constant 0 : index
    %66 = vector.load %arg4[%c0_66, %c0_67] : memref<8x1xf32, #tpu.memory_space<vmem>>, vector<8x1xf32>
    %67 = vector.broadcast %66 : vector<8x1xf32> to vector<8x64xf32>
    %68 = arith.addf %65, %67 : vector<8x64xf32>
    %cst_68 = arith.constant 0.000000e+00 : f32
    %69 = vector.broadcast %cst_68 : f32 to vector<8x64xf32>
    %70 = arith.maximumf %68, %69 : vector<8x64xf32>
    %cst_69 = arith.constant 0.000000e+00 : f32
    %71 = vector.broadcast %cst_69 : f32 to vector<16x16xf32>
    %c0_70 = arith.constant 0 : index
    %c0_71 = arith.constant 0 : index
    %c0_72 = arith.constant 0 : index
    %72 = vector.load %arg5[%c0_70, %c0_71, %c0_72] : memref<9x64x16xf32, #tpu.memory_space<vmem>>, vector<1x64x16xf32>
    %73 = vector.shape_cast %72 : vector<1x64x16xf32> to vector<64x16xf32>
    %cst_73 = arith.constant dense<0.000000e+00> : vector<8x16xf32>
    %74 = tpu.matmul %70, %73, %cst_73 {dimension_numbers = #tpu.dot_dimension_numbers<[1], [0], [0], [1], [0, 0, 1, 1], [], []>} : vector<8x64xf32>, vector<64x16xf32>, vector<8x16xf32> -> vector<8x16xf32>
    %c0_74 = arith.constant 0 : index
    %c0_75 = arith.constant 0 : index
    %c0_76 = arith.constant 0 : index
    %75 = vector.load %arg6[%c0_74, %c0_75, %c0_76] : memref<9x16x8xf32, #tpu.memory_space<vmem>>, vector<1x16x8xf32>
    %76 = vector.shape_cast %75 : vector<1x16x8xf32> to vector<16x8xf32>
    %cst_77 = arith.constant dense<0.000000e+00> : vector<16x16xf32>
    %77 = tpu.matmul %76, %74, %cst_77 {dimension_numbers = #tpu.dot_dimension_numbers<[1], [0], [0], [1], [0, 0, 1, 1], [], []>} : vector<16x8xf32>, vector<8x16xf32>, vector<16x16xf32> -> vector<16x16xf32>
    %78 = arith.addf %71, %77 : vector<16x16xf32>
    %c1_78 = arith.constant 1 : index
    %c0_79 = arith.constant 0 : index
    %c0_80 = arith.constant 0 : index
    %79 = vector.load %arg5[%c1_78, %c0_79, %c0_80] : memref<9x64x16xf32, #tpu.memory_space<vmem>>, vector<1x64x16xf32>
    %80 = vector.shape_cast %79 : vector<1x64x16xf32> to vector<64x16xf32>
    %cst_81 = arith.constant dense<0.000000e+00> : vector<8x16xf32>
    %81 = tpu.matmul %70, %80, %cst_81 {dimension_numbers = #tpu.dot_dimension_numbers<[1], [0], [0], [1], [0, 0, 1, 1], [], []>} : vector<8x64xf32>, vector<64x16xf32>, vector<8x16xf32> -> vector<8x16xf32>
    %c1_82 = arith.constant 1 : index
    %c0_83 = arith.constant 0 : index
    %c0_84 = arith.constant 0 : index
    %82 = vector.load %arg6[%c1_82, %c0_83, %c0_84] : memref<9x16x8xf32, #tpu.memory_space<vmem>>, vector<1x16x8xf32>
    %83 = vector.shape_cast %82 : vector<1x16x8xf32> to vector<16x8xf32>
    %cst_85 = arith.constant dense<0.000000e+00> : vector<16x16xf32>
    %84 = tpu.matmul %83, %81, %cst_85 {dimension_numbers = #tpu.dot_dimension_numbers<[1], [0], [0], [1], [0, 0, 1, 1], [], []>} : vector<16x8xf32>, vector<8x16xf32>, vector<16x16xf32> -> vector<16x16xf32>
    %85 = arith.addf %78, %84 : vector<16x16xf32>
    %c2_86 = arith.constant 2 : index
    %c0_87 = arith.constant 0 : index
    %c0_88 = arith.constant 0 : index
    %86 = vector.load %arg5[%c2_86, %c0_87, %c0_88] : memref<9x64x16xf32, #tpu.memory_space<vmem>>, vector<1x64x16xf32>
    %87 = vector.shape_cast %86 : vector<1x64x16xf32> to vector<64x16xf32>
    %cst_89 = arith.constant dense<0.000000e+00> : vector<8x16xf32>
    %88 = tpu.matmul %70, %87, %cst_89 {dimension_numbers = #tpu.dot_dimension_numbers<[1], [0], [0], [1], [0, 0, 1, 1], [], []>} : vector<8x64xf32>, vector<64x16xf32>, vector<8x16xf32> -> vector<8x16xf32>
    %c2_90 = arith.constant 2 : index
    %c0_91 = arith.constant 0 : index
    %c0_92 = arith.constant 0 : index
    %89 = vector.load %arg6[%c2_90, %c0_91, %c0_92] : memref<9x16x8xf32, #tpu.memory_space<vmem>>, vector<1x16x8xf32>
    %90 = vector.shape_cast %89 : vector<1x16x8xf32> to vector<16x8xf32>
    %cst_93 = arith.constant dense<0.000000e+00> : vector<16x16xf32>
    %91 = tpu.matmul %90, %88, %cst_93 {dimension_numbers = #tpu.dot_dimension_numbers<[1], [0], [0], [1], [0, 0, 1, 1], [], []>} : vector<16x8xf32>, vector<8x16xf32>, vector<16x16xf32> -> vector<16x16xf32>
    %92 = arith.addf %85, %91 : vector<16x16xf32>
    %c3_94 = arith.constant 3 : index
    %c0_95 = arith.constant 0 : index
    %c0_96 = arith.constant 0 : index
    %93 = vector.load %arg5[%c3_94, %c0_95, %c0_96] : memref<9x64x16xf32, #tpu.memory_space<vmem>>, vector<1x64x16xf32>
    %94 = vector.shape_cast %93 : vector<1x64x16xf32> to vector<64x16xf32>
    %cst_97 = arith.constant dense<0.000000e+00> : vector<8x16xf32>
    %95 = tpu.matmul %70, %94, %cst_97 {dimension_numbers = #tpu.dot_dimension_numbers<[1], [0], [0], [1], [0, 0, 1, 1], [], []>} : vector<8x64xf32>, vector<64x16xf32>, vector<8x16xf32> -> vector<8x16xf32>
    %c3_98 = arith.constant 3 : index
    %c0_99 = arith.constant 0 : index
    %c0_100 = arith.constant 0 : index
    %96 = vector.load %arg6[%c3_98, %c0_99, %c0_100] : memref<9x16x8xf32, #tpu.memory_space<vmem>>, vector<1x16x8xf32>
    %97 = vector.shape_cast %96 : vector<1x16x8xf32> to vector<16x8xf32>
    %cst_101 = arith.constant dense<0.000000e+00> : vector<16x16xf32>
    %98 = tpu.matmul %97, %95, %cst_101 {dimension_numbers = #tpu.dot_dimension_numbers<[1], [0], [0], [1], [0, 0, 1, 1], [], []>} : vector<16x8xf32>, vector<8x16xf32>, vector<16x16xf32> -> vector<16x16xf32>
    %99 = arith.addf %92, %98 : vector<16x16xf32>
    %c4_102 = arith.constant 4 : index
    %c0_103 = arith.constant 0 : index
    %c0_104 = arith.constant 0 : index
    %100 = vector.load %arg5[%c4_102, %c0_103, %c0_104] : memref<9x64x16xf32, #tpu.memory_space<vmem>>, vector<1x64x16xf32>
    %101 = vector.shape_cast %100 : vector<1x64x16xf32> to vector<64x16xf32>
    %cst_105 = arith.constant dense<0.000000e+00> : vector<8x16xf32>
    %102 = tpu.matmul %70, %101, %cst_105 {dimension_numbers = #tpu.dot_dimension_numbers<[1], [0], [0], [1], [0, 0, 1, 1], [], []>} : vector<8x64xf32>, vector<64x16xf32>, vector<8x16xf32> -> vector<8x16xf32>
    %c4_106 = arith.constant 4 : index
    %c0_107 = arith.constant 0 : index
    %c0_108 = arith.constant 0 : index
    %103 = vector.load %arg6[%c4_106, %c0_107, %c0_108] : memref<9x16x8xf32, #tpu.memory_space<vmem>>, vector<1x16x8xf32>
    %104 = vector.shape_cast %103 : vector<1x16x8xf32> to vector<16x8xf32>
    %cst_109 = arith.constant dense<0.000000e+00> : vector<16x16xf32>
    %105 = tpu.matmul %104, %102, %cst_109 {dimension_numbers = #tpu.dot_dimension_numbers<[1], [0], [0], [1], [0, 0, 1, 1], [], []>} : vector<16x8xf32>, vector<8x16xf32>, vector<16x16xf32> -> vector<16x16xf32>
    %106 = arith.addf %99, %105 : vector<16x16xf32>
    %c5_110 = arith.constant 5 : index
    %c0_111 = arith.constant 0 : index
    %c0_112 = arith.constant 0 : index
    %107 = vector.load %arg5[%c5_110, %c0_111, %c0_112] : memref<9x64x16xf32, #tpu.memory_space<vmem>>, vector<1x64x16xf32>
    %108 = vector.shape_cast %107 : vector<1x64x16xf32> to vector<64x16xf32>
    %cst_113 = arith.constant dense<0.000000e+00> : vector<8x16xf32>
    %109 = tpu.matmul %70, %108, %cst_113 {dimension_numbers = #tpu.dot_dimension_numbers<[1], [0], [0], [1], [0, 0, 1, 1], [], []>} : vector<8x64xf32>, vector<64x16xf32>, vector<8x16xf32> -> vector<8x16xf32>
    %c5_114 = arith.constant 5 : index
    %c0_115 = arith.constant 0 : index
    %c0_116 = arith.constant 0 : index
    %110 = vector.load %arg6[%c5_114, %c0_115, %c0_116] : memref<9x16x8xf32, #tpu.memory_space<vmem>>, vector<1x16x8xf32>
    %111 = vector.shape_cast %110 : vector<1x16x8xf32> to vector<16x8xf32>
    %cst_117 = arith.constant dense<0.000000e+00> : vector<16x16xf32>
    %112 = tpu.matmul %111, %109, %cst_117 {dimension_numbers = #tpu.dot_dimension_numbers<[1], [0], [0], [1], [0, 0, 1, 1], [], []>} : vector<16x8xf32>, vector<8x16xf32>, vector<16x16xf32> -> vector<16x16xf32>
    %113 = arith.addf %106, %112 : vector<16x16xf32>
    %c6_118 = arith.constant 6 : index
    %c0_119 = arith.constant 0 : index
    %c0_120 = arith.constant 0 : index
    %114 = vector.load %arg5[%c6_118, %c0_119, %c0_120] : memref<9x64x16xf32, #tpu.memory_space<vmem>>, vector<1x64x16xf32>
    %115 = vector.shape_cast %114 : vector<1x64x16xf32> to vector<64x16xf32>
    %cst_121 = arith.constant dense<0.000000e+00> : vector<8x16xf32>
    %116 = tpu.matmul %70, %115, %cst_121 {dimension_numbers = #tpu.dot_dimension_numbers<[1], [0], [0], [1], [0, 0, 1, 1], [], []>} : vector<8x64xf32>, vector<64x16xf32>, vector<8x16xf32> -> vector<8x16xf32>
    %c6_122 = arith.constant 6 : index
    %c0_123 = arith.constant 0 : index
    %c0_124 = arith.constant 0 : index
    %117 = vector.load %arg6[%c6_122, %c0_123, %c0_124] : memref<9x16x8xf32, #tpu.memory_space<vmem>>, vector<1x16x8xf32>
    %118 = vector.shape_cast %117 : vector<1x16x8xf32> to vector<16x8xf32>
    %cst_125 = arith.constant dense<0.000000e+00> : vector<16x16xf32>
    %119 = tpu.matmul %118, %116, %cst_125 {dimension_numbers = #tpu.dot_dimension_numbers<[1], [0], [0], [1], [0, 0, 1, 1], [], []>} : vector<16x8xf32>, vector<8x16xf32>, vector<16x16xf32> -> vector<16x16xf32>
    %120 = arith.addf %113, %119 : vector<16x16xf32>
    %c7_126 = arith.constant 7 : index
    %c0_127 = arith.constant 0 : index
    %c0_128 = arith.constant 0 : index
    %121 = vector.load %arg5[%c7_126, %c0_127, %c0_128] : memref<9x64x16xf32, #tpu.memory_space<vmem>>, vector<1x64x16xf32>
    %122 = vector.shape_cast %121 : vector<1x64x16xf32> to vector<64x16xf32>
    %cst_129 = arith.constant dense<0.000000e+00> : vector<8x16xf32>
    %123 = tpu.matmul %70, %122, %cst_129 {dimension_numbers = #tpu.dot_dimension_numbers<[1], [0], [0], [1], [0, 0, 1, 1], [], []>} : vector<8x64xf32>, vector<64x16xf32>, vector<8x16xf32> -> vector<8x16xf32>
    %c7_130 = arith.constant 7 : index
    %c0_131 = arith.constant 0 : index
    %c0_132 = arith.constant 0 : index
    %124 = vector.load %arg6[%c7_130, %c0_131, %c0_132] : memref<9x16x8xf32, #tpu.memory_space<vmem>>, vector<1x16x8xf32>
    %125 = vector.shape_cast %124 : vector<1x16x8xf32> to vector<16x8xf32>
    %cst_133 = arith.constant dense<0.000000e+00> : vector<16x16xf32>
    %126 = tpu.matmul %125, %123, %cst_133 {dimension_numbers = #tpu.dot_dimension_numbers<[1], [0], [0], [1], [0, 0, 1, 1], [], []>} : vector<16x8xf32>, vector<8x16xf32>, vector<16x16xf32> -> vector<16x16xf32>
    %127 = arith.addf %120, %126 : vector<16x16xf32>
    %c8_134 = arith.constant 8 : index
    %c0_135 = arith.constant 0 : index
    %c0_136 = arith.constant 0 : index
    %128 = vector.load %arg5[%c8_134, %c0_135, %c0_136] : memref<9x64x16xf32, #tpu.memory_space<vmem>>, vector<1x64x16xf32>
    %129 = vector.shape_cast %128 : vector<1x64x16xf32> to vector<64x16xf32>
    %cst_137 = arith.constant dense<0.000000e+00> : vector<8x16xf32>
    %130 = tpu.matmul %70, %129, %cst_137 {dimension_numbers = #tpu.dot_dimension_numbers<[1], [0], [0], [1], [0, 0, 1, 1], [], []>} : vector<8x64xf32>, vector<64x16xf32>, vector<8x16xf32> -> vector<8x16xf32>
    %c8_138 = arith.constant 8 : index
    %c0_139 = arith.constant 0 : index
    %c0_140 = arith.constant 0 : index
    %131 = vector.load %arg6[%c8_138, %c0_139, %c0_140] : memref<9x16x8xf32, #tpu.memory_space<vmem>>, vector<1x16x8xf32>
    %132 = vector.shape_cast %131 : vector<1x16x8xf32> to vector<16x8xf32>
    %cst_141 = arith.constant dense<0.000000e+00> : vector<16x16xf32>
    %133 = tpu.matmul %132, %130, %cst_141 {dimension_numbers = #tpu.dot_dimension_numbers<[1], [0], [0], [1], [0, 0, 1, 1], [], []>} : vector<16x8xf32>, vector<8x16xf32>, vector<16x16xf32> -> vector<16x16xf32>
    %134 = arith.addf %127, %133 : vector<16x16xf32>
    %c0_142 = arith.constant 0 : index
    %c0_143 = arith.constant 0 : index
    %135 = vector.load %arg7[%c0_142, %c0_143] : memref<16x1xf32, #tpu.memory_space<vmem>>, vector<16x1xf32>
    %136 = vector.broadcast %135 : vector<16x1xf32> to vector<16x16xf32>
    %137 = arith.addf %134, %136 : vector<16x16xf32>
    %cst_144 = arith.constant 0.000000e+00 : f32
    %138 = vector.broadcast %cst_144 : f32 to vector<16x16xf32>
    %139 = arith.maximumf %137, %138 : vector<16x16xf32>
    %cst_145 = arith.constant 0.000000e+00 : f32
    %140 = vector.broadcast %cst_145 : f32 to vector<32x16xf32>
    %c0_146 = arith.constant 0 : index
    %c0_147 = arith.constant 0 : index
    %c0_148 = arith.constant 0 : index
    %141 = vector.load %arg8[%c0_146, %c0_147, %c0_148] : memref<9x16x16xf32, #tpu.memory_space<vmem>>, vector<1x16x16xf32>
    %142 = vector.shape_cast %141 : vector<1x16x16xf32> to vector<16x16xf32>
    %cst_149 = arith.constant dense<0.000000e+00> : vector<16x16xf32>
    %143 = tpu.matmul %139, %142, %cst_149 {dimension_numbers = #tpu.dot_dimension_numbers<[1], [0], [0], [1], [0, 0, 1, 1], [], []>} : vector<16x16xf32>, vector<16x16xf32>, vector<16x16xf32> -> vector<16x16xf32>
    %c0_150 = arith.constant 0 : index
    %c0_151 = arith.constant 0 : index
    %c0_152 = arith.constant 0 : index
    %144 = vector.load %arg9[%c0_150, %c0_151, %c0_152] : memref<9x32x16xf32, #tpu.memory_space<vmem>>, vector<1x32x16xf32>
    %145 = vector.shape_cast %144 : vector<1x32x16xf32> to vector<32x16xf32>
    %cst_153 = arith.constant dense<0.000000e+00> : vector<32x16xf32>
    %146 = tpu.matmul %145, %143, %cst_153 {dimension_numbers = #tpu.dot_dimension_numbers<[1], [0], [0], [1], [0, 0, 1, 1], [], []>} : vector<32x16xf32>, vector<16x16xf32>, vector<32x16xf32> -> vector<32x16xf32>
    %147 = arith.addf %140, %146 : vector<32x16xf32>
    %c1_154 = arith.constant 1 : index
    %c0_155 = arith.constant 0 : index
    %c0_156 = arith.constant 0 : index
    %148 = vector.load %arg8[%c1_154, %c0_155, %c0_156] : memref<9x16x16xf32, #tpu.memory_space<vmem>>, vector<1x16x16xf32>
    %149 = vector.shape_cast %148 : vector<1x16x16xf32> to vector<16x16xf32>
    %cst_157 = arith.constant dense<0.000000e+00> : vector<16x16xf32>
    %150 = tpu.matmul %139, %149, %cst_157 {dimension_numbers = #tpu.dot_dimension_numbers<[1], [0], [0], [1], [0, 0, 1, 1], [], []>} : vector<16x16xf32>, vector<16x16xf32>, vector<16x16xf32> -> vector<16x16xf32>
    %c1_158 = arith.constant 1 : index
    %c0_159 = arith.constant 0 : index
    %c0_160 = arith.constant 0 : index
    %151 = vector.load %arg9[%c1_158, %c0_159, %c0_160] : memref<9x32x16xf32, #tpu.memory_space<vmem>>, vector<1x32x16xf32>
    %152 = vector.shape_cast %151 : vector<1x32x16xf32> to vector<32x16xf32>
    %cst_161 = arith.constant dense<0.000000e+00> : vector<32x16xf32>
    %153 = tpu.matmul %152, %150, %cst_161 {dimension_numbers = #tpu.dot_dimension_numbers<[1], [0], [0], [1], [0, 0, 1, 1], [], []>} : vector<32x16xf32>, vector<16x16xf32>, vector<32x16xf32> -> vector<32x16xf32>
    %154 = arith.addf %147, %153 : vector<32x16xf32>
    %c2_162 = arith.constant 2 : index
    %c0_163 = arith.constant 0 : index
    %c0_164 = arith.constant 0 : index
    %155 = vector.load %arg8[%c2_162, %c0_163, %c0_164] : memref<9x16x16xf32, #tpu.memory_space<vmem>>, vector<1x16x16xf32>
    %156 = vector.shape_cast %155 : vector<1x16x16xf32> to vector<16x16xf32>
    %cst_165 = arith.constant dense<0.000000e+00> : vector<16x16xf32>
    %157 = tpu.matmul %139, %156, %cst_165 {dimension_numbers = #tpu.dot_dimension_numbers<[1], [0], [0], [1], [0, 0, 1, 1], [], []>} : vector<16x16xf32>, vector<16x16xf32>, vector<16x16xf32> -> vector<16x16xf32>
    %c2_166 = arith.constant 2 : index
    %c0_167 = arith.constant 0 : index
    %c0_168 = arith.constant 0 : index
    %158 = vector.load %arg9[%c2_166, %c0_167, %c0_168] : memref<9x32x16xf32, #tpu.memory_space<vmem>>, vector<1x32x16xf32>
    %159 = vector.shape_cast %158 : vector<1x32x16xf32> to vector<32x16xf32>
    %cst_169 = arith.constant dense<0.000000e+00> : vector<32x16xf32>
    %160 = tpu.matmul %159, %157, %cst_169 {dimension_numbers = #tpu.dot_dimension_numbers<[1], [0], [0], [1], [0, 0, 1, 1], [], []>} : vector<32x16xf32>, vector<16x16xf32>, vector<32x16xf32> -> vector<32x16xf32>
    %161 = arith.addf %154, %160 : vector<32x16xf32>
    %c3_170 = arith.constant 3 : index
    %c0_171 = arith.constant 0 : index
    %c0_172 = arith.constant 0 : index
    %162 = vector.load %arg8[%c3_170, %c0_171, %c0_172] : memref<9x16x16xf32, #tpu.memory_space<vmem>>, vector<1x16x16xf32>
    %163 = vector.shape_cast %162 : vector<1x16x16xf32> to vector<16x16xf32>
    %cst_173 = arith.constant dense<0.000000e+00> : vector<16x16xf32>
    %164 = tpu.matmul %139, %163, %cst_173 {dimension_numbers = #tpu.dot_dimension_numbers<[1], [0], [0], [1], [0, 0, 1, 1], [], []>} : vector<16x16xf32>, vector<16x16xf32>, vector<16x16xf32> -> vector<16x16xf32>
    %c3_174 = arith.constant 3 : index
    %c0_175 = arith.constant 0 : index
    %c0_176 = arith.constant 0 : index
    %165 = vector.load %arg9[%c3_174, %c0_175, %c0_176] : memref<9x32x16xf32, #tpu.memory_space<vmem>>, vector<1x32x16xf32>
    %166 = vector.shape_cast %165 : vector<1x32x16xf32> to vector<32x16xf32>
    %cst_177 = arith.constant dense<0.000000e+00> : vector<32x16xf32>
    %167 = tpu.matmul %166, %164, %cst_177 {dimension_numbers = #tpu.dot_dimension_numbers<[1], [0], [0], [1], [0, 0, 1, 1], [], []>} : vector<32x16xf32>, vector<16x16xf32>, vector<32x16xf32> -> vector<32x16xf32>
    %168 = arith.addf %161, %167 : vector<32x16xf32>
    %c4_178 = arith.constant 4 : index
    %c0_179 = arith.constant 0 : index
    %c0_180 = arith.constant 0 : index
    %169 = vector.load %arg8[%c4_178, %c0_179, %c0_180] : memref<9x16x16xf32, #tpu.memory_space<vmem>>, vector<1x16x16xf32>
    %170 = vector.shape_cast %169 : vector<1x16x16xf32> to vector<16x16xf32>
    %cst_181 = arith.constant dense<0.000000e+00> : vector<16x16xf32>
    %171 = tpu.matmul %139, %170, %cst_181 {dimension_numbers = #tpu.dot_dimension_numbers<[1], [0], [0], [1], [0, 0, 1, 1], [], []>} : vector<16x16xf32>, vector<16x16xf32>, vector<16x16xf32> -> vector<16x16xf32>
    %c4_182 = arith.constant 4 : index
    %c0_183 = arith.constant 0 : index
    %c0_184 = arith.constant 0 : index
    %172 = vector.load %arg9[%c4_182, %c0_183, %c0_184] : memref<9x32x16xf32, #tpu.memory_space<vmem>>, vector<1x32x16xf32>
    %173 = vector.shape_cast %172 : vector<1x32x16xf32> to vector<32x16xf32>
    %cst_185 = arith.constant dense<0.000000e+00> : vector<32x16xf32>
    %174 = tpu.matmul %173, %171, %cst_185 {dimension_numbers = #tpu.dot_dimension_numbers<[1], [0], [0], [1], [0, 0, 1, 1], [], []>} : vector<32x16xf32>, vector<16x16xf32>, vector<32x16xf32> -> vector<32x16xf32>
    %175 = arith.addf %168, %174 : vector<32x16xf32>
    %c5_186 = arith.constant 5 : index
    %c0_187 = arith.constant 0 : index
    %c0_188 = arith.constant 0 : index
    %176 = vector.load %arg8[%c5_186, %c0_187, %c0_188] : memref<9x16x16xf32, #tpu.memory_space<vmem>>, vector<1x16x16xf32>
    %177 = vector.shape_cast %176 : vector<1x16x16xf32> to vector<16x16xf32>
    %cst_189 = arith.constant dense<0.000000e+00> : vector<16x16xf32>
    %178 = tpu.matmul %139, %177, %cst_189 {dimension_numbers = #tpu.dot_dimension_numbers<[1], [0], [0], [1], [0, 0, 1, 1], [], []>} : vector<16x16xf32>, vector<16x16xf32>, vector<16x16xf32> -> vector<16x16xf32>
    %c5_190 = arith.constant 5 : index
    %c0_191 = arith.constant 0 : index
    %c0_192 = arith.constant 0 : index
    %179 = vector.load %arg9[%c5_190, %c0_191, %c0_192] : memref<9x32x16xf32, #tpu.memory_space<vmem>>, vector<1x32x16xf32>
    %180 = vector.shape_cast %179 : vector<1x32x16xf32> to vector<32x16xf32>
    %cst_193 = arith.constant dense<0.000000e+00> : vector<32x16xf32>
    %181 = tpu.matmul %180, %178, %cst_193 {dimension_numbers = #tpu.dot_dimension_numbers<[1], [0], [0], [1], [0, 0, 1, 1], [], []>} : vector<32x16xf32>, vector<16x16xf32>, vector<32x16xf32> -> vector<32x16xf32>
    %182 = arith.addf %175, %181 : vector<32x16xf32>
    %c6_194 = arith.constant 6 : index
    %c0_195 = arith.constant 0 : index
    %c0_196 = arith.constant 0 : index
    %183 = vector.load %arg8[%c6_194, %c0_195, %c0_196] : memref<9x16x16xf32, #tpu.memory_space<vmem>>, vector<1x16x16xf32>
    %184 = vector.shape_cast %183 : vector<1x16x16xf32> to vector<16x16xf32>
    %cst_197 = arith.constant dense<0.000000e+00> : vector<16x16xf32>
    %185 = tpu.matmul %139, %184, %cst_197 {dimension_numbers = #tpu.dot_dimension_numbers<[1], [0], [0], [1], [0, 0, 1, 1], [], []>} : vector<16x16xf32>, vector<16x16xf32>, vector<16x16xf32> -> vector<16x16xf32>
    %c6_198 = arith.constant 6 : index
    %c0_199 = arith.constant 0 : index
    %c0_200 = arith.constant 0 : index
    %186 = vector.load %arg9[%c6_198, %c0_199, %c0_200] : memref<9x32x16xf32, #tpu.memory_space<vmem>>, vector<1x32x16xf32>
    %187 = vector.shape_cast %186 : vector<1x32x16xf32> to vector<32x16xf32>
    %cst_201 = arith.constant dense<0.000000e+00> : vector<32x16xf32>
    %188 = tpu.matmul %187, %185, %cst_201 {dimension_numbers = #tpu.dot_dimension_numbers<[1], [0], [0], [1], [0, 0, 1, 1], [], []>} : vector<32x16xf32>, vector<16x16xf32>, vector<32x16xf32> -> vector<32x16xf32>
    %189 = arith.addf %182, %188 : vector<32x16xf32>
    %c7_202 = arith.constant 7 : index
    %c0_203 = arith.constant 0 : index
    %c0_204 = arith.constant 0 : index
    %190 = vector.load %arg8[%c7_202, %c0_203, %c0_204] : memref<9x16x16xf32, #tpu.memory_space<vmem>>, vector<1x16x16xf32>
    %191 = vector.shape_cast %190 : vector<1x16x16xf32> to vector<16x16xf32>
    %cst_205 = arith.constant dense<0.000000e+00> : vector<16x16xf32>
    %192 = tpu.matmul %139, %191, %cst_205 {dimension_numbers = #tpu.dot_dimension_numbers<[1], [0], [0], [1], [0, 0, 1, 1], [], []>} : vector<16x16xf32>, vector<16x16xf32>, vector<16x16xf32> -> vector<16x16xf32>
    %c7_206 = arith.constant 7 : index
    %c0_207 = arith.constant 0 : index
    %c0_208 = arith.constant 0 : index
    %193 = vector.load %arg9[%c7_206, %c0_207, %c0_208] : memref<9x32x16xf32, #tpu.memory_space<vmem>>, vector<1x32x16xf32>
    %194 = vector.shape_cast %193 : vector<1x32x16xf32> to vector<32x16xf32>
    %cst_209 = arith.constant dense<0.000000e+00> : vector<32x16xf32>
    %195 = tpu.matmul %194, %192, %cst_209 {dimension_numbers = #tpu.dot_dimension_numbers<[1], [0], [0], [1], [0, 0, 1, 1], [], []>} : vector<32x16xf32>, vector<16x16xf32>, vector<32x16xf32> -> vector<32x16xf32>
    %196 = arith.addf %189, %195 : vector<32x16xf32>
    %c8_210 = arith.constant 8 : index
    %c0_211 = arith.constant 0 : index
    %c0_212 = arith.constant 0 : index
    %197 = vector.load %arg8[%c8_210, %c0_211, %c0_212] : memref<9x16x16xf32, #tpu.memory_space<vmem>>, vector<1x16x16xf32>
    %198 = vector.shape_cast %197 : vector<1x16x16xf32> to vector<16x16xf32>
    %cst_213 = arith.constant dense<0.000000e+00> : vector<16x16xf32>
    %199 = tpu.matmul %139, %198, %cst_213 {dimension_numbers = #tpu.dot_dimension_numbers<[1], [0], [0], [1], [0, 0, 1, 1], [], []>} : vector<16x16xf32>, vector<16x16xf32>, vector<16x16xf32> -> vector<16x16xf32>
    %c8_214 = arith.constant 8 : index
    %c0_215 = arith.constant 0 : index
    %c0_216 = arith.constant 0 : index
    %200 = vector.load %arg9[%c8_214, %c0_215, %c0_216] : memref<9x32x16xf32, #tpu.memory_space<vmem>>, vector<1x32x16xf32>
    %201 = vector.shape_cast %200 : vector<1x32x16xf32> to vector<32x16xf32>
    %cst_217 = arith.constant dense<0.000000e+00> : vector<32x16xf32>
    %202 = tpu.matmul %201, %199, %cst_217 {dimension_numbers = #tpu.dot_dimension_numbers<[1], [0], [0], [1], [0, 0, 1, 1], [], []>} : vector<32x16xf32>, vector<16x16xf32>, vector<32x16xf32> -> vector<32x16xf32>
    %203 = arith.addf %196, %202 : vector<32x16xf32>
    %c0_218 = arith.constant 0 : index
    %c0_219 = arith.constant 0 : index
    %204 = vector.load %arg10[%c0_218, %c0_219] : memref<32x1xf32, #tpu.memory_space<vmem>>, vector<32x1xf32>
    %205 = vector.broadcast %204 : vector<32x1xf32> to vector<32x16xf32>
    %206 = arith.addf %203, %205 : vector<32x16xf32>
    %cst_220 = arith.constant 0.000000e+00 : f32
    %207 = vector.broadcast %cst_220 : f32 to vector<32x16xf32>
    %208 = arith.maximumf %206, %207 : vector<32x16xf32>
    %cst_221 = arith.constant 0.000000e+00 : f32
    %209 = vector.broadcast %cst_221 : f32 to vector<32x16xf32>
    %c0_222 = arith.constant 0 : index
    %c0_223 = arith.constant 0 : index
    %c0_224 = arith.constant 0 : index
    %210 = vector.load %arg11[%c0_222, %c0_223, %c0_224] : memref<9x16x16xf32, #tpu.memory_space<vmem>>, vector<1x16x16xf32>
    %211 = vector.shape_cast %210 : vector<1x16x16xf32> to vector<16x16xf32>
    %cst_225 = arith.constant dense<0.000000e+00> : vector<32x16xf32>
    %212 = tpu.matmul %208, %211, %cst_225 {dimension_numbers = #tpu.dot_dimension_numbers<[1], [0], [0], [1], [0, 0, 1, 1], [], []>} : vector<32x16xf32>, vector<16x16xf32>, vector<32x16xf32> -> vector<32x16xf32>
    %c0_226 = arith.constant 0 : index
    %c0_227 = arith.constant 0 : index
    %c0_228 = arith.constant 0 : index
    %213 = vector.load %arg12[%c0_226, %c0_227, %c0_228] : memref<9x32x32xf32, #tpu.memory_space<vmem>>, vector<1x32x32xf32>
    %214 = vector.shape_cast %213 : vector<1x32x32xf32> to vector<32x32xf32>
    %cst_229 = arith.constant dense<0.000000e+00> : vector<32x16xf32>
    %215 = tpu.matmul %214, %212, %cst_229 {dimension_numbers = #tpu.dot_dimension_numbers<[1], [0], [0], [1], [0, 0, 1, 1], [], []>} : vector<32x32xf32>, vector<32x16xf32>, vector<32x16xf32> -> vector<32x16xf32>
    %216 = arith.addf %209, %215 : vector<32x16xf32>
    %c1_230 = arith.constant 1 : index
    %c0_231 = arith.constant 0 : index
    %c0_232 = arith.constant 0 : index
    %217 = vector.load %arg11[%c1_230, %c0_231, %c0_232] : memref<9x16x16xf32, #tpu.memory_space<vmem>>, vector<1x16x16xf32>
    %218 = vector.shape_cast %217 : vector<1x16x16xf32> to vector<16x16xf32>
    %cst_233 = arith.constant dense<0.000000e+00> : vector<32x16xf32>
    %219 = tpu.matmul %208, %218, %cst_233 {dimension_numbers = #tpu.dot_dimension_numbers<[1], [0], [0], [1], [0, 0, 1, 1], [], []>} : vector<32x16xf32>, vector<16x16xf32>, vector<32x16xf32> -> vector<32x16xf32>
    %c1_234 = arith.constant 1 : index
    %c0_235 = arith.constant 0 : index
    %c0_236 = arith.constant 0 : index
    %220 = vector.load %arg12[%c1_234, %c0_235, %c0_236] : memref<9x32x32xf32, #tpu.memory_space<vmem>>, vector<1x32x32xf32>
    %221 = vector.shape_cast %220 : vector<1x32x32xf32> to vector<32x32xf32>
    %cst_237 = arith.constant dense<0.000000e+00> : vector<32x16xf32>
    %222 = tpu.matmul %221, %219, %cst_237 {dimension_numbers = #tpu.dot_dimension_numbers<[1], [0], [0], [1], [0, 0, 1, 1], [], []>} : vector<32x32xf32>, vector<32x16xf32>, vector<32x16xf32> -> vector<32x16xf32>
    %223 = arith.addf %216, %222 : vector<32x16xf32>
    %c2_238 = arith.constant 2 : index
    %c0_239 = arith.constant 0 : index
    %c0_240 = arith.constant 0 : index
    %224 = vector.load %arg11[%c2_238, %c0_239, %c0_240] : memref<9x16x16xf32, #tpu.memory_space<vmem>>, vector<1x16x16xf32>
    %225 = vector.shape_cast %224 : vector<1x16x16xf32> to vector<16x16xf32>
    %cst_241 = arith.constant dense<0.000000e+00> : vector<32x16xf32>
    %226 = tpu.matmul %208, %225, %cst_241 {dimension_numbers = #tpu.dot_dimension_numbers<[1], [0], [0], [1], [0, 0, 1, 1], [], []>} : vector<32x16xf32>, vector<16x16xf32>, vector<32x16xf32> -> vector<32x16xf32>
    %c2_242 = arith.constant 2 : index
    %c0_243 = arith.constant 0 : index
    %c0_244 = arith.constant 0 : index
    %227 = vector.load %arg12[%c2_242, %c0_243, %c0_244] : memref<9x32x32xf32, #tpu.memory_space<vmem>>, vector<1x32x32xf32>
    %228 = vector.shape_cast %227 : vector<1x32x32xf32> to vector<32x32xf32>
    %cst_245 = arith.constant dense<0.000000e+00> : vector<32x16xf32>
    %229 = tpu.matmul %228, %226, %cst_245 {dimension_numbers = #tpu.dot_dimension_numbers<[1], [0], [0], [1], [0, 0, 1, 1], [], []>} : vector<32x32xf32>, vector<32x16xf32>, vector<32x16xf32> -> vector<32x16xf32>
    %230 = arith.addf %223, %229 : vector<32x16xf32>
    %c3_246 = arith.constant 3 : index
    %c0_247 = arith.constant 0 : index
    %c0_248 = arith.constant 0 : index
    %231 = vector.load %arg11[%c3_246, %c0_247, %c0_248] : memref<9x16x16xf32, #tpu.memory_space<vmem>>, vector<1x16x16xf32>
    %232 = vector.shape_cast %231 : vector<1x16x16xf32> to vector<16x16xf32>
    %cst_249 = arith.constant dense<0.000000e+00> : vector<32x16xf32>
    %233 = tpu.matmul %208, %232, %cst_249 {dimension_numbers = #tpu.dot_dimension_numbers<[1], [0], [0], [1], [0, 0, 1, 1], [], []>} : vector<32x16xf32>, vector<16x16xf32>, vector<32x16xf32> -> vector<32x16xf32>
    %c3_250 = arith.constant 3 : index
    %c0_251 = arith.constant 0 : index
    %c0_252 = arith.constant 0 : index
    %234 = vector.load %arg12[%c3_250, %c0_251, %c0_252] : memref<9x32x32xf32, #tpu.memory_space<vmem>>, vector<1x32x32xf32>
    %235 = vector.shape_cast %234 : vector<1x32x32xf32> to vector<32x32xf32>
    %cst_253 = arith.constant dense<0.000000e+00> : vector<32x16xf32>
    %236 = tpu.matmul %235, %233, %cst_253 {dimension_numbers = #tpu.dot_dimension_numbers<[1], [0], [0], [1], [0, 0, 1, 1], [], []>} : vector<32x32xf32>, vector<32x16xf32>, vector<32x16xf32> -> vector<32x16xf32>
    %237 = arith.addf %230, %236 : vector<32x16xf32>
    %c4_254 = arith.constant 4 : index
    %c0_255 = arith.constant 0 : index
    %c0_256 = arith.constant 0 : index
    %238 = vector.load %arg11[%c4_254, %c0_255, %c0_256] : memref<9x16x16xf32, #tpu.memory_space<vmem>>, vector<1x16x16xf32>
    %239 = vector.shape_cast %238 : vector<1x16x16xf32> to vector<16x16xf32>
    %cst_257 = arith.constant dense<0.000000e+00> : vector<32x16xf32>
    %240 = tpu.matmul %208, %239, %cst_257 {dimension_numbers = #tpu.dot_dimension_numbers<[1], [0], [0], [1], [0, 0, 1, 1], [], []>} : vector<32x16xf32>, vector<16x16xf32>, vector<32x16xf32> -> vector<32x16xf32>
    %c4_258 = arith.constant 4 : index
    %c0_259 = arith.constant 0 : index
    %c0_260 = arith.constant 0 : index
    %241 = vector.load %arg12[%c4_258, %c0_259, %c0_260] : memref<9x32x32xf32, #tpu.memory_space<vmem>>, vector<1x32x32xf32>
    %242 = vector.shape_cast %241 : vector<1x32x32xf32> to vector<32x32xf32>
    %cst_261 = arith.constant dense<0.000000e+00> : vector<32x16xf32>
    %243 = tpu.matmul %242, %240, %cst_261 {dimension_numbers = #tpu.dot_dimension_numbers<[1], [0], [0], [1], [0, 0, 1, 1], [], []>} : vector<32x32xf32>, vector<32x16xf32>, vector<32x16xf32> -> vector<32x16xf32>
    %244 = arith.addf %237, %243 : vector<32x16xf32>
    %c5_262 = arith.constant 5 : index
    %c0_263 = arith.constant 0 : index
    %c0_264 = arith.constant 0 : index
    %245 = vector.load %arg11[%c5_262, %c0_263, %c0_264] : memref<9x16x16xf32, #tpu.memory_space<vmem>>, vector<1x16x16xf32>
    %246 = vector.shape_cast %245 : vector<1x16x16xf32> to vector<16x16xf32>
    %cst_265 = arith.constant dense<0.000000e+00> : vector<32x16xf32>
    %247 = tpu.matmul %208, %246, %cst_265 {dimension_numbers = #tpu.dot_dimension_numbers<[1], [0], [0], [1], [0, 0, 1, 1], [], []>} : vector<32x16xf32>, vector<16x16xf32>, vector<32x16xf32> -> vector<32x16xf32>
    %c5_266 = arith.constant 5 : index
    %c0_267 = arith.constant 0 : index
    %c0_268 = arith.constant 0 : index
    %248 = vector.load %arg12[%c5_266, %c0_267, %c0_268] : memref<9x32x32xf32, #tpu.memory_space<vmem>>, vector<1x32x32xf32>
    %249 = vector.shape_cast %248 : vector<1x32x32xf32> to vector<32x32xf32>
    %cst_269 = arith.constant dense<0.000000e+00> : vector<32x16xf32>
    %250 = tpu.matmul %249, %247, %cst_269 {dimension_numbers = #tpu.dot_dimension_numbers<[1], [0], [0], [1], [0, 0, 1, 1], [], []>} : vector<32x32xf32>, vector<32x16xf32>, vector<32x16xf32> -> vector<32x16xf32>
    %251 = arith.addf %244, %250 : vector<32x16xf32>
    %c6_270 = arith.constant 6 : index
    %c0_271 = arith.constant 0 : index
    %c0_272 = arith.constant 0 : index
    %252 = vector.load %arg11[%c6_270, %c0_271, %c0_272] : memref<9x16x16xf32, #tpu.memory_space<vmem>>, vector<1x16x16xf32>
    %253 = vector.shape_cast %252 : vector<1x16x16xf32> to vector<16x16xf32>
    %cst_273 = arith.constant dense<0.000000e+00> : vector<32x16xf32>
    %254 = tpu.matmul %208, %253, %cst_273 {dimension_numbers = #tpu.dot_dimension_numbers<[1], [0], [0], [1], [0, 0, 1, 1], [], []>} : vector<32x16xf32>, vector<16x16xf32>, vector<32x16xf32> -> vector<32x16xf32>
    %c6_274 = arith.constant 6 : index
    %c0_275 = arith.constant 0 : index
    %c0_276 = arith.constant 0 : index
    %255 = vector.load %arg12[%c6_274, %c0_275, %c0_276] : memref<9x32x32xf32, #tpu.memory_space<vmem>>, vector<1x32x32xf32>
    %256 = vector.shape_cast %255 : vector<1x32x32xf32> to vector<32x32xf32>
    %cst_277 = arith.constant dense<0.000000e+00> : vector<32x16xf32>
    %257 = tpu.matmul %256, %254, %cst_277 {dimension_numbers = #tpu.dot_dimension_numbers<[1], [0], [0], [1], [0, 0, 1, 1], [], []>} : vector<32x32xf32>, vector<32x16xf32>, vector<32x16xf32> -> vector<32x16xf32>
    %258 = arith.addf %251, %257 : vector<32x16xf32>
    %c7_278 = arith.constant 7 : index
    %c0_279 = arith.constant 0 : index
    %c0_280 = arith.constant 0 : index
    %259 = vector.load %arg11[%c7_278, %c0_279, %c0_280] : memref<9x16x16xf32, #tpu.memory_space<vmem>>, vector<1x16x16xf32>
    %260 = vector.shape_cast %259 : vector<1x16x16xf32> to vector<16x16xf32>
    %cst_281 = arith.constant dense<0.000000e+00> : vector<32x16xf32>
    %261 = tpu.matmul %208, %260, %cst_281 {dimension_numbers = #tpu.dot_dimension_numbers<[1], [0], [0], [1], [0, 0, 1, 1], [], []>} : vector<32x16xf32>, vector<16x16xf32>, vector<32x16xf32> -> vector<32x16xf32>
    %c7_282 = arith.constant 7 : index
    %c0_283 = arith.constant 0 : index
    %c0_284 = arith.constant 0 : index
    %262 = vector.load %arg12[%c7_282, %c0_283, %c0_284] : memref<9x32x32xf32, #tpu.memory_space<vmem>>, vector<1x32x32xf32>
    %263 = vector.shape_cast %262 : vector<1x32x32xf32> to vector<32x32xf32>
    %cst_285 = arith.constant dense<0.000000e+00> : vector<32x16xf32>
    %264 = tpu.matmul %263, %261, %cst_285 {dimension_numbers = #tpu.dot_dimension_numbers<[1], [0], [0], [1], [0, 0, 1, 1], [], []>} : vector<32x32xf32>, vector<32x16xf32>, vector<32x16xf32> -> vector<32x16xf32>
    %265 = arith.addf %258, %264 : vector<32x16xf32>
    %c8_286 = arith.constant 8 : index
    %c0_287 = arith.constant 0 : index
    %c0_288 = arith.constant 0 : index
    %266 = vector.load %arg11[%c8_286, %c0_287, %c0_288] : memref<9x16x16xf32, #tpu.memory_space<vmem>>, vector<1x16x16xf32>
    %267 = vector.shape_cast %266 : vector<1x16x16xf32> to vector<16x16xf32>
    %cst_289 = arith.constant dense<0.000000e+00> : vector<32x16xf32>
    %268 = tpu.matmul %208, %267, %cst_289 {dimension_numbers = #tpu.dot_dimension_numbers<[1], [0], [0], [1], [0, 0, 1, 1], [], []>} : vector<32x16xf32>, vector<16x16xf32>, vector<32x16xf32> -> vector<32x16xf32>
    %c8_290 = arith.constant 8 : index
    %c0_291 = arith.constant 0 : index
    %c0_292 = arith.constant 0 : index
    %269 = vector.load %arg12[%c8_290, %c0_291, %c0_292] : memref<9x32x32xf32, #tpu.memory_space<vmem>>, vector<1x32x32xf32>
    %270 = vector.shape_cast %269 : vector<1x32x32xf32> to vector<32x32xf32>
    %cst_293 = arith.constant dense<0.000000e+00> : vector<32x16xf32>
    %271 = tpu.matmul %270, %268, %cst_293 {dimension_numbers = #tpu.dot_dimension_numbers<[1], [0], [0], [1], [0, 0, 1, 1], [], []>} : vector<32x32xf32>, vector<32x16xf32>, vector<32x16xf32> -> vector<32x16xf32>
    %272 = arith.addf %265, %271 : vector<32x16xf32>
    %c0_294 = arith.constant 0 : index
    %c0_295 = arith.constant 0 : index
    %273 = vector.load %arg13[%c0_294, %c0_295] : memref<32x1xf32, #tpu.memory_space<vmem>>, vector<32x1xf32>
    %274 = vector.broadcast %273 : vector<32x1xf32> to vector<32x16xf32>
    %275 = arith.addf %272, %274 : vector<32x16xf32>
    %cst_296 = arith.constant 0.000000e+00 : f32
    %276 = vector.broadcast %cst_296 : f32 to vector<32x16xf32>
    %277 = arith.maximumf %275, %276 : vector<32x16xf32>
    %c0_297 = arith.constant 0 : index
    %c0_298 = arith.constant 0 : index
    %278 = vector.load %arg14[%c0_297, %c0_298] : memref<6x32xf32, #tpu.memory_space<vmem>>, vector<6x32xf32>
    %cst_299 = arith.constant dense<0.000000e+00> : vector<6x16xf32>
    %279 = tpu.matmul %278, %277, %cst_299 {dimension_numbers = #tpu.dot_dimension_numbers<[1], [0], [0], [1], [0, 0, 1, 1], [], []>} : vector<6x32xf32>, vector<32x16xf32>, vector<6x16xf32> -> vector<6x16xf32>
    %c0_300 = arith.constant 0 : index
    %c0_301 = arith.constant 0 : index
    %280 = vector.load %arg15[%c0_300, %c0_301] : memref<6x1xf32, #tpu.memory_space<vmem>>, vector<6x1xf32>
    %281 = vector.broadcast %280 : vector<6x1xf32> to vector<6x16xf32>
    %282 = arith.addf %279, %281 : vector<6x16xf32>
    %c0_302 = arith.constant 0 : index
    %c0_303 = arith.constant 0 : index
    %283 = vector.load %arg16[%c0_302, %c0_303] : memref<16x256xf32, #tpu.memory_space<vmem>>, vector<16x256xf32>
    %cst_304 = arith.constant dense<0.000000e+00> : vector<6x256xf32>
    %284 = tpu.matmul %282, %283, %cst_304 {dimension_numbers = #tpu.dot_dimension_numbers<[1], [0], [0], [1], [0, 0, 1, 1], [], []>} : vector<6x16xf32>, vector<16x256xf32>, vector<6x256xf32> -> vector<6x256xf32>
    %c0_305 = arith.constant 0 : index
    %c0_306 = arith.constant 0 : index
    %c0_307 = arith.constant 0 : index
    %285 = vector.load %arg17[%c0_305, %c0_306, %c0_307] : memref<1x6x256xf32, #tpu.memory_space<vmem>>, vector<1x6x256xf32>
    %286 = vector.shape_cast %285 : vector<1x6x256xf32> to vector<6x256xf32>
    %287 = vector.shape_cast %284 : vector<6x256xf32> to vector<1x6x256xf32>
    tpu.vector_store %arg17[%c0_305, %c0_306, %c0_307], %287 {strides = array<i32>} : memref<1x6x256xf32, #tpu.memory_space<vmem>>, vector<1x6x256xf32>,
    return
  }
  func.func @transform_0(%arg0: i32) -> (i32, i32, i32) {
    %c0_i32 = arith.constant 0 : i32
    %c0_i32_0 = arith.constant 0 : i32
    %c0_i32_1 = arith.constant 0 : i32
    return %arg0, %c0_i32, %c0_i32_0 : i32, i32, i32
  }
  func.func @transform_1(%arg0: i32) -> (i32, i32, i32) {
    %c0_i32 = arith.constant 0 : i32
    %c0_i32_0 = arith.constant 0 : i32
    %c0_i32_1 = arith.constant 0 : i32
    %c0_i32_2 = arith.constant 0 : i32
    return %c0_i32, %c0_i32_0, %c0_i32_1 : i32, i32, i32
  }
  func.func @transform_2(%arg0: i32) -> (i32, i32, i32) {
    %c0_i32 = arith.constant 0 : i32
    %c0_i32_0 = arith.constant 0 : i32
    %c0_i32_1 = arith.constant 0 : i32
    %c0_i32_2 = arith.constant 0 : i32
    return %c0_i32, %c0_i32_0, %c0_i32_1 : i32, i32, i32
  }
  func.func @transform_3(%arg0: i32) -> (i32, i32) {
    %c0_i32 = arith.constant 0 : i32
    %c0_i32_0 = arith.constant 0 : i32
    %c0_i32_1 = arith.constant 0 : i32
    return %c0_i32, %c0_i32_0 : i32, i32
  }
  func.func @transform_4(%arg0: i32) -> (i32, i32, i32) {
    %c0_i32 = arith.constant 0 : i32
    %c0_i32_0 = arith.constant 0 : i32
    %c0_i32_1 = arith.constant 0 : i32
    %c0_i32_2 = arith.constant 0 : i32
    return %c0_i32, %c0_i32_0, %c0_i32_1 : i32, i32, i32
  }
  func.func @transform_5(%arg0: i32) -> (i32, i32, i32) {
    %c0_i32 = arith.constant 0 : i32
    %c0_i32_0 = arith.constant 0 : i32
    %c0_i32_1 = arith.constant 0 : i32
    %c0_i32_2 = arith.constant 0 : i32
    return %c0_i32, %c0_i32_0, %c0_i32_1 : i32, i32, i32
  }
  func.func @transform_6(%arg0: i32) -> (i32, i32) {
    %c0_i32 = arith.constant 0 : i32
    %c0_i32_0 = arith.constant 0 : i32
    %c0_i32_1 = arith.constant 0 : i32
    return %c0_i32, %c0_i32_0 : i32, i32
  }
  func.func @transform_7(%arg0: i32) -> (i32, i32, i32) {
    %c0_i32 = arith.constant 0 : i32
    %c0_i32_0 = arith.constant 0 : i32
    %c0_i32_1 = arith.constant 0 : i32
    %c0_i32_2 = arith.constant 0 : i32
    return %c0_i32, %c0_i32_0, %c0_i32_1 : i32, i32, i32
  }
  func.func @transform_8(%arg0: i32) -> (i32, i32, i32) {
    %c0_i32 = arith.constant 0 : i32
    %c0_i32_0 = arith.constant 0 : i32
    %c0_i32_1 = arith.constant 0 : i32
    %c0_i32_2 = arith.constant 0 : i32
    return %c0_i32, %c0_i32_0, %c0_i32_1 : i32, i32, i32
  }
  func.func @transform_9(%arg0: i32) -> (i32, i32) {
    %c0_i32 = arith.constant 0 : i32
    %c0_i32_0 = arith.constant 0 : i32
    %c0_i32_1 = arith.constant 0 : i32
    return %c0_i32, %c0_i32_0 : i32, i32
  }
  func.func @transform_10(%arg0: i32) -> (i32, i32, i32) {
    %c0_i32 = arith.constant 0 : i32
    %c0_i32_0 = arith.constant 0 : i32
    %c0_i32_1 = arith.constant 0 : i32
    %c0_i32_2 = arith.constant 0 : i32
    return %c0_i32, %c0_i32_0, %c0_i32_1 : i32, i32, i32
  }
  func.func @transform_11(%arg0: i32) -> (i32, i32, i32) {
    %c0_i32 = arith.constant 0 : i32
    %c0_i32_0 = arith.constant 0 : i32
    %c0_i32_1 = arith.constant 0 : i32
    %c0_i32_2 = arith.constant 0 : i32
    return %c0_i32, %c0_i32_0, %c0_i32_1 : i32, i32, i32
  }
  func.func @transform_12(%arg0: i32) -> (i32, i32) {
    %c0_i32 = arith.constant 0 : i32
    %c0_i32_0 = arith.constant 0 : i32
    %c0_i32_1 = arith.constant 0 : i32
    return %c0_i32, %c0_i32_0 : i32, i32
  }
  func.func @transform_13(%arg0: i32) -> (i32, i32) {
    %c0_i32 = arith.constant 0 : i32
    %c0_i32_0 = arith.constant 0 : i32
    %c0_i32_1 = arith.constant 0 : i32
    return %c0_i32, %c0_i32_0 : i32, i32
  }
  func.func @transform_14(%arg0: i32) -> (i32, i32) {
    %c0_i32 = arith.constant 0 : i32
    %c0_i32_0 = arith.constant 0 : i32
    %c0_i32_1 = arith.constant 0 : i32
    return %c0_i32, %c0_i32_0 : i32, i32
  }
  func.func @transform_15(%arg0: i32) -> (i32, i32) {
    %c0_i32 = arith.constant 0 : i32
    %c0_i32_0 = arith.constant 0 : i32
    %c0_i32_1 = arith.constant 0 : i32
    return %c0_i32, %c0_i32_0 : i32, i32
  }
  func.func @transform_16(%arg0: i32) -> (i32, i32, i32) {
    %c0_i32 = arith.constant 0 : i32
    %c0_i32_0 = arith.constant 0 : i32
    %c0_i32_1 = arith.constant 0 : i32
    return %arg0, %c0_i32, %c0_i32_0 : i32, i32, i32
  }
}

</mosaic_0001>

<llo_original>
// kernel: deeplabv3_forward_pallas.1
$region0: #{deeplabv3_forward_pallas.1}
  #allocation0 [shape = 'u32[]', space=smem, size = 0x4, offset = 0x4, fixed_abs, tag = 'smem constant byte address 0x4 - core index']
  #allocation1 [shape = 'u32[144,128]{1,0:T(1,128)}', space=vmem, size = 0x12000, scoped, tag = 'internal scratch']
  %s0 = inlined_call_operand.vmem [shape: f32[2,4,256], index: 0, kind: input, shape index: {}]
  %s1 = inlined_call_operand.hbm [shape: f32[9,256,64], index: 1, kind: input, shape index: {}]
  %s2 = inlined_call_operand.vmem [shape: f32[9,8,4], index: 2, kind: input, shape index: {}]
  %s3 = inlined_call_operand.vmem [shape: f32[8,1], index: 3, kind: input, shape index: {}]
  %s4 = inlined_call_operand.hbm [shape: f32[9,64,16], index: 4, kind: input, shape index: {}]
  %s5 = inlined_call_operand.vmem [shape: f32[9,16,8], index: 5, kind: input, shape index: {}]
  %s6 = inlined_call_operand.vmem [shape: f32[16,1], index: 6, kind: input, shape index: {}]
  %s7 = inlined_call_operand.hbm [shape: f32[9,16,16], index: 7, kind: input, shape index: {}, may-alias: {7,10}]
  %s8 = inlined_call_operand.vmem [shape: f32[9,32,16], index: 8, kind: input, shape index: {}]
  %s9 = inlined_call_operand.vmem [shape: f32[32,1], index: 9, kind: input, shape index: {}]
  %s10 = inlined_call_operand.hbm [shape: f32[9,16,16], index: 10, kind: input, shape index: {}, may-alias: {7,10}]
  %s11 = inlined_call_operand.hbm [shape: f32[9,32,32], index: 11, kind: input, shape index: {}]
  %s12 = inlined_call_operand.vmem [shape: f32[32,1], index: 12, kind: input, shape index: {}]
  %s13 = inlined_call_operand.hbm [shape: f32[6,32], index: 13, kind: input, shape index: {}]
  %s14 = inlined_call_operand.vmem [shape: f32[6,1], index: 14, kind: input, shape index: {}]
  %s15 = inlined_call_operand.hbm [shape: f32[16,256], index: 15, kind: input, shape index: {}]
  %s16 = inlined_call_operand.vmem [shape: f32[2,6,256], index: 16, kind: output, shape index: {}]
  %s17 = sld [smem:[#allocation0]]
  $region125: #{deeplabv3_forward_pallas.1} parent=0
    _
  %s19 = ssub.s32 1, %s17
  %s20 = scalar_select 0, %s19, %s17
  $region1: #{deeplabv3_forward_pallas.1} parent=0
    #allocation2 [shape = 'u8[1179648]{0}', space=vmem, size = 0x120000, scoped, tag = 'input window, operand 1, single buffered']
    #allocation3 [shape = 's32[2]{0}', space=sflag, size = 0x8, scoped, tag = 'scoped memory for deeplabv3_forward_pallas.1']
    #allocation4 [shape = 'u8[294912]{0}', space=vmem, size = 0x48000, scoped, tag = 'input window, operand 4, single buffered']
    #allocation5 [shape = 's32[1]{0}', space=sflag, size = 0x4, scoped, tag = 'scoped memory for deeplabv3_forward_pallas.1']
    #allocation6 [shape = 'u8[73728]{0}', space=vmem, size = 0x12000, scoped, tag = 'input window, operand 7, single buffered']
    #allocation7 [shape = 'u8[73728]{0}', space=vmem, size = 0x12000, scoped, tag = 'input window, operand 10, single buffered']
    #allocation8 [shape = 's32[1]{0}', space=sflag, size = 0x4, scoped, tag = 'scoped memory for deeplabv3_forward_pallas.1']
    #allocation9 [shape = 'u8[147456]{0}', space=vmem, size = 0x24000, scoped, tag = 'input window, operand 11, single buffered']
    #allocation10 [shape = 'u8[4096]{0}', space=vmem, size = 0x1000, scoped, tag = 'input window, operand 13, single buffered']
    #allocation11 [shape = 's32[1]{0}', space=sflag, size = 0x4, scoped, tag = 'scoped memory for deeplabv3_forward_pallas.1']
    #allocation12 [shape = 'u8[16384]{0}', space=vmem, size = 0x4000, scoped, tag = 'input window, operand 15, single buffered']
    %21 = vsyncpa [#allocation3], 0
    %22 = vsyncpa [#allocation5], 0
    %23 = vsyncpa [#allocation8], 0
    %24 = vsyncpa [#allocation11], 0
    loop: start=0, step=1, limit=4
    $region2: #{deeplabv3_forward_pallas.1} parent=1 // loop_pre_header
      _
    $region3: #{deeplabv3_forward_pallas.1} parent=1 // loop_header
      %s26 = sphi 0, %s30
      %p27 = scmp.ge.s32.totalorder %s26, 4
      %s36 = sphi 0, %s38
      %s39 = sphi 0, %s36
      %s40 = sphi 0, %s39
      %s56 = sphi 0, %s40
      %s60 = sphi 0, %s60
      %s62 = sphi 0, %s60
      %s63 = sphi 0, %s62
      %s77 = sphi 0, %s63
      %s81 = sphi 0, %s81
      %s83 = sphi 0, %s81
      %s84 = sphi 0, %s83
      %s98 = sphi 0, %s84
      %s102 = sphi 0, %s102
      %s104 = sphi 0, %s102
      %s105 = sphi 0, %s104
      %s119 = sphi 0, %s105
      %s123 = sphi 0, %s123
      %s125 = sphi 0, %s123
      %s126 = sphi 0, %s125
      %s140 = sphi 0, %s126
      %s144 = sphi 0, %s144
      %s146 = sphi 0, %s144
      %s147 = sphi 0, %s146
      %s161 = sphi 0, %s147
      %s165 = sphi 0, %s165
      %s167 = sphi 0, %s165
      %s168 = sphi 0, %s167
      %s182 = sphi 0, %s168
      %s186 = sphi 0, %s186
      %s188 = sphi 0, %s186
      %s189 = sphi 0, %s188
      %s203 = sphi 0, %s189
      %s207 = sphi 0, %s207
      %s209 = sphi 0, %s207
      %s210 = sphi 0, %s209
      %s224 = sphi 0, %s210
      %s228 = sphi 0, %s228
      %s230 = sphi 0, %s228
      %s231 = sphi 0, %s230
      %s245 = sphi 0, %s231
      %s249 = sphi 0, %s249
      %s251 = sphi 0, %s249
      %s252 = sphi 0, %s251
      %s266 = sphi 0, %s252
      %s270 = sphi 0, %s270
      %s272 = sphi 0, %s270
      %s273 = sphi 0, %s272
      %s287 = sphi 0, %s273
      %s291 = sphi 0, %s291
      %s293 = sphi 0, %s291
      %s294 = sphi 0, %s293
      %s308 = sphi 0, %s294
      %s312 = sphi 0, %s312
      %s314 = sphi 0, %s312
      %s315 = sphi 0, %s314
      %s329 = sphi 0, %s315
      %s333 = sphi 0, %s333
      %s335 = sphi 0, %s333
      %s336 = sphi 0, %s335
      %s350 = sphi 0, %s336
      %s354 = sphi 0, %s354
      %s356 = sphi 0, %s354
      %s357 = sphi 0, %s356
      %s371 = sphi 0, %s357
      %s377 = sphi 0, %s379
      %s380 = sphi 0, %s377
      %s381 = sphi 0, %s380
      %s397 = sphi 0, %s381
    $region4: #{deeplabv3_forward_pallas.1} parent=1 // loop_header_branch
      %29 = sbr.rel (%p27) target = $region8
    $region5: #{deeplabv3_forward_pallas.1} parent=1 // loop_body
      %s31 = ssub.s32 %s26, 1
      %s32 = ssub.s32 %s26, 2
      %s33 = sadd.s32 %s26, 1
      %s34 = ssub.s32 %s26, %s33
      %p35 = scmp.eq.s32.totalorder %s34, 0
      %s37 = sadd.s32 %s36, 1
      %s38 = scalar_select %p35, %s36, %s37
      %p41 = pneg %p35
      %p42 = scmp.eq.s32.totalorder %s26, 1
      %p43 = por %p41, %p42
      %p44 = scmp.ne.s32.totalorder %s36, %s39
      %p45 = scmp.eq.s32.totalorder %s26, 0
      %p46 = por %p44, %p45
      %p47 = scmp.ne.s32.totalorder %s36, %s39
      %p48 = scmp.eq.s32.totalorder %s31, 1
      %p49 = por %p47, %p48
      %p50 = scmp.ne.s32.totalorder %s39, %s40
      %p51 = scmp.eq.s32.totalorder %s31, 0
      %p52 = por %p50, %p51
      %p53 = scmp.ne.s32.totalorder %s39, %s40
      %p54 = scmp.eq.s32.totalorder %s32, 1
      %p55 = por %p53, %p54
      %p57 = scmp.ne.s32.totalorder %s40, %s56
      %p58 = scmp.eq.s32.totalorder %s32, 0
      %p59 = por %p57, %p58
      %s61 = sadd.s32 %s60, 1
      %p64 = scmp.eq.s32.totalorder %s26, 1
      %p65 = scmp.ne.s32.totalorder %s60, %s62
      %p66 = scmp.eq.s32.totalorder %s26, 0
      %p67 = por %p65, %p66
      %p68 = scmp.ne.s32.totalorder %s60, %s62
      %p69 = scmp.eq.s32.totalorder %s31, 1
      %p70 = por %p68, %p69
      %p71 = scmp.ne.s32.totalorder %s62, %s63
      %p72 = scmp.eq.s32.totalorder %s31, 0
      %p73 = por %p71, %p72
      %p74 = scmp.ne.s32.totalorder %s62, %s63
      %p75 = scmp.eq.s32.totalorder %s32, 1
      %p76 = por %p74, %p75
      %p78 = scmp.ne.s32.totalorder %s63, %s77
      %p79 = scmp.eq.s32.totalorder %s32, 0
      %p80 = por %p78, %p79
      %s82 = sadd.s32 %s81, 1
      %p85 = scmp.eq.s32.totalorder %s26, 1
      %p86 = scmp.ne.s32.totalorder %s81, %s83
      %p87 = scmp.eq.s32.totalorder %s26, 0
      %p88 = por %p86, %p87
      %p89 = scmp.ne.s32.totalorder %s81, %s83
      %p90 = scmp.eq.s32.totalorder %s31, 1
      %p91 = por %p89, %p90
      %p92 = scmp.ne.s32.totalorder %s83, %s84
      %p93 = scmp.eq.s32.totalorder %s31, 0
      %p94 = por %p92, %p93
      %p95 = scmp.ne.s32.totalorder %s83, %s84
      %p96 = scmp.eq.s32.totalorder %s32, 1
      %p97 = por %p95, %p96
      %p99 = scmp.ne.s32.totalorder %s84, %s98
      %p100 = scmp.eq.s32.totalorder %s32, 0
      %p101 = por %p99, %p100
      %s103 = sadd.s32 %s102, 1
      %p106 = scmp.eq.s32.totalorder %s26, 1
      %p107 = scmp.ne.s32.totalorder %s102, %s104
      %p108 = scmp.eq.s32.totalorder %s26, 0
      %p109 = por %p107, %p108
      %p110 = scmp.ne.s32.totalorder %s102, %s104
      %p111 = scmp.eq.s32.totalorder %s31, 1
      %p112 = por %p110, %p111
      %p113 = scmp.ne.s32.totalorder %s104, %s105
      %p114 = scmp.eq.s32.totalorder %s31, 0
      %p115 = por %p113, %p114
      %p116 = scmp.ne.s32.totalorder %s104, %s105
      %p117 = scmp.eq.s32.totalorder %s32, 1
      %p118 = por %p116, %p117
      %p120 = scmp.ne.s32.totalorder %s105, %s119
      %p121 = scmp.eq.s32.totalorder %s32, 0
      %p122 = por %p120, %p121
      %s124 = sadd.s32 %s123, 1
      %p127 = scmp.eq.s32.totalorder %s26, 1
      %p128 = scmp.ne.s32.totalorder %s123, %s125
      %p129 = scmp.eq.s32.totalorder %s26, 0
      %p130 = por %p128, %p129
      %p131 = scmp.ne.s32.totalorder %s123, %s125
      %p132 = scmp.eq.s32.totalorder %s31, 1
      %p133 = por %p131, %p132
      %p134 = scmp.ne.s32.totalorder %s125, %s126
      %p135 = scmp.eq.s32.totalorder %s31, 0
      %p136 = por %p134, %p135
      %p137 = scmp.ne.s32.totalorder %s125, %s126
      %p138 = scmp.eq.s32.totalorder %s32, 1
      %p139 = por %p137, %p138
      %p141 = scmp.ne.s32.totalorder %s126, %s140
      %p142 = scmp.eq.s32.totalorder %s32, 0
      %p143 = por %p141, %p142
      %s145 = sadd.s32 %s144, 1
      %p148 = scmp.eq.s32.totalorder %s26, 1
      %p149 = scmp.ne.s32.totalorder %s144, %s146
      %p150 = scmp.eq.s32.totalorder %s26, 0
      %p151 = por %p149, %p150
      %p152 = scmp.ne.s32.totalorder %s144, %s146
      %p153 = scmp.eq.s32.totalorder %s31, 1
      %p154 = por %p152, %p153
      %p155 = scmp.ne.s32.totalorder %s146, %s147
      %p156 = scmp.eq.s32.totalorder %s31, 0
      %p157 = por %p155, %p156
      %p158 = scmp.ne.s32.totalorder %s146, %s147
      %p159 = scmp.eq.s32.totalorder %s32, 1
      %p160 = por %p158, %p159
      %p162 = scmp.ne.s32.totalorder %s147, %s161
      %p163 = scmp.eq.s32.totalorder %s32, 0
      %p164 = por %p162, %p163
      %s166 = sadd.s32 %s165, 1
      %p169 = scmp.eq.s32.totalorder %s26, 1
      %p170 = scmp.ne.s32.totalorder %s165, %s167
      %p171 = scmp.eq.s32.totalorder %s26, 0
      %p172 = por %p170, %p171
      %p173 = scmp.ne.s32.totalorder %s165, %s167
      %p174 = scmp.eq.s32.totalorder %s31, 1
      %p175 = por %p173, %p174
      %p176 = scmp.ne.s32.totalorder %s167, %s168
      %p177 = scmp.eq.s32.totalorder %s31, 0
      %p178 = por %p176, %p177
      %p179 = scmp.ne.s32.totalorder %s167, %s168
      %p180 = scmp.eq.s32.totalorder %s32, 1
      %p181 = por %p179, %p180
      %p183 = scmp.ne.s32.totalorder %s168, %s182
      %p184 = scmp.eq.s32.totalorder %s32, 0
      %p185 = por %p183, %p184
      %s187 = sadd.s32 %s186, 1
      %p190 = scmp.eq.s32.totalorder %s26, 1
      %p191 = scmp.ne.s32.totalorder %s186, %s188
      %p192 = scmp.eq.s32.totalorder %s26, 0
      %p193 = por %p191, %p192
      %p194 = scmp.ne.s32.totalorder %s186, %s188
      %p195 = scmp.eq.s32.totalorder %s31, 1
      %p196 = por %p194, %p195
      %p197 = scmp.ne.s32.totalorder %s188, %s189
      %p198 = scmp.eq.s32.totalorder %s31, 0
      %p199 = por %p197, %p198
      %p200 = scmp.ne.s32.totalorder %s188, %s189
      %p201 = scmp.eq.s32.totalorder %s32, 1
      %p202 = por %p200, %p201
      %p204 = scmp.ne.s32.totalorder %s189, %s203
      %p205 = scmp.eq.s32.totalorder %s32, 0
      %p206 = por %p204, %p205
      %s208 = sadd.s32 %s207, 1
      %p211 = scmp.eq.s32.totalorder %s26, 1
      %p212 = scmp.ne.s32.totalorder %s207, %s209
      %p213 = scmp.eq.s32.totalorder %s26, 0
      %p214 = por %p212, %p213
      %p215 = scmp.ne.s32.totalorder %s207, %s209
      %p216 = scmp.eq.s32.totalorder %s31, 1
      %p217 = por %p215, %p216
      %p218 = scmp.ne.s32.totalorder %s209, %s210
      %p219 = scmp.eq.s32.totalorder %s31, 0
      %p220 = por %p218, %p219
      %p221 = scmp.ne.s32.totalorder %s209, %s210
      %p222 = scmp.eq.s32.totalorder %s32, 1
      %p223 = por %p221, %p222
      %p225 = scmp.ne.s32.totalorder %s210, %s224
      %p226 = scmp.eq.s32.totalorder %s32, 0
      %p227 = por %p225, %p226
      %s229 = sadd.s32 %s228, 1
      %p232 = scmp.eq.s32.totalorder %s26, 1
      %p233 = scmp.ne.s32.totalorder %s228, %s230
      %p234 = scmp.eq.s32.totalorder %s26, 0
      %p235 = por %p233, %p234
      %p236 = scmp.ne.s32.totalorder %s228, %s230
      %p237 = scmp.eq.s32.totalorder %s31, 1
      %p238 = por %p236, %p237
      %p239 = scmp.ne.s32.totalorder %s230, %s231
      %p240 = scmp.eq.s32.totalorder %s31, 0
      %p241 = por %p239, %p240
      %p242 = scmp.ne.s32.totalorder %s230, %s231
      %p243 = scmp.eq.s32.totalorder %s32, 1
      %p244 = por %p242, %p243
      %p246 = scmp.ne.s32.totalorder %s231, %s245
      %p247 = scmp.eq.s32.totalorder %s32, 0
      %p248 = por %p246, %p247
      %s250 = sadd.s32 %s249, 1
      %p253 = scmp.eq.s32.totalorder %s26, 1
      %p254 = scmp.ne.s32.totalorder %s249, %s251
      %p255 = scmp.eq.s32.totalorder %s26, 0
      %p256 = por %p254, %p255
      %p257 = scmp.ne.s32.totalorder %s249, %s251
      %p258 = scmp.eq.s32.totalorder %s31, 1
      %p259 = por %p257, %p258
      %p260 = scmp.ne.s32.totalorder %s251, %s252
      %p261 = scmp.eq.s32.totalorder %s31, 0
      %p262 = por %p260, %p261
      %p263 = scmp.ne.s32.totalorder %s251, %s252
      %p264 = scmp.eq.s32.totalorder %s32, 1
      %p265 = por %p263, %p264
      %p267 = scmp.ne.s32.totalorder %s252, %s266
      %p268 = scmp.eq.s32.totalorder %s32, 0
      %p269 = por %p267, %p268
      %s271 = sadd.s32 %s270, 1
      %p274 = scmp.eq.s32.totalorder %s26, 1
      %p275 = scmp.ne.s32.totalorder %s270, %s272
      %p276 = scmp.eq.s32.totalorder %s26, 0
      %p277 = por %p275, %p276
      %p278 = scmp.ne.s32.totalorder %s270, %s272
      %p279 = scmp.eq.s32.totalorder %s31, 1
      %p280 = por %p278, %p279
      %p281 = scmp.ne.s32.totalorder %s272, %s273
      %p282 = scmp.eq.s32.totalorder %s31, 0
      %p283 = por %p281, %p282
      %p284 = scmp.ne.s32.totalorder %s272, %s273
      %p285 = scmp.eq.s32.totalorder %s32, 1
      %p286 = por %p284, %p285
      %p288 = scmp.ne.s32.totalorder %s273, %s287
      %p289 = scmp.eq.s32.totalorder %s32, 0
      %p290 = por %p288, %p289
      %s292 = sadd.s32 %s291, 1
      %p295 = scmp.eq.s32.totalorder %s26, 1
      %p296 = scmp.ne.s32.totalorder %s291, %s293
      %p297 = scmp.eq.s32.totalorder %s26, 0
      %p298 = por %p296, %p297
      %p299 = scmp.ne.s32.totalorder %s291, %s293
      %p300 = scmp.eq.s32.totalorder %s31, 1
      %p301 = por %p299, %p300
      %p302 = scmp.ne.s32.totalorder %s293, %s294
      %p303 = scmp.eq.s32.totalorder %s31, 0
      %p304 = por %p302, %p303
      %p305 = scmp.ne.s32.totalorder %s293, %s294
      %p306 = scmp.eq.s32.totalorder %s32, 1
      %p307 = por %p305, %p306
      %p309 = scmp.ne.s32.totalorder %s294, %s308
      %p310 = scmp.eq.s32.totalorder %s32, 0
      %p311 = por %p309, %p310
      %s313 = sadd.s32 %s312, 1
      %p316 = scmp.eq.s32.totalorder %s26, 1
      %p317 = scmp.ne.s32.totalorder %s312, %s314
      %p318 = scmp.eq.s32.totalorder %s26, 0
      %p319 = por %p317, %p318
      %p320 = scmp.ne.s32.totalorder %s312, %s314
      %p321 = scmp.eq.s32.totalorder %s31, 1
      %p322 = por %p320, %p321
      %p323 = scmp.ne.s32.totalorder %s314, %s315
      %p324 = scmp.eq.s32.totalorder %s31, 0
      %p325 = por %p323, %p324
      %p326 = scmp.ne.s32.totalorder %s314, %s315
      %p327 = scmp.eq.s32.totalorder %s32, 1
      %p328 = por %p326, %p327
      %p330 = scmp.ne.s32.totalorder %s315, %s329
      %p331 = scmp.eq.s32.totalorder %s32, 0
      %p332 = por %p330, %p331
      %s334 = sadd.s32 %s333, 1
      %p337 = scmp.eq.s32.totalorder %s26, 1
      %p338 = scmp.ne.s32.totalorder %s333, %s335
      %p339 = scmp.eq.s32.totalorder %s26, 0
      %p340 = por %p338, %p339
      %p341 = scmp.ne.s32.totalorder %s333, %s335
      %p342 = scmp.eq.s32.totalorder %s31, 1
      %p343 = por %p341, %p342
      %p344 = scmp.ne.s32.totalorder %s335, %s336
      %p345 = scmp.eq.s32.totalorder %s31, 0
      %p346 = por %p344, %p345
      %p347 = scmp.ne.s32.totalorder %s335, %s336
      %p348 = scmp.eq.s32.totalorder %s32, 1
      %p349 = por %p347, %p348
      %p351 = scmp.ne.s32.totalorder %s336, %s350
      %p352 = scmp.eq.s32.totalorder %s32, 0
      %p353 = por %p351, %p352
      %s355 = sadd.s32 %s354, 1
      %p358 = scmp.eq.s32.totalorder %s26, 1
      %p359 = scmp.ne.s32.totalorder %s354, %s356
      %p360 = scmp.eq.s32.totalorder %s26, 0
      %p361 = por %p359, %p360
      %p362 = scmp.ne.s32.totalorder %s354, %s356
      %p363 = scmp.eq.s32.totalorder %s31, 1
      %p364 = por %p362, %p363
      %p365 = scmp.ne.s32.totalorder %s356, %s357
      %p366 = scmp.eq.s32.totalorder %s31, 0
      %p367 = por %p365, %p366
      %p368 = scmp.ne.s32.totalorder %s356, %s357
      %p369 = scmp.eq.s32.totalorder %s32, 1
      %p370 = por %p368, %p369
      %p372 = scmp.ne.s32.totalorder %s357, %s371
      %p373 = scmp.eq.s32.totalorder %s32, 0
      %p374 = por %p372, %p373
      %s375 = ssub.s32 %s26, %s33
      %p376 = scmp.eq.s32.totalorder %s375, 0
      %s378 = sadd.s32 %s377, 1
      %s379 = scalar_select %p376, %s377, %s378
      %p382 = pneg %p376
      %p383 = scmp.eq.s32.totalorder %s26, 1
      %p384 = por %p382, %p383
      %p385 = scmp.ne.s32.totalorder %s377, %s380
      %p386 = scmp.eq.s32.totalorder %s26, 0
      %p387 = por %p385, %p386
      %p388 = scmp.ne.s32.totalorder %s377, %s380
      %p389 = scmp.eq.s32.totalorder %s31, 1
      %p390 = por %p388, %p389
      %p391 = scmp.ne.s32.totalorder %s380, %s381
      %p392 = scmp.eq.s32.totalorder %s31, 0
      %p393 = por %p391, %p392
      %p394 = scmp.ne.s32.totalorder %s380, %s381
      %p395 = scmp.eq.s32.totalorder %s32, 1
      %p396 = por %p394, %p395
      %p398 = scmp.ne.s32.totalorder %s381, %s397
      %p399 = scmp.eq.s32.totalorder %s32, 0
      %p400 = por %p398, %p399
      %p401 = scmp.le.s32.totalorder 1, %s26
      %p402 = scmp.lt.s32.totalorder %s26, 3
      %p403 = pnand %p401, %p402
      %p404 = pneg %p403
      // Predicated region
      $region9: #{deeplabv3_forward_pallas.1} parent=5 // pred_check
        _
      $region10: #{deeplabv3_forward_pallas.1} parent=5 // pred_check_branch
        %406 = sbr.rel (%p403) target = $region12
      $region11: #{deeplabv3_forward_pallas.1} parent=5 // pred_region
        %s407 = ssub.s32 %s26, 1
        // Predicated region
        $region13: #{deeplabv3_forward_pallas.1} parent=11 // pred_check
          %p408 = pneg %p73
        $region14: #{deeplabv3_forward_pallas.1} parent=11 // pred_check_branch
          %410 = sbr.rel (%p408) target = $region16
        $region15: #{deeplabv3_forward_pallas.1} parent=11 // pred_region
          %s412 = ssub.s32 36864, 36864
          %413 = vsyncadd [#allocation3], %s412
          %s414 = sshll.u32 [#allocation2], 4
          %s415 = int_to_ptr.vmem [resolvable:$true] %s414
          %420 = dma.hbm_to_vmem [thread:$0]  %s1, 36864, %s415, [#allocation3], 128, 128, 8
        $region16: #{deeplabv3_forward_pallas.1} parent=11 // pred_fallthru
          _
        // Predicated region
        $region17: #{deeplabv3_forward_pallas.1} parent=11 // pred_check
          %p421 = pneg %p94
        $region18: #{deeplabv3_forward_pallas.1} parent=11 // pred_check_branch
          %423 = sbr.rel (%p421) target = $region20
        $region19: #{deeplabv3_forward_pallas.1} parent=11 // pred_region
          _
        $region20: #{deeplabv3_forward_pallas.1} parent=11 // pred_fallthru
          _
        // Predicated region
        $region21: #{deeplabv3_forward_pallas.1} parent=11 // pred_check
          %p424 = pneg %p115
        $region22: #{deeplabv3_forward_pallas.1} parent=11 // pred_check_branch
          %426 = sbr.rel (%p424) target = $region24
        $region23: #{deeplabv3_forward_pallas.1} parent=11 // pred_region
          _
        $region24: #{deeplabv3_forward_pallas.1} parent=11 // pred_fallthru
          _
        // Predicated region
        $region25: #{deeplabv3_forward_pallas.1} parent=11 // pred_check
          %p427 = pneg %p136
        $region26: #{deeplabv3_forward_pallas.1} parent=11 // pred_check_branch
          %429 = sbr.rel (%p427) target = $region28
        $region27: #{deeplabv3_forward_pallas.1} parent=11 // pred_region
          %s431 = ssub.s32 9216, 9216
          %432 = vsyncadd [#allocation5], %s431
          %s433 = sshll.u32 [#allocation4], 4
          %s434 = int_to_ptr.vmem [resolvable:$true] %s433
          %439 = dma.hbm_to_vmem [thread:$0]  %s4, 9216, %s434, [#allocation5], 128, 128, 8
        $region28: #{deeplabv3_forward_pallas.1} parent=11 // pred_fallthru
          _
        // Predicated region
        $region29: #{deeplabv3_forward_pallas.1} parent=11 // pred_check
          %p440 = pneg %p157
        $region30: #{deeplabv3_forward_pallas.1} parent=11 // pred_check_branch
          %442 = sbr.rel (%p440) target = $region32
        $region31: #{deeplabv3_forward_pallas.1} parent=11 // pred_region
          _
        $region32: #{deeplabv3_forward_pallas.1} parent=11 // pred_fallthru
          _
        // Predicated region
        $region33: #{deeplabv3_forward_pallas.1} parent=11 // pred_check
          %p443 = pneg %p178
        $region34: #{deeplabv3_forward_pallas.1} parent=11 // pred_check_branch
          %445 = sbr.rel (%p443) target = $region36
        $region35: #{deeplabv3_forward_pallas.1} parent=11 // pred_region
          _
        $region36: #{deeplabv3_forward_pallas.1} parent=11 // pred_fallthru
          _
        // Predicated region
        $region37: #{deeplabv3_forward_pallas.1} parent=11 // pred_check
          %p446 = pneg %p199
        $region38: #{deeplabv3_forward_pallas.1} parent=11 // pred_check_branch
          %448 = sbr.rel (%p446) target = $region40
        $region39: #{deeplabv3_forward_pallas.1} parent=11 // pred_region
          %s450 = ssub.s32 2304, 2304
          %451 = vsyncadd [#allocation5], %s450
          %s452 = sshll.u32 [#allocation6], 4
          %s453 = int_to_ptr.vmem [resolvable:$true] %s452
          %458 = dma.hbm_to_vmem [thread:$0]  %s7, 2304, %s453, [#allocation5], 128, 128, 8
        $region40: #{deeplabv3_forward_pallas.1} parent=11 // pred_fallthru
          _
        // Predicated region
        $region41: #{deeplabv3_forward_pallas.1} parent=11 // pred_check
          %p459 = pneg %p220
        $region42: #{deeplabv3_forward_pallas.1} parent=11 // pred_check_branch
          %461 = sbr.rel (%p459) target = $region44
        $region43: #{deeplabv3_forward_pallas.1} parent=11 // pred_region
          _
        $region44: #{deeplabv3_forward_pallas.1} parent=11 // pred_fallthru
          _
        // Predicated region
        $region45: #{deeplabv3_forward_pallas.1} parent=11 // pred_check
          %p462 = pneg %p241
        $region46: #{deeplabv3_forward_pallas.1} parent=11 // pred_check_branch
          %464 = sbr.rel (%p462) target = $region48
        $region47: #{deeplabv3_forward_pallas.1} parent=11 // pred_region
          _
        $region48: #{deeplabv3_forward_pallas.1} parent=11 // pred_fallthru
          _
        // Predicated region
        $region49: #{deeplabv3_forward_pallas.1} parent=11 // pred_check
          %p465 = pneg %p262
        $region50: #{deeplabv3_forward_pallas.1} parent=11 // pred_check_branch
          %467 = sbr.rel (%p465) target = $region52
        $region51: #{deeplabv3_forward_pallas.1} parent=11 // pred_region
          %s469 = ssub.s32 2304, 2304
          %470 = vsyncadd [#allocation8], %s469
          %s471 = sshll.u32 [#allocation7], 4
          %s472 = int_to_ptr.vmem [resolvable:$true] %s471
          %477 = dma.hbm_to_vmem [thread:$0]  %s10, 2304, %s472, [#allocation8], 128, 128, 8
        $region52: #{deeplabv3_forward_pallas.1} parent=11 // pred_fallthru
          _
        // Predicated region
        $region53: #{deeplabv3_forward_pallas.1} parent=11 // pred_check
          %p478 = pneg %p283
        $region54: #{deeplabv3_forward_pallas.1} parent=11 // pred_check_branch
          %480 = sbr.rel (%p478) target = $region56
        $region55: #{deeplabv3_forward_pallas.1} parent=11 // pred_region
          %s482 = ssub.s32 4608, 4608
          %483 = vsyncadd [#allocation8], %s482
          %s484 = sshll.u32 [#allocation9], 4
          %s485 = int_to_ptr.vmem [resolvable:$true] %s484
          %490 = dma.hbm_to_vmem [thread:$0]  %s11, 4608, %s485, [#allocation8], 128, 128, 8
        $region56: #{deeplabv3_forward_pallas.1} parent=11 // pred_fallthru
          _
        // Predicated region
        $region57: #{deeplabv3_forward_pallas.1} parent=11 // pred_check
          %p491 = pneg %p304
        $region58: #{deeplabv3_forward_pallas.1} parent=11 // pred_check_branch
          %493 = sbr.rel (%p491) target = $region60
        $region59: #{deeplabv3_forward_pallas.1} parent=11 // pred_region
          _
        $region60: #{deeplabv3_forward_pallas.1} parent=11 // pred_fallthru
          _
        // Predicated region
        $region61: #{deeplabv3_forward_pallas.1} parent=11 // pred_check
          %p494 = pneg %p325
        $region62: #{deeplabv3_forward_pallas.1} parent=11 // pred_check_branch
          %496 = sbr.rel (%p494) target = $region64
        $region63: #{deeplabv3_forward_pallas.1} parent=11 // pred_region
          %s498 = ssub.s32 128, 128
          %499 = vsyncadd [#allocation11], %s498
          %s501 = sshll.u32 [#allocation10], 4
          %s502 = int_to_ptr.vmem [resolvable:$true] %s501
          %504 = dma.hbm_to_vmem [thread:$0]  %s13, 128, %s502, [#allocation11]
        $region64: #{deeplabv3_forward_pallas.1} parent=11 // pred_fallthru
          _
        // Predicated region
        $region65: #{deeplabv3_forward_pallas.1} parent=11 // pred_check
          %p505 = pneg %p346
        $region66: #{deeplabv3_forward_pallas.1} parent=11 // pred_check_branch
          %507 = sbr.rel (%p505) target = $region68
        $region67: #{deeplabv3_forward_pallas.1} parent=11 // pred_region
          _
        $region68: #{deeplabv3_forward_pallas.1} parent=11 // pred_fallthru
          _
        // Predicated region
        $region69: #{deeplabv3_forward_pallas.1} parent=11 // pred_check
          %p508 = pneg %p367
        $region70: #{deeplabv3_forward_pallas.1} parent=11 // pred_check_branch
          %510 = sbr.rel (%p508) target = $region72
        $region71: #{deeplabv3_forward_pallas.1} parent=11 // pred_region
          %s512 = ssub.s32 512, 512
          %513 = vsyncadd [#allocation11], %s512
          %s514 = sshll.u32 [#allocation12], 4
          %s515 = int_to_ptr.vmem [resolvable:$true] %s514
          %520 = dma.hbm_to_vmem [thread:$0]  %s15, 512, %s515, [#allocation11], 256, 256, 16
        $region72: #{deeplabv3_forward_pallas.1} parent=11 // pred_fallthru
          _
      $region12: #{deeplabv3_forward_pallas.1} parent=5 // pred_fallthru
        _
      %p521 = scmp.lt.s32.totalorder %s26, 2
      // Predicated region
      $region73: #{deeplabv3_forward_pallas.1} parent=5 // pred_check
        %p522 = pneg %p521
      $region74: #{deeplabv3_forward_pallas.1} parent=5 // pred_check_branch
        %524 = sbr.rel (%p522) target = $region76
      $region75: #{deeplabv3_forward_pallas.1} parent=5 // pred_region
        // Predicated region
        $region77: #{deeplabv3_forward_pallas.1} parent=75 // pred_check
          %p525 = pneg %p46
        $region78: #{deeplabv3_forward_pallas.1} parent=75 // pred_check_branch
          %527 = sbr.rel (%p525) target = $region80
        $region79: #{deeplabv3_forward_pallas.1} parent=75 // pred_region
          %p528 = scmp.lt.s32.totalorder %s26, 1
          %s529 = scalar_select %p528, %s26, 1
          %s530 = smul.addr %s529, 2
          %s531 = smul.addr %s530, 4
          %s532 = scalar_lea.vmem %s0, %s531
        $region80: #{deeplabv3_forward_pallas.1} parent=75 // pred_fallthru
          _
      $region76: #{deeplabv3_forward_pallas.1} parent=5 // pred_fallthru
        _
      %p533 = scmp.le.s32.totalorder 1, %s26
      %p534 = scmp.lt.s32.totalorder %s26, 3
      %p535 = pnand %p533, %p534
      %p536 = pneg %p535
      // Predicated region
      $region81: #{deeplabv3_forward_pallas.1} parent=5 // pred_check
        _
      $region82: #{deeplabv3_forward_pallas.1} parent=5 // pred_check_branch
        %538 = sbr.rel (%p535) target = $region84
      $region83: #{deeplabv3_forward_pallas.1} parent=5 // pred_region
        %s539 = ssub.s32 %s26, 1
        // Predicated region
        $region85: #{deeplabv3_forward_pallas.1} parent=83 // pred_check
          %p540 = pneg %p73
        $region86: #{deeplabv3_forward_pallas.1} parent=83 // pred_check_branch
          %542 = sbr.rel (%p540) target = $region88
        $region87: #{deeplabv3_forward_pallas.1} parent=83 // pred_region
          %543 = dma.done [#allocation3], 36864
        $region88: #{deeplabv3_forward_pallas.1} parent=83 // pred_fallthru
          _
        // Predicated region
        $region89: #{deeplabv3_forward_pallas.1} parent=83 // pred_check
          %p544 = pneg %p136
        $region90: #{deeplabv3_forward_pallas.1} parent=83 // pred_check_branch
          %546 = sbr.rel (%p544) target = $region92
        $region91: #{deeplabv3_forward_pallas.1} parent=83 // pred_region
          %547 = dma.done [#allocation5], 9216
        $region92: #{deeplabv3_forward_pallas.1} parent=83 // pred_fallthru
          _
        // Predicated region
        $region93: #{deeplabv3_forward_pallas.1} parent=83 // pred_check
          %p548 = pneg %p199
        $region94: #{deeplabv3_forward_pallas.1} parent=83 // pred_check_branch
          %550 = sbr.rel (%p548) target = $region96
        $region95: #{deeplabv3_forward_pallas.1} parent=83 // pred_region
          %551 = dma.done [#allocation5], 2304
        $region96: #{deeplabv3_forward_pallas.1} parent=83 // pred_fallthru
          _
        // Predicated region
        $region97: #{deeplabv3_forward_pallas.1} parent=83 // pred_check
          %p552 = pneg %p262
        $region98: #{deeplabv3_forward_pallas.1} parent=83 // pred_check_branch
          %554 = sbr.rel (%p552) target = $region100
        $region99: #{deeplabv3_forward_pallas.1} parent=83 // pred_region
          %555 = dma.done [#allocation8], 2304
        $region100: #{deeplabv3_forward_pallas.1} parent=83 // pred_fallthru
          _
        // Predicated region
        $region101: #{deeplabv3_forward_pallas.1} parent=83 // pred_check
          %p556 = pneg %p283
        $region102: #{deeplabv3_forward_pallas.1} parent=83 // pred_check_branch
          %558 = sbr.rel (%p556) target = $region104
        $region103: #{deeplabv3_forward_pallas.1} parent=83 // pred_region
          %559 = dma.done [#allocation8], 4608
        $region104: #{deeplabv3_forward_pallas.1} parent=83 // pred_fallthru
          _
        // Predicated region
        $region105: #{deeplabv3_forward_pallas.1} parent=83 // pred_check
          %p560 = pneg %p325
        $region106: #{deeplabv3_forward_pallas.1} parent=83 // pred_check_branch
          %562 = sbr.rel (%p560) target = $region108
        $region107: #{deeplabv3_forward_pallas.1} parent=83 // pred_region
          %563 = dma.done [#allocation11], 128
        $region108: #{deeplabv3_forward_pallas.1} parent=83 // pred_fallthru
          _
        // Predicated region
        $region109: #{deeplabv3_forward_pallas.1} parent=83 // pred_check
          %p564 = pneg %p367
        $region110: #{deeplabv3_forward_pallas.1} parent=83 // pred_check_branch
          %566 = sbr.rel (%p564) target = $region112
        $region111: #{deeplabv3_forward_pallas.1} parent=83 // pred_region
          %567 = dma.done [#allocation11], 512
        $region112: #{deeplabv3_forward_pallas.1} parent=83 // pred_fallthru
          _
        %p568 = scmp.lt.s32.totalorder %s31, 1
        %s569 = scalar_select %p568, %s31, 1
        %s570 = smul.addr %s569, 2
        %s571 = smul.addr %s570, 4
        %s572 = scalar_lea.vmem %s0, %s571
        %p573 = pneg %p52
        %p574 = pneg %p49
        %p575 = pneg %p73
        %p576 = pneg %p70
        %p577 = pneg %p94
        %p578 = pneg %p91
        %p579 = pneg %p115
        %p580 = pneg %p112
        %p581 = pneg %p136
        %p582 = pneg %p133
        %p583 = pneg %p157
        %p584 = pneg %p154
        %p585 = pneg %p178
        %p586 = pneg %p175
        %p587 = pneg %p199
        %p588 = pneg %p196
        %p589 = pneg %p220
        %p590 = pneg %p217
        %p591 = pneg %p241
        %p592 = pneg %p238
        %p593 = pneg %p262
        %p594 = pneg %p259
        %p595 = pneg %p283
        %p596 = pneg %p280
        %p597 = pneg %p304
        %p598 = pneg %p301
        %p599 = pneg %p325
        %p600 = pneg %p322
        %p601 = pneg %p346
        %p602 = pneg %p343
        %p603 = pneg %p367
        %p604 = pneg %p364
        %p605 = pneg %p393
        %p606 = pneg %p390
        %p607 = scmp.lt.s32.totalorder %s31, 1
        %s608 = scalar_select %p607, %s31, 1
        %s609 = smul.addr %s608, 2
        %s610 = smul.addr %s609, 8
        %s611 = scalar_lea.vmem %s16, %s610
        %p612 = scmp.lt.s32.totalorder %s31, 1
        %s613 = scalar_select %p612, %s31, 1
        %s614 = smul.addr %s613, 2
        %s615 = smul.addr %s614, 4
        %s616 = scalar_lea.vmem %s0, %s615
        %p617 = scmp.lt.s32.totalorder %s31, 1
        %s618 = scalar_select %p617, %s31, 1
        %s619 = smul.addr %s618, 2
        %s620 = smul.addr %s619, 8
        %s621 = scalar_lea.vmem %s16, %s620
        %v622 = vld [vmem:[%s616] sm:$0xff]
        %v623 = vld [vmem:[#allocation2] sm:$0xff]
        %v624 = vld [vmem:[#allocation2 + $0x8] sm:$0xff]
        %v625 = vld [vmem:[#allocation2 + $0x10] sm:$0xff]
        %v626 = vld [vmem:[#allocation2 + $0x18] sm:$0xff]
        %v627 = vld [vmem:[#allocation2 + $0x20] sm:$0xff]
        %v628 = vld [vmem:[#allocation2 + $0x28] sm:$0xff]
        %v629 = vld [vmem:[#allocation2 + $0x30] sm:$0xff]
        %v630 = vld [vmem:[#allocation2 + $0x38] sm:$0xff]
        %v631 = vld [vmem:[#allocation2 + $0x40] sm:$0xff]
        %v632 = vld [vmem:[#allocation2 + $0x48] sm:$0xff]
        %v633 = vld [vmem:[#allocation2 + $0x50] sm:$0xff]
        %v634 = vld [vmem:[#allocation2 + $0x58] sm:$0xff]
        %v635 = vld [vmem:[#allocation2 + $0x60] sm:$0xff]
        %v636 = vld [vmem:[#allocation2 + $0x68] sm:$0xff]
        %v637 = vld [vmem:[#allocation2 + $0x70] sm:$0xff]
        %v638 = vld [vmem:[#allocation2 + $0x78] sm:$0xff]
        %v639 = vld [vmem:[#allocation2 + $0x80] sm:$0xff]
        %v640 = vld [vmem:[#allocation2 + $0x88] sm:$0xff]
        %v641 = vld [vmem:[#allocation2 + $0x90] sm:$0xff]
        %v642 = vld [vmem:[#allocation2 + $0x98] sm:$0xff]
        %v643 = vld [vmem:[#allocation2 + $0xa0] sm:$0xff]
        %v644 = vld [vmem:[#allocation2 + $0xa8] sm:$0xff]
        %v645 = vld [vmem:[#allocation2 + $0xb0] sm:$0xff]
        %v646 = vld [vmem:[#allocation2 + $0xb8] sm:$0xff]
        %v647 = vld [vmem:[#allocation2 + $0xc0] sm:$0xff]
        %v648 = vld [vmem:[#allocation2 + $0xc8] sm:$0xff]
        %v649 = vld [vmem:[#allocation2 + $0xd0] sm:$0xff]
        %v650 = vld [vmem:[#allocation2 + $0xd8] sm:$0xff]
        %v651 = vld [vmem:[#allocation2 + $0xe0] sm:$0xff]
        %v652 = vld [vmem:[#allocation2 + $0xe8] sm:$0xff]
        %v653 = vld [vmem:[#allocation2 + $0xf0] sm:$0xff]
        %v654 = vld [vmem:[#allocation2 + $0xf8] sm:$0xff]
        %v656 = vcombine.high %v622, %v622
        %658 = vmatprep.subr.mxu0 0.0
        %659 = vmatpush1.msra.mxu0 %v623
        %660 = vmatprep.subr.mxu0 0.0
        %661 = vmatpush1.msra.mxu0 %v624
        %662 = vmatprep.subr.mxu0 0.0
        %663 = vmatpush1.msra.mxu0 %v625
        %664 = vmatprep.subr.mxu0 0.0
        %665 = vmatpush1.msra.mxu0 %v626
        %666 = vmatprep.subr.mxu0 0.0
        %667 = vmatpush1.msra.mxu0 %v627
        %668 = vmatprep.subr.mxu0 0.0
        %669 = vmatpush1.msra.mxu0 %v628
        %670 = vmatprep.subr.mxu0 0.0
        %671 = vmatpush1.msra.mxu0 %v629
        %672 = vmatprep.subr.mxu0 0.0
        %673 = vmatpush1.msra.mxu0 %v630
        %674 = vmatprep.subr.mxu0 0.0
        %675 = vmatpush1.msra.mxu0 %v631
        %676 = vmatprep.subr.mxu0 0.0
        %677 = vmatpush1.msra.mxu0 %v632
        %678 = vmatprep.subr.mxu0 0.0
        %679 = vmatpush1.msra.mxu0 %v633
        %680 = vmatprep.subr.mxu0 0.0
        %681 = vmatpush1.msra.mxu0 %v634
        %682 = vmatprep.subr.mxu0 0.0
        %683 = vmatpush1.msra.mxu0 %v635
        %684 = vmatprep.subr.mxu0 0.0
        %685 = vmatpush1.msra.mxu0 %v636
        %686 = vmatprep.subr.mxu0 0.0
        %687 = vmatpush1.msra.mxu0 %v637
        %688 = vmatprep.subr.mxu0 0.0
        %689 = vmatpush1.msra.mxu0 %v638
        %690 = vmatprep.subr.mxu0 0.0
        %691 = vmatpush1.msra.mxu0 %v639
        %692 = vmatprep.subr.mxu0 0.0
        %693 = vmatpush1.msra.mxu0 %v640
        %694 = vmatprep.subr.mxu0 0.0
        %695 = vmatpush1.msra.mxu0 %v641
        %696 = vmatprep.subr.mxu0 0.0
        %697 = vmatpush1.msra.mxu0 %v642
        %698 = vmatprep.subr.mxu0 0.0
        %699 = vmatpush1.msra.mxu0 %v643
        %700 = vmatprep.subr.mxu0 0.0
        %701 = vmatpush1.msra.mxu0 %v644
        %702 = vmatprep.subr.mxu0 0.0
        %703 = vmatpush1.msra.mxu0 %v645
        %704 = vmatprep.subr.mxu0 0.0
        %705 = vmatpush1.msra.mxu0 %v646
        %706 = vmatprep.subr.mxu0 0.0
        %707 = vmatpush1.msra.mxu0 %v647
        %708 = vmatprep.subr.mxu0 0.0
        %709 = vmatpush1.msra.mxu0 %v648
        %710 = vmatprep.subr.mxu0 0.0
        %711 = vmatpush1.msra.mxu0 %v649
        %712 = vmatprep.subr.mxu0 0.0
        %713 = vmatpush1.msra.mxu0 %v650
        %714 = vmatprep.subr.mxu0 0.0
        %715 = vmatpush1.msra.mxu0 %v651
        %716 = vmatprep.subr.mxu0 0.0
        %717 = vmatpush1.msra.mxu0 %v652
        %718 = vmatprep.subr.mxu0 0.0
        %719 = vmatpush1.msra.mxu0 %v653
        %720 = vmatprep.subr.mxu0 0.0
        %721 = vmatpush1.msra.mxu0 %v654
        %722 = vmatprep.mubr.f32.mxu0 %v656
        %723 = vmatmul.mubr.f32.gmra.mrb[0].mxu0 %v622
        %v724 = vpop.f32.mrb[0].mxu0
        %v725 = vadd.f32 0.0, %v724
        %v726 = vpop.f32.mrb[0].mxu0
        %727 = vdwg.mxu0
        %v728 = vld [vmem:[%s2] sm:$0xff]
        %s729 = scalar_lea.vmem [#allocation2], 256
        %v730 = vld [vmem:[%s729] sm:$0xff]
        %v731 = vld [vmem:[%s729 + $0x8] sm:$0xff]
        %v732 = vld [vmem:[%s729 + $0x10] sm:$0xff]
        %v733 = vld [vmem:[%s729 + $0x18] sm:$0xff]
        %v734 = vld [vmem:[%s729 + $0x20] sm:$0xff]
        %v735 = vld [vmem:[%s729 + $0x28] sm:$0xff]
        %v736 = vld [vmem:[%s729 + $0x30] sm:$0xff]
        %v737 = vld [vmem:[%s729 + $0x38] sm:$0xff]
        %v738 = vld [vmem:[%s729 + $0x40] sm:$0xff]
        %v739 = vld [vmem:[%s729 + $0x48] sm:$0xff]
        %v740 = vld [vmem:[%s729 + $0x50] sm:$0xff]
        %v741 = vld [vmem:[%s729 + $0x58] sm:$0xff]
        %v742 = vld [vmem:[%s729 + $0x60] sm:$0xff]
        %v743 = vld [vmem:[%s729 + $0x68] sm:$0xff]
        %v744 = vld [vmem:[%s729 + $0x70] sm:$0xff]
        %v745 = vld [vmem:[%s729 + $0x78] sm:$0xff]
        %v746 = vld [vmem:[%s729 + $0x80] sm:$0xff]
        %v747 = vld [vmem:[%s729 + $0x88] sm:$0xff]
        %v748 = vld [vmem:[%s729 + $0x90] sm:$0xff]
        %v749 = vld [vmem:[%s729 + $0x98] sm:$0xff]
        %v750 = vld [vmem:[%s729 + $0xa0] sm:$0xff]
        %v751 = vld [vmem:[%s729 + $0xa8] sm:$0xff]
        %v752 = vld [vmem:[%s729 + $0xb0] sm:$0xff]
        %v753 = vld [vmem:[%s729 + $0xb8] sm:$0xff]
        %v754 = vld [vmem:[%s729 + $0xc0] sm:$0xff]
        %v755 = vld [vmem:[%s729 + $0xc8] sm:$0xff]
        %v756 = vld [vmem:[%s729 + $0xd0] sm:$0xff]
        %v757 = vld [vmem:[%s729 + $0xd8] sm:$0xff]
        %v758 = vld [vmem:[%s729 + $0xe0] sm:$0xff]
        %v759 = vld [vmem:[%s729 + $0xe8] sm:$0xff]
        %v760 = vld [vmem:[%s729 + $0xf0] sm:$0xff]
        %v761 = vld [vmem:[%s729 + $0xf8] sm:$0xff]
        %762 = vmatprep.subr.mxu0 0.0
        %763 = vmatpush1.msra.mxu0 %v730
        %764 = vmatprep.subr.mxu0 0.0
        %765 = vmatpush1.msra.mxu0 %v731
        %766 = vmatprep.subr.mxu0 0.0
        %767 = vmatpush1.msra.mxu0 %v732
        %768 = vmatprep.subr.mxu0 0.0
        %769 = vmatpush1.msra.mxu0 %v733
        %770 = vmatprep.subr.mxu0 0.0
        %771 = vmatpush1.msra.mxu0 %v734
        %772 = vmatprep.subr.mxu0 0.0
        %773 = vmatpush1.msra.mxu0 %v735
        %774 = vmatprep.subr.mxu0 0.0
        %775 = vmatpush1.msra.mxu0 %v736
        %776 = vmatprep.subr.mxu0 0.0
        %777 = vmatpush1.msra.mxu0 %v737
        %778 = vmatprep.subr.mxu0 0.0
        %779 = vmatpush1.msra.mxu0 %v738
        %780 = vmatprep.subr.mxu0 0.0
        %781 = vmatpush1.msra.mxu0 %v739
        %782 = vmatprep.subr.mxu0 0.0
        %783 = vmatpush1.msra.mxu0 %v740
        %784 = vmatprep.subr.mxu0 0.0
        %785 = vmatpush1.msra.mxu0 %v741
        %786 = vmatprep.subr.mxu0 0.0
        %787 = vmatpush1.msra.mxu0 %v742
        %788 = vmatprep.subr.mxu0 0.0
        %789 = vmatpush1.msra.mxu0 %v743
        %790 = vmatprep.subr.mxu0 0.0
        %791 = vmatpush1.msra.mxu0 %v744
        %792 = vmatprep.subr.mxu0 0.0
        %793 = vmatpush1.msra.mxu0 %v745
        %794 = vmatprep.subr.mxu0 0.0
        %795 = vmatpush1.msra.mxu0 %v746
        %796 = vmatprep.subr.mxu0 0.0
        %797 = vmatpush1.msra.mxu0 %v747
        %798 = vmatprep.subr.mxu0 0.0
        %799 = vmatpush1.msra.mxu0 %v748
        %800 = vmatprep.subr.mxu0 0.0
        %801 = vmatpush1.msra.mxu0 %v749
        %802 = vmatprep.subr.mxu0 0.0
        %803 = vmatpush1.msra.mxu0 %v750
        %804 = vmatprep.subr.mxu0 0.0
        %805 = vmatpush1.msra.mxu0 %v751
        %806 = vmatprep.subr.mxu0 0.0
        %807 = vmatpush1.msra.mxu0 %v752
        %808 = vmatprep.subr.mxu0 0.0
        %809 = vmatpush1.msra.mxu0 %v753
        %810 = vmatprep.subr.mxu0 0.0
        %811 = vmatpush1.msra.mxu0 %v754
        %812 = vmatprep.subr.mxu0 0.0
        %813 = vmatpush1.msra.mxu0 %v755
        %814 = vmatprep.subr.mxu0 0.0
        %815 = vmatpush1.msra.mxu0 %v756
        %816 = vmatprep.subr.mxu0 0.0
        %817 = vmatpush1.msra.mxu0 %v757
        %818 = vmatprep.subr.mxu0 0.0
        %819 = vmatpush1.msra.mxu0 %v758
        %820 = vmatprep.subr.mxu0 0.0
        %821 = vmatpush1.msra.mxu0 %v759
        %822 = vmatprep.subr.mxu0 0.0
        %823 = vmatpush1.msra.mxu0 %v760
        %824 = vmatprep.subr.mxu0 0.0
        %825 = vmatpush1.msra.mxu0 %v761
        %826 = vmatprep.mubr.f32.mxu0 %v656
        %827 = vmatmul.mubr.f32.gmra.mrb[0].mxu0 %v622
        %v828 = vpop.f32.mrb[0].mxu0
        %v829 = vadd.f32 0.0, %v828
        %v830 = vpop.f32.mrb[0].mxu0
        %831 = vdwg.mxu0
        %s832 = scalar_lea.vmem %s2, 8
        %v833 = vld [vmem:[%s832] sm:$0xff]
        %vm834 = vcmask 31744
        %v836 = vsel %vm834, %v833, 0
        %vm838 = vcmask 1043456
        %v840 = vsel %vm838, %v829, 0
        %842 = vmatprep.subr.mxu0 0.0
        %843 = vmatpush1.msra.mxu0 %v840
        %844 = vmatprep.subr.mxu0 0.0
        %845 = vmatpush1.msra.mxu0 0.0
        %846 = vmatprep.subr.mxu0 0.0
        %847 = vmatpush1.msra.mxu0 0.0
        %848 = vmatprep.subr.mxu0 0.0
        %849 = vmatpush1.msra.mxu0 0.0
        %850 = vmatprep.subr.mxu0 0.0
        %851 = vmatpush1.msra.mxu0 0.0
        %852 = vmatprep.subr.mxu0 0.0
        %853 = vmatpush1.msra.mxu0 0.0
        %854 = vmatprep.subr.mxu0 0.0
        %855 = vmatpush1.msra.mxu0 0.0
        %856 = vmatprep.subr.mxu0 0.0
        %857 = vmatpush1.msra.mxu0 0.0
        %858 = vmatprep.subr.mxu0 0.0
        %859 = vmatpush1.msra.mxu0 0.0
        %860 = vmatprep.subr.mxu0 0.0
        %861 = vmatpush1.msra.mxu0 0.0
        %862 = vmatprep.subr.mxu0 0.0
        %863 = vmatpush1.msra.mxu0 0.0
        %864 = vmatprep.subr.mxu0 0.0
        %865 = vmatpush1.msra.mxu0 0.0
        %866 = vmatprep.subr.mxu0 0.0
        %867 = vmatpush1.msra.mxu0 0.0
        %868 = vmatprep.subr.mxu0 0.0
        %869 = vmatpush1.msra.mxu0 0.0
        %870 = vmatprep.subr.mxu0 0.0
        %871 = vmatpush1.msra.mxu0 0.0
        %872 = vmatprep.subr.mxu0 0.0
        %873 = vmatpush1.msra.mxu0 0.0
        %874 = vmatprep.subr.mxu0 0.0
        %875 = vmatpush1.msra.mxu0 0.0
        %876 = vmatprep.subr.mxu0 0.0
        %877 = vmatpush1.msra.mxu0 0.0
        %878 = vmatprep.subr.mxu0 0.0
        %879 = vmatpush1.msra.mxu0 0.0
        %880 = vmatprep.subr.mxu0 0.0
        %881 = vmatpush1.msra.mxu0 0.0
        %882 = vmatprep.subr.mxu0 0.0
        %883 = vmatpush1.msra.mxu0 0.0
        %884 = vmatprep.subr.mxu0 0.0
        %885 = vmatpush1.msra.mxu0 0.0
        %886 = vmatprep.subr.mxu0 0.0
        %887 = vmatpush1.msra.mxu0 0.0
        %888 = vmatprep.subr.mxu0 0.0
        %889 = vmatpush1.msra.mxu0 0.0
        %890 = vmatprep.subr.mxu0 0.0
        %891 = vmatpush1.msra.mxu0 0.0
        %892 = vmatprep.subr.mxu0 0.0
        %893 = vmatpush1.msra.mxu0 0.0
        %894 = vmatprep.subr.mxu0 0.0
        %895 = vmatpush1.msra.mxu0 0.0
        %896 = vmatprep.subr.mxu0 0.0
        %897 = vmatpush1.msra.mxu0 0.0
        %898 = vmatprep.subr.mxu0 0.0
        %899 = vmatpush1.msra.mxu0 0.0
        %900 = vmatprep.subr.mxu0 0.0
        %901 = vmatpush1.msra.mxu0 0.0
        %902 = vmatprep.subr.mxu0 0.0
        %903 = vmatpush1.msra.mxu0 0.0
        %904 = vmatprep.subr.mxu0 0.0
        %905 = vmatpush1.msra.mxu0 0.0
        %906 = vmatprep.mubr.f32.mxu0 0.0
        %907 = vmatmul.mubr.f32.gmra.mrb[0].mxu0 %v836
        %v908 = vpop.f32.mrb[0].mxu0
        %v909 = vadd.f32 0.0, %v908
        %v910 = vpop.f32.mrb[0].mxu0
        %911 = vdwg.mxu0
        %v913 = vsel %vm834, %v728, 0
        %v916 = vsel %vm838, %v725, 0
        %918 = vmatprep.subr.mxu0 0.0
        %919 = vmatpush1.msra.mxu0 %v916
        %920 = vmatprep.subr.mxu0 0.0
        %921 = vmatpush1.msra.mxu0 0.0
        %922 = vmatprep.subr.mxu0 0.0
        %923 = vmatpush1.msra.mxu0 0.0
        %924 = vmatprep.subr.mxu0 0.0
        %925 = vmatpush1.msra.mxu0 0.0
        %926 = vmatprep.subr.mxu0 0.0
        %927 = vmatpush1.msra.mxu0 0.0
        %928 = vmatprep.subr.mxu0 0.0
        %929 = vmatpush1.msra.mxu0 0.0
        %930 = vmatprep.subr.mxu0 0.0
        %931 = vmatpush1.msra.mxu0 0.0
        %932 = vmatprep.subr.mxu0 0.0
        %933 = vmatpush1.msra.mxu0 0.0
        %934 = vmatprep.subr.mxu0 0.0
        %935 = vmatpush1.msra.mxu0 0.0
        %936 = vmatprep.subr.mxu0 0.0
        %937 = vmatpush1.msra.mxu0 0.0
        %938 = vmatprep.subr.mxu0 0.0
        %939 = vmatpush1.msra.mxu0 0.0
        %940 = vmatprep.subr.mxu0 0.0
        %941 = vmatpush1.msra.mxu0 0.0
        %942 = vmatprep.subr.mxu0 0.0
        %943 = vmatpush1.msra.mxu0 0.0
        %944 = vmatprep.subr.mxu0 0.0
        %945 = vmatpush1.msra.mxu0 0.0
        %946 = vmatprep.subr.mxu0 0.0
        %947 = vmatpush1.msra.mxu0 0.0
        %948 = vmatprep.subr.mxu0 0.0
        %949 = vmatpush1.msra.mxu0 0.0
        %950 = vmatprep.subr.mxu0 0.0
        %951 = vmatpush1.msra.mxu0 0.0
        %952 = vmatprep.subr.mxu0 0.0
        %953 = vmatpush1.msra.mxu0 0.0
        %954 = vmatprep.subr.mxu0 0.0
        %955 = vmatpush1.msra.mxu0 0.0
        %956 = vmatprep.subr.mxu0 0.0
        %957 = vmatpush1.msra.mxu0 0.0
        %958 = vmatprep.subr.mxu0 0.0
        %959 = vmatpush1.msra.mxu0 0.0
        %960 = vmatprep.subr.mxu0 0.0
        %961 = vmatpush1.msra.mxu0 0.0
        %962 = vmatprep.subr.mxu0 0.0
        %963 = vmatpush1.msra.mxu0 0.0
        %964 = vmatprep.subr.mxu0 0.0
        %965 = vmatpush1.msra.mxu0 0.0
        %966 = vmatprep.subr.mxu0 0.0
        %967 = vmatpush1.msra.mxu0 0.0
        %968 = vmatprep.subr.mxu0 0.0
        %969 = vmatpush1.msra.mxu0 0.0
        %970 = vmatprep.subr.mxu0 0.0
        %971 = vmatpush1.msra.mxu0 0.0
        %972 = vmatprep.subr.mxu0 0.0
        %973 = vmatpush1.msra.mxu0 0.0
        %974 = vmatprep.subr.mxu0 0.0
        %975 = vmatpush1.msra.mxu0 0.0
        %976 = vmatprep.subr.mxu0 0.0
        %977 = vmatpush1.msra.mxu0 0.0
        %978 = vmatprep.subr.mxu0 0.0
        %979 = vmatpush1.msra.mxu0 0.0
        %980 = vmatprep.subr.mxu0 0.0
        %981 = vmatpush1.msra.mxu0 0.0
        %982 = vmatprep.mubr.f32.mxu0 0.0
        %983 = vmatmul.mubr.f32.gmra.mrb[0].mxu0 %v913
        %v984 = vpop.f32.mrb[0].mxu0
        %v985 = vadd.f32 %v909, %v984
        %v986 = vpop.f32.mrb[0].mxu0
        %987 = vdwg.mxu0
        %s988 = scalar_lea.vmem [#allocation2], 512
        %v989 = vld [vmem:[%s988] sm:$0xff]
        %v990 = vld [vmem:[%s988 + $0x8] sm:$0xff]
        %v991 = vld [vmem:[%s988 + $0x10] sm:$0xff]
        %v992 = vld [vmem:[%s988 + $0x18] sm:$0xff]
        %v993 = vld [vmem:[%s988 + $0x20] sm:$0xff]
        %v994 = vld [vmem:[%s988 + $0x28] sm:$0xff]
        %v995 = vld [vmem:[%s988 + $0x30] sm:$0xff]
        %v996 = vld [vmem:[%s988 + $0x38] sm:$0xff]
        %v997 = vld [vmem:[%s988 + $0x40] sm:$0xff]
        %v998 = vld [vmem:[%s988 + $0x48] sm:$0xff]
        %v999 = vld [vmem:[%s988 + $0x50] sm:$0xff]
        %v1000 = vld [vmem:[%s988 + $0x58] sm:$0xff]
        %v1001 = vld [vmem:[%s988 + $0x60] sm:$0xff]
        %v1002 = vld [vmem:[%s988 + $0x68] sm:$0xff]
        %v1003 = vld [vmem:[%s988 + $0x70] sm:$0xff]
        %v1004 = vld [vmem:[%s988 + $0x78] sm:$0xff]
        %v1005 = vld [vmem:[%s988 + $0x80] sm:$0xff]
        %v1006 = vld [vmem:[%s988 + $0x88] sm:$0xff]
        %v1007 = vld [vmem:[%s988 + $0x90] sm:$0xff]
        %v1008 = vld [vmem:[%s988 + $0x98] sm:$0xff]
        %v1009 = vld [vmem:[%s988 + $0xa0] sm:$0xff]
        %v1010 = vld [vmem:[%s988 + $0xa8] sm:$0xff]
        %v1011 = vld [vmem:[%s988 + $0xb0] sm:$0xff]
        %v1012 = vld [vmem:[%s988 + $0xb8] sm:$0xff]
        %v1013 = vld [vmem:[%s988 + $0xc0] sm:$0xff]
        %v1014 = vld [vmem:[%s988 + $0xc8] sm:$0xff]
        %v1015 = vld [vmem:[%s988 + $0xd0] sm:$0xff]
        %v1016 = vld [vmem:[%s988 + $0xd8] sm:$0xff]
        %v1017 = vld [vmem:[%s988 + $0xe0] sm:$0xff]
        %v1018 = vld [vmem:[%s988 + $0xe8] sm:$0xff]
        %v1019 = vld [vmem:[%s988 + $0xf0] sm:$0xff]
        %v1020 = vld [vmem:[%s988 + $0xf8] sm:$0xff]
        %1021 = vmatprep.subr.mxu0 0.0
        %1022 = vmatpush1.msra.mxu0 %v989
        %1023 = vmatprep.subr.mxu0 0.0
        %1024 = vmatpush1.msra.mxu0 %v990
        %1025 = vmatprep.subr.mxu0 0.0
        %1026 = vmatpush1.msra.mxu0 %v991
        %1027 = vmatprep.subr.mxu0 0.0
        %1028 = vmatpush1.msra.mxu0 %v992
        %1029 = vmatprep.subr.mxu0 0.0
        %1030 = vmatpush1.msra.mxu0 %v993
        %1031 = vmatprep.subr.mxu0 0.0
        %1032 = vmatpush1.msra.mxu0 %v994
        %1033 = vmatprep.subr.mxu0 0.0
        %1034 = vmatpush1.msra.mxu0 %v995
        %1035 = vmatprep.subr.mxu0 0.0
        %1036 = vmatpush1.msra.mxu0 %v996
        %1037 = vmatprep.subr.mxu0 0.0
        %1038 = vmatpush1.msra.mxu0 %v997
        %1039 = vmatprep.subr.mxu0 0.0
        %1040 = vmatpush1.msra.mxu0 %v998
        %1041 = vmatprep.subr.mxu0 0.0
        %1042 = vmatpush1.msra.mxu0 %v999
        %1043 = vmatprep.subr.mxu0 0.0
        %1044 = vmatpush1.msra.mxu0 %v1000
        %1045 = vmatprep.subr.mxu0 0.0
        %1046 = vmatpush1.msra.mxu0 %v1001
        %1047 = vmatprep.subr.mxu0 0.0
        %1048 = vmatpush1.msra.mxu0 %v1002
        %1049 = vmatprep.subr.mxu0 0.0
        %1050 = vmatpush1.msra.mxu0 %v1003
        %1051 = vmatprep.subr.mxu0 0.0
        %1052 = vmatpush1.msra.mxu0 %v1004
        %1053 = vmatprep.subr.mxu0 0.0
        %1054 = vmatpush1.msra.mxu0 %v1005
        %1055 = vmatprep.subr.mxu0 0.0
        %1056 = vmatpush1.msra.mxu0 %v1006
        %1057 = vmatprep.subr.mxu0 0.0
        %1058 = vmatpush1.msra.mxu0 %v1007
        %1059 = vmatprep.subr.mxu0 0.0
        %1060 = vmatpush1.msra.mxu0 %v1008
        %1061 = vmatprep.subr.mxu0 0.0
        %1062 = vmatpush1.msra.mxu0 %v1009
        %1063 = vmatprep.subr.mxu0 0.0
        %1064 = vmatpush1.msra.mxu0 %v1010
        %1065 = vmatprep.subr.mxu0 0.0
        %1066 = vmatpush1.msra.mxu0 %v1011
        %1067 = vmatprep.subr.mxu0 0.0
        %1068 = vmatpush1.msra.mxu0 %v1012
        %1069 = vmatprep.subr.mxu0 0.0
        %1070 = vmatpush1.msra.mxu0 %v1013
        %1071 = vmatprep.subr.mxu0 0.0
        %1072 = vmatpush1.msra.mxu0 %v1014
        %1073 = vmatprep.subr.mxu0 0.0
        %1074 = vmatpush1.msra.mxu0 %v1015
        %1075 = vmatprep.subr.mxu0 0.0
        %1076 = vmatpush1.msra.mxu0 %v1016
        %1077 = vmatprep.subr.mxu0 0.0
        %1078 = vmatpush1.msra.mxu0 %v1017
        %1079 = vmatprep.subr.mxu0 0.0
        %1080 = vmatpush1.msra.mxu0 %v1018
        %1081 = vmatprep.subr.mxu0 0.0
        %1082 = vmatpush1.msra.mxu0 %v1019
        %1083 = vmatprep.subr.mxu0 0.0
        %1084 = vmatpush1.msra.mxu0 %v1020
        %1085 = vmatprep.mubr.f32.mxu0 %v656
        %1086 = vmatmul.mubr.f32.gmra.mrb[0].mxu0 %v622
        %v1087 = vpop.f32.mrb[0].mxu0
        %v1088 = vadd.f32 0.0, %v1087
        %v1089 = vpop.f32.mrb[0].mxu0
        %1090 = vdwg.mxu0
        %s1091 = scalar_lea.vmem %s2, 16
        %v1092 = vld [vmem:[%s1091] sm:$0xff]
        %v1094 = vsel %vm834, %v1092, 0
        %v1097 = vsel %vm838, %v1088, 0
        %1099 = vmatprep.subr.mxu0 0.0
        %1100 = vmatpush1.msra.mxu0 %v1097
        %1101 = vmatprep.subr.mxu0 0.0
        %1102 = vmatpush1.msra.mxu0 0.0
        %1103 = vmatprep.subr.mxu0 0.0
        %1104 = vmatpush1.msra.mxu0 0.0
        %1105 = vmatprep.subr.mxu0 0.0
        %1106 = vmatpush1.msra.mxu0 0.0
        %1107 = vmatprep.subr.mxu0 0.0
        %1108 = vmatpush1.msra.mxu0 0.0
        %1109 = vmatprep.subr.mxu0 0.0
        %1110 = vmatpush1.msra.mxu0 0.0
        %1111 = vmatprep.subr.mxu0 0.0
        %1112 = vmatpush1.msra.mxu0 0.0
        %1113 = vmatprep.subr.mxu0 0.0
        %1114 = vmatpush1.msra.mxu0 0.0
        %1115 = vmatprep.subr.mxu0 0.0
        %1116 = vmatpush1.msra.mxu0 0.0
        %1117 = vmatprep.subr.mxu0 0.0
        %1118 = vmatpush1.msra.mxu0 0.0
        %1119 = vmatprep.subr.mxu0 0.0
        %1120 = vmatpush1.msra.mxu0 0.0
        %1121 = vmatprep.subr.mxu0 0.0
        %1122 = vmatpush1.msra.mxu0 0.0
        %1123 = vmatprep.subr.mxu0 0.0
        %1124 = vmatpush1.msra.mxu0 0.0
        %1125 = vmatprep.subr.mxu0 0.0
        %1126 = vmatpush1.msra.mxu0 0.0
        %1127 = vmatprep.subr.mxu0 0.0
        %1128 = vmatpush1.msra.mxu0 0.0
        %1129 = vmatprep.subr.mxu0 0.0
        %1130 = vmatpush1.msra.mxu0 0.0
        %1131 = vmatprep.subr.mxu0 0.0
        %1132 = vmatpush1.msra.mxu0 0.0
        %1133 = vmatprep.subr.mxu0 0.0
        %1134 = vmatpush1.msra.mxu0 0.0
        %1135 = vmatprep.subr.mxu0 0.0
        %1136 = vmatpush1.msra.mxu0 0.0
        %1137 = vmatprep.subr.mxu0 0.0
        %1138 = vmatpush1.msra.mxu0 0.0
        %1139 = vmatprep.subr.mxu0 0.0
        %1140 = vmatpush1.msra.mxu0 0.0
        %1141 = vmatprep.subr.mxu0 0.0
        %1142 = vmatpush1.msra.mxu0 0.0
        %1143 = vmatprep.subr.mxu0 0.0
        %1144 = vmatpush1.msra.mxu0 0.0
        %1145 = vmatprep.subr.mxu0 0.0
        %1146 = vmatpush1.msra.mxu0 0.0
        %1147 = vmatprep.subr.mxu0 0.0
        %1148 = vmatpush1.msra.mxu0 0.0
        %1149 = vmatprep.subr.mxu0 0.0
        %1150 = vmatpush1.msra.mxu0 0.0
        %1151 = vmatprep.subr.mxu0 0.0
        %1152 = vmatpush1.msra.mxu0 0.0
        %1153 = vmatprep.subr.mxu0 0.0
        %1154 = vmatpush1.msra.mxu0 0.0
        %1155 = vmatprep.subr.mxu0 0.0
        %1156 = vmatpush1.msra.mxu0 0.0
        %1157 = vmatprep.subr.mxu0 0.0
        %1158 = vmatpush1.msra.mxu0 0.0
        %1159 = vmatprep.subr.mxu0 0.0
        %1160 = vmatpush1.msra.mxu0 0.0
        %1161 = vmatprep.subr.mxu0 0.0
        %1162 = vmatpush1.msra.mxu0 0.0
        %1163 = vmatprep.mubr.f32.mxu0 0.0
        %1164 = vmatmul.mubr.f32.gmra.mrb[0].mxu0 %v1094
        %v1165 = vpop.f32.mrb[0].mxu0
        %v1166 = vadd.f32 0.0, %v1165
        %v1167 = vpop.f32.mrb[0].mxu0
        %1168 = vdwg.mxu0
        %v1169 = vadd.f32 %v985, %v1166
        %s1170 = scalar_lea.vmem [#allocation2], 768
        %v1171 = vld [vmem:[%s1170] sm:$0xff]
        %v1172 = vld [vmem:[%s1170 + $0x8] sm:$0xff]
        %v1173 = vld [vmem:[%s1170 + $0x10] sm:$0xff]
        %v1174 = vld [vmem:[%s1170 + $0x18] sm:$0xff]
        %v1175 = vld [vmem:[%s1170 + $0x20] sm:$0xff]
        %v1176 = vld [vmem:[%s1170 + $0x28] sm:$0xff]
        %v1177 = vld [vmem:[%s1170 + $0x30] sm:$0xff]
        %v1178 = vld [vmem:[%s1170 + $0x38] sm:$0xff]
        %v1179 = vld [vmem:[%s1170 + $0x40] sm:$0xff]
        %v1180 = vld [vmem:[%s1170 + $0x48] sm:$0xff]
        %v1181 = vld [vmem:[%s1170 + $0x50] sm:$0xff]
        %v1182 = vld [vmem:[%s1170 + $0x58] sm:$0xff]
        %v1183 = vld [vmem:[%s1170 + $0x60] sm:$0xff]
        %v1184 = vld [vmem:[%s1170 + $0x68] sm:$0xff]
        %v1185 = vld [vmem:[%s1170 + $0x70] sm:$0xff]
        %v1186 = vld [vmem:[%s1170 + $0x78] sm:$0xff]
        %v1187 = vld [vmem:[%s1170 + $0x80] sm:$0xff]
        %v1188 = vld [vmem:[%s1170 + $0x88] sm:$0xff]
        %v1189 = vld [vmem:[%s1170 + $0x90] sm:$0xff]
        %v1190 = vld [vmem:[%s1170 + $0x98] sm:$0xff]
        %v1191 = vld [vmem:[%s1170 + $0xa0] sm:$0xff]
        %v1192 = vld [vmem:[%s1170 + $0xa8] sm:$0xff]
        %v1193 = vld [vmem:[%s1170 + $0xb0] sm:$0xff]
        %v1194 = vld [vmem:[%s1170 + $0xb8] sm:$0xff]
        %v1195 = vld [vmem:[%s1170 + $0xc0] sm:$0xff]
        %v1196 = vld [vmem:[%s1170 + $0xc8] sm:$0xff]
        %v1197 = vld [vmem:[%s1170 + $0xd0] sm:$0xff]
        %v1198 = vld [vmem:[%s1170 + $0xd8] sm:$0xff]
        %v1199 = vld [vmem:[%s1170 + $0xe0] sm:$0xff]
        %v1200 = vld [vmem:[%s1170 + $0xe8] sm:$0xff]
        %v1201 = vld [vmem:[%s1170 + $0xf0] sm:$0xff]
        %v1202 = vld [vmem:[%s1170 + $0xf8] sm:$0xff]
        %1203 = vmatprep.subr.mxu0 0.0
        %1204 = vmatpush1.msra.mxu0 %v1171
        %1205 = vmatprep.subr.mxu0 0.0
        %1206 = vmatpush1.msra.mxu0 %v1172
        %1207 = vmatprep.subr.mxu0 0.0
        %1208 = vmatpush1.msra.mxu0 %v1173
        %1209 = vmatprep.subr.mxu0 0.0
        %1210 = vmatpush1.msra.mxu0 %v1174
        %1211 = vmatprep.subr.mxu0 0.0
        %1212 = vmatpush1.msra.mxu0 %v1175
        %1213 = vmatprep.subr.mxu0 0.0
        %1214 = vmatpush1.msra.mxu0 %v1176
        %1215 = vmatprep.subr.mxu0 0.0
        %1216 = vmatpush1.msra.mxu0 %v1177
        %1217 = vmatprep.subr.mxu0 0.0
        %1218 = vmatpush1.msra.mxu0 %v1178
        %1219 = vmatprep.subr.mxu0 0.0
        %1220 = vmatpush1.msra.mxu0 %v1179
        %1221 = vmatprep.subr.mxu0 0.0
        %1222 = vmatpush1.msra.mxu0 %v1180
        %1223 = vmatprep.subr.mxu0 0.0
        %1224 = vmatpush1.msra.mxu0 %v1181
        %1225 = vmatprep.subr.mxu0 0.0
        %1226 = vmatpush1.msra.mxu0 %v1182
        %1227 = vmatprep.subr.mxu0 0.0
        %1228 = vmatpush1.msra.mxu0 %v1183
        %1229 = vmatprep.subr.mxu0 0.0
        %1230 = vmatpush1.msra.mxu0 %v1184
        %1231 = vmatprep.subr.mxu0 0.0
        %1232 = vmatpush1.msra.mxu0 %v1185
        %1233 = vmatprep.subr.mxu0 0.0
        %1234 = vmatpush1.msra.mxu0 %v1186
        %1235 = vmatprep.subr.mxu0 0.0
        %1236 = vmatpush1.msra.mxu0 %v1187
        %1237 = vmatprep.subr.mxu0 0.0
        %1238 = vmatpush1.msra.mxu0 %v1188
        %1239 = vmatprep.subr.mxu0 0.0
        %1240 = vmatpush1.msra.mxu0 %v1189
        %1241 = vmatprep.subr.mxu0 0.0
        %1242 = vmatpush1.msra.mxu0 %v1190
        %1243 = vmatprep.subr.mxu0 0.0
        %1244 = vmatpush1.msra.mxu0 %v1191
        %1245 = vmatprep.subr.mxu0 0.0
        %1246 = vmatpush1.msra.mxu0 %v1192
        %1247 = vmatprep.subr.mxu0 0.0
        %1248 = vmatpush1.msra.mxu0 %v1193
        %1249 = vmatprep.subr.mxu0 0.0
        %1250 = vmatpush1.msra.mxu0 %v1194
        %1251 = vmatprep.subr.mxu0 0.0
        %1252 = vmatpush1.msra.mxu0 %v1195
        %1253 = vmatprep.subr.mxu0 0.0
        %1254 = vmatpush1.msra.mxu0 %v1196
        %1255 = vmatprep.subr.mxu0 0.0
        %1256 = vmatpush1.msra.mxu0 %v1197
        %1257 = vmatprep.subr.mxu0 0.0
        %1258 = vmatpush1.msra.mxu0 %v1198
        %1259 = vmatprep.subr.mxu0 0.0
        %1260 = vmatpush1.msra.mxu0 %v1199
        %1261 = vmatprep.subr.mxu0 0.0
        %1262 = vmatpush1.msra.mxu0 %v1200
        %1263 = vmatprep.subr.mxu0 0.0
        %1264 = vmatpush1.msra.mxu0 %v1201
        %1265 = vmatprep.subr.mxu0 0.0
        %1266 = vmatpush1.msra.mxu0 %v1202
        %1267 = vmatprep.mubr.f32.mxu0 %v656
        %1268 = vmatmul.mubr.f32.gmra.mrb[0].mxu0 %v622
        %v1269 = vpop.f32.mrb[0].mxu0
        %v1270 = vadd.f32 0.0, %v1269
        %v1271 = vpop.f32.mrb[0].mxu0
        %1272 = vdwg.mxu0
        %s1273 = scalar_lea.vmem %s2, 24
        %v1274 = vld [vmem:[%s1273] sm:$0xff]
        %v1276 = vsel %vm834, %v1274, 0
        %v1279 = vsel %vm838, %v1270, 0
        %1281 = vmatprep.subr.mxu0 0.0
        %1282 = vmatpush1.msra.mxu0 %v1279
        %1283 = vmatprep.subr.mxu0 0.0
        %1284 = vmatpush1.msra.mxu0 0.0
        %1285 = vmatprep.subr.mxu0 0.0
        %1286 = vmatpush1.msra.mxu0 0.0
        %1287 = vmatprep.subr.mxu0 0.0
        %1288 = vmatpush1.msra.mxu0 0.0
        %1289 = vmatprep.subr.mxu0 0.0
        %1290 = vmatpush1.msra.mxu0 0.0
        %1291 = vmatprep.subr.mxu0 0.0
        %1292 = vmatpush1.msra.mxu0 0.0
        %1293 = vmatprep.subr.mxu0 0.0
        %1294 = vmatpush1.msra.mxu0 0.0
        %1295 = vmatprep.subr.mxu0 0.0
        %1296 = vmatpush1.msra.mxu0 0.0
        %1297 = vmatprep.subr.mxu0 0.0
        %1298 = vmatpush1.msra.mxu0 0.0
        %1299 = vmatprep.subr.mxu0 0.0
        %1300 = vmatpush1.msra.mxu0 0.0
        %1301 = vmatprep.subr.mxu0 0.0
        %1302 = vmatpush1.msra.mxu0 0.0
        %1303 = vmatprep.subr.mxu0 0.0
        %1304 = vmatpush1.msra.mxu0 0.0
        %1305 = vmatprep.subr.mxu0 0.0
        %1306 = vmatpush1.msra.mxu0 0.0
        %1307 = vmatprep.subr.mxu0 0.0
        %1308 = vmatpush1.msra.mxu0 0.0
        %1309 = vmatprep.subr.mxu0 0.0
        %1310 = vmatpush1.msra.mxu0 0.0
        %1311 = vmatprep.subr.mxu0 0.0
        %1312 = vmatpush1.msra.mxu0 0.0
        %1313 = vmatprep.subr.mxu0 0.0
        %1314 = vmatpush1.msra.mxu0 0.0
        %1315 = vmatprep.subr.mxu0 0.0
        %1316 = vmatpush1.msra.mxu0 0.0
        %1317 = vmatprep.subr.mxu0 0.0
        %1318 = vmatpush1.msra.mxu0 0.0
        %1319 = vmatprep.subr.mxu0 0.0
        %1320 = vmatpush1.msra.mxu0 0.0
        %1321 = vmatprep.subr.mxu0 0.0
        %1322 = vmatpush1.msra.mxu0 0.0
        %1323 = vmatprep.subr.mxu0 0.0
        %1324 = vmatpush1.msra.mxu0 0.0
        %1325 = vmatprep.subr.mxu0 0.0
        %1326 = vmatpush1.msra.mxu0 0.0
        %1327 = vmatprep.subr.mxu0 0.0
        %1328 = vmatpush1.msra.mxu0 0.0
        %1329 = vmatprep.subr.mxu0 0.0
        %1330 = vmatpush1.msra.mxu0 0.0
        %1331 = vmatprep.subr.mxu0 0.0
        %1332 = vmatpush1.msra.mxu0 0.0
        %1333 = vmatprep.subr.mxu0 0.0
        %1334 = vmatpush1.msra.mxu0 0.0
        %1335 = vmatprep.subr.mxu0 0.0
        %1336 = vmatpush1.msra.mxu0 0.0
        %1337 = vmatprep.subr.mxu0 0.0
        %1338 = vmatpush1.msra.mxu0 0.0
        %1339 = vmatprep.subr.mxu0 0.0
        %1340 = vmatpush1.msra.mxu0 0.0
        %1341 = vmatprep.subr.mxu0 0.0
        %1342 = vmatpush1.msra.mxu0 0.0
        %1343 = vmatprep.subr.mxu0 0.0
        %1344 = vmatpush1.msra.mxu0 0.0
        %1345 = vmatprep.mubr.f32.mxu0 0.0
        %1346 = vmatmul.mubr.f32.gmra.mrb[0].mxu0 %v1276
        %v1347 = vpop.f32.mrb[0].mxu0
        %v1348 = vadd.f32 0.0, %v1347
        %v1349 = vpop.f32.mrb[0].mxu0
        %1350 = vdwg.mxu0
        %v1351 = vadd.f32 %v1169, %v1348
        %s1352 = scalar_lea.vmem [#allocation2], 1024
        %v1353 = vld [vmem:[%s1352] sm:$0xff]
        %v1354 = vld [vmem:[%s1352 + $0x8] sm:$0xff]
        %v1355 = vld [vmem:[%s1352 + $0x10] sm:$0xff]
        %v1356 = vld [vmem:[%s1352 + $0x18] sm:$0xff]
        %v1357 = vld [vmem:[%s1352 + $0x20] sm:$0xff]
        %v1358 = vld [vmem:[%s1352 + $0x28] sm:$0xff]
        %v1359 = vld [vmem:[%s1352 + $0x30] sm:$0xff]
        %v1360 = vld [vmem:[%s1352 + $0x38] sm:$0xff]
        %v1361 = vld [vmem:[%s1352 + $0x40] sm:$0xff]
        %v1362 = vld [vmem:[%s1352 + $0x48] sm:$0xff]
        %v1363 = vld [vmem:[%s1352 + $0x50] sm:$0xff]
        %v1364 = vld [vmem:[%s1352 + $0x58] sm:$0xff]
        %v1365 = vld [vmem:[%s1352 + $0x60] sm:$0xff]
        %v1366 = vld [vmem:[%s1352 + $0x68] sm:$0xff]
        %v1367 = vld [vmem:[%s1352 + $0x70] sm:$0xff]
        %v1368 = vld [vmem:[%s1352 + $0x78] sm:$0xff]
        %v1369 = vld [vmem:[%s1352 + $0x80] sm:$0xff]
        %v1370 = vld [vmem:[%s1352 + $0x88] sm:$0xff]
        %v1371 = vld [vmem:[%s1352 + $0x90] sm:$0xff]
        %v1372 = vld [vmem:[%s1352 + $0x98] sm:$0xff]
        %v1373 = vld [vmem:[%s1352 + $0xa0] sm:$0xff]
        %v1374 = vld [vmem:[%s1352 + $0xa8] sm:$0xff]
        %v1375 = vld [vmem:[%s1352 + $0xb0] sm:$0xff]
        %v1376 = vld [vmem:[%s1352 + $0xb8] sm:$0xff]
        %v1377 = vld [vmem:[%s1352 + $0xc0] sm:$0xff]
        %v1378 = vld [vmem:[%s1352 + $0xc8] sm:$0xff]
        %v1379 = vld [vmem:[%s1352 + $0xd0] sm:$0xff]
        %v1380 = vld [vmem:[%s1352 + $0xd8] sm:$0xff]
        %v1381 = vld [vmem:[%s1352 + $0xe0] sm:$0xff]
        %v1382 = vld [vmem:[%s1352 + $0xe8] sm:$0xff]
        %v1383 = vld [vmem:[%s1352 + $0xf0] sm:$0xff]
        %v1384 = vld [vmem:[%s1352 + $0xf8] sm:$0xff]
        %1385 = vmatprep.subr.mxu0 0.0
        %1386 = vmatpush1.msra.mxu0 %v1353
        %1387 = vmatprep.subr.mxu0 0.0
        %1388 = vmatpush1.msra.mxu0 %v1354
        %1389 = vmatprep.subr.mxu0 0.0
        %1390 = vmatpush1.msra.mxu0 %v1355
        %1391 = vmatprep.subr.mxu0 0.0
        %1392 = vmatpush1.msra.mxu0 %v1356
        %1393 = vmatprep.subr.mxu0 0.0
        %1394 = vmatpush1.msra.mxu0 %v1357
        %1395 = vmatprep.subr.mxu0 0.0
        %1396 = vmatpush1.msra.mxu0 %v1358
        %1397 = vmatprep.subr.mxu0 0.0
        %1398 = vmatpush1.msra.mxu0 %v1359
        %1399 = vmatprep.subr.mxu0 0.0
        %1400 = vmatpush1.msra.mxu0 %v1360
        %1401 = vmatprep.subr.mxu0 0.0
        %1402 = vmatpush1.msra.mxu0 %v1361
        %1403 = vmatprep.subr.mxu0 0.0
        %1404 = vmatpush1.msra.mxu0 %v1362
        %1405 = vmatprep.subr.mxu0 0.0
        %1406 = vmatpush1.msra.mxu0 %v1363
        %1407 = vmatprep.subr.mxu0 0.0
        %1408 = vmatpush1.msra.mxu0 %v1364
        %1409 = vmatprep.subr.mxu0 0.0
        %1410 = vmatpush1.msra.mxu0 %v1365
        %1411 = vmatprep.subr.mxu0 0.0
        %1412 = vmatpush1.msra.mxu0 %v1366
        %1413 = vmatprep.subr.mxu0 0.0
        %1414 = vmatpush1.msra.mxu0 %v1367
        %1415 = vmatprep.subr.mxu0 0.0
        %1416 = vmatpush1.msra.mxu0 %v1368
        %1417 = vmatprep.subr.mxu0 0.0
        %1418 = vmatpush1.msra.mxu0 %v1369
        %1419 = vmatprep.subr.mxu0 0.0
        %1420 = vmatpush1.msra.mxu0 %v1370
        %1421 = vmatprep.subr.mxu0 0.0
        %1422 = vmatpush1.msra.mxu0 %v1371
        %1423 = vmatprep.subr.mxu0 0.0
        %1424 = vmatpush1.msra.mxu0 %v1372
        %1425 = vmatprep.subr.mxu0 0.0
        %1426 = vmatpush1.msra.mxu0 %v1373
        %1427 = vmatprep.subr.mxu0 0.0
        %1428 = vmatpush1.msra.mxu0 %v1374
        %1429 = vmatprep.subr.mxu0 0.0
        %1430 = vmatpush1.msra.mxu0 %v1375
        %1431 = vmatprep.subr.mxu0 0.0
        %1432 = vmatpush1.msra.mxu0 %v1376
        %1433 = vmatprep.subr.mxu0 0.0
        %1434 = vmatpush1.msra.mxu0 %v1377
        %1435 = vmatprep.subr.mxu0 0.0
        %1436 = vmatpush1.msra.mxu0 %v1378
        %1437 = vmatprep.subr.mxu0 0.0
        %1438 = vmatpush1.msra.mxu0 %v1379
        %1439 = vmatprep.subr.mxu0 0.0
        %1440 = vmatpush1.msra.mxu0 %v1380
        %1441 = vmatprep.subr.mxu0 0.0
        %1442 = vmatpush1.msra.mxu0 %v1381
        %1443 = vmatprep.subr.mxu0 0.0
        %1444 = vmatpush1.msra.mxu0 %v1382
        %1445 = vmatprep.subr.mxu0 0.0
        %1446 = vmatpush1.msra.mxu0 %v1383
        %1447 = vmatprep.subr.mxu0 0.0
        %1448 = vmatpush1.msra.mxu0 %v1384
        %1449 = vmatprep.mubr.f32.mxu0 %v656
        %1450 = vmatmul.mubr.f32.gmra.mrb[0].mxu0 %v622
        %v1451 = vpop.f32.mrb[0].mxu0
        %v1452 = vadd.f32 0.0, %v1451
        %v1453 = vpop.f32.mrb[0].mxu0
        %1454 = vdwg.mxu0
        %s1455 = scalar_lea.vmem %s2, 32
        %v1456 = vld [vmem:[%s1455] sm:$0xff]
        %v1458 = vsel %vm834, %v1456, 0
        %v1461 = vsel %vm838, %v1452, 0
        %1463 = vmatprep.subr.mxu0 0.0
        %1464 = vmatpush1.msra.mxu0 %v1461
        %1465 = vmatprep.subr.mxu0 0.0
        %1466 = vmatpush1.msra.mxu0 0.0
        %1467 = vmatprep.subr.mxu0 0.0
        %1468 = vmatpush1.msra.mxu0 0.0
        %1469 = vmatprep.subr.mxu0 0.0
        %1470 = vmatpush1.msra.mxu0 0.0
        %1471 = vmatprep.subr.mxu0 0.0
        %1472 = vmatpush1.msra.mxu0 0.0
        %1473 = vmatprep.subr.mxu0 0.0
        %1474 = vmatpush1.msra.mxu0 0.0
        %1475 = vmatprep.subr.mxu0 0.0
        %1476 = vmatpush1.msra.mxu0 0.0
        %1477 = vmatprep.subr.mxu0 0.0
        %1478 = vmatpush1.msra.mxu0 0.0
        %1479 = vmatprep.subr.mxu0 0.0
        %1480 = vmatpush1.msra.mxu0 0.0
        %1481 = vmatprep.subr.mxu0 0.0
        %1482 = vmatpush1.msra.mxu0 0.0
        %1483 = vmatprep.subr.mxu0 0.0
        %1484 = vmatpush1.msra.mxu0 0.0
        %1485 = vmatprep.subr.mxu0 0.0
        %1486 = vmatpush1.msra.mxu0 0.0
        %1487 = vmatprep.subr.mxu0 0.0
        %1488 = vmatpush1.msra.mxu0 0.0
        %1489 = vmatprep.subr.mxu0 0.0
        %1490 = vmatpush1.msra.mxu0 0.0
        %1491 = vmatprep.subr.mxu0 0.0
        %1492 = vmatpush1.msra.mxu0 0.0
        %1493 = vmatprep.subr.mxu0 0.0
        %1494 = vmatpush1.msra.mxu0 0.0
        %1495 = vmatprep.subr.mxu0 0.0
        %1496 = vmatpush1.msra.mxu0 0.0
        %1497 = vmatprep.subr.mxu0 0.0
        %1498 = vmatpush1.msra.mxu0 0.0
        %1499 = vmatprep.subr.mxu0 0.0
        %1500 = vmatpush1.msra.mxu0 0.0
        %1501 = vmatprep.subr.mxu0 0.0
        %1502 = vmatpush1.msra.mxu0 0.0
        %1503 = vmatprep.subr.mxu0 0.0
        %1504 = vmatpush1.msra.mxu0 0.0
        %1505 = vmatprep.subr.mxu0 0.0
        %1506 = vmatpush1.msra.mxu0 0.0
        %1507 = vmatprep.subr.mxu0 0.0
        %1508 = vmatpush1.msra.mxu0 0.0
        %1509 = vmatprep.subr.mxu0 0.0
        %1510 = vmatpush1.msra.mxu0 0.0
        %1511 = vmatprep.subr.mxu0 0.0
        %1512 = vmatpush1.msra.mxu0 0.0
        %1513 = vmatprep.subr.mxu0 0.0
        %1514 = vmatpush1.msra.mxu0 0.0
        %1515 = vmatprep.subr.mxu0 0.0
        %1516 = vmatpush1.msra.mxu0 0.0
        %1517 = vmatprep.subr.mxu0 0.0
        %1518 = vmatpush1.msra.mxu0 0.0
        %1519 = vmatprep.subr.mxu0 0.0
        %1520 = vmatpush1.msra.mxu0 0.0
        %1521 = vmatprep.subr.mxu0 0.0
        %1522 = vmatpush1.msra.mxu0 0.0
        %1523 = vmatprep.subr.mxu0 0.0
        %1524 = vmatpush1.msra.mxu0 0.0
        %1525 = vmatprep.subr.mxu0 0.0
        %1526 = vmatpush1.msra.mxu0 0.0
        %1527 = vmatprep.mubr.f32.mxu0 0.0
        %1528 = vmatmul.mubr.f32.gmra.mrb[0].mxu0 %v1458
        %v1529 = vpop.f32.mrb[0].mxu0
        %v1530 = vadd.f32 0.0, %v1529
        %v1531 = vpop.f32.mrb[0].mxu0
        %1532 = vdwg.mxu0
        %v1533 = vadd.f32 %v1351, %v1530
        %s1534 = scalar_lea.vmem [#allocation2], 1280
        %v1535 = vld [vmem:[%s1534] sm:$0xff]
        %v1536 = vld [vmem:[%s1534 + $0x8] sm:$0xff]
        %v1537 = vld [vmem:[%s1534 + $0x10] sm:$0xff]
        %v1538 = vld [vmem:[%s1534 + $0x18] sm:$0xff]
        %v1539 = vld [vmem:[%s1534 + $0x20] sm:$0xff]
        %v1540 = vld [vmem:[%s1534 + $0x28] sm:$0xff]
        %v1541 = vld [vmem:[%s1534 + $0x30] sm:$0xff]
        %v1542 = vld [vmem:[%s1534 + $0x38] sm:$0xff]
        %v1543 = vld [vmem:[%s1534 + $0x40] sm:$0xff]
        %v1544 = vld [vmem:[%s1534 + $0x48] sm:$0xff]
        %v1545 = vld [vmem:[%s1534 + $0x50] sm:$0xff]
        %v1546 = vld [vmem:[%s1534 + $0x58] sm:$0xff]
        %v1547 = vld [vmem:[%s1534 + $0x60] sm:$0xff]
        %v1548 = vld [vmem:[%s1534 + $0x68] sm:$0xff]
        %v1549 = vld [vmem:[%s1534 + $0x70] sm:$0xff]
        %v1550 = vld [vmem:[%s1534 + $0x78] sm:$0xff]
        %v1551 = vld [vmem:[%s1534 + $0x80] sm:$0xff]
        %v1552 = vld [vmem:[%s1534 + $0x88] sm:$0xff]
        %v1553 = vld [vmem:[%s1534 + $0x90] sm:$0xff]
        %v1554 = vld [vmem:[%s1534 + $0x98] sm:$0xff]
        %v1555 = vld [vmem:[%s1534 + $0xa0] sm:$0xff]
        %v1556 = vld [vmem:[%s1534 + $0xa8] sm:$0xff]
        %v1557 = vld [vmem:[%s1534 + $0xb0] sm:$0xff]
        %v1558 = vld [vmem:[%s1534 + $0xb8] sm:$0xff]
        %v1559 = vld [vmem:[%s1534 + $0xc0] sm:$0xff]
        %v1560 = vld [vmem:[%s1534 + $0xc8] sm:$0xff]
        %v1561 = vld [vmem:[%s1534 + $0xd0] sm:$0xff]
        %v1562 = vld [vmem:[%s1534 + $0xd8] sm:$0xff]
        %v1563 = vld [vmem:[%s1534 + $0xe0] sm:$0xff]
        %v1564 = vld [vmem:[%s1534 + $0xe8] sm:$0xff]
        %v1565 = vld [vmem:[%s1534 + $0xf0] sm:$0xff]
        %v1566 = vld [vmem:[%s1534 + $0xf8] sm:$0xff]
        %1567 = vmatprep.subr.mxu0 0.0
        %1568 = vmatpush1.msra.mxu0 %v1535
        %1569 = vmatprep.subr.mxu0 0.0
        %1570 = vmatpush1.msra.mxu0 %v1536
        %1571 = vmatprep.subr.mxu0 0.0
        %1572 = vmatpush1.msra.mxu0 %v1537
        %1573 = vmatprep.subr.mxu0 0.0
        %1574 = vmatpush1.msra.mxu0 %v1538
        %1575 = vmatprep.subr.mxu0 0.0
        %1576 = vmatpush1.msra.mxu0 %v1539
        %1577 = vmatprep.subr.mxu0 0.0
        %1578 = vmatpush1.msra.mxu0 %v1540
        %1579 = vmatprep.subr.mxu0 0.0
        %1580 = vmatpush1.msra.mxu0 %v1541
        %1581 = vmatprep.subr.mxu0 0.0
        %1582 = vmatpush1.msra.mxu0 %v1542
        %1583 = vmatprep.subr.mxu0 0.0
        %1584 = vmatpush1.msra.mxu0 %v1543
        %1585 = vmatprep.subr.mxu0 0.0
        %1586 = vmatpush1.msra.mxu0 %v1544
        %1587 = vmatprep.subr.mxu0 0.0
        %1588 = vmatpush1.msra.mxu0 %v1545
        %1589 = vmatprep.subr.mxu0 0.0
        %1590 = vmatpush1.msra.mxu0 %v1546
        %1591 = vmatprep.subr.mxu0 0.0
        %1592 = vmatpush1.msra.mxu0 %v1547
        %1593 = vmatprep.subr.mxu0 0.0
        %1594 = vmatpush1.msra.mxu0 %v1548
        %1595 = vmatprep.subr.mxu0 0.0
        %1596 = vmatpush1.msra.mxu0 %v1549
        %1597 = vmatprep.subr.mxu0 0.0
        %1598 = vmatpush1.msra.mxu0 %v1550
        %1599 = vmatprep.subr.mxu0 0.0
        %1600 = vmatpush1.msra.mxu0 %v1551
        %1601 = vmatprep.subr.mxu0 0.0
        %1602 = vmatpush1.msra.mxu0 %v1552
        %1603 = vmatprep.subr.mxu0 0.0
        %1604 = vmatpush1.msra.mxu0 %v1553
        %1605 = vmatprep.subr.mxu0 0.0
        %1606 = vmatpush1.msra.mxu0 %v1554
        %1607 = vmatprep.subr.mxu0 0.0
        %1608 = vmatpush1.msra.mxu0 %v1555
        %1609 = vmatprep.subr.mxu0 0.0
        %1610 = vmatpush1.msra.mxu0 %v1556
        %1611 = vmatprep.subr.mxu0 0.0
        %1612 = vmatpush1.msra.mxu0 %v1557
        %1613 = vmatprep.subr.mxu0 0.0
        %1614 = vmatpush1.msra.mxu0 %v1558
        %1615 = vmatprep.subr.mxu0 0.0
        %1616 = vmatpush1.msra.mxu0 %v1559
        %1617 = vmatprep.subr.mxu0 0.0
        %1618 = vmatpush1.msra.mxu0 %v1560
        %1619 = vmatprep.subr.mxu0 0.0
        %1620 = vmatpush1.msra.mxu0 %v1561
        %1621 = vmatprep.subr.mxu0 0.0
        %1622 = vmatpush1.msra.mxu0 %v1562
        %1623 = vmatprep.subr.mxu0 0.0
        %1624 = vmatpush1.msra.mxu0 %v1563
        %1625 = vmatprep.subr.mxu0 0.0
        %1626 = vmatpush1.msra.mxu0 %v1564
        %1627 = vmatprep.subr.mxu0 0.0
        %1628 = vmatpush1.msra.mxu0 %v1565
        %1629 = vmatprep.subr.mxu0 0.0
        %1630 = vmatpush1.msra.mxu0 %v1566
        %1631 = vmatprep.mubr.f32.mxu0 %v656
        %1632 = vmatmul.mubr.f32.gmra.mrb[0].mxu0 %v622
        %v1633 = vpop.f32.mrb[0].mxu0
        %v1634 = vadd.f32 0.0, %v1633
        %v1635 = vpop.f32.mrb[0].mxu0
        %1636 = vdwg.mxu0
        %s1637 = scalar_lea.vmem %s2, 40
        %v1638 = vld [vmem:[%s1637] sm:$0xff]
        %v1640 = vsel %vm834, %v1638, 0
        %v1643 = vsel %vm838, %v1634, 0
        %1645 = vmatprep.subr.mxu0 0.0
        %1646 = vmatpush1.msra.mxu0 %v1643
        %1647 = vmatprep.subr.mxu0 0.0
        %1648 = vmatpush1.msra.mxu0 0.0
        %1649 = vmatprep.subr.mxu0 0.0
        %1650 = vmatpush1.msra.mxu0 0.0
        %1651 = vmatprep.subr.mxu0 0.0
        %1652 = vmatpush1.msra.mxu0 0.0
        %1653 = vmatprep.subr.mxu0 0.0
        %1654 = vmatpush1.msra.mxu0 0.0
        %1655 = vmatprep.subr.mxu0 0.0
        %1656 = vmatpush1.msra.mxu0 0.0
        %1657 = vmatprep.subr.mxu0 0.0
        %1658 = vmatpush1.msra.mxu0 0.0
        %1659 = vmatprep.subr.mxu0 0.0
        %1660 = vmatpush1.msra.mxu0 0.0
        %1661 = vmatprep.subr.mxu0 0.0
        %1662 = vmatpush1.msra.mxu0 0.0
        %1663 = vmatprep.subr.mxu0 0.0
        %1664 = vmatpush1.msra.mxu0 0.0
        %1665 = vmatprep.subr.mxu0 0.0
        %1666 = vmatpush1.msra.mxu0 0.0
        %1667 = vmatprep.subr.mxu0 0.0
        %1668 = vmatpush1.msra.mxu0 0.0
        %1669 = vmatprep.subr.mxu0 0.0
        %1670 = vmatpush1.msra.mxu0 0.0
        %1671 = vmatprep.subr.mxu0 0.0
        %1672 = vmatpush1.msra.mxu0 0.0
        %1673 = vmatprep.subr.mxu0 0.0
        %1674 = vmatpush1.msra.mxu0 0.0
        %1675 = vmatprep.subr.mxu0 0.0
        %1676 = vmatpush1.msra.mxu0 0.0
        %1677 = vmatprep.subr.mxu0 0.0
        %1678 = vmatpush1.msra.mxu0 0.0
        %1679 = vmatprep.subr.mxu0 0.0
        %1680 = vmatpush1.msra.mxu0 0.0
        %1681 = vmatprep.subr.mxu0 0.0
        %1682 = vmatpush1.msra.mxu0 0.0
        %1683 = vmatprep.subr.mxu0 0.0
        %1684 = vmatpush1.msra.mxu0 0.0
        %1685 = vmatprep.subr.mxu0 0.0
        %1686 = vmatpush1.msra.mxu0 0.0
        %1687 = vmatprep.subr.mxu0 0.0
        %1688 = vmatpush1.msra.mxu0 0.0
        %1689 = vmatprep.subr.mxu0 0.0
        %1690 = vmatpush1.msra.mxu0 0.0
        %1691 = vmatprep.subr.mxu0 0.0
        %1692 = vmatpush1.msra.mxu0 0.0
        %1693 = vmatprep.subr.mxu0 0.0
        %1694 = vmatpush1.msra.mxu0 0.0
        %1695 = vmatprep.subr.mxu0 0.0
        %1696 = vmatpush1.msra.mxu0 0.0
        %1697 = vmatprep.subr.mxu0 0.0
        %1698 = vmatpush1.msra.mxu0 0.0
        %1699 = vmatprep.subr.mxu0 0.0
        %1700 = vmatpush1.msra.mxu0 0.0
        %1701 = vmatprep.subr.mxu0 0.0
        %1702 = vmatpush1.msra.mxu0 0.0
        %1703 = vmatprep.subr.mxu0 0.0
        %1704 = vmatpush1.msra.mxu0 0.0
        %1705 = vmatprep.subr.mxu0 0.0
        %1706 = vmatpush1.msra.mxu0 0.0
        %1707 = vmatprep.subr.mxu0 0.0
        %1708 = vmatpush1.msra.mxu0 0.0
        %1709 = vmatprep.mubr.f32.mxu0 0.0
        %1710 = vmatmul.mubr.f32.gmra.mrb[0].mxu0 %v1640
        %v1711 = vpop.f32.mrb[0].mxu0
        %v1712 = vadd.f32 0.0, %v1711
        %v1713 = vpop.f32.mrb[0].mxu0
        %1714 = vdwg.mxu0
        %v1715 = vadd.f32 %v1533, %v1712
        %s1716 = scalar_lea.vmem [#allocation2], 1536
        %v1717 = vld [vmem:[%s1716] sm:$0xff]
        %v1718 = vld [vmem:[%s1716 + $0x8] sm:$0xff]
        %v1719 = vld [vmem:[%s1716 + $0x10] sm:$0xff]
        %v1720 = vld [vmem:[%s1716 + $0x18] sm:$0xff]
        %v1721 = vld [vmem:[%s1716 + $0x20] sm:$0xff]
        %v1722 = vld [vmem:[%s1716 + $0x28] sm:$0xff]
        %v1723 = vld [vmem:[%s1716 + $0x30] sm:$0xff]
        %v1724 = vld [vmem:[%s1716 + $0x38] sm:$0xff]
        %v1725 = vld [vmem:[%s1716 + $0x40] sm:$0xff]
        %v1726 = vld [vmem:[%s1716 + $0x48] sm:$0xff]
        %v1727 = vld [vmem:[%s1716 + $0x50] sm:$0xff]
        %v1728 = vld [vmem:[%s1716 + $0x58] sm:$0xff]
        %v1729 = vld [vmem:[%s1716 + $0x60] sm:$0xff]
        %v1730 = vld [vmem:[%s1716 + $0x68] sm:$0xff]
        %v1731 = vld [vmem:[%s1716 + $0x70] sm:$0xff]
        %v1732 = vld [vmem:[%s1716 + $0x78] sm:$0xff]
        %v1733 = vld [vmem:[%s1716 + $0x80] sm:$0xff]
        %v1734 = vld [vmem:[%s1716 + $0x88] sm:$0xff]
        %v1735 = vld [vmem:[%s1716 + $0x90] sm:$0xff]
        %v1736 = vld [vmem:[%s1716 + $0x98] sm:$0xff]
        %v1737 = vld [vmem:[%s1716 + $0xa0] sm:$0xff]
        %v1738 = vld [vmem:[%s1716 + $0xa8] sm:$0xff]
        %v1739 = vld [vmem:[%s1716 + $0xb0] sm:$0xff]
        %v1740 = vld [vmem:[%s1716 + $0xb8] sm:$0xff]
        %v1741 = vld [vmem:[%s1716 + $0xc0] sm:$0xff]
        %v1742 = vld [vmem:[%s1716 + $0xc8] sm:$0xff]
        %v1743 = vld [vmem:[%s1716 + $0xd0] sm:$0xff]
        %v1744 = vld [vmem:[%s1716 + $0xd8] sm:$0xff]
        %v1745 = vld [vmem:[%s1716 + $0xe0] sm:$0xff]
        %v1746 = vld [vmem:[%s1716 + $0xe8] sm:$0xff]
        %v1747 = vld [vmem:[%s1716 + $0xf0] sm:$0xff]
        %v1748 = vld [vmem:[%s1716 + $0xf8] sm:$0xff]
        %1749 = vmatprep.subr.mxu0 0.0
        %1750 = vmatpush1.msra.mxu0 %v1717
        %1751 = vmatprep.subr.mxu0 0.0
        %1752 = vmatpush1.msra.mxu0 %v1718
        %1753 = vmatprep.subr.mxu0 0.0
        %1754 = vmatpush1.msra.mxu0 %v1719
        %1755 = vmatprep.subr.mxu0 0.0
        %1756 = vmatpush1.msra.mxu0 %v1720
        %1757 = vmatprep.subr.mxu0 0.0
        %1758 = vmatpush1.msra.mxu0 %v1721
        %1759 = vmatprep.subr.mxu0 0.0
        %1760 = vmatpush1.msra.mxu0 %v1722
        %1761 = vmatprep.subr.mxu0 0.0
        %1762 = vmatpush1.msra.mxu0 %v1723
        %1763 = vmatprep.subr.mxu0 0.0
        %1764 = vmatpush1.msra.mxu0 %v1724
        %1765 = vmatprep.subr.mxu0 0.0
        %1766 = vmatpush1.msra.mxu0 %v1725
        %1767 = vmatprep.subr.mxu0 0.0
        %1768 = vmatpush1.msra.mxu0 %v1726
        %1769 = vmatprep.subr.mxu0 0.0
        %1770 = vmatpush1.msra.mxu0 %v1727
        %1771 = vmatprep.subr.mxu0 0.0
        %1772 = vmatpush1.msra.mxu0 %v1728
        %1773 = vmatprep.subr.mxu0 0.0
        %1774 = vmatpush1.msra.mxu0 %v1729
        %1775 = vmatprep.subr.mxu0 0.0
        %1776 = vmatpush1.msra.mxu0 %v1730
        %1777 = vmatprep.subr.mxu0 0.0
        %1778 = vmatpush1.msra.mxu0 %v1731
        %1779 = vmatprep.subr.mxu0 0.0
        %1780 = vmatpush1.msra.mxu0 %v1732
        %1781 = vmatprep.subr.mxu0 0.0
        %1782 = vmatpush1.msra.mxu0 %v1733
        %1783 = vmatprep.subr.mxu0 0.0
        %1784 = vmatpush1.msra.mxu0 %v1734
        %1785 = vmatprep.subr.mxu0 0.0
        %1786 = vmatpush1.msra.mxu0 %v1735
        %1787 = vmatprep.subr.mxu0 0.0
        %1788 = vmatpush1.msra.mxu0 %v1736
        %1789 = vmatprep.subr.mxu0 0.0
        %1790 = vmatpush1.msra.mxu0 %v1737
        %1791 = vmatprep.subr.mxu0 0.0
        %1792 = vmatpush1.msra.mxu0 %v1738
        %1793 = vmatprep.subr.mxu0 0.0
        %1794 = vmatpush1.msra.mxu0 %v1739
        %1795 = vmatprep.subr.mxu0 0.0
        %1796 = vmatpush1.msra.mxu0 %v1740
        %1797 = vmatprep.subr.mxu0 0.0
        %1798 = vmatpush1.msra.mxu0 %v1741
        %1799 = vmatprep.subr.mxu0 0.0
        %1800 = vmatpush1.msra.mxu0 %v1742
        %1801 = vmatprep.subr.mxu0 0.0
        %1802 = vmatpush1.msra.mxu0 %v1743
        %1803 = vmatprep.subr.mxu0 0.0
        %1804 = vmatpush1.msra.mxu0 %v1744
        %1805 = vmatprep.subr.mxu0 0.0
        %1806 = vmatpush1.msra.mxu0 %v1745
        %1807 = vmatprep.subr.mxu0 0.0
        %1808 = vmatpush1.msra.mxu0 %v1746
        %1809 = vmatprep.subr.mxu0 0.0
        %1810 = vmatpush1.msra.mxu0 %v1747
        %1811 = vmatprep.subr.mxu0 0.0
        %1812 = vmatpush1.msra.mxu0 %v1748
        %1813 = vmatprep.mubr.f32.mxu0 %v656
        %1814 = vmatmul.mubr.f32.gmra.mrb[0].mxu0 %v622
        %v1815 = vpop.f32.mrb[0].mxu0
        %v1816 = vadd.f32 0.0, %v1815
        %v1817 = vpop.f32.mrb[0].mxu0
        %1818 = vdwg.mxu0
        %s1819 = scalar_lea.vmem %s2, 48
        %v1820 = vld [vmem:[%s1819] sm:$0xff]
        %v1822 = vsel %vm834, %v1820, 0
        %v1825 = vsel %vm838, %v1816, 0
        %1827 = vmatprep.subr.mxu0 0.0
        %1828 = vmatpush1.msra.mxu0 %v1825
        %1829 = vmatprep.subr.mxu0 0.0
        %1830 = vmatpush1.msra.mxu0 0.0
        %1831 = vmatprep.subr.mxu0 0.0
        %1832 = vmatpush1.msra.mxu0 0.0
        %1833 = vmatprep.subr.mxu0 0.0
        %1834 = vmatpush1.msra.mxu0 0.0
        %1835 = vmatprep.subr.mxu0 0.0
        %1836 = vmatpush1.msra.mxu0 0.0
        %1837 = vmatprep.subr.mxu0 0.0
        %1838 = vmatpush1.msra.mxu0 0.0
        %1839 = vmatprep.subr.mxu0 0.0
        %1840 = vmatpush1.msra.mxu0 0.0
        %1841 = vmatprep.subr.mxu0 0.0
        %1842 = vmatpush1.msra.mxu0 0.0
        %1843 = vmatprep.subr.mxu0 0.0
        %1844 = vmatpush1.msra.mxu0 0.0
        %1845 = vmatprep.subr.mxu0 0.0
        %1846 = vmatpush1.msra.mxu0 0.0
        %1847 = vmatprep.subr.mxu0 0.0
        %1848 = vmatpush1.msra.mxu0 0.0
        %1849 = vmatprep.subr.mxu0 0.0
        %1850 = vmatpush1.msra.mxu0 0.0
        %1851 = vmatprep.subr.mxu0 0.0
        %1852 = vmatpush1.msra.mxu0 0.0
        %1853 = vmatprep.subr.mxu0 0.0
        %1854 = vmatpush1.msra.mxu0 0.0
        %1855 = vmatprep.subr.mxu0 0.0
        %1856 = vmatpush1.msra.mxu0 0.0
        %1857 = vmatprep.subr.mxu0 0.0
        %1858 = vmatpush1.msra.mxu0 0.0
        %1859 = vmatprep.subr.mxu0 0.0
        %1860 = vmatpush1.msra.mxu0 0.0
        %1861 = vmatprep.subr.mxu0 0.0
        %1862 = vmatpush1.msra.mxu0 0.0
        %1863 = vmatprep.subr.mxu0 0.0
        %1864 = vmatpush1.msra.mxu0 0.0
        %1865 = vmatprep.subr.mxu0 0.0
        %1866 = vmatpush1.msra.mxu0 0.0
        %1867 = vmatprep.subr.mxu0 0.0
        %1868 = vmatpush1.msra.mxu0 0.0
        %1869 = vmatprep.subr.mxu0 0.0
        %1870 = vmatpush1.msra.mxu0 0.0
        %1871 = vmatprep.subr.mxu0 0.0
        %1872 = vmatpush1.msra.mxu0 0.0
        %1873 = vmatprep.subr.mxu0 0.0
        %1874 = vmatpush1.msra.mxu0 0.0
        %1875 = vmatprep.subr.mxu0 0.0
        %1876 = vmatpush1.msra.mxu0 0.0
        %1877 = vmatprep.subr.mxu0 0.0
        %1878 = vmatpush1.msra.mxu0 0.0
        %1879 = vmatprep.subr.mxu0 0.0
        %1880 = vmatpush1.msra.mxu0 0.0
        %1881 = vmatprep.subr.mxu0 0.0
        %1882 = vmatpush1.msra.mxu0 0.0
        %1883 = vmatprep.subr.mxu0 0.0
        %1884 = vmatpush1.msra.mxu0 0.0
        %1885 = vmatprep.subr.mxu0 0.0
        %1886 = vmatpush1.msra.mxu0 0.0
        %1887 = vmatprep.subr.mxu0 0.0
        %1888 = vmatpush1.msra.mxu0 0.0
        %1889 = vmatprep.subr.mxu0 0.0
        %1890 = vmatpush1.msra.mxu0 0.0
        %1891 = vmatprep.mubr.f32.mxu0 0.0
        %1892 = vmatmul.mubr.f32.gmra.mrb[0].mxu0 %v1822
        %v1893 = vpop.f32.mrb[0].mxu0
        %v1894 = vadd.f32 0.0, %v1893
        %v1895 = vpop.f32.mrb[0].mxu0
        %1896 = vdwg.mxu0
        %v1897 = vadd.f32 %v1715, %v1894
        %s1898 = scalar_lea.vmem [#allocation2], 1792
        %v1899 = vld [vmem:[%s1898] sm:$0xff]
        %v1900 = vld [vmem:[%s1898 + $0x8] sm:$0xff]
        %v1901 = vld [vmem:[%s1898 + $0x10] sm:$0xff]
        %v1902 = vld [vmem:[%s1898 + $0x18] sm:$0xff]
        %v1903 = vld [vmem:[%s1898 + $0x20] sm:$0xff]
        %v1904 = vld [vmem:[%s1898 + $0x28] sm:$0xff]
        %v1905 = vld [vmem:[%s1898 + $0x30] sm:$0xff]
        %v1906 = vld [vmem:[%s1898 + $0x38] sm:$0xff]
        %v1907 = vld [vmem:[%s1898 + $0x40] sm:$0xff]
        %v1908 = vld [vmem:[%s1898 + $0x48] sm:$0xff]
        %v1909 = vld [vmem:[%s1898 + $0x50] sm:$0xff]
        %v1910 = vld [vmem:[%s1898 + $0x58] sm:$0xff]
        %v1911 = vld [vmem:[%s1898 + $0x60] sm:$0xff]
        %v1912 = vld [vmem:[%s1898 + $0x68] sm:$0xff]
        %v1913 = vld [vmem:[%s1898 + $0x70] sm:$0xff]
        %v1914 = vld [vmem:[%s1898 + $0x78] sm:$0xff]
        %v1915 = vld [vmem:[%s1898 + $0x80] sm:$0xff]
        %v1916 = vld [vmem:[%s1898 + $0x88] sm:$0xff]
        %v1917 = vld [vmem:[%s1898 + $0x90] sm:$0xff]
        %v1918 = vld [vmem:[%s1898 + $0x98] sm:$0xff]
        %v1919 = vld [vmem:[%s1898 + $0xa0] sm:$0xff]
        %v1920 = vld [vmem:[%s1898 + $0xa8] sm:$0xff]
        %v1921 = vld [vmem:[%s1898 + $0xb0] sm:$0xff]
        %v1922 = vld [vmem:[%s1898 + $0xb8] sm:$0xff]
        %v1923 = vld [vmem:[%s1898 + $0xc0] sm:$0xff]
        %v1924 = vld [vmem:[%s1898 + $0xc8] sm:$0xff]
        %v1925 = vld [vmem:[%s1898 + $0xd0] sm:$0xff]
        %v1926 = vld [vmem:[%s1898 + $0xd8] sm:$0xff]
        %v1927 = vld [vmem:[%s1898 + $0xe0] sm:$0xff]
        %v1928 = vld [vmem:[%s1898 + $0xe8] sm:$0xff]
        %v1929 = vld [vmem:[%s1898 + $0xf0] sm:$0xff]
        %v1930 = vld [vmem:[%s1898 + $0xf8] sm:$0xff]
        %1931 = vmatprep.subr.mxu0 0.0
        %1932 = vmatpush1.msra.mxu0 %v1899
        %1933 = vmatprep.subr.mxu0 0.0
        %1934 = vmatpush1.msra.mxu0 %v1900
        %1935 = vmatprep.subr.mxu0 0.0
        %1936 = vmatpush1.msra.mxu0 %v1901
        %1937 = vmatprep.subr.mxu0 0.0
        %1938 = vmatpush1.msra.mxu0 %v1902
        %1939 = vmatprep.subr.mxu0 0.0
        %1940 = vmatpush1.msra.mxu0 %v1903
        %1941 = vmatprep.subr.mxu0 0.0
        %1942 = vmatpush1.msra.mxu0 %v1904
        %1943 = vmatprep.subr.mxu0 0.0
        %1944 = vmatpush1.msra.mxu0 %v1905
        %1945 = vmatprep.subr.mxu0 0.0
        %1946 = vmatpush1.msra.mxu0 %v1906
        %1947 = vmatprep.subr.mxu0 0.0
        %1948 = vmatpush1.msra.mxu0 %v1907
        %1949 = vmatprep.subr.mxu0 0.0
        %1950 = vmatpush1.msra.mxu0 %v1908
        %1951 = vmatprep.subr.mxu0 0.0
        %1952 = vmatpush1.msra.mxu0 %v1909
        %1953 = vmatprep.subr.mxu0 0.0
        %1954 = vmatpush1.msra.mxu0 %v1910
        %1955 = vmatprep.subr.mxu0 0.0
        %1956 = vmatpush1.msra.mxu0 %v1911
        %1957 = vmatprep.subr.mxu0 0.0
        %1958 = vmatpush1.msra.mxu0 %v1912
        %1959 = vmatprep.subr.mxu0 0.0
        %1960 = vmatpush1.msra.mxu0 %v1913
        %1961 = vmatprep.subr.mxu0 0.0
        %1962 = vmatpush1.msra.mxu0 %v1914
        %1963 = vmatprep.subr.mxu0 0.0
        %1964 = vmatpush1.msra.mxu0 %v1915
        %1965 = vmatprep.subr.mxu0 0.0
        %1966 = vmatpush1.msra.mxu0 %v1916
        %1967 = vmatprep.subr.mxu0 0.0
        %1968 = vmatpush1.msra.mxu0 %v1917
        %1969 = vmatprep.subr.mxu0 0.0
        %1970 = vmatpush1.msra.mxu0 %v1918
        %1971 = vmatprep.subr.mxu0 0.0
        %1972 = vmatpush1.msra.mxu0 %v1919
        %1973 = vmatprep.subr.mxu0 0.0
        %1974 = vmatpush1.msra.mxu0 %v1920
        %1975 = vmatprep.subr.mxu0 0.0
        %1976 = vmatpush1.msra.mxu0 %v1921
        %1977 = vmatprep.subr.mxu0 0.0
        %1978 = vmatpush1.msra.mxu0 %v1922
        %1979 = vmatprep.subr.mxu0 0.0
        %1980 = vmatpush1.msra.mxu0 %v1923
        %1981 = vmatprep.subr.mxu0 0.0
        %1982 = vmatpush1.msra.mxu0 %v1924
        %1983 = vmatprep.subr.mxu0 0.0
        %1984 = vmatpush1.msra.mxu0 %v1925
        %1985 = vmatprep.subr.mxu0 0.0
        %1986 = vmatpush1.msra.mxu0 %v1926
        %1987 = vmatprep.subr.mxu0 0.0
        %1988 = vmatpush1.msra.mxu0 %v1927
        %1989 = vmatprep.subr.mxu0 0.0
        %1990 = vmatpush1.msra.mxu0 %v1928
        %1991 = vmatprep.subr.mxu0 0.0
        %1992 = vmatpush1.msra.mxu0 %v1929
        %1993 = vmatprep.subr.mxu0 0.0
        %1994 = vmatpush1.msra.mxu0 %v1930
        %1995 = vmatprep.mubr.f32.mxu0 %v656
        %1996 = vmatmul.mubr.f32.gmra.mrb[0].mxu0 %v622
        %v1997 = vpop.f32.mrb[0].mxu0
        %v1998 = vadd.f32 0.0, %v1997
        %v1999 = vpop.f32.mrb[0].mxu0
        %2000 = vdwg.mxu0
        %s2001 = scalar_lea.vmem %s2, 56
        %v2002 = vld [vmem:[%s2001] sm:$0xff]
        %v2004 = vsel %vm834, %v2002, 0
        %v2007 = vsel %vm838, %v1998, 0
        %2009 = vmatprep.subr.mxu0 0.0
        %2010 = vmatpush1.msra.mxu0 %v2007
        %2011 = vmatprep.subr.mxu0 0.0
        %2012 = vmatpush1.msra.mxu0 0.0
        %2013 = vmatprep.subr.mxu0 0.0
        %2014 = vmatpush1.msra.mxu0 0.0
        %2015 = vmatprep.subr.mxu0 0.0
        %2016 = vmatpush1.msra.mxu0 0.0
        %2017 = vmatprep.subr.mxu0 0.0
        %2018 = vmatpush1.msra.mxu0 0.0
        %2019 = vmatprep.subr.mxu0 0.0
        %2020 = vmatpush1.msra.mxu0 0.0
        %2021 = vmatprep.subr.mxu0 0.0
        %2022 = vmatpush1.msra.mxu0 0.0
        %2023 = vmatprep.subr.mxu0 0.0
        %2024 = vmatpush1.msra.mxu0 0.0
        %2025 = vmatprep.subr.mxu0 0.0
        %2026 = vmatpush1.msra.mxu0 0.0
        %2027 = vmatprep.subr.mxu0 0.0
        %2028 = vmatpush1.msra.mxu0 0.0
        %2029 = vmatprep.subr.mxu0 0.0
        %2030 = vmatpush1.msra.mxu0 0.0
        %2031 = vmatprep.subr.mxu0 0.0
        %2032 = vmatpush1.msra.mxu0 0.0
        %2033 = vmatprep.subr.mxu0 0.0
        %2034 = vmatpush1.msra.mxu0 0.0
        %2035 = vmatprep.subr.mxu0 0.0
        %2036 = vmatpush1.msra.mxu0 0.0
        %2037 = vmatprep.subr.mxu0 0.0
        %2038 = vmatpush1.msra.mxu0 0.0
        %2039 = vmatprep.subr.mxu0 0.0
        %2040 = vmatpush1.msra.mxu0 0.0
        %2041 = vmatprep.subr.mxu0 0.0
        %2042 = vmatpush1.msra.mxu0 0.0
        %2043 = vmatprep.subr.mxu0 0.0
        %2044 = vmatpush1.msra.mxu0 0.0
        %2045 = vmatprep.subr.mxu0 0.0
        %2046 = vmatpush1.msra.mxu0 0.0
        %2047 = vmatprep.subr.mxu0 0.0
        %2048 = vmatpush1.msra.mxu0 0.0
        %2049 = vmatprep.subr.mxu0 0.0
        %2050 = vmatpush1.msra.mxu0 0.0
        %2051 = vmatprep.subr.mxu0 0.0
        %2052 = vmatpush1.msra.mxu0 0.0
        %2053 = vmatprep.subr.mxu0 0.0
        %2054 = vmatpush1.msra.mxu0 0.0
        %2055 = vmatprep.subr.mxu0 0.0
        %2056 = vmatpush1.msra.mxu0 0.0
        %2057 = vmatprep.subr.mxu0 0.0
        %2058 = vmatpush1.msra.mxu0 0.0
        %2059 = vmatprep.subr.mxu0 0.0
        %2060 = vmatpush1.msra.mxu0 0.0
        %2061 = vmatprep.subr.mxu0 0.0
        %2062 = vmatpush1.msra.mxu0 0.0
        %2063 = vmatprep.subr.mxu0 0.0
        %2064 = vmatpush1.msra.mxu0 0.0
        %2065 = vmatprep.subr.mxu0 0.0
        %2066 = vmatpush1.msra.mxu0 0.0
        %2067 = vmatprep.subr.mxu0 0.0
        %2068 = vmatpush1.msra.mxu0 0.0
        %2069 = vmatprep.subr.mxu0 0.0
        %2070 = vmatpush1.msra.mxu0 0.0
        %2071 = vmatprep.subr.mxu0 0.0
        %2072 = vmatpush1.msra.mxu0 0.0
        %2073 = vmatprep.mubr.f32.mxu0 0.0
        %2074 = vmatmul.mubr.f32.gmra.mrb[0].mxu0 %v2004
        %v2075 = vpop.f32.mrb[0].mxu0
        %v2076 = vadd.f32 0.0, %v2075
        %v2077 = vpop.f32.mrb[0].mxu0
        %2078 = vdwg.mxu0
        %v2079 = vadd.f32 %v1897, %v2076
        %s2080 = scalar_lea.vmem [#allocation2], 2048
        %v2081 = vld [vmem:[%s2080] sm:$0xff]
        %v2082 = vld [vmem:[%s2080 + $0x8] sm:$0xff]
        %v2083 = vld [vmem:[%s2080 + $0x10] sm:$0xff]
        %v2084 = vld [vmem:[%s2080 + $0x18] sm:$0xff]
        %v2085 = vld [vmem:[%s2080 + $0x20] sm:$0xff]
        %v2086 = vld [vmem:[%s2080 + $0x28] sm:$0xff]
        %v2087 = vld [vmem:[%s2080 + $0x30] sm:$0xff]
        %v2088 = vld [vmem:[%s2080 + $0x38] sm:$0xff]
        %v2089 = vld [vmem:[%s2080 + $0x40] sm:$0xff]
        %v2090 = vld [vmem:[%s2080 + $0x48] sm:$0xff]
        %v2091 = vld [vmem:[%s2080 + $0x50] sm:$0xff]
        %v2092 = vld [vmem:[%s2080 + $0x58] sm:$0xff]
        %v2093 = vld [vmem:[%s2080 + $0x60] sm:$0xff]
        %v2094 = vld [vmem:[%s2080 + $0x68] sm:$0xff]
        %v2095 = vld [vmem:[%s2080 + $0x70] sm:$0xff]
        %v2096 = vld [vmem:[%s2080 + $0x78] sm:$0xff]
        %v2097 = vld [vmem:[%s2080 + $0x80] sm:$0xff]
        %v2098 = vld [vmem:[%s2080 + $0x88] sm:$0xff]
        %v2099 = vld [vmem:[%s2080 + $0x90] sm:$0xff]
        %v2100 = vld [vmem:[%s2080 + $0x98] sm:$0xff]
        %v2101 = vld [vmem:[%s2080 + $0xa0] sm:$0xff]
        %v2102 = vld [vmem:[%s2080 + $0xa8] sm:$0xff]
        %v2103 = vld [vmem:[%s2080 + $0xb0] sm:$0xff]
        %v2104 = vld [vmem:[%s2080 + $0xb8] sm:$0xff]
        %v2105 = vld [vmem:[%s2080 + $0xc0] sm:$0xff]
        %v2106 = vld [vmem:[%s2080 + $0xc8] sm:$0xff]
        %v2107 = vld [vmem:[%s2080 + $0xd0] sm:$0xff]
        %v2108 = vld [vmem:[%s2080 + $0xd8] sm:$0xff]
        %v2109 = vld [vmem:[%s2080 + $0xe0] sm:$0xff]
        %v2110 = vld [vmem:[%s2080 + $0xe8] sm:$0xff]
        %v2111 = vld [vmem:[%s2080 + $0xf0] sm:$0xff]
        %v2112 = vld [vmem:[%s2080 + $0xf8] sm:$0xff]
        %2113 = vmatprep.subr.mxu0 0.0
        %2114 = vmatpush1.msra.mxu0 %v2081
        %2115 = vmatprep.subr.mxu0 0.0
        %2116 = vmatpush1.msra.mxu0 %v2082
        %2117 = vmatprep.subr.mxu0 0.0
        %2118 = vmatpush1.msra.mxu0 %v2083
        %2119 = vmatprep.subr.mxu0 0.0
        %2120 = vmatpush1.msra.mxu0 %v2084
        %2121 = vmatprep.subr.mxu0 0.0
        %2122 = vmatpush1.msra.mxu0 %v2085
        %2123 = vmatprep.subr.mxu0 0.0
        %2124 = vmatpush1.msra.mxu0 %v2086
        %2125 = vmatprep.subr.mxu0 0.0
        %2126 = vmatpush1.msra.mxu0 %v2087
        %2127 = vmatprep.subr.mxu0 0.0
        %2128 = vmatpush1.msra.mxu0 %v2088
        %2129 = vmatprep.subr.mxu0 0.0
        %2130 = vmatpush1.msra.mxu0 %v2089
        %2131 = vmatprep.subr.mxu0 0.0
        %2132 = vmatpush1.msra.mxu0 %v2090
        %2133 = vmatprep.subr.mxu0 0.0
        %2134 = vmatpush1.msra.mxu0 %v2091
        %2135 = vmatprep.subr.mxu0 0.0
        %2136 = vmatpush1.msra.mxu0 %v2092
        %2137 = vmatprep.subr.mxu0 0.0
        %2138 = vmatpush1.msra.mxu0 %v2093
        %2139 = vmatprep.subr.mxu0 0.0
        %2140 = vmatpush1.msra.mxu0 %v2094
        %2141 = vmatprep.subr.mxu0 0.0
        %2142 = vmatpush1.msra.mxu0 %v2095
        %2143 = vmatprep.subr.mxu0 0.0
        %2144 = vmatpush1.msra.mxu0 %v2096
        %2145 = vmatprep.subr.mxu0 0.0
        %2146 = vmatpush1.msra.mxu0 %v2097
        %2147 = vmatprep.subr.mxu0 0.0
        %2148 = vmatpush1.msra.mxu0 %v2098
        %2149 = vmatprep.subr.mxu0 0.0
        %2150 = vmatpush1.msra.mxu0 %v2099
        %2151 = vmatprep.subr.mxu0 0.0
        %2152 = vmatpush1.msra.mxu0 %v2100
        %2153 = vmatprep.subr.mxu0 0.0
        %2154 = vmatpush1.msra.mxu0 %v2101
        %2155 = vmatprep.subr.mxu0 0.0
        %2156 = vmatpush1.msra.mxu0 %v2102
        %2157 = vmatprep.subr.mxu0 0.0
        %2158 = vmatpush1.msra.mxu0 %v2103
        %2159 = vmatprep.subr.mxu0 0.0
        %2160 = vmatpush1.msra.mxu0 %v2104
        %2161 = vmatprep.subr.mxu0 0.0
        %2162 = vmatpush1.msra.mxu0 %v2105
        %2163 = vmatprep.subr.mxu0 0.0
        %2164 = vmatpush1.msra.mxu0 %v2106
        %2165 = vmatprep.subr.mxu0 0.0
        %2166 = vmatpush1.msra.mxu0 %v2107
        %2167 = vmatprep.subr.mxu0 0.0
        %2168 = vmatpush1.msra.mxu0 %v2108
        %2169 = vmatprep.subr.mxu0 0.0
        %2170 = vmatpush1.msra.mxu0 %v2109
        %2171 = vmatprep.subr.mxu0 0.0
        %2172 = vmatpush1.msra.mxu0 %v2110
        %2173 = vmatprep.subr.mxu0 0.0
        %2174 = vmatpush1.msra.mxu0 %v2111
        %2175 = vmatprep.subr.mxu0 0.0
        %2176 = vmatpush1.msra.mxu0 %v2112
        %2177 = vmatprep.mubr.f32.mxu0 %v656
        %2178 = vmatmul.mubr.f32.gmra.mrb[0].mxu0 %v622
        %v2179 = vpop.f32.mrb[0].mxu0
        %v2180 = vadd.f32 0.0, %v2179
        %v2181 = vpop.f32.mrb[0].mxu0
        %2182 = vdwg.mxu0
        %s2183 = scalar_lea.vmem %s2, 64
        %v2184 = vld [vmem:[%s2183] sm:$0xff]
        %v2186 = vsel %vm834, %v2184, 0
        %v2189 = vsel %vm838, %v2180, 0
        %2191 = vmatprep.subr.mxu0 0.0
        %2192 = vmatpush1.msra.mxu0 %v2189
        %2193 = vmatprep.subr.mxu0 0.0
        %2194 = vmatpush1.msra.mxu0 0.0
        %2195 = vmatprep.subr.mxu0 0.0
        %2196 = vmatpush1.msra.mxu0 0.0
        %2197 = vmatprep.subr.mxu0 0.0
        %2198 = vmatpush1.msra.mxu0 0.0
        %2199 = vmatprep.subr.mxu0 0.0
        %2200 = vmatpush1.msra.mxu0 0.0
        %2201 = vmatprep.subr.mxu0 0.0
        %2202 = vmatpush1.msra.mxu0 0.0
        %2203 = vmatprep.subr.mxu0 0.0
        %2204 = vmatpush1.msra.mxu0 0.0
        %2205 = vmatprep.subr.mxu0 0.0
        %2206 = vmatpush1.msra.mxu0 0.0
        %2207 = vmatprep.subr.mxu0 0.0
        %2208 = vmatpush1.msra.mxu0 0.0
        %2209 = vmatprep.subr.mxu0 0.0
        %2210 = vmatpush1.msra.mxu0 0.0
        %2211 = vmatprep.subr.mxu0 0.0
        %2212 = vmatpush1.msra.mxu0 0.0
        %2213 = vmatprep.subr.mxu0 0.0
        %2214 = vmatpush1.msra.mxu0 0.0
        %2215 = vmatprep.subr.mxu0 0.0
        %2216 = vmatpush1.msra.mxu0 0.0
        %2217 = vmatprep.subr.mxu0 0.0
        %2218 = vmatpush1.msra.mxu0 0.0
        %2219 = vmatprep.subr.mxu0 0.0
        %2220 = vmatpush1.msra.mxu0 0.0
        %2221 = vmatprep.subr.mxu0 0.0
        %2222 = vmatpush1.msra.mxu0 0.0
        %2223 = vmatprep.subr.mxu0 0.0
        %2224 = vmatpush1.msra.mxu0 0.0
        %2225 = vmatprep.subr.mxu0 0.0
        %2226 = vmatpush1.msra.mxu0 0.0
        %2227 = vmatprep.subr.mxu0 0.0
        %2228 = vmatpush1.msra.mxu0 0.0
        %2229 = vmatprep.subr.mxu0 0.0
        %2230 = vmatpush1.msra.mxu0 0.0
        %2231 = vmatprep.subr.mxu0 0.0
        %2232 = vmatpush1.msra.mxu0 0.0
        %2233 = vmatprep.subr.mxu0 0.0
        %2234 = vmatpush1.msra.mxu0 0.0
        %2235 = vmatprep.subr.mxu0 0.0
        %2236 = vmatpush1.msra.mxu0 0.0
        %2237 = vmatprep.subr.mxu0 0.0
        %2238 = vmatpush1.msra.mxu0 0.0
        %2239 = vmatprep.subr.mxu0 0.0
        %2240 = vmatpush1.msra.mxu0 0.0
        %2241 = vmatprep.subr.mxu0 0.0
        %2242 = vmatpush1.msra.mxu0 0.0
        %2243 = vmatprep.subr.mxu0 0.0
        %2244 = vmatpush1.msra.mxu0 0.0
        %2245 = vmatprep.subr.mxu0 0.0
        %2246 = vmatpush1.msra.mxu0 0.0
        %2247 = vmatprep.subr.mxu0 0.0
        %2248 = vmatpush1.msra.mxu0 0.0
        %2249 = vmatprep.subr.mxu0 0.0
        %2250 = vmatpush1.msra.mxu0 0.0
        %2251 = vmatprep.subr.mxu0 0.0
        %2252 = vmatpush1.msra.mxu0 0.0
        %2253 = vmatprep.subr.mxu0 0.0
        %2254 = vmatpush1.msra.mxu0 0.0
        %2255 = vmatprep.mubr.f32.mxu0 0.0
        %2256 = vmatmul.mubr.f32.gmra.mrb[0].mxu0 %v2186
        %v2257 = vpop.f32.mrb[0].mxu0
        %v2258 = vadd.f32 0.0, %v2257
        %v2259 = vpop.f32.mrb[0].mxu0
        %2260 = vdwg.mxu0
        %v2261 = vadd.f32 %v2079, %v2258
        %v2262 = vld [vmem:[%s3] sm:$0xff]
        %2264 = vset.pattern.permute.xlu0 0
        %2265 = vperm.xlu0 %2264, %v2262
        %v2266 = vpop.permute.xlu0 %2265
        %v2268 = vadd.f32 %v2261, %v2266
        %v2269 = vmax.f32 %v2268, 0.0
        %v2270 = vld [vmem:[#allocation4] sm:$0xff]
        %v2271 = vld [vmem:[#allocation4 + $0x8] sm:$0xff]
        %v2272 = vld [vmem:[#allocation4 + $0x10] sm:$0xff]
        %v2273 = vld [vmem:[#allocation4 + $0x18] sm:$0xff]
        %v2274 = vld [vmem:[#allocation4 + $0x20] sm:$0xff]
        %v2275 = vld [vmem:[#allocation4 + $0x28] sm:$0xff]
        %v2276 = vld [vmem:[#allocation4 + $0x30] sm:$0xff]
        %v2277 = vld [vmem:[#allocation4 + $0x38] sm:$0xff]
        %vm2278 = vcmask 523264
        %v2280 = vsel %vm2278, %v2269, 0
        %2282 = vmatprep.subr.mxu0 0.0
        %2283 = vmatpush1.msra.mxu0 %v2270
        %2284 = vmatprep.subr.mxu0 0.0
        %2285 = vmatpush1.msra.mxu0 %v2271
        %2286 = vmatprep.subr.mxu0 0.0
        %2287 = vmatpush1.msra.mxu0 %v2272
        %2288 = vmatprep.subr.mxu0 0.0
        %2289 = vmatpush1.msra.mxu0 %v2273
        %2290 = vmatprep.subr.mxu0 0.0
        %2291 = vmatpush1.msra.mxu0 %v2274
        %2292 = vmatprep.subr.mxu0 0.0
        %2293 = vmatpush1.msra.mxu0 %v2275
        %2294 = vmatprep.subr.mxu0 0.0
        %2295 = vmatpush1.msra.mxu0 %v2276
        %2296 = vmatprep.subr.mxu0 0.0
        %2297 = vmatpush1.msra.mxu0 %v2277
        %2298 = vmatprep.subr.mxu0 0.0
        %2299 = vmatpush1.msra.mxu0 0.0
        %2300 = vmatprep.subr.mxu0 0.0
        %2301 = vmatpush1.msra.mxu0 0.0
        %2302 = vmatprep.subr.mxu0 0.0
        %2303 = vmatpush1.msra.mxu0 0.0
        %2304 = vmatprep.subr.mxu0 0.0
        %2305 = vmatpush1.msra.mxu0 0.0
        %2306 = vmatprep.subr.mxu0 0.0
        %2307 = vmatpush1.msra.mxu0 0.0
        %2308 = vmatprep.subr.mxu0 0.0
        %2309 = vmatpush1.msra.mxu0 0.0
        %2310 = vmatprep.subr.mxu0 0.0
        %2311 = vmatpush1.msra.mxu0 0.0
        %2312 = vmatprep.subr.mxu0 0.0
        %2313 = vmatpush1.msra.mxu0 0.0
        %2314 = vmatprep.subr.mxu0 0.0
        %2315 = vmatpush1.msra.mxu0 0.0
        %2316 = vmatprep.subr.mxu0 0.0
        %2317 = vmatpush1.msra.mxu0 0.0
        %2318 = vmatprep.subr.mxu0 0.0
        %2319 = vmatpush1.msra.mxu0 0.0
        %2320 = vmatprep.subr.mxu0 0.0
        %2321 = vmatpush1.msra.mxu0 0.0
        %2322 = vmatprep.subr.mxu0 0.0
        %2323 = vmatpush1.msra.mxu0 0.0
        %2324 = vmatprep.subr.mxu0 0.0
        %2325 = vmatpush1.msra.mxu0 0.0
        %2326 = vmatprep.subr.mxu0 0.0
        %2327 = vmatpush1.msra.mxu0 0.0
        %2328 = vmatprep.subr.mxu0 0.0
        %2329 = vmatpush1.msra.mxu0 0.0
        %2330 = vmatprep.subr.mxu0 0.0
        %2331 = vmatpush1.msra.mxu0 0.0
        %2332 = vmatprep.subr.mxu0 0.0
        %2333 = vmatpush1.msra.mxu0 0.0
        %2334 = vmatprep.subr.mxu0 0.0
        %2335 = vmatpush1.msra.mxu0 0.0
        %2336 = vmatprep.subr.mxu0 0.0
        %2337 = vmatpush1.msra.mxu0 0.0
        %2338 = vmatprep.subr.mxu0 0.0
        %2339 = vmatpush1.msra.mxu0 0.0
        %2340 = vmatprep.subr.mxu0 0.0
        %2341 = vmatpush1.msra.mxu0 0.0
        %2342 = vmatprep.subr.mxu0 0.0
        %2343 = vmatpush1.msra.mxu0 0.0
        %2344 = vmatprep.subr.mxu0 0.0
        %2345 = vmatpush1.msra.mxu0 0.0
        %2346 = vmatprep.mubr.f32.mxu0 0.0
        %2347 = vmatmul.mubr.f32.gmra.mrb[0].mxu0 %v2280
        %v2348 = vpop.f32.mrb[0].mxu0
        %v2349 = vadd.f32 0.0, %v2348
        %v2350 = vpop.f32.mrb[0].mxu0
        %2351 = vdwg.mxu0
        %v2352 = vld [vmem:[%s5] sm:$0xff]
        %v2353 = vld [vmem:[%s5 + $0x8] sm:$0xff]
        %s2354 = scalar_lea.vmem [#allocation4], 64
        %v2355 = vld [vmem:[%s2354] sm:$0xff]
        %v2356 = vld [vmem:[%s2354 + $0x8] sm:$0xff]
        %v2357 = vld [vmem:[%s2354 + $0x10] sm:$0xff]
        %v2358 = vld [vmem:[%s2354 + $0x18] sm:$0xff]
        %v2359 = vld [vmem:[%s2354 + $0x20] sm:$0xff]
        %v2360 = vld [vmem:[%s2354 + $0x28] sm:$0xff]
        %v2361 = vld [vmem:[%s2354 + $0x30] sm:$0xff]
        %v2362 = vld [vmem:[%s2354 + $0x38] sm:$0xff]
        %2363 = vmatprep.subr.mxu0 0.0
        %2364 = vmatpush1.msra.mxu0 %v2355
        %2365 = vmatprep.subr.mxu0 0.0
        %2366 = vmatpush1.msra.mxu0 %v2356
        %2367 = vmatprep.subr.mxu0 0.0
        %2368 = vmatpush1.msra.mxu0 %v2357
        %2369 = vmatprep.subr.mxu0 0.0
        %2370 = vmatpush1.msra.mxu0 %v2358
        %2371 = vmatprep.subr.mxu0 0.0
        %2372 = vmatpush1.msra.mxu0 %v2359
        %2373 = vmatprep.subr.mxu0 0.0
        %2374 = vmatpush1.msra.mxu0 %v2360
        %2375 = vmatprep.subr.mxu0 0.0
        %2376 = vmatpush1.msra.mxu0 %v2361
        %2377 = vmatprep.subr.mxu0 0.0
        %2378 = vmatpush1.msra.mxu0 %v2362
        %2379 = vmatprep.subr.mxu0 0.0
        %2380 = vmatpush1.msra.mxu0 0.0
        %2381 = vmatprep.subr.mxu0 0.0
        %2382 = vmatpush1.msra.mxu0 0.0
        %2383 = vmatprep.subr.mxu0 0.0
        %2384 = vmatpush1.msra.mxu0 0.0
        %2385 = vmatprep.subr.mxu0 0.0
        %2386 = vmatpush1.msra.mxu0 0.0
        %2387 = vmatprep.subr.mxu0 0.0
        %2388 = vmatpush1.msra.mxu0 0.0
        %2389 = vmatprep.subr.mxu0 0.0
        %2390 = vmatpush1.msra.mxu0 0.0
        %2391 = vmatprep.subr.mxu0 0.0
        %2392 = vmatpush1.msra.mxu0 0.0
        %2393 = vmatprep.subr.mxu0 0.0
        %2394 = vmatpush1.msra.mxu0 0.0
        %2395 = vmatprep.subr.mxu0 0.0
        %2396 = vmatpush1.msra.mxu0 0.0
        %2397 = vmatprep.subr.mxu0 0.0
        %2398 = vmatpush1.msra.mxu0 0.0
        %2399 = vmatprep.subr.mxu0 0.0
        %2400 = vmatpush1.msra.mxu0 0.0
        %2401 = vmatprep.subr.mxu0 0.0
        %2402 = vmatpush1.msra.mxu0 0.0
        %2403 = vmatprep.subr.mxu0 0.0
        %2404 = vmatpush1.msra.mxu0 0.0
        %2405 = vmatprep.subr.mxu0 0.0
        %2406 = vmatpush1.msra.mxu0 0.0
        %2407 = vmatprep.subr.mxu0 0.0
        %2408 = vmatpush1.msra.mxu0 0.0
        %2409 = vmatprep.subr.mxu0 0.0
        %2410 = vmatpush1.msra.mxu0 0.0
        %2411 = vmatprep.subr.mxu0 0.0
        %2412 = vmatpush1.msra.mxu0 0.0
        %2413 = vmatprep.subr.mxu0 0.0
        %2414 = vmatpush1.msra.mxu0 0.0
        %2415 = vmatprep.subr.mxu0 0.0
        %2416 = vmatpush1.msra.mxu0 0.0
        %2417 = vmatprep.subr.mxu0 0.0
        %2418 = vmatpush1.msra.mxu0 0.0
        %2419 = vmatprep.subr.mxu0 0.0
        %2420 = vmatpush1.msra.mxu0 0.0
        %2421 = vmatprep.subr.mxu0 0.0
        %2422 = vmatpush1.msra.mxu0 0.0
        %2423 = vmatprep.subr.mxu0 0.0
        %2424 = vmatpush1.msra.mxu0 0.0
        %2425 = vmatprep.subr.mxu0 0.0
        %2426 = vmatpush1.msra.mxu0 0.0
        %2427 = vmatprep.mubr.f32.mxu0 0.0
        %2428 = vmatmul.mubr.f32.gmra.mrb[0].mxu0 %v2280
        %v2429 = vpop.f32.mrb[0].mxu0
        %v2430 = vadd.f32 0.0, %v2429
        %v2431 = vpop.f32.mrb[0].mxu0
        %2432 = vdwg.mxu0
        %s2433 = scalar_lea.vmem %s5, 16
        %v2434 = vld [vmem:[%s2433] sm:$0xff]
        %v2435 = vld [vmem:[%s2433 + $0x8] sm:$0xff]
        %vm2436 = vcmask 64512
        %v2438 = vsel %vm2436, %v2434, 0
        %v2441 = vsel %vm2436, %v2435, 0
        %2443 = vmatprep.subr.mxu0 0.0
        %2444 = vmatpush1.msra.mxu0 %v2430
        %2445 = vmatprep.subr.mxu0 0.0
        %2446 = vmatpush1.msra.mxu0 0.0
        %2447 = vmatprep.subr.mxu0 0.0
        %2448 = vmatpush1.msra.mxu0 0.0
        %2449 = vmatprep.subr.mxu0 0.0
        %2450 = vmatpush1.msra.mxu0 0.0
        %2451 = vmatprep.subr.mxu0 0.0
        %2452 = vmatpush1.msra.mxu0 0.0
        %2453 = vmatprep.subr.mxu0 0.0
        %2454 = vmatpush1.msra.mxu0 0.0
        %2455 = vmatprep.subr.mxu0 0.0
        %2456 = vmatpush1.msra.mxu0 0.0
        %2457 = vmatprep.subr.mxu0 0.0
        %2458 = vmatpush1.msra.mxu0 0.0
        %2459 = vmatprep.subr.mxu0 0.0
        %2460 = vmatpush1.msra.mxu0 0.0
        %2461 = vmatprep.subr.mxu0 0.0
        %2462 = vmatpush1.msra.mxu0 0.0
        %2463 = vmatprep.subr.mxu0 0.0
        %2464 = vmatpush1.msra.mxu0 0.0
        %2465 = vmatprep.subr.mxu0 0.0
        %2466 = vmatpush1.msra.mxu0 0.0
        %2467 = vmatprep.subr.mxu0 0.0
        %2468 = vmatpush1.msra.mxu0 0.0
        %2469 = vmatprep.subr.mxu0 0.0
        %2470 = vmatpush1.msra.mxu0 0.0
        %2471 = vmatprep.subr.mxu0 0.0
        %2472 = vmatpush1.msra.mxu0 0.0
        %2473 = vmatprep.subr.mxu0 0.0
        %2474 = vmatpush1.msra.mxu0 0.0
        %2475 = vmatprep.subr.mxu0 0.0
        %2476 = vmatpush1.msra.mxu0 0.0
        %2477 = vmatprep.subr.mxu0 0.0
        %2478 = vmatpush1.msra.mxu0 0.0
        %2479 = vmatprep.subr.mxu0 0.0
        %2480 = vmatpush1.msra.mxu0 0.0
        %2481 = vmatprep.subr.mxu0 0.0
        %2482 = vmatpush1.msra.mxu0 0.0
        %2483 = vmatprep.subr.mxu0 0.0
        %2484 = vmatpush1.msra.mxu0 0.0
        %2485 = vmatprep.subr.mxu0 0.0
        %2486 = vmatpush1.msra.mxu0 0.0
        %2487 = vmatprep.subr.mxu0 0.0
        %2488 = vmatpush1.msra.mxu0 0.0
        %2489 = vmatprep.subr.mxu0 0.0
        %2490 = vmatpush1.msra.mxu0 0.0
        %2491 = vmatprep.subr.mxu0 0.0
        %2492 = vmatpush1.msra.mxu0 0.0
        %2493 = vmatprep.subr.mxu0 0.0
        %2494 = vmatpush1.msra.mxu0 0.0
        %2495 = vmatprep.subr.mxu0 0.0
        %2496 = vmatpush1.msra.mxu0 0.0
        %2497 = vmatprep.subr.mxu0 0.0
        %2498 = vmatpush1.msra.mxu0 0.0
        %2499 = vmatprep.subr.mxu0 0.0
        %2500 = vmatpush1.msra.mxu0 0.0
        %2501 = vmatprep.subr.mxu0 0.0
        %2502 = vmatpush1.msra.mxu0 0.0
        %2503 = vmatprep.subr.mxu0 0.0
        %2504 = vmatpush1.msra.mxu0 0.0
        %2505 = vmatprep.subr.mxu0 0.0
        %2506 = vmatpush1.msra.mxu0 0.0
        %2507 = vmatprep.mubr.f32.mxu0 0.0
        %2508 = vmatmul.mubr.f32.gmra.mrb[0].mxu0 %v2438
        %v2509 = vpop.f32.mrb[0].mxu0
        %v2510 = vadd.f32 0.0, %v2509
        %v2511 = vpop.f32.mrb[0].mxu0
        %2512 = vmatprep.mubr.f32.mxu0 0.0
        %2513 = vmatmul.mubr.f32.gmra.mrb[0].mxu0 %v2441
        %v2514 = vpop.f32.mrb[0].mxu0
        %v2515 = vadd.f32 0.0, %v2514
        %v2516 = vpop.f32.mrb[0].mxu0
        %2517 = vdwg.mxu0
        %v2519 = vsel %vm2436, %v2352, 0
        %v2522 = vsel %vm2436, %v2353, 0
        %2524 = vmatprep.subr.mxu0 0.0
        %2525 = vmatpush1.msra.mxu0 %v2349
        %2526 = vmatprep.subr.mxu0 0.0
        %2527 = vmatpush1.msra.mxu0 0.0
        %2528 = vmatprep.subr.mxu0 0.0
        %2529 = vmatpush1.msra.mxu0 0.0
        %2530 = vmatprep.subr.mxu0 0.0
        %2531 = vmatpush1.msra.mxu0 0.0
        %2532 = vmatprep.subr.mxu0 0.0
        %2533 = vmatpush1.msra.mxu0 0.0
        %2534 = vmatprep.subr.mxu0 0.0
        %2535 = vmatpush1.msra.mxu0 0.0
        %2536 = vmatprep.subr.mxu0 0.0
        %2537 = vmatpush1.msra.mxu0 0.0
        %2538 = vmatprep.subr.mxu0 0.0
        %2539 = vmatpush1.msra.mxu0 0.0
        %2540 = vmatprep.subr.mxu0 0.0
        %2541 = vmatpush1.msra.mxu0 0.0
        %2542 = vmatprep.subr.mxu0 0.0
        %2543 = vmatpush1.msra.mxu0 0.0
        %2544 = vmatprep.subr.mxu0 0.0
        %2545 = vmatpush1.msra.mxu0 0.0
        %2546 = vmatprep.subr.mxu0 0.0
        %2547 = vmatpush1.msra.mxu0 0.0
        %2548 = vmatprep.subr.mxu0 0.0
        %2549 = vmatpush1.msra.mxu0 0.0
        %2550 = vmatprep.subr.mxu0 0.0
        %2551 = vmatpush1.msra.mxu0 0.0
        %2552 = vmatprep.subr.mxu0 0.0
        %2553 = vmatpush1.msra.mxu0 0.0
        %2554 = vmatprep.subr.mxu0 0.0
        %2555 = vmatpush1.msra.mxu0 0.0
        %2556 = vmatprep.subr.mxu0 0.0
        %2557 = vmatpush1.msra.mxu0 0.0
        %2558 = vmatprep.subr.mxu0 0.0
        %2559 = vmatpush1.msra.mxu0 0.0
        %2560 = vmatprep.subr.mxu0 0.0
        %2561 = vmatpush1.msra.mxu0 0.0
        %2562 = vmatprep.subr.mxu0 0.0
        %2563 = vmatpush1.msra.mxu0 0.0
        %2564 = vmatprep.subr.mxu0 0.0
        %2565 = vmatpush1.msra.mxu0 0.0
        %2566 = vmatprep.subr.mxu0 0.0
        %2567 = vmatpush1.msra.mxu0 0.0
        %2568 = vmatprep.subr.mxu0 0.0
        %2569 = vmatpush1.msra.mxu0 0.0
        %2570 = vmatprep.subr.mxu0 0.0
        %2571 = vmatpush1.msra.mxu0 0.0
        %2572 = vmatprep.subr.mxu0 0.0
        %2573 = vmatpush1.msra.mxu0 0.0
        %2574 = vmatprep.subr.mxu0 0.0
        %2575 = vmatpush1.msra.mxu0 0.0
        %2576 = vmatprep.subr.mxu0 0.0
        %2577 = vmatpush1.msra.mxu0 0.0
        %2578 = vmatprep.subr.mxu0 0.0
        %2579 = vmatpush1.msra.mxu0 0.0
        %2580 = vmatprep.subr.mxu0 0.0
        %2581 = vmatpush1.msra.mxu0 0.0
        %2582 = vmatprep.subr.mxu0 0.0
        %2583 = vmatpush1.msra.mxu0 0.0
        %2584 = vmatprep.subr.mxu0 0.0
        %2585 = vmatpush1.msra.mxu0 0.0
        %2586 = vmatprep.subr.mxu0 0.0
        %2587 = vmatpush1.msra.mxu0 0.0
        %2588 = vmatprep.mubr.f32.mxu0 0.0
        %2589 = vmatmul.mubr.f32.gmra.mrb[0].mxu0 %v2519
        %v2590 = vpop.f32.mrb[0].mxu0
        %v2591 = vadd.f32 %v2510, %v2590
        %v2592 = vpop.f32.mrb[0].mxu0
        %2593 = vmatprep.mubr.f32.mxu0 0.0
        %2594 = vmatmul.mubr.f32.gmra.mrb[0].mxu0 %v2522
        %v2595 = vpop.f32.mrb[0].mxu0
        %v2596 = vadd.f32 %v2515, %v2595
        %v2597 = vpop.f32.mrb[0].mxu0
        %2598 = vdwg.mxu0
        %s2599 = scalar_lea.vmem [#allocation4], 128
        %v2600 = vld [vmem:[%s2599] sm:$0xff]
        %v2601 = vld [vmem:[%s2599 + $0x8] sm:$0xff]
        %v2602 = vld [vmem:[%s2599 + $0x10] sm:$0xff]
        %v2603 = vld [vmem:[%s2599 + $0x18] sm:$0xff]
        %v2604 = vld [vmem:[%s2599 + $0x20] sm:$0xff]
        %v2605 = vld [vmem:[%s2599 + $0x28] sm:$0xff]
        %v2606 = vld [vmem:[%s2599 + $0x30] sm:$0xff]
        %v2607 = vld [vmem:[%s2599 + $0x38] sm:$0xff]
        %2608 = vmatprep.subr.mxu0 0.0
        %2609 = vmatpush1.msra.mxu0 %v2600
        %2610 = vmatprep.subr.mxu0 0.0
        %2611 = vmatpush1.msra.mxu0 %v2601
        %2612 = vmatprep.subr.mxu0 0.0
        %2613 = vmatpush1.msra.mxu0 %v2602
        %2614 = vmatprep.subr.mxu0 0.0
        %2615 = vmatpush1.msra.mxu0 %v2603
        %2616 = vmatprep.subr.mxu0 0.0
        %2617 = vmatpush1.msra.mxu0 %v2604
        %2618 = vmatprep.subr.mxu0 0.0
        %2619 = vmatpush1.msra.mxu0 %v2605
        %2620 = vmatprep.subr.mxu0 0.0
        %2621 = vmatpush1.msra.mxu0 %v2606
        %2622 = vmatprep.subr.mxu0 0.0
        %2623 = vmatpush1.msra.mxu0 %v2607
        %2624 = vmatprep.subr.mxu0 0.0
        %2625 = vmatpush1.msra.mxu0 0.0
        %2626 = vmatprep.subr.mxu0 0.0
        %2627 = vmatpush1.msra.mxu0 0.0
        %2628 = vmatprep.subr.mxu0 0.0
        %2629 = vmatpush1.msra.mxu0 0.0
        %2630 = vmatprep.subr.mxu0 0.0
        %2631 = vmatpush1.msra.mxu0 0.0
        %2632 = vmatprep.subr.mxu0 0.0
        %2633 = vmatpush1.msra.mxu0 0.0
        %2634 = vmatprep.subr.mxu0 0.0
        %2635 = vmatpush1.msra.mxu0 0.0
        %2636 = vmatprep.subr.mxu0 0.0
        %2637 = vmatpush1.msra.mxu0 0.0
        %2638 = vmatprep.subr.mxu0 0.0
        %2639 = vmatpush1.msra.mxu0 0.0
        %2640 = vmatprep.subr.mxu0 0.0
        %2641 = vmatpush1.msra.mxu0 0.0
        %2642 = vmatprep.subr.mxu0 0.0
        %2643 = vmatpush1.msra.mxu0 0.0
        %2644 = vmatprep.subr.mxu0 0.0
        %2645 = vmatpush1.msra.mxu0 0.0
        %2646 = vmatprep.subr.mxu0 0.0
        %2647 = vmatpush1.msra.mxu0 0.0
        %2648 = vmatprep.subr.mxu0 0.0
        %2649 = vmatpush1.msra.mxu0 0.0
        %2650 = vmatprep.subr.mxu0 0.0
        %2651 = vmatpush1.msra.mxu0 0.0
        %2652 = vmatprep.subr.mxu0 0.0
        %2653 = vmatpush1.msra.mxu0 0.0
        %2654 = vmatprep.subr.mxu0 0.0
        %2655 = vmatpush1.msra.mxu0 0.0
        %2656 = vmatprep.subr.mxu0 0.0
        %2657 = vmatpush1.msra.mxu0 0.0
        %2658 = vmatprep.subr.mxu0 0.0
        %2659 = vmatpush1.msra.mxu0 0.0
        %2660 = vmatprep.subr.mxu0 0.0
        %2661 = vmatpush1.msra.mxu0 0.0
        %2662 = vmatprep.subr.mxu0 0.0
        %2663 = vmatpush1.msra.mxu0 0.0
        %2664 = vmatprep.subr.mxu0 0.0
        %2665 = vmatpush1.msra.mxu0 0.0
        %2666 = vmatprep.subr.mxu0 0.0
        %2667 = vmatpush1.msra.mxu0 0.0
        %2668 = vmatprep.subr.mxu0 0.0
        %2669 = vmatpush1.msra.mxu0 0.0
        %2670 = vmatprep.subr.mxu0 0.0
        %2671 = vmatpush1.msra.mxu0 0.0
        %2672 = vmatprep.mubr.f32.mxu0 0.0
        %2673 = vmatmul.mubr.f32.gmra.mrb[0].mxu0 %v2280
        %v2674 = vpop.f32.mrb[0].mxu0
        %v2675 = vadd.f32 0.0, %v2674
        %v2676 = vpop.f32.mrb[0].mxu0
        %2677 = vdwg.mxu0
        %s2678 = scalar_lea.vmem %s5, 32
        %v2679 = vld [vmem:[%s2678] sm:$0xff]
        %v2680 = vld [vmem:[%s2678 + $0x8] sm:$0xff]
        %v2682 = vsel %vm2436, %v2679, 0
        %v2685 = vsel %vm2436, %v2680, 0
        %2687 = vmatprep.subr.mxu0 0.0
        %2688 = vmatpush1.msra.mxu0 %v2675
        %2689 = vmatprep.subr.mxu0 0.0
        %2690 = vmatpush1.msra.mxu0 0.0
        %2691 = vmatprep.subr.mxu0 0.0
        %2692 = vmatpush1.msra.mxu0 0.0
        %2693 = vmatprep.subr.mxu0 0.0
        %2694 = vmatpush1.msra.mxu0 0.0
        %2695 = vmatprep.subr.mxu0 0.0
        %2696 = vmatpush1.msra.mxu0 0.0
        %2697 = vmatprep.subr.mxu0 0.0
        %2698 = vmatpush1.msra.mxu0 0.0
        %2699 = vmatprep.subr.mxu0 0.0
        %2700 = vmatpush1.msra.mxu0 0.0
        %2701 = vmatprep.subr.mxu0 0.0
        %2702 = vmatpush1.msra.mxu0 0.0
        %2703 = vmatprep.subr.mxu0 0.0
        %2704 = vmatpush1.msra.mxu0 0.0
        %2705 = vmatprep.subr.mxu0 0.0
        %2706 = vmatpush1.msra.mxu0 0.0
        %2707 = vmatprep.subr.mxu0 0.0
        %2708 = vmatpush1.msra.mxu0 0.0
        %2709 = vmatprep.subr.mxu0 0.0
        %2710 = vmatpush1.msra.mxu0 0.0
        %2711 = vmatprep.subr.mxu0 0.0
        %2712 = vmatpush1.msra.mxu0 0.0
        %2713 = vmatprep.subr.mxu0 0.0
        %2714 = vmatpush1.msra.mxu0 0.0
        %2715 = vmatprep.subr.mxu0 0.0
        %2716 = vmatpush1.msra.mxu0 0.0
        %2717 = vmatprep.subr.mxu0 0.0
        %2718 = vmatpush1.msra.mxu0 0.0
        %2719 = vmatprep.subr.mxu0 0.0
        %2720 = vmatpush1.msra.mxu0 0.0
        %2721 = vmatprep.subr.mxu0 0.0
        %2722 = vmatpush1.msra.mxu0 0.0
        %2723 = vmatprep.subr.mxu0 0.0
        %2724 = vmatpush1.msra.mxu0 0.0
        %2725 = vmatprep.subr.mxu0 0.0
        %2726 = vmatpush1.msra.mxu0 0.0
        %2727 = vmatprep.subr.mxu0 0.0
        %2728 = vmatpush1.msra.mxu0 0.0
        %2729 = vmatprep.subr.mxu0 0.0
        %2730 = vmatpush1.msra.mxu0 0.0
        %2731 = vmatprep.subr.mxu0 0.0
        %2732 = vmatpush1.msra.mxu0 0.0
        %2733 = vmatprep.subr.mxu0 0.0
        %2734 = vmatpush1.msra.mxu0 0.0
        %2735 = vmatprep.subr.mxu0 0.0
        %2736 = vmatpush1.msra.mxu0 0.0
        %2737 = vmatprep.subr.mxu0 0.0
        %2738 = vmatpush1.msra.mxu0 0.0
        %2739 = vmatprep.subr.mxu0 0.0
        %2740 = vmatpush1.msra.mxu0 0.0
        %2741 = vmatprep.subr.mxu0 0.0
        %2742 = vmatpush1.msra.mxu0 0.0
        %2743 = vmatprep.subr.mxu0 0.0
        %2744 = vmatpush1.msra.mxu0 0.0
        %2745 = vmatprep.subr.mxu0 0.0
        %2746 = vmatpush1.msra.mxu0 0.0
        %2747 = vmatprep.subr.mxu0 0.0
        %2748 = vmatpush1.msra.mxu0 0.0
        %2749 = vmatprep.subr.mxu0 0.0
        %2750 = vmatpush1.msra.mxu0 0.0
        %2751 = vmatprep.mubr.f32.mxu0 0.0
        %2752 = vmatmul.mubr.f32.gmra.mrb[0].mxu0 %v2682
        %v2753 = vpop.f32.mrb[0].mxu0
        %v2754 = vadd.f32 0.0, %v2753
        %v2755 = vpop.f32.mrb[0].mxu0
        %2756 = vmatprep.mubr.f32.mxu0 0.0
        %2757 = vmatmul.mubr.f32.gmra.mrb[0].mxu0 %v2685
        %v2758 = vpop.f32.mrb[0].mxu0
        %v2759 = vadd.f32 0.0, %v2758
        %v2760 = vpop.f32.mrb[0].mxu0
        %2761 = vdwg.mxu0
        %v2762 = vadd.f32 %v2591, %v2754
        %v2763 = vadd.f32 %v2596, %v2759
        %s2764 = scalar_lea.vmem [#allocation4], 192
        %v2765 = vld [vmem:[%s2764] sm:$0xff]
        %v2766 = vld [vmem:[%s2764 + $0x8] sm:$0xff]
        %v2767 = vld [vmem:[%s2764 + $0x10] sm:$0xff]
        %v2768 = vld [vmem:[%s2764 + $0x18] sm:$0xff]
        %v2769 = vld [vmem:[%s2764 + $0x20] sm:$0xff]
        %v2770 = vld [vmem:[%s2764 + $0x28] sm:$0xff]
        %v2771 = vld [vmem:[%s2764 + $0x30] sm:$0xff]
        %v2772 = vld [vmem:[%s2764 + $0x38] sm:$0xff]
        %2773 = vmatprep.subr.mxu0 0.0
        %2774 = vmatpush1.msra.mxu0 %v2765
        %2775 = vmatprep.subr.mxu0 0.0
        %2776 = vmatpush1.msra.mxu0 %v2766
        %2777 = vmatprep.subr.mxu0 0.0
        %2778 = vmatpush1.msra.mxu0 %v2767
        %2779 = vmatprep.subr.mxu0 0.0
        %2780 = vmatpush1.msra.mxu0 %v2768
        %2781 = vmatprep.subr.mxu0 0.0
        %2782 = vmatpush1.msra.mxu0 %v2769
        %2783 = vmatprep.subr.mxu0 0.0
        %2784 = vmatpush1.msra.mxu0 %v2770
        %2785 = vmatprep.subr.mxu0 0.0
        %2786 = vmatpush1.msra.mxu0 %v2771
        %2787 = vmatprep.subr.mxu0 0.0
        %2788 = vmatpush1.msra.mxu0 %v2772
        %2789 = vmatprep.subr.mxu0 0.0
        %2790 = vmatpush1.msra.mxu0 0.0
        %2791 = vmatprep.subr.mxu0 0.0
        %2792 = vmatpush1.msra.mxu0 0.0
        %2793 = vmatprep.subr.mxu0 0.0
        %2794 = vmatpush1.msra.mxu0 0.0
        %2795 = vmatprep.subr.mxu0 0.0
        %2796 = vmatpush1.msra.mxu0 0.0
        %2797 = vmatprep.subr.mxu0 0.0
        %2798 = vmatpush1.msra.mxu0 0.0
        %2799 = vmatprep.subr.mxu0 0.0
        %2800 = vmatpush1.msra.mxu0 0.0
        %2801 = vmatprep.subr.mxu0 0.0
        %2802 = vmatpush1.msra.mxu0 0.0
        %2803 = vmatprep.subr.mxu0 0.0
        %2804 = vmatpush1.msra.mxu0 0.0
        %2805 = vmatprep.subr.mxu0 0.0
        %2806 = vmatpush1.msra.mxu0 0.0
        %2807 = vmatprep.subr.mxu0 0.0
        %2808 = vmatpush1.msra.mxu0 0.0
        %2809 = vmatprep.subr.mxu0 0.0
        %2810 = vmatpush1.msra.mxu0 0.0
        %2811 = vmatprep.subr.mxu0 0.0
        %2812 = vmatpush1.msra.mxu0 0.0
        %2813 = vmatprep.subr.mxu0 0.0
        %2814 = vmatpush1.msra.mxu0 0.0
        %2815 = vmatprep.subr.mxu0 0.0
        %2816 = vmatpush1.msra.mxu0 0.0
        %2817 = vmatprep.subr.mxu0 0.0
        %2818 = vmatpush1.msra.mxu0 0.0
        %2819 = vmatprep.subr.mxu0 0.0
        %2820 = vmatpush1.msra.mxu0 0.0
        %2821 = vmatprep.subr.mxu0 0.0
        %2822 = vmatpush1.msra.mxu0 0.0
        %2823 = vmatprep.subr.mxu0 0.0
        %2824 = vmatpush1.msra.mxu0 0.0
        %2825 = vmatprep.subr.mxu0 0.0
        %2826 = vmatpush1.msra.mxu0 0.0
        %2827 = vmatprep.subr.mxu0 0.0
        %2828 = vmatpush1.msra.mxu0 0.0
        %2829 = vmatprep.subr.mxu0 0.0
        %2830 = vmatpush1.msra.mxu0 0.0
        %2831 = vmatprep.subr.mxu0 0.0
        %2832 = vmatpush1.msra.mxu0 0.0
        %2833 = vmatprep.subr.mxu0 0.0
        %2834 = vmatpush1.msra.mxu0 0.0
        %2835 = vmatprep.subr.mxu0 0.0
        %2836 = vmatpush1.msra.mxu0 0.0
        %2837 = vmatprep.mubr.f32.mxu0 0.0
        %2838 = vmatmul.mubr.f32.gmra.mrb[0].mxu0 %v2280
        %v2839 = vpop.f32.mrb[0].mxu0
        %v2840 = vadd.f32 0.0, %v2839
        %v2841 = vpop.f32.mrb[0].mxu0
        %2842 = vdwg.mxu0
        %s2843 = scalar_lea.vmem %s5, 48
        %v2844 = vld [vmem:[%s2843] sm:$0xff]
        %v2845 = vld [vmem:[%s2843 + $0x8] sm:$0xff]
        %v2847 = vsel %vm2436, %v2844, 0
        %v2850 = vsel %vm2436, %v2845, 0
        %2852 = vmatprep.subr.mxu0 0.0
        %2853 = vmatpush1.msra.mxu0 %v2840
        %2854 = vmatprep.subr.mxu0 0.0
        %2855 = vmatpush1.msra.mxu0 0.0
        %2856 = vmatprep.subr.mxu0 0.0
        %2857 = vmatpush1.msra.mxu0 0.0
        %2858 = vmatprep.subr.mxu0 0.0
        %2859 = vmatpush1.msra.mxu0 0.0
        %2860 = vmatprep.subr.mxu0 0.0
        %2861 = vmatpush1.msra.mxu0 0.0
        %2862 = vmatprep.subr.mxu0 0.0
        %2863 = vmatpush1.msra.mxu0 0.0
        %2864 = vmatprep.subr.mxu0 0.0
        %2865 = vmatpush1.msra.mxu0 0.0
        %2866 = vmatprep.subr.mxu0 0.0
        %2867 = vmatpush1.msra.mxu0 0.0
        %2868 = vmatprep.subr.mxu0 0.0
        %2869 = vmatpush1.msra.mxu0 0.0
        %2870 = vmatprep.subr.mxu0 0.0
        %2871 = vmatpush1.msra.mxu0 0.0
        %2872 = vmatprep.subr.mxu0 0.0
        %2873 = vmatpush1.msra.mxu0 0.0
        %2874 = vmatprep.subr.mxu0 0.0
        %2875 = vmatpush1.msra.mxu0 0.0
        %2876 = vmatprep.subr.mxu0 0.0
        %2877 = vmatpush1.msra.mxu0 0.0
        %2878 = vmatprep.subr.mxu0 0.0
        %2879 = vmatpush1.msra.mxu0 0.0
        %2880 = vmatprep.subr.mxu0 0.0
        %2881 = vmatpush1.msra.mxu0 0.0
        %2882 = vmatprep.subr.mxu0 0.0
        %2883 = vmatpush1.msra.mxu0 0.0
        %2884 = vmatprep.subr.mxu0 0.0
        %2885 = vmatpush1.msra.mxu0 0.0
        %2886 = vmatprep.subr.mxu0 0.0
        %2887 = vmatpush1.msra.mxu0 0.0
        %2888 = vmatprep.subr.mxu0 0.0
        %2889 = vmatpush1.msra.mxu0 0.0
        %2890 = vmatprep.subr.mxu0 0.0
        %2891 = vmatpush1.msra.mxu0 0.0
        %2892 = vmatprep.subr.mxu0 0.0
        %2893 = vmatpush1.msra.mxu0 0.0
        %2894 = vmatprep.subr.mxu0 0.0
        %2895 = vmatpush1.msra.mxu0 0.0
        %2896 = vmatprep.subr.mxu0 0.0
        %2897 = vmatpush1.msra.mxu0 0.0
        %2898 = vmatprep.subr.mxu0 0.0
        %2899 = vmatpush1.msra.mxu0 0.0
        %2900 = vmatprep.subr.mxu0 0.0
        %2901 = vmatpush1.msra.mxu0 0.0
        %2902 = vmatprep.subr.mxu0 0.0
        %2903 = vmatpush1.msra.mxu0 0.0
        %2904 = vmatprep.subr.mxu0 0.0
        %2905 = vmatpush1.msra.mxu0 0.0
        %2906 = vmatprep.subr.mxu0 0.0
        %2907 = vmatpush1.msra.mxu0 0.0
        %2908 = vmatprep.subr.mxu0 0.0
        %2909 = vmatpush1.msra.mxu0 0.0
        %2910 = vmatprep.subr.mxu0 0.0
        %2911 = vmatpush1.msra.mxu0 0.0
        %2912 = vmatprep.subr.mxu0 0.0
        %2913 = vmatpush1.msra.mxu0 0.0
        %2914 = vmatprep.subr.mxu0 0.0
        %2915 = vmatpush1.msra.mxu0 0.0
        %2916 = vmatprep.mubr.f32.mxu0 0.0
        %2917 = vmatmul.mubr.f32.gmra.mrb[0].mxu0 %v2847
        %v2918 = vpop.f32.mrb[0].mxu0
        %v2919 = vadd.f32 0.0, %v2918
        %v2920 = vpop.f32.mrb[0].mxu0
        %2921 = vmatprep.mubr.f32.mxu0 0.0
        %2922 = vmatmul.mubr.f32.gmra.mrb[0].mxu0 %v2850
        %v2923 = vpop.f32.mrb[0].mxu0
        %v2924 = vadd.f32 0.0, %v2923
        %v2925 = vpop.f32.mrb[0].mxu0
        %2926 = vdwg.mxu0
        %v2927 = vadd.f32 %v2762, %v2919
        %v2928 = vadd.f32 %v2763, %v2924
        %s2929 = scalar_lea.vmem [#allocation4], 256
        %v2930 = vld [vmem:[%s2929] sm:$0xff]
        %v2931 = vld [vmem:[%s2929 + $0x8] sm:$0xff]
        %v2932 = vld [vmem:[%s2929 + $0x10] sm:$0xff]
        %v2933 = vld [vmem:[%s2929 + $0x18] sm:$0xff]
        %v2934 = vld [vmem:[%s2929 + $0x20] sm:$0xff]
        %v2935 = vld [vmem:[%s2929 + $0x28] sm:$0xff]
        %v2936 = vld [vmem:[%s2929 + $0x30] sm:$0xff]
        %v2937 = vld [vmem:[%s2929 + $0x38] sm:$0xff]
        %2938 = vmatprep.subr.mxu0 0.0
        %2939 = vmatpush1.msra.mxu0 %v2930
        %2940 = vmatprep.subr.mxu0 0.0
        %2941 = vmatpush1.msra.mxu0 %v2931
        %2942 = vmatprep.subr.mxu0 0.0
        %2943 = vmatpush1.msra.mxu0 %v2932
        %2944 = vmatprep.subr.mxu0 0.0
        %2945 = vmatpush1.msra.mxu0 %v2933
        %2946 = vmatprep.subr.mxu0 0.0
        %2947 = vmatpush1.msra.mxu0 %v2934
        %2948 = vmatprep.subr.mxu0 0.0
        %2949 = vmatpush1.msra.mxu0 %v2935
        %2950 = vmatprep.subr.mxu0 0.0
        %2951 = vmatpush1.msra.mxu0 %v2936
        %2952 = vmatprep.subr.mxu0 0.0
        %2953 = vmatpush1.msra.mxu0 %v2937
        %2954 = vmatprep.subr.mxu0 0.0
        %2955 = vmatpush1.msra.mxu0 0.0
        %2956 = vmatprep.subr.mxu0 0.0
        %2957 = vmatpush1.msra.mxu0 0.0
        %2958 = vmatprep.subr.mxu0 0.0
        %2959 = vmatpush1.msra.mxu0 0.0
        %2960 = vmatprep.subr.mxu0 0.0
        %2961 = vmatpush1.msra.mxu0 0.0
        %2962 = vmatprep.subr.mxu0 0.0
        %2963 = vmatpush1.msra.mxu0 0.0
        %2964 = vmatprep.subr.mxu0 0.0
        %2965 = vmatpush1.msra.mxu0 0.0
        %2966 = vmatprep.subr.mxu0 0.0
        %2967 = vmatpush1.msra.mxu0 0.0
        %2968 = vmatprep.subr.mxu0 0.0
        %2969 = vmatpush1.msra.mxu0 0.0
        %2970 = vmatprep.subr.mxu0 0.0
        %2971 = vmatpush1.msra.mxu0 0.0
        %2972 = vmatprep.subr.mxu0 0.0
        %2973 = vmatpush1.msra.mxu0 0.0
        %2974 = vmatprep.subr.mxu0 0.0
        %2975 = vmatpush1.msra.mxu0 0.0
        %2976 = vmatprep.subr.mxu0 0.0
        %2977 = vmatpush1.msra.mxu0 0.0
        %2978 = vmatprep.subr.mxu0 0.0
        %2979 = vmatpush1.msra.mxu0 0.0
        %2980 = vmatprep.subr.mxu0 0.0
        %2981 = vmatpush1.msra.mxu0 0.0
        %2982 = vmatprep.subr.mxu0 0.0
        %2983 = vmatpush1.msra.mxu0 0.0
        %2984 = vmatprep.subr.mxu0 0.0
        %2985 = vmatpush1.msra.mxu0 0.0
        %2986 = vmatprep.subr.mxu0 0.0
        %2987 = vmatpush1.msra.mxu0 0.0
        %2988 = vmatprep.subr.mxu0 0.0
        %2989 = vmatpush1.msra.mxu0 0.0
        %2990 = vmatprep.subr.mxu0 0.0
        %2991 = vmatpush1.msra.mxu0 0.0
        %2992 = vmatprep.subr.mxu0 0.0
        %2993 = vmatpush1.msra.mxu0 0.0
        %2994 = vmatprep.subr.mxu0 0.0
        %2995 = vmatpush1.msra.mxu0 0.0
        %2996 = vmatprep.subr.mxu0 0.0
        %2997 = vmatpush1.msra.mxu0 0.0
        %2998 = vmatprep.subr.mxu0 0.0
        %2999 = vmatpush1.msra.mxu0 0.0
        %3000 = vmatprep.subr.mxu0 0.0
        %3001 = vmatpush1.msra.mxu0 0.0
        %3002 = vmatprep.mubr.f32.mxu0 0.0
        %3003 = vmatmul.mubr.f32.gmra.mrb[0].mxu0 %v2280
        %v3004 = vpop.f32.mrb[0].mxu0
        %v3005 = vadd.f32 0.0, %v3004
        %v3006 = vpop.f32.mrb[0].mxu0
        %3007 = vdwg.mxu0
        %s3008 = scalar_lea.vmem %s5, 64
        %v3009 = vld [vmem:[%s3008] sm:$0xff]
        %v3010 = vld [vmem:[%s3008 + $0x8] sm:$0xff]
        %v3012 = vsel %vm2436, %v3009, 0
        %v3015 = vsel %vm2436, %v3010, 0
        %3017 = vmatprep.subr.mxu0 0.0
        %3018 = vmatpush1.msra.mxu0 %v3005
        %3019 = vmatprep.subr.mxu0 0.0
        %3020 = vmatpush1.msra.mxu0 0.0
        %3021 = vmatprep.subr.mxu0 0.0
        %3022 = vmatpush1.msra.mxu0 0.0
        %3023 = vmatprep.subr.mxu0 0.0
        %3024 = vmatpush1.msra.mxu0 0.0
        %3025 = vmatprep.subr.mxu0 0.0
        %3026 = vmatpush1.msra.mxu0 0.0
        %3027 = vmatprep.subr.mxu0 0.0
        %3028 = vmatpush1.msra.mxu0 0.0
        %3029 = vmatprep.subr.mxu0 0.0
        %3030 = vmatpush1.msra.mxu0 0.0
        %3031 = vmatprep.subr.mxu0 0.0
        %3032 = vmatpush1.msra.mxu0 0.0
        %3033 = vmatprep.subr.mxu0 0.0
        %3034 = vmatpush1.msra.mxu0 0.0
        %3035 = vmatprep.subr.mxu0 0.0
        %3036 = vmatpush1.msra.mxu0 0.0
        %3037 = vmatprep.subr.mxu0 0.0
        %3038 = vmatpush1.msra.mxu0 0.0
        %3039 = vmatprep.subr.mxu0 0.0
        %3040 = vmatpush1.msra.mxu0 0.0
        %3041 = vmatprep.subr.mxu0 0.0
        %3042 = vmatpush1.msra.mxu0 0.0
        %3043 = vmatprep.subr.mxu0 0.0
        %3044 = vmatpush1.msra.mxu0 0.0
        %3045 = vmatprep.subr.mxu0 0.0
        %3046 = vmatpush1.msra.mxu0 0.0
        %3047 = vmatprep.subr.mxu0 0.0
        %3048 = vmatpush1.msra.mxu0 0.0
        %3049 = vmatprep.subr.mxu0 0.0
        %3050 = vmatpush1.msra.mxu0 0.0
        %3051 = vmatprep.subr.mxu0 0.0
        %3052 = vmatpush1.msra.mxu0 0.0
        %3053 = vmatprep.subr.mxu0 0.0
        %3054 = vmatpush1.msra.mxu0 0.0
        %3055 = vmatprep.subr.mxu0 0.0
        %3056 = vmatpush1.msra.mxu0 0.0
        %3057 = vmatprep.subr.mxu0 0.0
        %3058 = vmatpush1.msra.mxu0 0.0
        %3059 = vmatprep.subr.mxu0 0.0
        %3060 = vmatpush1.msra.mxu0 0.0
        %3061 = vmatprep.subr.mxu0 0.0
        %3062 = vmatpush1.msra.mxu0 0.0
        %3063 = vmatprep.subr.mxu0 0.0
        %3064 = vmatpush1.msra.mxu0 0.0
        %3065 = vmatprep.subr.mxu0 0.0
        %3066 = vmatpush1.msra.mxu0 0.0
        %3067 = vmatprep.subr.mxu0 0.0
        %3068 = vmatpush1.msra.mxu0 0.0
        %3069 = vmatprep.subr.mxu0 0.0
        %3070 = vmatpush1.msra.mxu0 0.0
        %3071 = vmatprep.subr.mxu0 0.0
        %3072 = vmatpush1.msra.mxu0 0.0
        %3073 = vmatprep.subr.mxu0 0.0
        %3074 = vmatpush1.msra.mxu0 0.0
        %3075 = vmatprep.subr.mxu0 0.0
        %3076 = vmatpush1.msra.mxu0 0.0
        %3077 = vmatprep.subr.mxu0 0.0
        %3078 = vmatpush1.msra.mxu0 0.0
        %3079 = vmatprep.subr.mxu0 0.0
        %3080 = vmatpush1.msra.mxu0 0.0
        %3081 = vmatprep.mubr.f32.mxu0 0.0
        %3082 = vmatmul.mubr.f32.gmra.mrb[0].mxu0 %v3012
        %v3083 = vpop.f32.mrb[0].mxu0
        %v3084 = vadd.f32 0.0, %v3083
        %v3085 = vpop.f32.mrb[0].mxu0
        %3086 = vmatprep.mubr.f32.mxu0 0.0
        %3087 = vmatmul.mubr.f32.gmra.mrb[0].mxu0 %v3015
        %v3088 = vpop.f32.mrb[0].mxu0
        %v3089 = vadd.f32 0.0, %v3088
        %v3090 = vpop.f32.mrb[0].mxu0
        %3091 = vdwg.mxu0
        %v3092 = vadd.f32 %v2927, %v3084
        %v3093 = vadd.f32 %v2928, %v3089
        %s3094 = scalar_lea.vmem [#allocation4], 320
        %v3095 = vld [vmem:[%s3094] sm:$0xff]
        %v3096 = vld [vmem:[%s3094 + $0x8] sm:$0xff]
        %v3097 = vld [vmem:[%s3094 + $0x10] sm:$0xff]
        %v3098 = vld [vmem:[%s3094 + $0x18] sm:$0xff]
        %v3099 = vld [vmem:[%s3094 + $0x20] sm:$0xff]
        %v3100 = vld [vmem:[%s3094 + $0x28] sm:$0xff]
        %v3101 = vld [vmem:[%s3094 + $0x30] sm:$0xff]
        %v3102 = vld [vmem:[%s3094 + $0x38] sm:$0xff]
        %3103 = vmatprep.subr.mxu0 0.0
        %3104 = vmatpush1.msra.mxu0 %v3095
        %3105 = vmatprep.subr.mxu0 0.0
        %3106 = vmatpush1.msra.mxu0 %v3096
        %3107 = vmatprep.subr.mxu0 0.0
        %3108 = vmatpush1.msra.mxu0 %v3097
        %3109 = vmatprep.subr.mxu0 0.0
        %3110 = vmatpush1.msra.mxu0 %v3098
        %3111 = vmatprep.subr.mxu0 0.0
        %3112 = vmatpush1.msra.mxu0 %v3099
        %3113 = vmatprep.subr.mxu0 0.0
        %3114 = vmatpush1.msra.mxu0 %v3100
        %3115 = vmatprep.subr.mxu0 0.0
        %3116 = vmatpush1.msra.mxu0 %v3101
        %3117 = vmatprep.subr.mxu0 0.0
        %3118 = vmatpush1.msra.mxu0 %v3102
        %3119 = vmatprep.subr.mxu0 0.0
        %3120 = vmatpush1.msra.mxu0 0.0
        %3121 = vmatprep.subr.mxu0 0.0
        %3122 = vmatpush1.msra.mxu0 0.0
        %3123 = vmatprep.subr.mxu0 0.0
        %3124 = vmatpush1.msra.mxu0 0.0
        %3125 = vmatprep.subr.mxu0 0.0
        %3126 = vmatpush1.msra.mxu0 0.0
        %3127 = vmatprep.subr.mxu0 0.0
        %3128 = vmatpush1.msra.mxu0 0.0
        %3129 = vmatprep.subr.mxu0 0.0
        %3130 = vmatpush1.msra.mxu0 0.0
        %3131 = vmatprep.subr.mxu0 0.0
        %3132 = vmatpush1.msra.mxu0 0.0
        %3133 = vmatprep.subr.mxu0 0.0
        %3134 = vmatpush1.msra.mxu0 0.0
        %3135 = vmatprep.subr.mxu0 0.0
        %3136 = vmatpush1.msra.mxu0 0.0
        %3137 = vmatprep.subr.mxu0 0.0
        %3138 = vmatpush1.msra.mxu0 0.0
        %3139 = vmatprep.subr.mxu0 0.0
        %3140 = vmatpush1.msra.mxu0 0.0
        %3141 = vmatprep.subr.mxu0 0.0
        %3142 = vmatpush1.msra.mxu0 0.0
        %3143 = vmatprep.subr.mxu0 0.0
        %3144 = vmatpush1.msra.mxu0 0.0
        %3145 = vmatprep.subr.mxu0 0.0
        %3146 = vmatpush1.msra.mxu0 0.0
        %3147 = vmatprep.subr.mxu0 0.0
        %3148 = vmatpush1.msra.mxu0 0.0
        %3149 = vmatprep.subr.mxu0 0.0
        %3150 = vmatpush1.msra.mxu0 0.0
        %3151 = vmatprep.subr.mxu0 0.0
        %3152 = vmatpush1.msra.mxu0 0.0
        %3153 = vmatprep.subr.mxu0 0.0
        %3154 = vmatpush1.msra.mxu0 0.0
        %3155 = vmatprep.subr.mxu0 0.0
        %3156 = vmatpush1.msra.mxu0 0.0
        %3157 = vmatprep.subr.mxu0 0.0
        %3158 = vmatpush1.msra.mxu0 0.0
        %3159 = vmatprep.subr.mxu0 0.0
        %3160 = vmatpush1.msra.mxu0 0.0
        %3161 = vmatprep.subr.mxu0 0.0
        %3162 = vmatpush1.msra.mxu0 0.0
        %3163 = vmatprep.subr.mxu0 0.0
        %3164 = vmatpush1.msra.mxu0 0.0
        %3165 = vmatprep.subr.mxu0 0.0
        %3166 = vmatpush1.msra.mxu0 0.0
        %3167 = vmatprep.mubr.f32.mxu0 0.0
        %3168 = vmatmul.mubr.f32.gmra.mrb[0].mxu0 %v2280
        %v3169 = vpop.f32.mrb[0].mxu0
        %v3170 = vadd.f32 0.0, %v3169
        %v3171 = vpop.f32.mrb[0].mxu0
        %3172 = vdwg.mxu0
        %s3173 = scalar_lea.vmem %s5, 80
        %v3174 = vld [vmem:[%s3173] sm:$0xff]
        %v3175 = vld [vmem:[%s3173 + $0x8] sm:$0xff]
        %v3177 = vsel %vm2436, %v3174, 0
        %v3180 = vsel %vm2436, %v3175, 0
        %3182 = vmatprep.subr.mxu0 0.0
        %3183 = vmatpush1.msra.mxu0 %v3170
        %3184 = vmatprep.subr.mxu0 0.0
        %3185 = vmatpush1.msra.mxu0 0.0
        %3186 = vmatprep.subr.mxu0 0.0
        %3187 = vmatpush1.msra.mxu0 0.0
        %3188 = vmatprep.subr.mxu0 0.0
        %3189 = vmatpush1.msra.mxu0 0.0
        %3190 = vmatprep.subr.mxu0 0.0
        %3191 = vmatpush1.msra.mxu0 0.0
        %3192 = vmatprep.subr.mxu0 0.0
        %3193 = vmatpush1.msra.mxu0 0.0
        %3194 = vmatprep.subr.mxu0 0.0
        %3195 = vmatpush1.msra.mxu0 0.0
        %3196 = vmatprep.subr.mxu0 0.0
        %3197 = vmatpush1.msra.mxu0 0.0
        %3198 = vmatprep.subr.mxu0 0.0
        %3199 = vmatpush1.msra.mxu0 0.0
        %3200 = vmatprep.subr.mxu0 0.0
        %3201 = vmatpush1.msra.mxu0 0.0
        %3202 = vmatprep.subr.mxu0 0.0
        %3203 = vmatpush1.msra.mxu0 0.0
        %3204 = vmatprep.subr.mxu0 0.0
        %3205 = vmatpush1.msra.mxu0 0.0
        %3206 = vmatprep.subr.mxu0 0.0
        %3207 = vmatpush1.msra.mxu0 0.0
        %3208 = vmatprep.subr.mxu0 0.0
        %3209 = vmatpush1.msra.mxu0 0.0
        %3210 = vmatprep.subr.mxu0 0.0
        %3211 = vmatpush1.msra.mxu0 0.0
        %3212 = vmatprep.subr.mxu0 0.0
        %3213 = vmatpush1.msra.mxu0 0.0
        %3214 = vmatprep.subr.mxu0 0.0
        %3215 = vmatpush1.msra.mxu0 0.0
        %3216 = vmatprep.subr.mxu0 0.0
        %3217 = vmatpush1.msra.mxu0 0.0
        %3218 = vmatprep.subr.mxu0 0.0
        %3219 = vmatpush1.msra.mxu0 0.0
        %3220 = vmatprep.subr.mxu0 0.0
        %3221 = vmatpush1.msra.mxu0 0.0
        %3222 = vmatprep.subr.mxu0 0.0
        %3223 = vmatpush1.msra.mxu0 0.0
        %3224 = vmatprep.subr.mxu0 0.0
        %3225 = vmatpush1.msra.mxu0 0.0
        %3226 = vmatprep.subr.mxu0 0.0
        %3227 = vmatpush1.msra.mxu0 0.0
        %3228 = vmatprep.subr.mxu0 0.0
        %3229 = vmatpush1.msra.mxu0 0.0
        %3230 = vmatprep.subr.mxu0 0.0
        %3231 = vmatpush1.msra.mxu0 0.0
        %3232 = vmatprep.subr.mxu0 0.0
        %3233 = vmatpush1.msra.mxu0 0.0
        %3234 = vmatprep.subr.mxu0 0.0
        %3235 = vmatpush1.msra.mxu0 0.0
        %3236 = vmatprep.subr.mxu0 0.0
        %3237 = vmatpush1.msra.mxu0 0.0
        %3238 = vmatprep.subr.mxu0 0.0
        %3239 = vmatpush1.msra.mxu0 0.0
        %3240 = vmatprep.subr.mxu0 0.0
        %3241 = vmatpush1.msra.mxu0 0.0
        %3242 = vmatprep.subr.mxu0 0.0
        %3243 = vmatpush1.msra.mxu0 0.0
        %3244 = vmatprep.subr.mxu0 0.0
        %3245 = vmatpush1.msra.mxu0 0.0
        %3246 = vmatprep.mubr.f32.mxu0 0.0
        %3247 = vmatmul.mubr.f32.gmra.mrb[0].mxu0 %v3177
        %v3248 = vpop.f32.mrb[0].mxu0
        %v3249 = vadd.f32 0.0, %v3248
        %v3250 = vpop.f32.mrb[0].mxu0
        %3251 = vmatprep.mubr.f32.mxu0 0.0
        %3252 = vmatmul.mubr.f32.gmra.mrb[0].mxu0 %v3180
        %v3253 = vpop.f32.mrb[0].mxu0
        %v3254 = vadd.f32 0.0, %v3253
        %v3255 = vpop.f32.mrb[0].mxu0
        %3256 = vdwg.mxu0
        %v3257 = vadd.f32 %v3092, %v3249
        %v3258 = vadd.f32 %v3093, %v3254
        %s3259 = scalar_lea.vmem [#allocation4], 384
        %v3260 = vld [vmem:[%s3259] sm:$0xff]
        %v3261 = vld [vmem:[%s3259 + $0x8] sm:$0xff]
        %v3262 = vld [vmem:[%s3259 + $0x10] sm:$0xff]
        %v3263 = vld [vmem:[%s3259 + $0x18] sm:$0xff]
        %v3264 = vld [vmem:[%s3259 + $0x20] sm:$0xff]
        %v3265 = vld [vmem:[%s3259 + $0x28] sm:$0xff]
        %v3266 = vld [vmem:[%s3259 + $0x30] sm:$0xff]
        %v3267 = vld [vmem:[%s3259 + $0x38] sm:$0xff]
        %3268 = vmatprep.subr.mxu0 0.0
        %3269 = vmatpush1.msra.mxu0 %v3260
        %3270 = vmatprep.subr.mxu0 0.0
        %3271 = vmatpush1.msra.mxu0 %v3261
        %3272 = vmatprep.subr.mxu0 0.0
        %3273 = vmatpush1.msra.mxu0 %v3262
        %3274 = vmatprep.subr.mxu0 0.0
        %3275 = vmatpush1.msra.mxu0 %v3263
        %3276 = vmatprep.subr.mxu0 0.0
        %3277 = vmatpush1.msra.mxu0 %v3264
        %3278 = vmatprep.subr.mxu0 0.0
        %3279 = vmatpush1.msra.mxu0 %v3265
        %3280 = vmatprep.subr.mxu0 0.0
        %3281 = vmatpush1.msra.mxu0 %v3266
        %3282 = vmatprep.subr.mxu0 0.0
        %3283 = vmatpush1.msra.mxu0 %v3267
        %3284 = vmatprep.subr.mxu0 0.0
        %3285 = vmatpush1.msra.mxu0 0.0
        %3286 = vmatprep.subr.mxu0 0.0
        %3287 = vmatpush1.msra.mxu0 0.0
        %3288 = vmatprep.subr.mxu0 0.0
        %3289 = vmatpush1.msra.mxu0 0.0
        %3290 = vmatprep.subr.mxu0 0.0
        %3291 = vmatpush1.msra.mxu0 0.0
        %3292 = vmatprep.subr.mxu0 0.0
        %3293 = vmatpush1.msra.mxu0 0.0
        %3294 = vmatprep.subr.mxu0 0.0
        %3295 = vmatpush1.msra.mxu0 0.0
        %3296 = vmatprep.subr.mxu0 0.0
        %3297 = vmatpush1.msra.mxu0 0.0
        %3298 = vmatprep.subr.mxu0 0.0
        %3299 = vmatpush1.msra.mxu0 0.0
        %3300 = vmatprep.subr.mxu0 0.0
        %3301 = vmatpush1.msra.mxu0 0.0
        %3302 = vmatprep.subr.mxu0 0.0
        %3303 = vmatpush1.msra.mxu0 0.0
        %3304 = vmatprep.subr.mxu0 0.0
        %3305 = vmatpush1.msra.mxu0 0.0
        %3306 = vmatprep.subr.mxu0 0.0
        %3307 = vmatpush1.msra.mxu0 0.0
        %3308 = vmatprep.subr.mxu0 0.0
        %3309 = vmatpush1.msra.mxu0 0.0
        %3310 = vmatprep.subr.mxu0 0.0
        %3311 = vmatpush1.msra.mxu0 0.0
        %3312 = vmatprep.subr.mxu0 0.0
        %3313 = vmatpush1.msra.mxu0 0.0
        %3314 = vmatprep.subr.mxu0 0.0
        %3315 = vmatpush1.msra.mxu0 0.0
        %3316 = vmatprep.subr.mxu0 0.0
        %3317 = vmatpush1.msra.mxu0 0.0
        %3318 = vmatprep.subr.mxu0 0.0
        %3319 = vmatpush1.msra.mxu0 0.0
        %3320 = vmatprep.subr.mxu0 0.0
        %3321 = vmatpush1.msra.mxu0 0.0
        %3322 = vmatprep.subr.mxu0 0.0
        %3323 = vmatpush1.msra.mxu0 0.0
        %3324 = vmatprep.subr.mxu0 0.0
        %3325 = vmatpush1.msra.mxu0 0.0
        %3326 = vmatprep.subr.mxu0 0.0
        %3327 = vmatpush1.msra.mxu0 0.0
        %3328 = vmatprep.subr.mxu0 0.0
        %3329 = vmatpush1.msra.mxu0 0.0
        %3330 = vmatprep.subr.mxu0 0.0
        %3331 = vmatpush1.msra.mxu0 0.0
        %3332 = vmatprep.mubr.f32.mxu0 0.0
        %3333 = vmatmul.mubr.f32.gmra.mrb[0].mxu0 %v2280
        %v3334 = vpop.f32.mrb[0].mxu0
        %v3335 = vadd.f32 0.0, %v3334
        %v3336 = vpop.f32.mrb[0].mxu0
        %3337 = vdwg.mxu0
        %s3338 = scalar_lea.vmem %s5, 96
        %v3339 = vld [vmem:[%s3338] sm:$0xff]
        %v3340 = vld [vmem:[%s3338 + $0x8] sm:$0xff]
        %v3342 = vsel %vm2436, %v3339, 0
        %v3345 = vsel %vm2436, %v3340, 0
        %3347 = vmatprep.subr.mxu0 0.0
        %3348 = vmatpush1.msra.mxu0 %v3335
        %3349 = vmatprep.subr.mxu0 0.0
        %3350 = vmatpush1.msra.mxu0 0.0
        %3351 = vmatprep.subr.mxu0 0.0
        %3352 = vmatpush1.msra.mxu0 0.0
        %3353 = vmatprep.subr.mxu0 0.0
        %3354 = vmatpush1.msra.mxu0 0.0
        %3355 = vmatprep.subr.mxu0 0.0
        %3356 = vmatpush1.msra.mxu0 0.0
        %3357 = vmatprep.subr.mxu0 0.0
        %3358 = vmatpush1.msra.mxu0 0.0
        %3359 = vmatprep.subr.mxu0 0.0
        %3360 = vmatpush1.msra.mxu0 0.0
        %3361 = vmatprep.subr.mxu0 0.0
        %3362 = vmatpush1.msra.mxu0 0.0
        %3363 = vmatprep.subr.mxu0 0.0
        %3364 = vmatpush1.msra.mxu0 0.0
        %3365 = vmatprep.subr.mxu0 0.0
        %3366 = vmatpush1.msra.mxu0 0.0
        %3367 = vmatprep.subr.mxu0 0.0
        %3368 = vmatpush1.msra.mxu0 0.0
        %3369 = vmatprep.subr.mxu0 0.0
        %3370 = vmatpush1.msra.mxu0 0.0
        %3371 = vmatprep.subr.mxu0 0.0
        %3372 = vmatpush1.msra.mxu0 0.0
        %3373 = vmatprep.subr.mxu0 0.0
        %3374 = vmatpush1.msra.mxu0 0.0
        %3375 = vmatprep.subr.mxu0 0.0
        %3376 = vmatpush1.msra.mxu0 0.0
        %3377 = vmatprep.subr.mxu0 0.0
        %3378 = vmatpush1.msra.mxu0 0.0
        %3379 = vmatprep.subr.mxu0 0.0
        %3380 = vmatpush1.msra.mxu0 0.0
        %3381 = vmatprep.subr.mxu0 0.0
        %3382 = vmatpush1.msra.mxu0 0.0
        %3383 = vmatprep.subr.mxu0 0.0
        %3384 = vmatpush1.msra.mxu0 0.0
        %3385 = vmatprep.subr.mxu0 0.0
        %3386 = vmatpush1.msra.mxu0 0.0
        %3387 = vmatprep.subr.mxu0 0.0
        %3388 = vmatpush1.msra.mxu0 0.0
        %3389 = vmatprep.subr.mxu0 0.0
        %3390 = vmatpush1.msra.mxu0 0.0
        %3391 = vmatprep.subr.mxu0 0.0
        %3392 = vmatpush1.msra.mxu0 0.0
        %3393 = vmatprep.subr.mxu0 0.0
        %3394 = vmatpush1.msra.mxu0 0.0
        %3395 = vmatprep.subr.mxu0 0.0
        %3396 = vmatpush1.msra.mxu0 0.0
        %3397 = vmatprep.subr.mxu0 0.0
        %3398 = vmatpush1.msra.mxu0 0.0
        %3399 = vmatprep.subr.mxu0 0.0
        %3400 = vmatpush1.msra.mxu0 0.0
        %3401 = vmatprep.subr.mxu0 0.0
        %3402 = vmatpush1.msra.mxu0 0.0
        %3403 = vmatprep.subr.mxu0 0.0
        %3404 = vmatpush1.msra.mxu0 0.0
        %3405 = vmatprep.subr.mxu0 0.0
        %3406 = vmatpush1.msra.mxu0 0.0
        %3407 = vmatprep.subr.mxu0 0.0
        %3408 = vmatpush1.msra.mxu0 0.0
        %3409 = vmatprep.subr.mxu0 0.0
        %3410 = vmatpush1.msra.mxu0 0.0
        %3411 = vmatprep.mubr.f32.mxu0 0.0
        %3412 = vmatmul.mubr.f32.gmra.mrb[0].mxu0 %v3342
        %v3413 = vpop.f32.mrb[0].mxu0
        %v3414 = vadd.f32 0.0, %v3413
        %v3415 = vpop.f32.mrb[0].mxu0
        %3416 = vmatprep.mubr.f32.mxu0 0.0
        %3417 = vmatmul.mubr.f32.gmra.mrb[0].mxu0 %v3345
        %v3418 = vpop.f32.mrb[0].mxu0
        %v3419 = vadd.f32 0.0, %v3418
        %v3420 = vpop.f32.mrb[0].mxu0
        %3421 = vdwg.mxu0
        %v3422 = vadd.f32 %v3257, %v3414
        %v3423 = vadd.f32 %v3258, %v3419
        %s3424 = scalar_lea.vmem [#allocation4], 448
        %v3425 = vld [vmem:[%s3424] sm:$0xff]
        %v3426 = vld [vmem:[%s3424 + $0x8] sm:$0xff]
        %v3427 = vld [vmem:[%s3424 + $0x10] sm:$0xff]
        %v3428 = vld [vmem:[%s3424 + $0x18] sm:$0xff]
        %v3429 = vld [vmem:[%s3424 + $0x20] sm:$0xff]
        %v3430 = vld [vmem:[%s3424 + $0x28] sm:$0xff]
        %v3431 = vld [vmem:[%s3424 + $0x30] sm:$0xff]
        %v3432 = vld [vmem:[%s3424 + $0x38] sm:$0xff]
        %3433 = vmatprep.subr.mxu0 0.0
        %3434 = vmatpush1.msra.mxu0 %v3425
        %3435 = vmatprep.subr.mxu0 0.0
        %3436 = vmatpush1.msra.mxu0 %v3426
        %3437 = vmatprep.subr.mxu0 0.0
        %3438 = vmatpush1.msra.mxu0 %v3427
        %3439 = vmatprep.subr.mxu0 0.0
        %3440 = vmatpush1.msra.mxu0 %v3428
        %3441 = vmatprep.subr.mxu0 0.0
        %3442 = vmatpush1.msra.mxu0 %v3429
        %3443 = vmatprep.subr.mxu0 0.0
        %3444 = vmatpush1.msra.mxu0 %v3430
        %3445 = vmatprep.subr.mxu0 0.0
        %3446 = vmatpush1.msra.mxu0 %v3431
        %3447 = vmatprep.subr.mxu0 0.0
        %3448 = vmatpush1.msra.mxu0 %v3432
        %3449 = vmatprep.subr.mxu0 0.0
        %3450 = vmatpush1.msra.mxu0 0.0
        %3451 = vmatprep.subr.mxu0 0.0
        %3452 = vmatpush1.msra.mxu0 0.0
        %3453 = vmatprep.subr.mxu0 0.0
        %3454 = vmatpush1.msra.mxu0 0.0
        %3455 = vmatprep.subr.mxu0 0.0
        %3456 = vmatpush1.msra.mxu0 0.0
        %3457 = vmatprep.subr.mxu0 0.0
        %3458 = vmatpush1.msra.mxu0 0.0
        %3459 = vmatprep.subr.mxu0 0.0
        %3460 = vmatpush1.msra.mxu0 0.0
        %3461 = vmatprep.subr.mxu0 0.0
        %3462 = vmatpush1.msra.mxu0 0.0
        %3463 = vmatprep.subr.mxu0 0.0
        %3464 = vmatpush1.msra.mxu0 0.0
        %3465 = vmatprep.subr.mxu0 0.0
        %3466 = vmatpush1.msra.mxu0 0.0
        %3467 = vmatprep.subr.mxu0 0.0
        %3468 = vmatpush1.msra.mxu0 0.0
        %3469 = vmatprep.subr.mxu0 0.0
        %3470 = vmatpush1.msra.mxu0 0.0
        %3471 = vmatprep.subr.mxu0 0.0
        %3472 = vmatpush1.msra.mxu0 0.0
        %3473 = vmatprep.subr.mxu0 0.0
        %3474 = vmatpush1.msra.mxu0 0.0
        %3475 = vmatprep.subr.mxu0 0.0
        %3476 = vmatpush1.msra.mxu0 0.0
        %3477 = vmatprep.subr.mxu0 0.0
        %3478 = vmatpush1.msra.mxu0 0.0
        %3479 = vmatprep.subr.mxu0 0.0
        %3480 = vmatpush1.msra.mxu0 0.0
        %3481 = vmatprep.subr.mxu0 0.0
        %3482 = vmatpush1.msra.mxu0 0.0
        %3483 = vmatprep.subr.mxu0 0.0
        %3484 = vmatpush1.msra.mxu0 0.0
        %3485 = vmatprep.subr.mxu0 0.0
        %3486 = vmatpush1.msra.mxu0 0.0
        %3487 = vmatprep.subr.mxu0 0.0
        %3488 = vmatpush1.msra.mxu0 0.0
        %3489 = vmatprep.subr.mxu0 0.0
        %3490 = vmatpush1.msra.mxu0 0.0
        %3491 = vmatprep.subr.mxu0 0.0
        %3492 = vmatpush1.msra.mxu0 0.0
        %3493 = vmatprep.subr.mxu0 0.0
        %3494 = vmatpush1.msra.mxu0 0.0
        %3495 = vmatprep.subr.mxu0 0.0
        %3496 = vmatpush1.msra.mxu0 0.0
        %3497 = vmatprep.mubr.f32.mxu0 0.0
        %3498 = vmatmul.mubr.f32.gmra.mrb[0].mxu0 %v2280
        %v3499 = vpop.f32.mrb[0].mxu0
        %v3500 = vadd.f32 0.0, %v3499
        %v3501 = vpop.f32.mrb[0].mxu0
        %3502 = vdwg.mxu0
        %s3503 = scalar_lea.vmem %s5, 112
        %v3504 = vld [vmem:[%s3503] sm:$0xff]
        %v3505 = vld [vmem:[%s3503 + $0x8] sm:$0xff]
        %v3507 = vsel %vm2436, %v3504, 0
        %v3510 = vsel %vm2436, %v3505, 0
        %3512 = vmatprep.subr.mxu0 0.0
        %3513 = vmatpush1.msra.mxu0 %v3500
        %3514 = vmatprep.subr.mxu0 0.0
        %3515 = vmatpush1.msra.mxu0 0.0
        %3516 = vmatprep.subr.mxu0 0.0
        %3517 = vmatpush1.msra.mxu0 0.0
        %3518 = vmatprep.subr.mxu0 0.0
        %3519 = vmatpush1.msra.mxu0 0.0
        %3520 = vmatprep.subr.mxu0 0.0
        %3521 = vmatpush1.msra.mxu0 0.0
        %3522 = vmatprep.subr.mxu0 0.0
        %3523 = vmatpush1.msra.mxu0 0.0
        %3524 = vmatprep.subr.mxu0 0.0
        %3525 = vmatpush1.msra.mxu0 0.0
        %3526 = vmatprep.subr.mxu0 0.0
        %3527 = vmatpush1.msra.mxu0 0.0
        %3528 = vmatprep.subr.mxu0 0.0
        %3529 = vmatpush1.msra.mxu0 0.0
        %3530 = vmatprep.subr.mxu0 0.0
        %3531 = vmatpush1.msra.mxu0 0.0
        %3532 = vmatprep.subr.mxu0 0.0
        %3533 = vmatpush1.msra.mxu0 0.0
        %3534 = vmatprep.subr.mxu0 0.0
        %3535 = vmatpush1.msra.mxu0 0.0
        %3536 = vmatprep.subr.mxu0 0.0
        %3537 = vmatpush1.msra.mxu0 0.0
        %3538 = vmatprep.subr.mxu0 0.0
        %3539 = vmatpush1.msra.mxu0 0.0
        %3540 = vmatprep.subr.mxu0 0.0
        %3541 = vmatpush1.msra.mxu0 0.0
        %3542 = vmatprep.subr.mxu0 0.0
        %3543 = vmatpush1.msra.mxu0 0.0
        %3544 = vmatprep.subr.mxu0 0.0
        %3545 = vmatpush1.msra.mxu0 0.0
        %3546 = vmatprep.subr.mxu0 0.0
        %3547 = vmatpush1.msra.mxu0 0.0
        %3548 = vmatprep.subr.mxu0 0.0
        %3549 = vmatpush1.msra.mxu0 0.0
        %3550 = vmatprep.subr.mxu0 0.0
        %3551 = vmatpush1.msra.mxu0 0.0
        %3552 = vmatprep.subr.mxu0 0.0
        %3553 = vmatpush1.msra.mxu0 0.0
        %3554 = vmatprep.subr.mxu0 0.0
        %3555 = vmatpush1.msra.mxu0 0.0
        %3556 = vmatprep.subr.mxu0 0.0
        %3557 = vmatpush1.msra.mxu0 0.0
        %3558 = vmatprep.subr.mxu0 0.0
        %3559 = vmatpush1.msra.mxu0 0.0
        %3560 = vmatprep.subr.mxu0 0.0
        %3561 = vmatpush1.msra.mxu0 0.0
        %3562 = vmatprep.subr.mxu0 0.0
        %3563 = vmatpush1.msra.mxu0 0.0
        %3564 = vmatprep.subr.mxu0 0.0
        %3565 = vmatpush1.msra.mxu0 0.0
        %3566 = vmatprep.subr.mxu0 0.0
        %3567 = vmatpush1.msra.mxu0 0.0
        %3568 = vmatprep.subr.mxu0 0.0
        %3569 = vmatpush1.msra.mxu0 0.0
        %3570 = vmatprep.subr.mxu0 0.0
        %3571 = vmatpush1.msra.mxu0 0.0
        %3572 = vmatprep.subr.mxu0 0.0
        %3573 = vmatpush1.msra.mxu0 0.0
        %3574 = vmatprep.subr.mxu0 0.0
        %3575 = vmatpush1.msra.mxu0 0.0
        %3576 = vmatprep.mubr.f32.mxu0 0.0
        %3577 = vmatmul.mubr.f32.gmra.mrb[0].mxu0 %v3507
        %v3578 = vpop.f32.mrb[0].mxu0
        %v3579 = vadd.f32 0.0, %v3578
        %v3580 = vpop.f32.mrb[0].mxu0
        %3581 = vmatprep.mubr.f32.mxu0 0.0
        %3582 = vmatmul.mubr.f32.gmra.mrb[0].mxu0 %v3510
        %v3583 = vpop.f32.mrb[0].mxu0
        %v3584 = vadd.f32 0.0, %v3583
        %v3585 = vpop.f32.mrb[0].mxu0
        %3586 = vdwg.mxu0
        %v3587 = vadd.f32 %v3422, %v3579
        %v3588 = vadd.f32 %v3423, %v3584
        %s3589 = scalar_lea.vmem [#allocation4], 512
        %v3590 = vld [vmem:[%s3589] sm:$0xff]
        %v3591 = vld [vmem:[%s3589 + $0x8] sm:$0xff]
        %v3592 = vld [vmem:[%s3589 + $0x10] sm:$0xff]
        %v3593 = vld [vmem:[%s3589 + $0x18] sm:$0xff]
        %v3594 = vld [vmem:[%s3589 + $0x20] sm:$0xff]
        %v3595 = vld [vmem:[%s3589 + $0x28] sm:$0xff]
        %v3596 = vld [vmem:[%s3589 + $0x30] sm:$0xff]
        %v3597 = vld [vmem:[%s3589 + $0x38] sm:$0xff]
        %3598 = vmatprep.subr.mxu0 0.0
        %3599 = vmatpush1.msra.mxu0 %v3590
        %3600 = vmatprep.subr.mxu0 0.0
        %3601 = vmatpush1.msra.mxu0 %v3591
        %3602 = vmatprep.subr.mxu0 0.0
        %3603 = vmatpush1.msra.mxu0 %v3592
        %3604 = vmatprep.subr.mxu0 0.0
        %3605 = vmatpush1.msra.mxu0 %v3593
        %3606 = vmatprep.subr.mxu0 0.0
        %3607 = vmatpush1.msra.mxu0 %v3594
        %3608 = vmatprep.subr.mxu0 0.0
        %3609 = vmatpush1.msra.mxu0 %v3595
        %3610 = vmatprep.subr.mxu0 0.0
        %3611 = vmatpush1.msra.mxu0 %v3596
        %3612 = vmatprep.subr.mxu0 0.0
        %3613 = vmatpush1.msra.mxu0 %v3597
        %3614 = vmatprep.subr.mxu0 0.0
        %3615 = vmatpush1.msra.mxu0 0.0
        %3616 = vmatprep.subr.mxu0 0.0
        %3617 = vmatpush1.msra.mxu0 0.0
        %3618 = vmatprep.subr.mxu0 0.0
        %3619 = vmatpush1.msra.mxu0 0.0
        %3620 = vmatprep.subr.mxu0 0.0
        %3621 = vmatpush1.msra.mxu0 0.0
        %3622 = vmatprep.subr.mxu0 0.0
        %3623 = vmatpush1.msra.mxu0 0.0
        %3624 = vmatprep.subr.mxu0 0.0
        %3625 = vmatpush1.msra.mxu0 0.0
        %3626 = vmatprep.subr.mxu0 0.0
        %3627 = vmatpush1.msra.mxu0 0.0
        %3628 = vmatprep.subr.mxu0 0.0
        %3629 = vmatpush1.msra.mxu0 0.0
        %3630 = vmatprep.subr.mxu0 0.0
        %3631 = vmatpush1.msra.mxu0 0.0
        %3632 = vmatprep.subr.mxu0 0.0
        %3633 = vmatpush1.msra.mxu0 0.0
        %3634 = vmatprep.subr.mxu0 0.0
        %3635 = vmatpush1.msra.mxu0 0.0
        %3636 = vmatprep.subr.mxu0 0.0
        %3637 = vmatpush1.msra.mxu0 0.0
        %3638 = vmatprep.subr.mxu0 0.0
        %3639 = vmatpush1.msra.mxu0 0.0
        %3640 = vmatprep.subr.mxu0 0.0
        %3641 = vmatpush1.msra.mxu0 0.0
        %3642 = vmatprep.subr.mxu0 0.0
        %3643 = vmatpush1.msra.mxu0 0.0
        %3644 = vmatprep.subr.mxu0 0.0
        %3645 = vmatpush1.msra.mxu0 0.0
        %3646 = vmatprep.subr.mxu0 0.0
        %3647 = vmatpush1.msra.mxu0 0.0
        %3648 = vmatprep.subr.mxu0 0.0
        %3649 = vmatpush1.msra.mxu0 0.0
        %3650 = vmatprep.subr.mxu0 0.0
        %3651 = vmatpush1.msra.mxu0 0.0
        %3652 = vmatprep.subr.mxu0 0.0
        %3653 = vmatpush1.msra.mxu0 0.0
        %3654 = vmatprep.subr.mxu0 0.0
        %3655 = vmatpush1.msra.mxu0 0.0
        %3656 = vmatprep.subr.mxu0 0.0
        %3657 = vmatpush1.msra.mxu0 0.0
        %3658 = vmatprep.subr.mxu0 0.0
        %3659 = vmatpush1.msra.mxu0 0.0
        %3660 = vmatprep.subr.mxu0 0.0
        %3661 = vmatpush1.msra.mxu0 0.0
        %3662 = vmatprep.mubr.f32.mxu0 0.0
        %3663 = vmatmul.mubr.f32.gmra.mrb[0].mxu0 %v2280
        %v3664 = vpop.f32.mrb[0].mxu0
        %v3665 = vadd.f32 0.0, %v3664
        %v3666 = vpop.f32.mrb[0].mxu0
        %3667 = vdwg.mxu0
        %s3668 = scalar_lea.vmem %s5, 128
        %v3669 = vld [vmem:[%s3668] sm:$0xff]
        %v3670 = vld [vmem:[%s3668 + $0x8] sm:$0xff]
        %v3672 = vsel %vm2436, %v3669, 0
        %v3675 = vsel %vm2436, %v3670, 0
        %3677 = vmatprep.subr.mxu0 0.0
        %3678 = vmatpush1.msra.mxu0 %v3665
        %3679 = vmatprep.subr.mxu0 0.0
        %3680 = vmatpush1.msra.mxu0 0.0
        %3681 = vmatprep.subr.mxu0 0.0
        %3682 = vmatpush1.msra.mxu0 0.0
        %3683 = vmatprep.subr.mxu0 0.0
        %3684 = vmatpush1.msra.mxu0 0.0
        %3685 = vmatprep.subr.mxu0 0.0
        %3686 = vmatpush1.msra.mxu0 0.0
        %3687 = vmatprep.subr.mxu0 0.0
        %3688 = vmatpush1.msra.mxu0 0.0
        %3689 = vmatprep.subr.mxu0 0.0
        %3690 = vmatpush1.msra.mxu0 0.0
        %3691 = vmatprep.subr.mxu0 0.0
        %3692 = vmatpush1.msra.mxu0 0.0
        %3693 = vmatprep.subr.mxu0 0.0
        %3694 = vmatpush1.msra.mxu0 0.0
        %3695 = vmatprep.subr.mxu0 0.0
        %3696 = vmatpush1.msra.mxu0 0.0
        %3697 = vmatprep.subr.mxu0 0.0
        %3698 = vmatpush1.msra.mxu0 0.0
        %3699 = vmatprep.subr.mxu0 0.0
        %3700 = vmatpush1.msra.mxu0 0.0
        %3701 = vmatprep.subr.mxu0 0.0
        %3702 = vmatpush1.msra.mxu0 0.0
        %3703 = vmatprep.subr.mxu0 0.0
        %3704 = vmatpush1.msra.mxu0 0.0
        %3705 = vmatprep.subr.mxu0 0.0
        %3706 = vmatpush1.msra.mxu0 0.0
        %3707 = vmatprep.subr.mxu0 0.0
        %3708 = vmatpush1.msra.mxu0 0.0
        %3709 = vmatprep.subr.mxu0 0.0
        %3710 = vmatpush1.msra.mxu0 0.0
        %3711 = vmatprep.subr.mxu0 0.0
        %3712 = vmatpush1.msra.mxu0 0.0
        %3713 = vmatprep.subr.mxu0 0.0
        %3714 = vmatpush1.msra.mxu0 0.0
        %3715 = vmatprep.subr.mxu0 0.0
        %3716 = vmatpush1.msra.mxu0 0.0
        %3717 = vmatprep.subr.mxu0 0.0
        %3718 = vmatpush1.msra.mxu0 0.0
        %3719 = vmatprep.subr.mxu0 0.0
        %3720 = vmatpush1.msra.mxu0 0.0
        %3721 = vmatprep.subr.mxu0 0.0
        %3722 = vmatpush1.msra.mxu0 0.0
        %3723 = vmatprep.subr.mxu0 0.0
        %3724 = vmatpush1.msra.mxu0 0.0
        %3725 = vmatprep.subr.mxu0 0.0
        %3726 = vmatpush1.msra.mxu0 0.0
        %3727 = vmatprep.subr.mxu0 0.0
        %3728 = vmatpush1.msra.mxu0 0.0
        %3729 = vmatprep.subr.mxu0 0.0
        %3730 = vmatpush1.msra.mxu0 0.0
        %3731 = vmatprep.subr.mxu0 0.0
        %3732 = vmatpush1.msra.mxu0 0.0
        %3733 = vmatprep.subr.mxu0 0.0
        %3734 = vmatpush1.msra.mxu0 0.0
        %3735 = vmatprep.subr.mxu0 0.0
        %3736 = vmatpush1.msra.mxu0 0.0
        %3737 = vmatprep.subr.mxu0 0.0
        %3738 = vmatpush1.msra.mxu0 0.0
        %3739 = vmatprep.subr.mxu0 0.0
        %3740 = vmatpush1.msra.mxu0 0.0
        %3741 = vmatprep.mubr.f32.mxu0 0.0
        %3742 = vmatmul.mubr.f32.gmra.mrb[0].mxu0 %v3672
        %v3743 = vpop.f32.mrb[0].mxu0
        %v3744 = vadd.f32 0.0, %v3743
        %v3745 = vpop.f32.mrb[0].mxu0
        %3746 = vmatprep.mubr.f32.mxu0 0.0
        %3747 = vmatmul.mubr.f32.gmra.mrb[0].mxu0 %v3675
        %v3748 = vpop.f32.mrb[0].mxu0
        %v3749 = vadd.f32 0.0, %v3748
        %v3750 = vpop.f32.mrb[0].mxu0
        %3751 = vdwg.mxu0
        %v3752 = vadd.f32 %v3587, %v3744
        %v3753 = vadd.f32 %v3588, %v3749
        %v3754 = vld [vmem:[%s6] sm:$0xff]
        %v3755 = vld [vmem:[%s6 + $0x8] sm:$0xff]
        %3757 = vset.pattern.permute.xlu0 0
        %3758 = vperm.xlu0 %3757, %v3754
        %v3759 = vpop.permute.xlu0 %3758
        %3762 = vset.pattern.permute.xlu0 0
        %3763 = vperm.xlu0 %3762, %v3755
        %v3764 = vpop.permute.xlu0 %3763
        %v3766 = vadd.f32 %v3752, %v3759
        %v3767 = vadd.f32 %v3753, %v3764
        %v3768 = vmax.f32 %v3766, 0.0
        %v3769 = vmax.f32 %v3767, 0.0
        %v3770 = vld [vmem:[#allocation6] sm:$0xff]
        %v3771 = vld [vmem:[#allocation6 + $0x8] sm:$0xff]
        %vm3772 = vcmask 130048
        %v3774 = vsel %vm3772, %v3768, 0
        %v3777 = vsel %vm3772, %v3769, 0
        %3779 = vmatprep.subr.mxu0 0.0
        %3780 = vmatpush1.msra.mxu0 %v3770
        %3781 = vmatprep.subr.mxu0 0.0
        %3782 = vmatpush1.msra.mxu0 %v3771
        %3783 = vmatprep.subr.mxu0 0.0
        %3784 = vmatpush1.msra.mxu0 0.0
        %3785 = vmatprep.subr.mxu0 0.0
        %3786 = vmatpush1.msra.mxu0 0.0
        %3787 = vmatprep.subr.mxu0 0.0
        %3788 = vmatpush1.msra.mxu0 0.0
        %3789 = vmatprep.subr.mxu0 0.0
        %3790 = vmatpush1.msra.mxu0 0.0
        %3791 = vmatprep.subr.mxu0 0.0
        %3792 = vmatpush1.msra.mxu0 0.0
        %3793 = vmatprep.subr.mxu0 0.0
        %3794 = vmatpush1.msra.mxu0 0.0
        %3795 = vmatprep.subr.mxu0 0.0
        %3796 = vmatpush1.msra.mxu0 0.0
        %3797 = vmatprep.subr.mxu0 0.0
        %3798 = vmatpush1.msra.mxu0 0.0
        %3799 = vmatprep.subr.mxu0 0.0
        %3800 = vmatpush1.msra.mxu0 0.0
        %3801 = vmatprep.subr.mxu0 0.0
        %3802 = vmatpush1.msra.mxu0 0.0
        %3803 = vmatprep.subr.mxu0 0.0
        %3804 = vmatpush1.msra.mxu0 0.0
        %3805 = vmatprep.subr.mxu0 0.0
        %3806 = vmatpush1.msra.mxu0 0.0
        %3807 = vmatprep.subr.mxu0 0.0
        %3808 = vmatpush1.msra.mxu0 0.0
        %3809 = vmatprep.subr.mxu0 0.0
        %3810 = vmatpush1.msra.mxu0 0.0
        %3811 = vmatprep.subr.mxu0 0.0
        %3812 = vmatpush1.msra.mxu0 0.0
        %3813 = vmatprep.subr.mxu0 0.0
        %3814 = vmatpush1.msra.mxu0 0.0
        %3815 = vmatprep.subr.mxu0 0.0
        %3816 = vmatpush1.msra.mxu0 0.0
        %3817 = vmatprep.subr.mxu0 0.0
        %3818 = vmatpush1.msra.mxu0 0.0
        %3819 = vmatprep.subr.mxu0 0.0
        %3820 = vmatpush1.msra.mxu0 0.0
        %3821 = vmatprep.subr.mxu0 0.0
        %3822 = vmatpush1.msra.mxu0 0.0
        %3823 = vmatprep.subr.mxu0 0.0
        %3824 = vmatpush1.msra.mxu0 0.0
        %3825 = vmatprep.subr.mxu0 0.0
        %3826 = vmatpush1.msra.mxu0 0.0
        %3827 = vmatprep.subr.mxu0 0.0
        %3828 = vmatpush1.msra.mxu0 0.0
        %3829 = vmatprep.subr.mxu0 0.0
        %3830 = vmatpush1.msra.mxu0 0.0
        %3831 = vmatprep.subr.mxu0 0.0
        %3832 = vmatpush1.msra.mxu0 0.0
        %3833 = vmatprep.subr.mxu0 0.0
        %3834 = vmatpush1.msra.mxu0 0.0
        %3835 = vmatprep.subr.mxu0 0.0
        %3836 = vmatpush1.msra.mxu0 0.0
        %3837 = vmatprep.subr.mxu0 0.0
        %3838 = vmatpush1.msra.mxu0 0.0
        %3839 = vmatprep.subr.mxu0 0.0
        %3840 = vmatpush1.msra.mxu0 0.0
        %3841 = vmatprep.subr.mxu0 0.0
        %3842 = vmatpush1.msra.mxu0 0.0
        %3843 = vmatprep.mubr.f32.mxu0 0.0
        %3844 = vmatmul.mubr.f32.gmra.mrb[0].mxu0 %v3774
        %v3845 = vpop.f32.mrb[0].mxu0
        %v3846 = vadd.f32 0.0, %v3845
        %v3847 = vpop.f32.mrb[0].mxu0
        %3848 = vmatprep.mubr.f32.mxu0 0.0
        %3849 = vmatmul.mubr.f32.gmra.mrb[0].mxu0 %v3777
        %v3850 = vpop.f32.mrb[0].mxu0
        %v3851 = vadd.f32 0.0, %v3850
        %v3852 = vpop.f32.mrb[0].mxu0
        %3853 = vdwg.mxu0
        %v3854 = vld [vmem:[%s8] sm:$0xff]
        %v3855 = vld [vmem:[%s8 + $0x8] sm:$0xff]
        %v3856 = vld [vmem:[%s8 + $0x10] sm:$0xff]
        %v3857 = vld [vmem:[%s8 + $0x18] sm:$0xff]
        %s3858 = scalar_lea.vmem [#allocation6], 16
        %v3859 = vld [vmem:[%s3858] sm:$0xff]
        %v3860 = vld [vmem:[%s3858 + $0x8] sm:$0xff]
        %3861 = vmatprep.subr.mxu0 0.0
        %3862 = vmatpush1.msra.mxu0 %v3859
        %3863 = vmatprep.subr.mxu0 0.0
        %3864 = vmatpush1.msra.mxu0 %v3860
        %3865 = vmatprep.subr.mxu0 0.0
        %3866 = vmatpush1.msra.mxu0 0.0
        %3867 = vmatprep.subr.mxu0 0.0
        %3868 = vmatpush1.msra.mxu0 0.0
        %3869 = vmatprep.subr.mxu0 0.0
        %3870 = vmatpush1.msra.mxu0 0.0
        %3871 = vmatprep.subr.mxu0 0.0
        %3872 = vmatpush1.msra.mxu0 0.0
        %3873 = vmatprep.subr.mxu0 0.0
        %3874 = vmatpush1.msra.mxu0 0.0
        %3875 = vmatprep.subr.mxu0 0.0
        %3876 = vmatpush1.msra.mxu0 0.0
        %3877 = vmatprep.subr.mxu0 0.0
        %3878 = vmatpush1.msra.mxu0 0.0
        %3879 = vmatprep.subr.mxu0 0.0
        %3880 = vmatpush1.msra.mxu0 0.0
        %3881 = vmatprep.subr.mxu0 0.0
        %3882 = vmatpush1.msra.mxu0 0.0
        %3883 = vmatprep.subr.mxu0 0.0
        %3884 = vmatpush1.msra.mxu0 0.0
        %3885 = vmatprep.subr.mxu0 0.0
        %3886 = vmatpush1.msra.mxu0 0.0
        %3887 = vmatprep.subr.mxu0 0.0
        %3888 = vmatpush1.msra.mxu0 0.0
        %3889 = vmatprep.subr.mxu0 0.0
        %3890 = vmatpush1.msra.mxu0 0.0
        %3891 = vmatprep.subr.mxu0 0.0
        %3892 = vmatpush1.msra.mxu0 0.0
        %3893 = vmatprep.subr.mxu0 0.0
        %3894 = vmatpush1.msra.mxu0 0.0
        %3895 = vmatprep.subr.mxu0 0.0
        %3896 = vmatpush1.msra.mxu0 0.0
        %3897 = vmatprep.subr.mxu0 0.0
        %3898 = vmatpush1.msra.mxu0 0.0
        %3899 = vmatprep.subr.mxu0 0.0
        %3900 = vmatpush1.msra.mxu0 0.0
        %3901 = vmatprep.subr.mxu0 0.0
        %3902 = vmatpush1.msra.mxu0 0.0
        %3903 = vmatprep.subr.mxu0 0.0
        %3904 = vmatpush1.msra.mxu0 0.0
        %3905 = vmatprep.subr.mxu0 0.0
        %3906 = vmatpush1.msra.mxu0 0.0
        %3907 = vmatprep.subr.mxu0 0.0
        %3908 = vmatpush1.msra.mxu0 0.0
        %3909 = vmatprep.subr.mxu0 0.0
        %3910 = vmatpush1.msra.mxu0 0.0
        %3911 = vmatprep.subr.mxu0 0.0
        %3912 = vmatpush1.msra.mxu0 0.0
        %3913 = vmatprep.subr.mxu0 0.0
        %3914 = vmatpush1.msra.mxu0 0.0
        %3915 = vmatprep.subr.mxu0 0.0
        %3916 = vmatpush1.msra.mxu0 0.0
        %3917 = vmatprep.subr.mxu0 0.0
        %3918 = vmatpush1.msra.mxu0 0.0
        %3919 = vmatprep.subr.mxu0 0.0
        %3920 = vmatpush1.msra.mxu0 0.0
        %3921 = vmatprep.subr.mxu0 0.0
        %3922 = vmatpush1.msra.mxu0 0.0
        %3923 = vmatprep.subr.mxu0 0.0
        %3924 = vmatpush1.msra.mxu0 0.0
        %3925 = vmatprep.mubr.f32.mxu0 0.0
        %3926 = vmatmul.mubr.f32.gmra.mrb[0].mxu0 %v3774
        %v3927 = vpop.f32.mrb[0].mxu0
        %v3928 = vadd.f32 0.0, %v3927
        %v3929 = vpop.f32.mrb[0].mxu0
        %3930 = vmatprep.mubr.f32.mxu0 0.0
        %3931 = vmatmul.mubr.f32.gmra.mrb[0].mxu0 %v3777
        %v3932 = vpop.f32.mrb[0].mxu0
        %v3933 = vadd.f32 0.0, %v3932
        %v3934 = vpop.f32.mrb[0].mxu0
        %3935 = vdwg.mxu0
        %s3936 = scalar_lea.vmem %s8, 32
        %v3937 = vld [vmem:[%s3936] sm:$0xff]
        %v3938 = vld [vmem:[%s3936 + $0x8] sm:$0xff]
        %v3939 = vld [vmem:[%s3936 + $0x10] sm:$0xff]
        %v3940 = vld [vmem:[%s3936 + $0x18] sm:$0xff]
        %v3942 = vsel %vm3772, %v3937, 0
        %v3945 = vsel %vm3772, %v3938, 0
        %v3948 = vsel %vm3772, %v3939, 0
        %v3951 = vsel %vm3772, %v3940, 0
        %3953 = vmatprep.subr.mxu0 0.0
        %3954 = vmatpush1.msra.mxu0 %v3928
        %3955 = vmatprep.subr.mxu0 0.0
        %3956 = vmatpush1.msra.mxu0 %v3933
        %3957 = vmatprep.subr.mxu0 0.0
        %3958 = vmatpush1.msra.mxu0 0.0
        %3959 = vmatprep.subr.mxu0 0.0
        %3960 = vmatpush1.msra.mxu0 0.0
        %3961 = vmatprep.subr.mxu0 0.0
        %3962 = vmatpush1.msra.mxu0 0.0
        %3963 = vmatprep.subr.mxu0 0.0
        %3964 = vmatpush1.msra.mxu0 0.0
        %3965 = vmatprep.subr.mxu0 0.0
        %3966 = vmatpush1.msra.mxu0 0.0
        %3967 = vmatprep.subr.mxu0 0.0
        %3968 = vmatpush1.msra.mxu0 0.0
        %3969 = vmatprep.subr.mxu0 0.0
        %3970 = vmatpush1.msra.mxu0 0.0
        %3971 = vmatprep.subr.mxu0 0.0
        %3972 = vmatpush1.msra.mxu0 0.0
        %3973 = vmatprep.subr.mxu0 0.0
        %3974 = vmatpush1.msra.mxu0 0.0
        %3975 = vmatprep.subr.mxu0 0.0
        %3976 = vmatpush1.msra.mxu0 0.0
        %3977 = vmatprep.subr.mxu0 0.0
        %3978 = vmatpush1.msra.mxu0 0.0
        %3979 = vmatprep.subr.mxu0 0.0
        %3980 = vmatpush1.msra.mxu0 0.0
        %3981 = vmatprep.subr.mxu0 0.0
        %3982 = vmatpush1.msra.mxu0 0.0
        %3983 = vmatprep.subr.mxu0 0.0
        %3984 = vmatpush1.msra.mxu0 0.0
        %3985 = vmatprep.subr.mxu0 0.0
        %3986 = vmatpush1.msra.mxu0 0.0
        %3987 = vmatprep.subr.mxu0 0.0
        %3988 = vmatpush1.msra.mxu0 0.0
        %3989 = vmatprep.subr.mxu0 0.0
        %3990 = vmatpush1.msra.mxu0 0.0
        %3991 = vmatprep.subr.mxu0 0.0
        %3992 = vmatpush1.msra.mxu0 0.0
        %3993 = vmatprep.subr.mxu0 0.0
        %3994 = vmatpush1.msra.mxu0 0.0
        %3995 = vmatprep.subr.mxu0 0.0
        %3996 = vmatpush1.msra.mxu0 0.0
        %3997 = vmatprep.subr.mxu0 0.0
        %3998 = vmatpush1.msra.mxu0 0.0
        %3999 = vmatprep.subr.mxu0 0.0
        %4000 = vmatpush1.msra.mxu0 0.0
        %4001 = vmatprep.subr.mxu0 0.0
        %4002 = vmatpush1.msra.mxu0 0.0
        %4003 = vmatprep.subr.mxu0 0.0
        %4004 = vmatpush1.msra.mxu0 0.0
        %4005 = vmatprep.subr.mxu0 0.0
        %4006 = vmatpush1.msra.mxu0 0.0
        %4007 = vmatprep.subr.mxu0 0.0
        %4008 = vmatpush1.msra.mxu0 0.0
        %4009 = vmatprep.subr.mxu0 0.0
        %4010 = vmatpush1.msra.mxu0 0.0
        %4011 = vmatprep.subr.mxu0 0.0
        %4012 = vmatpush1.msra.mxu0 0.0
        %4013 = vmatprep.subr.mxu0 0.0
        %4014 = vmatpush1.msra.mxu0 0.0
        %4015 = vmatprep.subr.mxu0 0.0
        %4016 = vmatpush1.msra.mxu0 0.0
        %4017 = vmatprep.mubr.f32.mxu0 0.0
        %4018 = vmatmul.mubr.f32.gmra.mrb[0].mxu0 %v3942
        %v4019 = vpop.f32.mrb[0].mxu0
        %v4020 = vadd.f32 0.0, %v4019
        %v4021 = vpop.f32.mrb[0].mxu0
        %4022 = vmatprep.mubr.f32.mxu0 0.0
        %4023 = vmatmul.mubr.f32.gmra.mrb[0].mxu0 %v3945
        %v4024 = vpop.f32.mrb[0].mxu0
        %v4025 = vadd.f32 0.0, %v4024
        %v4026 = vpop.f32.mrb[0].mxu0
        %4027 = vmatprep.mubr.f32.mxu0 0.0
        %4028 = vmatmul.mubr.f32.gmra.mrb[0].mxu0 %v3948
        %v4029 = vpop.f32.mrb[0].mxu0
        %v4030 = vadd.f32 0.0, %v4029
        %v4031 = vpop.f32.mrb[0].mxu0
        %4032 = vmatprep.mubr.f32.mxu0 0.0
        %4033 = vmatmul.mubr.f32.gmra.mrb[0].mxu0 %v3951
        %v4034 = vpop.f32.mrb[0].mxu0
        %v4035 = vadd.f32 0.0, %v4034
        %v4036 = vpop.f32.mrb[0].mxu0
        %4037 = vdwg.mxu0
        %v4039 = vsel %vm3772, %v3854, 0
        %v4042 = vsel %vm3772, %v3855, 0
        %v4045 = vsel %vm3772, %v3856, 0
        %v4048 = vsel %vm3772, %v3857, 0
        %4050 = vmatprep.subr.mxu0 0.0
        %4051 = vmatpush1.msra.mxu0 %v3846
        %4052 = vmatprep.subr.mxu0 0.0
        %4053 = vmatpush1.msra.mxu0 %v3851
        %4054 = vmatprep.subr.mxu0 0.0
        %4055 = vmatpush1.msra.mxu0 0.0
        %4056 = vmatprep.subr.mxu0 0.0
        %4057 = vmatpush1.msra.mxu0 0.0
        %4058 = vmatprep.subr.mxu0 0.0
        %4059 = vmatpush1.msra.mxu0 0.0
        %4060 = vmatprep.subr.mxu0 0.0
        %4061 = vmatpush1.msra.mxu0 0.0
        %4062 = vmatprep.subr.mxu0 0.0
        %4063 = vmatpush1.msra.mxu0 0.0
        %4064 = vmatprep.subr.mxu0 0.0
        %4065 = vmatpush1.msra.mxu0 0.0
        %4066 = vmatprep.subr.mxu0 0.0
        %4067 = vmatpush1.msra.mxu0 0.0
        %4068 = vmatprep.subr.mxu0 0.0
        %4069 = vmatpush1.msra.mxu0 0.0
        %4070 = vmatprep.subr.mxu0 0.0
        %4071 = vmatpush1.msra.mxu0 0.0
        %4072 = vmatprep.subr.mxu0 0.0
        %4073 = vmatpush1.msra.mxu0 0.0
        %4074 = vmatprep.subr.mxu0 0.0
        %4075 = vmatpush1.msra.mxu0 0.0
        %4076 = vmatprep.subr.mxu0 0.0
        %4077 = vmatpush1.msra.mxu0 0.0
        %4078 = vmatprep.subr.mxu0 0.0
        %4079 = vmatpush1.msra.mxu0 0.0
        %4080 = vmatprep.subr.mxu0 0.0
        %4081 = vmatpush1.msra.mxu0 0.0
        %4082 = vmatprep.subr.mxu0 0.0
        %4083 = vmatpush1.msra.mxu0 0.0
        %4084 = vmatprep.subr.mxu0 0.0
        %4085 = vmatpush1.msra.mxu0 0.0
        %4086 = vmatprep.subr.mxu0 0.0
        %4087 = vmatpush1.msra.mxu0 0.0
        %4088 = vmatprep.subr.mxu0 0.0
        %4089 = vmatpush1.msra.mxu0 0.0
        %4090 = vmatprep.subr.mxu0 0.0
        %4091 = vmatpush1.msra.mxu0 0.0
        %4092 = vmatprep.subr.mxu0 0.0
        %4093 = vmatpush1.msra.mxu0 0.0
        %4094 = vmatprep.subr.mxu0 0.0
        %4095 = vmatpush1.msra.mxu0 0.0
        %4096 = vmatprep.subr.mxu0 0.0
        %4097 = vmatpush1.msra.mxu0 0.0
        %4098 = vmatprep.subr.mxu0 0.0
        %4099 = vmatpush1.msra.mxu0 0.0
        %4100 = vmatprep.subr.mxu0 0.0
        %4101 = vmatpush1.msra.mxu0 0.0
        %4102 = vmatprep.subr.mxu0 0.0
        %4103 = vmatpush1.msra.mxu0 0.0
        %4104 = vmatprep.subr.mxu0 0.0
        %4105 = vmatpush1.msra.mxu0 0.0
        %4106 = vmatprep.subr.mxu0 0.0
        %4107 = vmatpush1.msra.mxu0 0.0
        %4108 = vmatprep.subr.mxu0 0.0
        %4109 = vmatpush1.msra.mxu0 0.0
        %4110 = vmatprep.subr.mxu0 0.0
        %4111 = vmatpush1.msra.mxu0 0.0
        %4112 = vmatprep.subr.mxu0 0.0
        %4113 = vmatpush1.msra.mxu0 0.0
        %4114 = vmatprep.mubr.f32.mxu0 0.0
        %4115 = vmatmul.mubr.f32.gmra.mrb[0].mxu0 %v4039
        %v4116 = vpop.f32.mrb[0].mxu0
        %v4117 = vadd.f32 %v4020, %v4116
        %v4118 = vpop.f32.mrb[0].mxu0
        %4119 = vmatprep.mubr.f32.mxu0 0.0
        %4120 = vmatmul.mubr.f32.gmra.mrb[0].mxu0 %v4042
        %v4121 = vpop.f32.mrb[0].mxu0
        %v4122 = vadd.f32 %v4025, %v4121
        %v4123 = vpop.f32.mrb[0].mxu0
        %4124 = vmatprep.mubr.f32.mxu0 0.0
        %4125 = vmatmul.mubr.f32.gmra.mrb[0].mxu0 %v4045
        %v4126 = vpop.f32.mrb[0].mxu0
        %v4127 = vadd.f32 %v4030, %v4126
        %v4128 = vpop.f32.mrb[0].mxu0
        %4129 = vmatprep.mubr.f32.mxu0 0.0
        %4130 = vmatmul.mubr.f32.gmra.mrb[0].mxu0 %v4048
        %v4131 = vpop.f32.mrb[0].mxu0
        %v4132 = vadd.f32 %v4035, %v4131
        %v4133 = vpop.f32.mrb[0].mxu0
        %4134 = vdwg.mxu0
        %s4135 = scalar_lea.vmem [#allocation6], 32
        %v4136 = vld [vmem:[%s4135] sm:$0xff]
        %v4137 = vld [vmem:[%s4135 + $0x8] sm:$0xff]
        %4138 = vmatprep.subr.mxu0 0.0
        %4139 = vmatpush1.msra.mxu0 %v4136
        %4140 = vmatprep.subr.mxu0 0.0
        %4141 = vmatpush1.msra.mxu0 %v4137
        %4142 = vmatprep.subr.mxu0 0.0
        %4143 = vmatpush1.msra.mxu0 0.0
        %4144 = vmatprep.subr.mxu0 0.0
        %4145 = vmatpush1.msra.mxu0 0.0
        %4146 = vmatprep.subr.mxu0 0.0
        %4147 = vmatpush1.msra.mxu0 0.0
        %4148 = vmatprep.subr.mxu0 0.0
        %4149 = vmatpush1.msra.mxu0 0.0
        %4150 = vmatprep.subr.mxu0 0.0
        %4151 = vmatpush1.msra.mxu0 0.0
        %4152 = vmatprep.subr.mxu0 0.0
        %4153 = vmatpush1.msra.mxu0 0.0
        %4154 = vmatprep.subr.mxu0 0.0
        %4155 = vmatpush1.msra.mxu0 0.0
        %4156 = vmatprep.subr.mxu0 0.0
        %4157 = vmatpush1.msra.mxu0 0.0
        %4158 = vmatprep.subr.mxu0 0.0
        %4159 = vmatpush1.msra.mxu0 0.0
        %4160 = vmatprep.subr.mxu0 0.0
        %4161 = vmatpush1.msra.mxu0 0.0
        %4162 = vmatprep.subr.mxu0 0.0
        %4163 = vmatpush1.msra.mxu0 0.0
        %4164 = vmatprep.subr.mxu0 0.0
        %4165 = vmatpush1.msra.mxu0 0.0
        %4166 = vmatprep.subr.mxu0 0.0
        %4167 = vmatpush1.msra.mxu0 0.0
        %4168 = vmatprep.subr.mxu0 0.0
        %4169 = vmatpush1.msra.mxu0 0.0
        %4170 = vmatprep.subr.mxu0 0.0
        %4171 = vmatpush1.msra.mxu0 0.0
        %4172 = vmatprep.subr.mxu0 0.0
        %4173 = vmatpush1.msra.mxu0 0.0
        %4174 = vmatprep.subr.mxu0 0.0
        %4175 = vmatpush1.msra.mxu0 0.0
        %4176 = vmatprep.subr.mxu0 0.0
        %4177 = vmatpush1.msra.mxu0 0.0
        %4178 = vmatprep.subr.mxu0 0.0
        %4179 = vmatpush1.msra.mxu0 0.0
        %4180 = vmatprep.subr.mxu0 0.0
        %4181 = vmatpush1.msra.mxu0 0.0
        %4182 = vmatprep.subr.mxu0 0.0
        %4183 = vmatpush1.msra.mxu0 0.0
        %4184 = vmatprep.subr.mxu0 0.0
        %4185 = vmatpush1.msra.mxu0 0.0
        %4186 = vmatprep.subr.mxu0 0.0
        %4187 = vmatpush1.msra.mxu0 0.0
        %4188 = vmatprep.subr.mxu0 0.0
        %4189 = vmatpush1.msra.mxu0 0.0
        %4190 = vmatprep.subr.mxu0 0.0
        %4191 = vmatpush1.msra.mxu0 0.0
        %4192 = vmatprep.subr.mxu0 0.0
        %4193 = vmatpush1.msra.mxu0 0.0
        %4194 = vmatprep.subr.mxu0 0.0
        %4195 = vmatpush1.msra.mxu0 0.0
        %4196 = vmatprep.subr.mxu0 0.0
        %4197 = vmatpush1.msra.mxu0 0.0
        %4198 = vmatprep.subr.mxu0 0.0
        %4199 = vmatpush1.msra.mxu0 0.0
        %4200 = vmatprep.subr.mxu0 0.0
        %4201 = vmatpush1.msra.mxu0 0.0
        %4202 = vmatprep.mubr.f32.mxu0 0.0
        %4203 = vmatmul.mubr.f32.gmra.mrb[0].mxu0 %v3774
        %v4204 = vpop.f32.mrb[0].mxu0
        %v4205 = vadd.f32 0.0, %v4204
        %v4206 = vpop.f32.mrb[0].mxu0
        %4207 = vmatprep.mubr.f32.mxu0 0.0
        %4208 = vmatmul.mubr.f32.gmra.mrb[0].mxu0 %v3777
        %v4209 = vpop.f32.mrb[0].mxu0
        %v4210 = vadd.f32 0.0, %v4209
        %v4211 = vpop.f32.mrb[0].mxu0
        %4212 = vdwg.mxu0
        %s4213 = scalar_lea.vmem %s8, 64
        %v4214 = vld [vmem:[%s4213] sm:$0xff]
        %v4215 = vld [vmem:[%s4213 + $0x8] sm:$0xff]
        %v4216 = vld [vmem:[%s4213 + $0x10] sm:$0xff]
        %v4217 = vld [vmem:[%s4213 + $0x18] sm:$0xff]
        %v4219 = vsel %vm3772, %v4214, 0
        %v4222 = vsel %vm3772, %v4215, 0
        %v4225 = vsel %vm3772, %v4216, 0
        %v4228 = vsel %vm3772, %v4217, 0
        %4230 = vmatprep.subr.mxu0 0.0
        %4231 = vmatpush1.msra.mxu0 %v4205
        %4232 = vmatprep.subr.mxu0 0.0
        %4233 = vmatpush1.msra.mxu0 %v4210
        %4234 = vmatprep.subr.mxu0 0.0
        %4235 = vmatpush1.msra.mxu0 0.0
        %4236 = vmatprep.subr.mxu0 0.0
        %4237 = vmatpush1.msra.mxu0 0.0
        %4238 = vmatprep.subr.mxu0 0.0
        %4239 = vmatpush1.msra.mxu0 0.0
        %4240 = vmatprep.subr.mxu0 0.0
        %4241 = vmatpush1.msra.mxu0 0.0
        %4242 = vmatprep.subr.mxu0 0.0
        %4243 = vmatpush1.msra.mxu0 0.0
        %4244 = vmatprep.subr.mxu0 0.0
        %4245 = vmatpush1.msra.mxu0 0.0
        %4246 = vmatprep.subr.mxu0 0.0
        %4247 = vmatpush1.msra.mxu0 0.0
        %4248 = vmatprep.subr.mxu0 0.0
        %4249 = vmatpush1.msra.mxu0 0.0
        %4250 = vmatprep.subr.mxu0 0.0
        %4251 = vmatpush1.msra.mxu0 0.0
        %4252 = vmatprep.subr.mxu0 0.0
        %4253 = vmatpush1.msra.mxu0 0.0
        %4254 = vmatprep.subr.mxu0 0.0
        %4255 = vmatpush1.msra.mxu0 0.0
        %4256 = vmatprep.subr.mxu0 0.0
        %4257 = vmatpush1.msra.mxu0 0.0
        %4258 = vmatprep.subr.mxu0 0.0
        %4259 = vmatpush1.msra.mxu0 0.0
        %4260 = vmatprep.subr.mxu0 0.0
        %4261 = vmatpush1.msra.mxu0 0.0
        %4262 = vmatprep.subr.mxu0 0.0
        %4263 = vmatpush1.msra.mxu0 0.0
        %4264 = vmatprep.subr.mxu0 0.0
        %4265 = vmatpush1.msra.mxu0 0.0
        %4266 = vmatprep.subr.mxu0 0.0
        %4267 = vmatpush1.msra.mxu0 0.0
        %4268 = vmatprep.subr.mxu0 0.0
        %4269 = vmatpush1.msra.mxu0 0.0
        %4270 = vmatprep.subr.mxu0 0.0
        %4271 = vmatpush1.msra.mxu0 0.0
        %4272 = vmatprep.subr.mxu0 0.0
        %4273 = vmatpush1.msra.mxu0 0.0
        %4274 = vmatprep.subr.mxu0 0.0
        %4275 = vmatpush1.msra.mxu0 0.0
        %4276 = vmatprep.subr.mxu0 0.0
        %4277 = vmatpush1.msra.mxu0 0.0
        %4278 = vmatprep.subr.mxu0 0.0
        %4279 = vmatpush1.msra.mxu0 0.0
        %4280 = vmatprep.subr.mxu0 0.0
        %4281 = vmatpush1.msra.mxu0 0.0
        %4282 = vmatprep.subr.mxu0 0.0
        %4283 = vmatpush1.msra.mxu0 0.0
        %4284 = vmatprep.subr.mxu0 0.0
        %4285 = vmatpush1.msra.mxu0 0.0
        %4286 = vmatprep.subr.mxu0 0.0
        %4287 = vmatpush1.msra.mxu0 0.0
        %4288 = vmatprep.subr.mxu0 0.0
        %4289 = vmatpush1.msra.mxu0 0.0
        %4290 = vmatprep.subr.mxu0 0.0
        %4291 = vmatpush1.msra.mxu0 0.0
        %4292 = vmatprep.subr.mxu0 0.0
        %4293 = vmatpush1.msra.mxu0 0.0
        %4294 = vmatprep.mubr.f32.mxu0 0.0
        %4295 = vmatmul.mubr.f32.gmra.mrb[0].mxu0 %v4219
        %v4296 = vpop.f32.mrb[0].mxu0
        %v4297 = vadd.f32 0.0, %v4296
        %v4298 = vpop.f32.mrb[0].mxu0
        %4299 = vmatprep.mubr.f32.mxu0 0.0
        %4300 = vmatmul.mubr.f32.gmra.mrb[0].mxu0 %v4222
        %v4301 = vpop.f32.mrb[0].mxu0
        %v4302 = vadd.f32 0.0, %v4301
        %v4303 = vpop.f32.mrb[0].mxu0
        %4304 = vmatprep.mubr.f32.mxu0 0.0
        %4305 = vmatmul.mubr.f32.gmra.mrb[0].mxu0 %v4225
        %v4306 = vpop.f32.mrb[0].mxu0
        %v4307 = vadd.f32 0.0, %v4306
        %v4308 = vpop.f32.mrb[0].mxu0
        %4309 = vmatprep.mubr.f32.mxu0 0.0
        %4310 = vmatmul.mubr.f32.gmra.mrb[0].mxu0 %v4228
        %v4311 = vpop.f32.mrb[0].mxu0
        %v4312 = vadd.f32 0.0, %v4311
        %v4313 = vpop.f32.mrb[0].mxu0
        %4314 = vdwg.mxu0
        %v4315 = vadd.f32 %v4117, %v4297
        %v4316 = vadd.f32 %v4122, %v4302
        %v4317 = vadd.f32 %v4127, %v4307
        %v4318 = vadd.f32 %v4132, %v4312
        %s4319 = scalar_lea.vmem [#allocation6], 48
        %v4320 = vld [vmem:[%s4319] sm:$0xff]
        %v4321 = vld [vmem:[%s4319 + $0x8] sm:$0xff]
        %4322 = vmatprep.subr.mxu0 0.0
        %4323 = vmatpush1.msra.mxu0 %v4320
        %4324 = vmatprep.subr.mxu0 0.0
        %4325 = vmatpush1.msra.mxu0 %v4321
        %4326 = vmatprep.subr.mxu0 0.0
        %4327 = vmatpush1.msra.mxu0 0.0
        %4328 = vmatprep.subr.mxu0 0.0
        %4329 = vmatpush1.msra.mxu0 0.0
        %4330 = vmatprep.subr.mxu0 0.0
        %4331 = vmatpush1.msra.mxu0 0.0
        %4332 = vmatprep.subr.mxu0 0.0
        %4333 = vmatpush1.msra.mxu0 0.0
        %4334 = vmatprep.subr.mxu0 0.0
        %4335 = vmatpush1.msra.mxu0 0.0
        %4336 = vmatprep.subr.mxu0 0.0
        %4337 = vmatpush1.msra.mxu0 0.0
        %4338 = vmatprep.subr.mxu0 0.0
        %4339 = vmatpush1.msra.mxu0 0.0
        %4340 = vmatprep.subr.mxu0 0.0
        %4341 = vmatpush1.msra.mxu0 0.0
        %4342 = vmatprep.subr.mxu0 0.0
        %4343 = vmatpush1.msra.mxu0 0.0
        %4344 = vmatprep.subr.mxu0 0.0
        %4345 = vmatpush1.msra.mxu0 0.0
        %4346 = vmatprep.subr.mxu0 0.0
        %4347 = vmatpush1.msra.mxu0 0.0
        %4348 = vmatprep.subr.mxu0 0.0
        %4349 = vmatpush1.msra.mxu0 0.0
        %4350 = vmatprep.subr.mxu0 0.0
        %4351 = vmatpush1.msra.mxu0 0.0
        %4352 = vmatprep.subr.mxu0 0.0
        %4353 = vmatpush1.msra.mxu0 0.0
        %4354 = vmatprep.subr.mxu0 0.0
        %4355 = vmatpush1.msra.mxu0 0.0
        %4356 = vmatprep.subr.mxu0 0.0
        %4357 = vmatpush1.msra.mxu0 0.0
        %4358 = vmatprep.subr.mxu0 0.0
        %4359 = vmatpush1.msra.mxu0 0.0
        %4360 = vmatprep.subr.mxu0 0.0
        %4361 = vmatpush1.msra.mxu0 0.0
        %4362 = vmatprep.subr.mxu0 0.0
        %4363 = vmatpush1.msra.mxu0 0.0
        %4364 = vmatprep.subr.mxu0 0.0
        %4365 = vmatpush1.msra.mxu0 0.0
        %4366 = vmatprep.subr.mxu0 0.0
        %4367 = vmatpush1.msra.mxu0 0.0
        %4368 = vmatprep.subr.mxu0 0.0
        %4369 = vmatpush1.msra.mxu0 0.0
        %4370 = vmatprep.subr.mxu0 0.0
        %4371 = vmatpush1.msra.mxu0 0.0
        %4372 = vmatprep.subr.mxu0 0.0
        %4373 = vmatpush1.msra.mxu0 0.0
        %4374 = vmatprep.subr.mxu0 0.0
        %4375 = vmatpush1.msra.mxu0 0.0
        %4376 = vmatprep.subr.mxu0 0.0
        %4377 = vmatpush1.msra.mxu0 0.0
        %4378 = vmatprep.subr.mxu0 0.0
        %4379 = vmatpush1.msra.mxu0 0.0
        %4380 = vmatprep.subr.mxu0 0.0
        %4381 = vmatpush1.msra.mxu0 0.0
        %4382 = vmatprep.subr.mxu0 0.0
        %4383 = vmatpush1.msra.mxu0 0.0
        %4384 = vmatprep.subr.mxu0 0.0
        %4385 = vmatpush1.msra.mxu0 0.0
        %4386 = vmatprep.mubr.f32.mxu0 0.0
        %4387 = vmatmul.mubr.f32.gmra.mrb[0].mxu0 %v3774
        %v4388 = vpop.f32.mrb[0].mxu0
        %v4389 = vadd.f32 0.0, %v4388
        %v4390 = vpop.f32.mrb[0].mxu0
        %4391 = vmatprep.mubr.f32.mxu0 0.0
        %4392 = vmatmul.mubr.f32.gmra.mrb[0].mxu0 %v3777
        %v4393 = vpop.f32.mrb[0].mxu0
        %v4394 = vadd.f32 0.0, %v4393
        %v4395 = vpop.f32.mrb[0].mxu0
        %4396 = vdwg.mxu0
        %s4397 = scalar_lea.vmem %s8, 96
        %v4398 = vld [vmem:[%s4397] sm:$0xff]
        %v4399 = vld [vmem:[%s4397 + $0x8] sm:$0xff]
        %v4400 = vld [vmem:[%s4397 + $0x10] sm:$0xff]
        %v4401 = vld [vmem:[%s4397 + $0x18] sm:$0xff]
        %v4403 = vsel %vm3772, %v4398, 0
        %v4406 = vsel %vm3772, %v4399, 0
        %v4409 = vsel %vm3772, %v4400, 0
        %v4412 = vsel %vm3772, %v4401, 0
        %4414 = vmatprep.subr.mxu0 0.0
        %4415 = vmatpush1.msra.mxu0 %v4389
        %4416 = vmatprep.subr.mxu0 0.0
        %4417 = vmatpush1.msra.mxu0 %v4394
        %4418 = vmatprep.subr.mxu0 0.0
        %4419 = vmatpush1.msra.mxu0 0.0
        %4420 = vmatprep.subr.mxu0 0.0
        %4421 = vmatpush1.msra.mxu0 0.0
        %4422 = vmatprep.subr.mxu0 0.0
        %4423 = vmatpush1.msra.mxu0 0.0
        %4424 = vmatprep.subr.mxu0 0.0
        %4425 = vmatpush1.msra.mxu0 0.0
        %4426 = vmatprep.subr.mxu0 0.0
        %4427 = vmatpush1.msra.mxu0 0.0
        %4428 = vmatprep.subr.mxu0 0.0
        %4429 = vmatpush1.msra.mxu0 0.0
        %4430 = vmatprep.subr.mxu0 0.0
        %4431 = vmatpush1.msra.mxu0 0.0
        %4432 = vmatprep.subr.mxu0 0.0
        %4433 = vmatpush1.msra.mxu0 0.0
        %4434 = vmatprep.subr.mxu0 0.0
        %4435 = vmatpush1.msra.mxu0 0.0
        %4436 = vmatprep.subr.mxu0 0.0
        %4437 = vmatpush1.msra.mxu0 0.0
        %4438 = vmatprep.subr.mxu0 0.0
        %4439 = vmatpush1.msra.mxu0 0.0
        %4440 = vmatprep.subr.mxu0 0.0
        %4441 = vmatpush1.msra.mxu0 0.0
        %4442 = vmatprep.subr.mxu0 0.0
        %4443 = vmatpush1.msra.mxu0 0.0
        %4444 = vmatprep.subr.mxu0 0.0
        %4445 = vmatpush1.msra.mxu0 0.0
        %4446 = vmatprep.subr.mxu0 0.0
        %4447 = vmatpush1.msra.mxu0 0.0
        %4448 = vmatprep.subr.mxu0 0.0
        %4449 = vmatpush1.msra.mxu0 0.0
        %4450 = vmatprep.subr.mxu0 0.0
        %4451 = vmatpush1.msra.mxu0 0.0
        %4452 = vmatprep.subr.mxu0 0.0
        %4453 = vmatpush1.msra.mxu0 0.0
        %4454 = vmatprep.subr.mxu0 0.0
        %4455 = vmatpush1.msra.mxu0 0.0
        %4456 = vmatprep.subr.mxu0 0.0
        %4457 = vmatpush1.msra.mxu0 0.0
        %4458 = vmatprep.subr.mxu0 0.0
        %4459 = vmatpush1.msra.mxu0 0.0
        %4460 = vmatprep.subr.mxu0 0.0
        %4461 = vmatpush1.msra.mxu0 0.0
        %4462 = vmatprep.subr.mxu0 0.0
        %4463 = vmatpush1.msra.mxu0 0.0
        %4464 = vmatprep.subr.mxu0 0.0
        %4465 = vmatpush1.msra.mxu0 0.0
        %4466 = vmatprep.subr.mxu0 0.0
        %4467 = vmatpush1.msra.mxu0 0.0
        %4468 = vmatprep.subr.mxu0 0.0
        %4469 = vmatpush1.msra.mxu0 0.0
        %4470 = vmatprep.subr.mxu0 0.0
        %4471 = vmatpush1.msra.mxu0 0.0
        %4472 = vmatprep.subr.mxu0 0.0
        %4473 = vmatpush1.msra.mxu0 0.0
        %4474 = vmatprep.subr.mxu0 0.0
        %4475 = vmatpush1.msra.mxu0 0.0
        %4476 = vmatprep.subr.mxu0 0.0
        %4477 = vmatpush1.msra.mxu0 0.0
        %4478 = vmatprep.mubr.f32.mxu0 0.0
        %4479 = vmatmul.mubr.f32.gmra.mrb[0].mxu0 %v4403
        %v4480 = vpop.f32.mrb[0].mxu0
        %v4481 = vadd.f32 0.0, %v4480
        %v4482 = vpop.f32.mrb[0].mxu0
        %4483 = vmatprep.mubr.f32.mxu0 0.0
        %4484 = vmatmul.mubr.f32.gmra.mrb[0].mxu0 %v4406
        %v4485 = vpop.f32.mrb[0].mxu0
        %v4486 = vadd.f32 0.0, %v4485
        %v4487 = vpop.f32.mrb[0].mxu0
        %4488 = vmatprep.mubr.f32.mxu0 0.0
        %4489 = vmatmul.mubr.f32.gmra.mrb[0].mxu0 %v4409
        %v4490 = vpop.f32.mrb[0].mxu0
        %v4491 = vadd.f32 0.0, %v4490
        %v4492 = vpop.f32.mrb[0].mxu0
        %4493 = vmatprep.mubr.f32.mxu0 0.0
        %4494 = vmatmul.mubr.f32.gmra.mrb[0].mxu0 %v4412
        %v4495 = vpop.f32.mrb[0].mxu0
        %v4496 = vadd.f32 0.0, %v4495
        %v4497 = vpop.f32.mrb[0].mxu0
        %4498 = vdwg.mxu0
        %v4499 = vadd.f32 %v4315, %v4481
        %v4500 = vadd.f32 %v4316, %v4486
        %v4501 = vadd.f32 %v4317, %v4491
        %v4502 = vadd.f32 %v4318, %v4496
        %s4503 = scalar_lea.vmem [#allocation6], 64
        %v4504 = vld [vmem:[%s4503] sm:$0xff]
        %v4505 = vld [vmem:[%s4503 + $0x8] sm:$0xff]
        %4506 = vmatprep.subr.mxu0 0.0
        %4507 = vmatpush1.msra.mxu0 %v4504
        %4508 = vmatprep.subr.mxu0 0.0
        %4509 = vmatpush1.msra.mxu0 %v4505
        %4510 = vmatprep.subr.mxu0 0.0
        %4511 = vmatpush1.msra.mxu0 0.0
        %4512 = vmatprep.subr.mxu0 0.0
        %4513 = vmatpush1.msra.mxu0 0.0
        %4514 = vmatprep.subr.mxu0 0.0
        %4515 = vmatpush1.msra.mxu0 0.0
        %4516 = vmatprep.subr.mxu0 0.0
        %4517 = vmatpush1.msra.mxu0 0.0
        %4518 = vmatprep.subr.mxu0 0.0
        %4519 = vmatpush1.msra.mxu0 0.0
        %4520 = vmatprep.subr.mxu0 0.0
        %4521 = vmatpush1.msra.mxu0 0.0
        %4522 = vmatprep.subr.mxu0 0.0
        %4523 = vmatpush1.msra.mxu0 0.0
        %4524 = vmatprep.subr.mxu0 0.0
        %4525 = vmatpush1.msra.mxu0 0.0
        %4526 = vmatprep.subr.mxu0 0.0
        %4527 = vmatpush1.msra.mxu0 0.0
        %4528 = vmatprep.subr.mxu0 0.0
        %4529 = vmatpush1.msra.mxu0 0.0
        %4530 = vmatprep.subr.mxu0 0.0
        %4531 = vmatpush1.msra.mxu0 0.0
        %4532 = vmatprep.subr.mxu0 0.0
        %4533 = vmatpush1.msra.mxu0 0.0
        %4534 = vmatprep.subr.mxu0 0.0
        %4535 = vmatpush1.msra.mxu0 0.0
        %4536 = vmatprep.subr.mxu0 0.0
        %4537 = vmatpush1.msra.mxu0 0.0
        %4538 = vmatprep.subr.mxu0 0.0
        %4539 = vmatpush1.msra.mxu0 0.0
        %4540 = vmatprep.subr.mxu0 0.0
        %4541 = vmatpush1.msra.mxu0 0.0
        %4542 = vmatprep.subr.mxu0 0.0
        %4543 = vmatpush1.msra.mxu0 0.0
        %4544 = vmatprep.subr.mxu0 0.0
        %4545 = vmatpush1.msra.mxu0 0.0
        %4546 = vmatprep.subr.mxu0 0.0
        %4547 = vmatpush1.msra.mxu0 0.0
        %4548 = vmatprep.subr.mxu0 0.0
        %4549 = vmatpush1.msra.mxu0 0.0
        %4550 = vmatprep.subr.mxu0 0.0
        %4551 = vmatpush1.msra.mxu0 0.0
        %4552 = vmatprep.subr.mxu0 0.0
        %4553 = vmatpush1.msra.mxu0 0.0
        %4554 = vmatprep.subr.mxu0 0.0
        %4555 = vmatpush1.msra.mxu0 0.0
        %4556 = vmatprep.subr.mxu0 0.0
        %4557 = vmatpush1.msra.mxu0 0.0
        %4558 = vmatprep.subr.mxu0 0.0
        %4559 = vmatpush1.msra.mxu0 0.0
        %4560 = vmatprep.subr.mxu0 0.0
        %4561 = vmatpush1.msra.mxu0 0.0
        %4562 = vmatprep.subr.mxu0 0.0
        %4563 = vmatpush1.msra.mxu0 0.0
        %4564 = vmatprep.subr.mxu0 0.0
        %4565 = vmatpush1.msra.mxu0 0.0
        %4566 = vmatprep.subr.mxu0 0.0
        %4567 = vmatpush1.msra.mxu0 0.0
        %4568 = vmatprep.subr.mxu0 0.0
        %4569 = vmatpush1.msra.mxu0 0.0
        %4570 = vmatprep.mubr.f32.mxu0 0.0
        %4571 = vmatmul.mubr.f32.gmra.mrb[0].mxu0 %v3774
        %v4572 = vpop.f32.mrb[0].mxu0
        %v4573 = vadd.f32 0.0, %v4572
        %v4574 = vpop.f32.mrb[0].mxu0
        %4575 = vmatprep.mubr.f32.mxu0 0.0
        %4576 = vmatmul.mubr.f32.gmra.mrb[0].mxu0 %v3777
        %v4577 = vpop.f32.mrb[0].mxu0
        %v4578 = vadd.f32 0.0, %v4577
        %v4579 = vpop.f32.mrb[0].mxu0
        %4580 = vdwg.mxu0
        %s4581 = scalar_lea.vmem %s8, 128
        %v4582 = vld [vmem:[%s4581] sm:$0xff]
        %v4583 = vld [vmem:[%s4581 + $0x8] sm:$0xff]
        %v4584 = vld [vmem:[%s4581 + $0x10] sm:$0xff]
        %v4585 = vld [vmem:[%s4581 + $0x18] sm:$0xff]
        %v4587 = vsel %vm3772, %v4582, 0
        %v4590 = vsel %vm3772, %v4583, 0
        %v4593 = vsel %vm3772, %v4584, 0
        %v4596 = vsel %vm3772, %v4585, 0
        %4598 = vmatprep.subr.mxu0 0.0
        %4599 = vmatpush1.msra.mxu0 %v4573
        %4600 = vmatprep.subr.mxu0 0.0
        %4601 = vmatpush1.msra.mxu0 %v4578
        %4602 = vmatprep.subr.mxu0 0.0
        %4603 = vmatpush1.msra.mxu0 0.0
        %4604 = vmatprep.subr.mxu0 0.0
        %4605 = vmatpush1.msra.mxu0 0.0
        %4606 = vmatprep.subr.mxu0 0.0
        %4607 = vmatpush1.msra.mxu0 0.0
        %4608 = vmatprep.subr.mxu0 0.0
        %4609 = vmatpush1.msra.mxu0 0.0
        %4610 = vmatprep.subr.mxu0 0.0
        %4611 = vmatpush1.msra.mxu0 0.0
        %4612 = vmatprep.subr.mxu0 0.0
        %4613 = vmatpush1.msra.mxu0 0.0
        %4614 = vmatprep.subr.mxu0 0.0
        %4615 = vmatpush1.msra.mxu0 0.0
        %4616 = vmatprep.subr.mxu0 0.0
        %4617 = vmatpush1.msra.mxu0 0.0
        %4618 = vmatprep.subr.mxu0 0.0
        %4619 = vmatpush1.msra.mxu0 0.0
        %4620 = vmatprep.subr.mxu0 0.0
        %4621 = vmatpush1.msra.mxu0 0.0
        %4622 = vmatprep.subr.mxu0 0.0
        %4623 = vmatpush1.msra.mxu0 0.0
        %4624 = vmatprep.subr.mxu0 0.0
        %4625 = vmatpush1.msra.mxu0 0.0
        %4626 = vmatprep.subr.mxu0 0.0
        %4627 = vmatpush1.msra.mxu0 0.0
        %4628 = vmatprep.subr.mxu0 0.0
        %4629 = vmatpush1.msra.mxu0 0.0
        %4630 = vmatprep.subr.mxu0 0.0
        %4631 = vmatpush1.msra.mxu0 0.0
        %4632 = vmatprep.subr.mxu0 0.0
        %4633 = vmatpush1.msra.mxu0 0.0
        %4634 = vmatprep.subr.mxu0 0.0
        %4635 = vmatpush1.msra.mxu0 0.0
        %4636 = vmatprep.subr.mxu0 0.0
        %4637 = vmatpush1.msra.mxu0 0.0
        %4638 = vmatprep.subr.mxu0 0.0
        %4639 = vmatpush1.msra.mxu0 0.0
        %4640 = vmatprep.subr.mxu0 0.0
        %4641 = vmatpush1.msra.mxu0 0.0
        %4642 = vmatprep.subr.mxu0 0.0
        %4643 = vmatpush1.msra.mxu0 0.0
        %4644 = vmatprep.subr.mxu0 0.0
        %4645 = vmatpush1.msra.mxu0 0.0
        %4646 = vmatprep.subr.mxu0 0.0
        %4647 = vmatpush1.msra.mxu0 0.0
        %4648 = vmatprep.subr.mxu0 0.0
        %4649 = vmatpush1.msra.mxu0 0.0
        %4650 = vmatprep.subr.mxu0 0.0
        %4651 = vmatpush1.msra.mxu0 0.0
        %4652 = vmatprep.subr.mxu0 0.0
        %4653 = vmatpush1.msra.mxu0 0.0
        %4654 = vmatprep.subr.mxu0 0.0
        %4655 = vmatpush1.msra.mxu0 0.0
        %4656 = vmatprep.subr.mxu0 0.0
        %4657 = vmatpush1.msra.mxu0 0.0
        %4658 = vmatprep.subr.mxu0 0.0
        %4659 = vmatpush1.msra.mxu0 0.0
        %4660 = vmatprep.subr.mxu0 0.0
        %4661 = vmatpush1.msra.mxu0 0.0
        %4662 = vmatprep.mubr.f32.mxu0 0.0
        %4663 = vmatmul.mubr.f32.gmra.mrb[0].mxu0 %v4587
        %v4664 = vpop.f32.mrb[0].mxu0
        %v4665 = vadd.f32 0.0, %v4664
        %v4666 = vpop.f32.mrb[0].mxu0
        %4667 = vmatprep.mubr.f32.mxu0 0.0
        %4668 = vmatmul.mubr.f32.gmra.mrb[0].mxu0 %v4590
        %v4669 = vpop.f32.mrb[0].mxu0
        %v4670 = vadd.f32 0.0, %v4669
        %v4671 = vpop.f32.mrb[0].mxu0
        %4672 = vmatprep.mubr.f32.mxu0 0.0
        %4673 = vmatmul.mubr.f32.gmra.mrb[0].mxu0 %v4593
        %v4674 = vpop.f32.mrb[0].mxu0
        %v4675 = vadd.f32 0.0, %v4674
        %v4676 = vpop.f32.mrb[0].mxu0
        %4677 = vmatprep.mubr.f32.mxu0 0.0
        %4678 = vmatmul.mubr.f32.gmra.mrb[0].mxu0 %v4596
        %v4679 = vpop.f32.mrb[0].mxu0
        %v4680 = vadd.f32 0.0, %v4679
        %v4681 = vpop.f32.mrb[0].mxu0
        %4682 = vdwg.mxu0
        %v4683 = vadd.f32 %v4499, %v4665
        %v4684 = vadd.f32 %v4500, %v4670
        %v4685 = vadd.f32 %v4501, %v4675
        %v4686 = vadd.f32 %v4502, %v4680
        %s4687 = scalar_lea.vmem [#allocation6], 80
        %v4688 = vld [vmem:[%s4687] sm:$0xff]
        %v4689 = vld [vmem:[%s4687 + $0x8] sm:$0xff]
        %4690 = vmatprep.subr.mxu0 0.0
        %4691 = vmatpush1.msra.mxu0 %v4688
        %4692 = vmatprep.subr.mxu0 0.0
        %4693 = vmatpush1.msra.mxu0 %v4689
        %4694 = vmatprep.subr.mxu0 0.0
        %4695 = vmatpush1.msra.mxu0 0.0
        %4696 = vmatprep.subr.mxu0 0.0
        %4697 = vmatpush1.msra.mxu0 0.0
        %4698 = vmatprep.subr.mxu0 0.0
        %4699 = vmatpush1.msra.mxu0 0.0
        %4700 = vmatprep.subr.mxu0 0.0
        %4701 = vmatpush1.msra.mxu0 0.0
        %4702 = vmatprep.subr.mxu0 0.0
        %4703 = vmatpush1.msra.mxu0 0.0
        %4704 = vmatprep.subr.mxu0 0.0
        %4705 = vmatpush1.msra.mxu0 0.0
        %4706 = vmatprep.subr.mxu0 0.0
        %4707 = vmatpush1.msra.mxu0 0.0
        %4708 = vmatprep.subr.mxu0 0.0
        %4709 = vmatpush1.msra.mxu0 0.0
        %4710 = vmatprep.subr.mxu0 0.0
        %4711 = vmatpush1.msra.mxu0 0.0
        %4712 = vmatprep.subr.mxu0 0.0
        %4713 = vmatpush1.msra.mxu0 0.0
        %4714 = vmatprep.subr.mxu0 0.0
        %4715 = vmatpush1.msra.mxu0 0.0
        %4716 = vmatprep.subr.mxu0 0.0
        %4717 = vmatpush1.msra.mxu0 0.0
        %4718 = vmatprep.subr.mxu0 0.0
        %4719 = vmatpush1.msra.mxu0 0.0
        %4720 = vmatprep.subr.mxu0 0.0
        %4721 = vmatpush1.msra.mxu0 0.0
        %4722 = vmatprep.subr.mxu0 0.0
        %4723 = vmatpush1.msra.mxu0 0.0
        %4724 = vmatprep.subr.mxu0 0.0
        %4725 = vmatpush1.msra.mxu0 0.0
        %4726 = vmatprep.subr.mxu0 0.0
        %4727 = vmatpush1.msra.mxu0 0.0
        %4728 = vmatprep.subr.mxu0 0.0
        %4729 = vmatpush1.msra.mxu0 0.0
        %4730 = vmatprep.subr.mxu0 0.0
        %4731 = vmatpush1.msra.mxu0 0.0
        %4732 = vmatprep.subr.mxu0 0.0
        %4733 = vmatpush1.msra.mxu0 0.0
        %4734 = vmatprep.subr.mxu0 0.0
        %4735 = vmatpush1.msra.mxu0 0.0
        %4736 = vmatprep.subr.mxu0 0.0
        %4737 = vmatpush1.msra.mxu0 0.0
        %4738 = vmatprep.subr.mxu0 0.0
        %4739 = vmatpush1.msra.mxu0 0.0
        %4740 = vmatprep.subr.mxu0 0.0
        %4741 = vmatpush1.msra.mxu0 0.0
        %4742 = vmatprep.subr.mxu0 0.0
        %4743 = vmatpush1.msra.mxu0 0.0
        %4744 = vmatprep.subr.mxu0 0.0
        %4745 = vmatpush1.msra.mxu0 0.0
        %4746 = vmatprep.subr.mxu0 0.0
        %4747 = vmatpush1.msra.mxu0 0.0
        %4748 = vmatprep.subr.mxu0 0.0
        %4749 = vmatpush1.msra.mxu0 0.0
        %4750 = vmatprep.subr.mxu0 0.0
        %4751 = vmatpush1.msra.mxu0 0.0
        %4752 = vmatprep.subr.mxu0 0.0
        %4753 = vmatpush1.msra.mxu0 0.0
        %4754 = vmatprep.mubr.f32.mxu0 0.0
        %4755 = vmatmul.mubr.f32.gmra.mrb[0].mxu0 %v3774
        %v4756 = vpop.f32.mrb[0].mxu0
        %v4757 = vadd.f32 0.0, %v4756
        %v4758 = vpop.f32.mrb[0].mxu0
        %4759 = vmatprep.mubr.f32.mxu0 0.0
        %4760 = vmatmul.mubr.f32.gmra.mrb[0].mxu0 %v3777
        %v4761 = vpop.f32.mrb[0].mxu0
        %v4762 = vadd.f32 0.0, %v4761
        %v4763 = vpop.f32.mrb[0].mxu0
        %4764 = vdwg.mxu0
        %s4765 = scalar_lea.vmem %s8, 160
        %v4766 = vld [vmem:[%s4765] sm:$0xff]
        %v4767 = vld [vmem:[%s4765 + $0x8] sm:$0xff]
        %v4768 = vld [vmem:[%s4765 + $0x10] sm:$0xff]
        %v4769 = vld [vmem:[%s4765 + $0x18] sm:$0xff]
        %v4771 = vsel %vm3772, %v4766, 0
        %v4774 = vsel %vm3772, %v4767, 0
        %v4777 = vsel %vm3772, %v4768, 0
        %v4780 = vsel %vm3772, %v4769, 0
        %4782 = vmatprep.subr.mxu0 0.0
        %4783 = vmatpush1.msra.mxu0 %v4757
        %4784 = vmatprep.subr.mxu0 0.0
        %4785 = vmatpush1.msra.mxu0 %v4762
        %4786 = vmatprep.subr.mxu0 0.0
        %4787 = vmatpush1.msra.mxu0 0.0
        %4788 = vmatprep.subr.mxu0 0.0
        %4789 = vmatpush1.msra.mxu0 0.0
        %4790 = vmatprep.subr.mxu0 0.0
        %4791 = vmatpush1.msra.mxu0 0.0
        %4792 = vmatprep.subr.mxu0 0.0
        %4793 = vmatpush1.msra.mxu0 0.0
        %4794 = vmatprep.subr.mxu0 0.0
        %4795 = vmatpush1.msra.mxu0 0.0
        %4796 = vmatprep.subr.mxu0 0.0
        %4797 = vmatpush1.msra.mxu0 0.0
        %4798 = vmatprep.subr.mxu0 0.0
        %4799 = vmatpush1.msra.mxu0 0.0
        %4800 = vmatprep.subr.mxu0 0.0
        %4801 = vmatpush1.msra.mxu0 0.0
        %4802 = vmatprep.subr.mxu0 0.0
        %4803 = vmatpush1.msra.mxu0 0.0
        %4804 = vmatprep.subr.mxu0 0.0
        %4805 = vmatpush1.msra.mxu0 0.0
        %4806 = vmatprep.subr.mxu0 0.0
        %4807 = vmatpush1.msra.mxu0 0.0
        %4808 = vmatprep.subr.mxu0 0.0
        %4809 = vmatpush1.msra.mxu0 0.0
        %4810 = vmatprep.subr.mxu0 0.0
        %4811 = vmatpush1.msra.mxu0 0.0
        %4812 = vmatprep.subr.mxu0 0.0
        %4813 = vmatpush1.msra.mxu0 0.0
        %4814 = vmatprep.subr.mxu0 0.0
        %4815 = vmatpush1.msra.mxu0 0.0
        %4816 = vmatprep.subr.mxu0 0.0
        %4817 = vmatpush1.msra.mxu0 0.0
        %4818 = vmatprep.subr.mxu0 0.0
        %4819 = vmatpush1.msra.mxu0 0.0
        %4820 = vmatprep.subr.mxu0 0.0
        %4821 = vmatpush1.msra.mxu0 0.0
        %4822 = vmatprep.subr.mxu0 0.0
        %4823 = vmatpush1.msra.mxu0 0.0
        %4824 = vmatprep.subr.mxu0 0.0
        %4825 = vmatpush1.msra.mxu0 0.0
        %4826 = vmatprep.subr.mxu0 0.0
        %4827 = vmatpush1.msra.mxu0 0.0
        %4828 = vmatprep.subr.mxu0 0.0
        %4829 = vmatpush1.msra.mxu0 0.0
        %4830 = vmatprep.subr.mxu0 0.0
        %4831 = vmatpush1.msra.mxu0 0.0
        %4832 = vmatprep.subr.mxu0 0.0
        %4833 = vmatpush1.msra.mxu0 0.0
        %4834 = vmatprep.subr.mxu0 0.0
        %4835 = vmatpush1.msra.mxu0 0.0
        %4836 = vmatprep.subr.mxu0 0.0
        %4837 = vmatpush1.msra.mxu0 0.0
        %4838 = vmatprep.subr.mxu0 0.0
        %4839 = vmatpush1.msra.mxu0 0.0
        %4840 = vmatprep.subr.mxu0 0.0
        %4841 = vmatpush1.msra.mxu0 0.0
        %4842 = vmatprep.subr.mxu0 0.0
        %4843 = vmatpush1.msra.mxu0 0.0
        %4844 = vmatprep.subr.mxu0 0.0
        %4845 = vmatpush1.msra.mxu0 0.0
        %4846 = vmatprep.mubr.f32.mxu0 0.0
        %4847 = vmatmul.mubr.f32.gmra.mrb[0].mxu0 %v4771
        %v4848 = vpop.f32.mrb[0].mxu0
        %v4849 = vadd.f32 0.0, %v4848
        %v4850 = vpop.f32.mrb[0].mxu0
        %4851 = vmatprep.mubr.f32.mxu0 0.0
        %4852 = vmatmul.mubr.f32.gmra.mrb[0].mxu0 %v4774
        %v4853 = vpop.f32.mrb[0].mxu0
        %v4854 = vadd.f32 0.0, %v4853
        %v4855 = vpop.f32.mrb[0].mxu0
        %4856 = vmatprep.mubr.f32.mxu0 0.0
        %4857 = vmatmul.mubr.f32.gmra.mrb[0].mxu0 %v4777
        %v4858 = vpop.f32.mrb[0].mxu0
        %v4859 = vadd.f32 0.0, %v4858
        %v4860 = vpop.f32.mrb[0].mxu0
        %4861 = vmatprep.mubr.f32.mxu0 0.0
        %4862 = vmatmul.mubr.f32.gmra.mrb[0].mxu0 %v4780
        %v4863 = vpop.f32.mrb[0].mxu0
        %v4864 = vadd.f32 0.0, %v4863
        %v4865 = vpop.f32.mrb[0].mxu0
        %4866 = vdwg.mxu0
        %v4867 = vadd.f32 %v4683, %v4849
        %v4868 = vadd.f32 %v4684, %v4854
        %v4869 = vadd.f32 %v4685, %v4859
        %v4870 = vadd.f32 %v4686, %v4864
        %s4871 = scalar_lea.vmem [#allocation6], 96
        %v4872 = vld [vmem:[%s4871] sm:$0xff]
        %v4873 = vld [vmem:[%s4871 + $0x8] sm:$0xff]
        %4874 = vmatprep.subr.mxu0 0.0
        %4875 = vmatpush1.msra.mxu0 %v4872
        %4876 = vmatprep.subr.mxu0 0.0
        %4877 = vmatpush1.msra.mxu0 %v4873
        %4878 = vmatprep.subr.mxu0 0.0
        %4879 = vmatpush1.msra.mxu0 0.0
        %4880 = vmatprep.subr.mxu0 0.0
        %4881 = vmatpush1.msra.mxu0 0.0
        %4882 = vmatprep.subr.mxu0 0.0
        %4883 = vmatpush1.msra.mxu0 0.0
        %4884 = vmatprep.subr.mxu0 0.0
        %4885 = vmatpush1.msra.mxu0 0.0
        %4886 = vmatprep.subr.mxu0 0.0
        %4887 = vmatpush1.msra.mxu0 0.0
        %4888 = vmatprep.subr.mxu0 0.0
        %4889 = vmatpush1.msra.mxu0 0.0
        %4890 = vmatprep.subr.mxu0 0.0
        %4891 = vmatpush1.msra.mxu0 0.0
        %4892 = vmatprep.subr.mxu0 0.0
        %4893 = vmatpush1.msra.mxu0 0.0
        %4894 = vmatprep.subr.mxu0 0.0
        %4895 = vmatpush1.msra.mxu0 0.0
        %4896 = vmatprep.subr.mxu0 0.0
        %4897 = vmatpush1.msra.mxu0 0.0
        %4898 = vmatprep.subr.mxu0 0.0
        %4899 = vmatpush1.msra.mxu0 0.0
        %4900 = vmatprep.subr.mxu0 0.0
        %4901 = vmatpush1.msra.mxu0 0.0
        %4902 = vmatprep.subr.mxu0 0.0
        %4903 = vmatpush1.msra.mxu0 0.0
        %4904 = vmatprep.subr.mxu0 0.0
        %4905 = vmatpush1.msra.mxu0 0.0
        %4906 = vmatprep.subr.mxu0 0.0
        %4907 = vmatpush1.msra.mxu0 0.0
        %4908 = vmatprep.subr.mxu0 0.0
        %4909 = vmatpush1.msra.mxu0 0.0
        %4910 = vmatprep.subr.mxu0 0.0
        %4911 = vmatpush1.msra.mxu0 0.0
        %4912 = vmatprep.subr.mxu0 0.0
        %4913 = vmatpush1.msra.mxu0 0.0
        %4914 = vmatprep.subr.mxu0 0.0
        %4915 = vmatpush1.msra.mxu0 0.0
        %4916 = vmatprep.subr.mxu0 0.0
        %4917 = vmatpush1.msra.mxu0 0.0
        %4918 = vmatprep.subr.mxu0 0.0
        %4919 = vmatpush1.msra.mxu0 0.0
        %4920 = vmatprep.subr.mxu0 0.0
        %4921 = vmatpush1.msra.mxu0 0.0
        %4922 = vmatprep.subr.mxu0 0.0
        %4923 = vmatpush1.msra.mxu0 0.0
        %4924 = vmatprep.subr.mxu0 0.0
        %4925 = vmatpush1.msra.mxu0 0.0
        %4926 = vmatprep.subr.mxu0 0.0
        %4927 = vmatpush1.msra.mxu0 0.0
        %4928 = vmatprep.subr.mxu0 0.0
        %4929 = vmatpush1.msra.mxu0 0.0
        %4930 = vmatprep.subr.mxu0 0.0
        %4931 = vmatpush1.msra.mxu0 0.0
        %4932 = vmatprep.subr.mxu0 0.0
        %4933 = vmatpush1.msra.mxu0 0.0
        %4934 = vmatprep.subr.mxu0 0.0
        %4935 = vmatpush1.msra.mxu0 0.0
        %4936 = vmatprep.subr.mxu0 0.0
        %4937 = vmatpush1.msra.mxu0 0.0
        %4938 = vmatprep.mubr.f32.mxu0 0.0
        %4939 = vmatmul.mubr.f32.gmra.mrb[0].mxu0 %v3774
        %v4940 = vpop.f32.mrb[0].mxu0
        %v4941 = vadd.f32 0.0, %v4940
        %v4942 = vpop.f32.mrb[0].mxu0
        %4943 = vmatprep.mubr.f32.mxu0 0.0
        %4944 = vmatmul.mubr.f32.gmra.mrb[0].mxu0 %v3777
        %v4945 = vpop.f32.mrb[0].mxu0
        %v4946 = vadd.f32 0.0, %v4945
        %v4947 = vpop.f32.mrb[0].mxu0
        %4948 = vdwg.mxu0
        %s4949 = scalar_lea.vmem %s8, 192
        %v4950 = vld [vmem:[%s4949] sm:$0xff]
        %v4951 = vld [vmem:[%s4949 + $0x8] sm:$0xff]
        %v4952 = vld [vmem:[%s4949 + $0x10] sm:$0xff]
        %v4953 = vld [vmem:[%s4949 + $0x18] sm:$0xff]
        %v4955 = vsel %vm3772, %v4950, 0
        %v4958 = vsel %vm3772, %v4951, 0
        %v4961 = vsel %vm3772, %v4952, 0
        %v4964 = vsel %vm3772, %v4953, 0
        %4966 = vmatprep.subr.mxu0 0.0
        %4967 = vmatpush1.msra.mxu0 %v4941
        %4968 = vmatprep.subr.mxu0 0.0
        %4969 = vmatpush1.msra.mxu0 %v4946
        %4970 = vmatprep.subr.mxu0 0.0
        %4971 = vmatpush1.msra.mxu0 0.0
        %4972 = vmatprep.subr.mxu0 0.0
        %4973 = vmatpush1.msra.mxu0 0.0
        %4974 = vmatprep.subr.mxu0 0.0
        %4975 = vmatpush1.msra.mxu0 0.0
        %4976 = vmatprep.subr.mxu0 0.0
        %4977 = vmatpush1.msra.mxu0 0.0
        %4978 = vmatprep.subr.mxu0 0.0
        %4979 = vmatpush1.msra.mxu0 0.0
        %4980 = vmatprep.subr.mxu0 0.0
        %4981 = vmatpush1.msra.mxu0 0.0
        %4982 = vmatprep.subr.mxu0 0.0
        %4983 = vmatpush1.msra.mxu0 0.0
        %4984 = vmatprep.subr.mxu0 0.0
        %4985 = vmatpush1.msra.mxu0 0.0
        %4986 = vmatprep.subr.mxu0 0.0
        %4987 = vmatpush1.msra.mxu0 0.0
        %4988 = vmatprep.subr.mxu0 0.0
        %4989 = vmatpush1.msra.mxu0 0.0
        %4990 = vmatprep.subr.mxu0 0.0
        %4991 = vmatpush1.msra.mxu0 0.0
        %4992 = vmatprep.subr.mxu0 0.0
        %4993 = vmatpush1.msra.mxu0 0.0
        %4994 = vmatprep.subr.mxu0 0.0
        %4995 = vmatpush1.msra.mxu0 0.0
        %4996 = vmatprep.subr.mxu0 0.0
        %4997 = vmatpush1.msra.mxu0 0.0
        %4998 = vmatprep.subr.mxu0 0.0
        %4999 = vmatpush1.msra.mxu0 0.0
        %5000 = vmatprep.subr.mxu0 0.0
        %5001 = vmatpush1.msra.mxu0 0.0
        %5002 = vmatprep.subr.mxu0 0.0
        %5003 = vmatpush1.msra.mxu0 0.0
        %5004 = vmatprep.subr.mxu0 0.0
        %5005 = vmatpush1.msra.mxu0 0.0
        %5006 = vmatprep.subr.mxu0 0.0
        %5007 = vmatpush1.msra.mxu0 0.0
        %5008 = vmatprep.subr.mxu0 0.0
        %5009 = vmatpush1.msra.mxu0 0.0
        %5010 = vmatprep.subr.mxu0 0.0
        %5011 = vmatpush1.msra.mxu0 0.0
        %5012 = vmatprep.subr.mxu0 0.0
        %5013 = vmatpush1.msra.mxu0 0.0
        %5014 = vmatprep.subr.mxu0 0.0
        %5015 = vmatpush1.msra.mxu0 0.0
        %5016 = vmatprep.subr.mxu0 0.0
        %5017 = vmatpush1.msra.mxu0 0.0
        %5018 = vmatprep.subr.mxu0 0.0
        %5019 = vmatpush1.msra.mxu0 0.0
        %5020 = vmatprep.subr.mxu0 0.0
        %5021 = vmatpush1.msra.mxu0 0.0
        %5022 = vmatprep.subr.mxu0 0.0
        %5023 = vmatpush1.msra.mxu0 0.0
        %5024 = vmatprep.subr.mxu0 0.0
        %5025 = vmatpush1.msra.mxu0 0.0
        %5026 = vmatprep.subr.mxu0 0.0
        %5027 = vmatpush1.msra.mxu0 0.0
        %5028 = vmatprep.subr.mxu0 0.0
        %5029 = vmatpush1.msra.mxu0 0.0
        %5030 = vmatprep.mubr.f32.mxu0 0.0
        %5031 = vmatmul.mubr.f32.gmra.mrb[0].mxu0 %v4955
        %v5032 = vpop.f32.mrb[0].mxu0
        %v5033 = vadd.f32 0.0, %v5032
        %v5034 = vpop.f32.mrb[0].mxu0
        %5035 = vmatprep.mubr.f32.mxu0 0.0
        %5036 = vmatmul.mubr.f32.gmra.mrb[0].mxu0 %v4958
        %v5037 = vpop.f32.mrb[0].mxu0
        %v5038 = vadd.f32 0.0, %v5037
        %v5039 = vpop.f32.mrb[0].mxu0
        %5040 = vmatprep.mubr.f32.mxu0 0.0
        %5041 = vmatmul.mubr.f32.gmra.mrb[0].mxu0 %v4961
        %v5042 = vpop.f32.mrb[0].mxu0
        %v5043 = vadd.f32 0.0, %v5042
        %v5044 = vpop.f32.mrb[0].mxu0
        %5045 = vmatprep.mubr.f32.mxu0 0.0
        %5046 = vmatmul.mubr.f32.gmra.mrb[0].mxu0 %v4964
        %v5047 = vpop.f32.mrb[0].mxu0
        %v5048 = vadd.f32 0.0, %v5047
        %v5049 = vpop.f32.mrb[0].mxu0
        %5050 = vdwg.mxu0
        %v5051 = vadd.f32 %v4867, %v5033
        %v5052 = vadd.f32 %v4868, %v5038
        %v5053 = vadd.f32 %v4869, %v5043
        %v5054 = vadd.f32 %v4870, %v5048
        %s5055 = scalar_lea.vmem [#allocation6], 112
        %v5056 = vld [vmem:[%s5055] sm:$0xff]
        %v5057 = vld [vmem:[%s5055 + $0x8] sm:$0xff]
        %5058 = vmatprep.subr.mxu0 0.0
        %5059 = vmatpush1.msra.mxu0 %v5056
        %5060 = vmatprep.subr.mxu0 0.0
        %5061 = vmatpush1.msra.mxu0 %v5057
        %5062 = vmatprep.subr.mxu0 0.0
        %5063 = vmatpush1.msra.mxu0 0.0
        %5064 = vmatprep.subr.mxu0 0.0
        %5065 = vmatpush1.msra.mxu0 0.0
        %5066 = vmatprep.subr.mxu0 0.0
        %5067 = vmatpush1.msra.mxu0 0.0
        %5068 = vmatprep.subr.mxu0 0.0
        %5069 = vmatpush1.msra.mxu0 0.0
        %5070 = vmatprep.subr.mxu0 0.0
        %5071 = vmatpush1.msra.mxu0 0.0
        %5072 = vmatprep.subr.mxu0 0.0
        %5073 = vmatpush1.msra.mxu0 0.0
        %5074 = vmatprep.subr.mxu0 0.0
        %5075 = vmatpush1.msra.mxu0 0.0
        %5076 = vmatprep.subr.mxu0 0.0
        %5077 = vmatpush1.msra.mxu0 0.0
        %5078 = vmatprep.subr.mxu0 0.0
        %5079 = vmatpush1.msra.mxu0 0.0
        %5080 = vmatprep.subr.mxu0 0.0
        %5081 = vmatpush1.msra.mxu0 0.0
        %5082 = vmatprep.subr.mxu0 0.0
        %5083 = vmatpush1.msra.mxu0 0.0
        %5084 = vmatprep.subr.mxu0 0.0
        %5085 = vmatpush1.msra.mxu0 0.0
        %5086 = vmatprep.subr.mxu0 0.0
        %5087 = vmatpush1.msra.mxu0 0.0
        %5088 = vmatprep.subr.mxu0 0.0
        %5089 = vmatpush1.msra.mxu0 0.0
        %5090 = vmatprep.subr.mxu0 0.0
        %5091 = vmatpush1.msra.mxu0 0.0
        %5092 = vmatprep.subr.mxu0 0.0
        %5093 = vmatpush1.msra.mxu0 0.0
        %5094 = vmatprep.subr.mxu0 0.0
        %5095 = vmatpush1.msra.mxu0 0.0
        %5096 = vmatprep.subr.mxu0 0.0
        %5097 = vmatpush1.msra.mxu0 0.0
        %5098 = vmatprep.subr.mxu0 0.0
        %5099 = vmatpush1.msra.mxu0 0.0
        %5100 = vmatprep.subr.mxu0 0.0
        %5101 = vmatpush1.msra.mxu0 0.0
        %5102 = vmatprep.subr.mxu0 0.0
        %5103 = vmatpush1.msra.mxu0 0.0
        %5104 = vmatprep.subr.mxu0 0.0
        %5105 = vmatpush1.msra.mxu0 0.0
        %5106 = vmatprep.subr.mxu0 0.0
        %5107 = vmatpush1.msra.mxu0 0.0
        %5108 = vmatprep.subr.mxu0 0.0
        %5109 = vmatpush1.msra.mxu0 0.0
        %5110 = vmatprep.subr.mxu0 0.0
        %5111 = vmatpush1.msra.mxu0 0.0
        %5112 = vmatprep.subr.mxu0 0.0
        %5113 = vmatpush1.msra.mxu0 0.0
        %5114 = vmatprep.subr.mxu0 0.0
        %5115 = vmatpush1.msra.mxu0 0.0
        %5116 = vmatprep.subr.mxu0 0.0
        %5117 = vmatpush1.msra.mxu0 0.0
        %5118 = vmatprep.subr.mxu0 0.0
        %5119 = vmatpush1.msra.mxu0 0.0
        %5120 = vmatprep.subr.mxu0 0.0
        %5121 = vmatpush1.msra.mxu0 0.0
        %5122 = vmatprep.mubr.f32.mxu0 0.0
        %5123 = vmatmul.mubr.f32.gmra.mrb[0].mxu0 %v3774
        %v5124 = vpop.f32.mrb[0].mxu0
        %v5125 = vadd.f32 0.0, %v5124
        %v5126 = vpop.f32.mrb[0].mxu0
        %5127 = vmatprep.mubr.f32.mxu0 0.0
        %5128 = vmatmul.mubr.f32.gmra.mrb[0].mxu0 %v3777
        %v5129 = vpop.f32.mrb[0].mxu0
        %v5130 = vadd.f32 0.0, %v5129
        %v5131 = vpop.f32.mrb[0].mxu0
        %5132 = vdwg.mxu0
        %s5133 = scalar_lea.vmem %s8, 224
        %v5134 = vld [vmem:[%s5133] sm:$0xff]
        %v5135 = vld [vmem:[%s5133 + $0x8] sm:$0xff]
        %v5136 = vld [vmem:[%s5133 + $0x10] sm:$0xff]
        %v5137 = vld [vmem:[%s5133 + $0x18] sm:$0xff]
        %v5139 = vsel %vm3772, %v5134, 0
        %v5142 = vsel %vm3772, %v5135, 0
        %v5145 = vsel %vm3772, %v5136, 0
        %v5148 = vsel %vm3772, %v5137, 0
        %5150 = vmatprep.subr.mxu0 0.0
        %5151 = vmatpush1.msra.mxu0 %v5125
        %5152 = vmatprep.subr.mxu0 0.0
        %5153 = vmatpush1.msra.mxu0 %v5130
        %5154 = vmatprep.subr.mxu0 0.0
        %5155 = vmatpush1.msra.mxu0 0.0
        %5156 = vmatprep.subr.mxu0 0.0
        %5157 = vmatpush1.msra.mxu0 0.0
        %5158 = vmatprep.subr.mxu0 0.0
        %5159 = vmatpush1.msra.mxu0 0.0
        %5160 = vmatprep.subr.mxu0 0.0
        %5161 = vmatpush1.msra.mxu0 0.0
        %5162 = vmatprep.subr.mxu0 0.0
        %5163 = vmatpush1.msra.mxu0 0.0
        %5164 = vmatprep.subr.mxu0 0.0
        %5165 = vmatpush1.msra.mxu0 0.0
        %5166 = vmatprep.subr.mxu0 0.0
        %5167 = vmatpush1.msra.mxu0 0.0
        %5168 = vmatprep.subr.mxu0 0.0
        %5169 = vmatpush1.msra.mxu0 0.0
        %5170 = vmatprep.subr.mxu0 0.0
        %5171 = vmatpush1.msra.mxu0 0.0
        %5172 = vmatprep.subr.mxu0 0.0
        %5173 = vmatpush1.msra.mxu0 0.0
        %5174 = vmatprep.subr.mxu0 0.0
        %5175 = vmatpush1.msra.mxu0 0.0
        %5176 = vmatprep.subr.mxu0 0.0
        %5177 = vmatpush1.msra.mxu0 0.0
        %5178 = vmatprep.subr.mxu0 0.0
        %5179 = vmatpush1.msra.mxu0 0.0
        %5180 = vmatprep.subr.mxu0 0.0
        %5181 = vmatpush1.msra.mxu0 0.0
        %5182 = vmatprep.subr.mxu0 0.0
        %5183 = vmatpush1.msra.mxu0 0.0
        %5184 = vmatprep.subr.mxu0 0.0
        %5185 = vmatpush1.msra.mxu0 0.0
        %5186 = vmatprep.subr.mxu0 0.0
        %5187 = vmatpush1.msra.mxu0 0.0
        %5188 = vmatprep.subr.mxu0 0.0
        %5189 = vmatpush1.msra.mxu0 0.0
        %5190 = vmatprep.subr.mxu0 0.0
        %5191 = vmatpush1.msra.mxu0 0.0
        %5192 = vmatprep.subr.mxu0 0.0
        %5193 = vmatpush1.msra.mxu0 0.0
        %5194 = vmatprep.subr.mxu0 0.0
        %5195 = vmatpush1.msra.mxu0 0.0
        %5196 = vmatprep.subr.mxu0 0.0
        %5197 = vmatpush1.msra.mxu0 0.0
        %5198 = vmatprep.subr.mxu0 0.0
        %5199 = vmatpush1.msra.mxu0 0.0
        %5200 = vmatprep.subr.mxu0 0.0
        %5201 = vmatpush1.msra.mxu0 0.0
        %5202 = vmatprep.subr.mxu0 0.0
        %5203 = vmatpush1.msra.mxu0 0.0
        %5204 = vmatprep.subr.mxu0 0.0
        %5205 = vmatpush1.msra.mxu0 0.0
        %5206 = vmatprep.subr.mxu0 0.0
        %5207 = vmatpush1.msra.mxu0 0.0
        %5208 = vmatprep.subr.mxu0 0.0
        %5209 = vmatpush1.msra.mxu0 0.0
        %5210 = vmatprep.subr.mxu0 0.0
        %5211 = vmatpush1.msra.mxu0 0.0
        %5212 = vmatprep.subr.mxu0 0.0
        %5213 = vmatpush1.msra.mxu0 0.0
        %5214 = vmatprep.mubr.f32.mxu0 0.0
        %5215 = vmatmul.mubr.f32.gmra.mrb[0].mxu0 %v5139
        %v5216 = vpop.f32.mrb[0].mxu0
        %v5217 = vadd.f32 0.0, %v5216
        %v5218 = vpop.f32.mrb[0].mxu0
        %5219 = vmatprep.mubr.f32.mxu0 0.0
        %5220 = vmatmul.mubr.f32.gmra.mrb[0].mxu0 %v5142
        %v5221 = vpop.f32.mrb[0].mxu0
        %v5222 = vadd.f32 0.0, %v5221
        %v5223 = vpop.f32.mrb[0].mxu0
        %5224 = vmatprep.mubr.f32.mxu0 0.0
        %5225 = vmatmul.mubr.f32.gmra.mrb[0].mxu0 %v5145
        %v5226 = vpop.f32.mrb[0].mxu0
        %v5227 = vadd.f32 0.0, %v5226
        %v5228 = vpop.f32.mrb[0].mxu0
        %5229 = vmatprep.mubr.f32.mxu0 0.0
        %5230 = vmatmul.mubr.f32.gmra.mrb[0].mxu0 %v5148
        %v5231 = vpop.f32.mrb[0].mxu0
        %v5232 = vadd.f32 0.0, %v5231
        %v5233 = vpop.f32.mrb[0].mxu0
        %5234 = vdwg.mxu0
        %v5235 = vadd.f32 %v5051, %v5217
        %v5236 = vadd.f32 %v5052, %v5222
        %v5237 = vadd.f32 %v5053, %v5227
        %v5238 = vadd.f32 %v5054, %v5232
        %s5239 = scalar_lea.vmem [#allocation6], 128
        %v5240 = vld [vmem:[%s5239] sm:$0xff]
        %v5241 = vld [vmem:[%s5239 + $0x8] sm:$0xff]
        %5242 = vmatprep.subr.mxu0 0.0
        %5243 = vmatpush1.msra.mxu0 %v5240
        %5244 = vmatprep.subr.mxu0 0.0
        %5245 = vmatpush1.msra.mxu0 %v5241
        %5246 = vmatprep.subr.mxu0 0.0
        %5247 = vmatpush1.msra.mxu0 0.0
        %5248 = vmatprep.subr.mxu0 0.0
        %5249 = vmatpush1.msra.mxu0 0.0
        %5250 = vmatprep.subr.mxu0 0.0
        %5251 = vmatpush1.msra.mxu0 0.0
        %5252 = vmatprep.subr.mxu0 0.0
        %5253 = vmatpush1.msra.mxu0 0.0
        %5254 = vmatprep.subr.mxu0 0.0
        %5255 = vmatpush1.msra.mxu0 0.0
        %5256 = vmatprep.subr.mxu0 0.0
        %5257 = vmatpush1.msra.mxu0 0.0
        %5258 = vmatprep.subr.mxu0 0.0
        %5259 = vmatpush1.msra.mxu0 0.0
        %5260 = vmatprep.subr.mxu0 0.0
        %5261 = vmatpush1.msra.mxu0 0.0
        %5262 = vmatprep.subr.mxu0 0.0
        %5263 = vmatpush1.msra.mxu0 0.0
        %5264 = vmatprep.subr.mxu0 0.0
        %5265 = vmatpush1.msra.mxu0 0.0
        %5266 = vmatprep.subr.mxu0 0.0
        %5267 = vmatpush1.msra.mxu0 0.0
        %5268 = vmatprep.subr.mxu0 0.0
        %5269 = vmatpush1.msra.mxu0 0.0
        %5270 = vmatprep.subr.mxu0 0.0
        %5271 = vmatpush1.msra.mxu0 0.0
        %5272 = vmatprep.subr.mxu0 0.0
        %5273 = vmatpush1.msra.mxu0 0.0
        %5274 = vmatprep.subr.mxu0 0.0
        %5275 = vmatpush1.msra.mxu0 0.0
        %5276 = vmatprep.subr.mxu0 0.0
        %5277 = vmatpush1.msra.mxu0 0.0
        %5278 = vmatprep.subr.mxu0 0.0
        %5279 = vmatpush1.msra.mxu0 0.0
        %5280 = vmatprep.subr.mxu0 0.0
        %5281 = vmatpush1.msra.mxu0 0.0
        %5282 = vmatprep.subr.mxu0 0.0
        %5283 = vmatpush1.msra.mxu0 0.0
        %5284 = vmatprep.subr.mxu0 0.0
        %5285 = vmatpush1.msra.mxu0 0.0
        %5286 = vmatprep.subr.mxu0 0.0
        %5287 = vmatpush1.msra.mxu0 0.0
        %5288 = vmatprep.subr.mxu0 0.0
        %5289 = vmatpush1.msra.mxu0 0.0
        %5290 = vmatprep.subr.mxu0 0.0
        %5291 = vmatpush1.msra.mxu0 0.0
        %5292 = vmatprep.subr.mxu0 0.0
        %5293 = vmatpush1.msra.mxu0 0.0
        %5294 = vmatprep.subr.mxu0 0.0
        %5295 = vmatpush1.msra.mxu0 0.0
        %5296 = vmatprep.subr.mxu0 0.0
        %5297 = vmatpush1.msra.mxu0 0.0
        %5298 = vmatprep.subr.mxu0 0.0
        %5299 = vmatpush1.msra.mxu0 0.0
        %5300 = vmatprep.subr.mxu0 0.0
        %5301 = vmatpush1.msra.mxu0 0.0
        %5302 = vmatprep.subr.mxu0 0.0
        %5303 = vmatpush1.msra.mxu0 0.0
        %5304 = vmatprep.subr.mxu0 0.0
        %5305 = vmatpush1.msra.mxu0 0.0
        %5306 = vmatprep.mubr.f32.mxu0 0.0
        %5307 = vmatmul.mubr.f32.gmra.mrb[0].mxu0 %v3774
        %v5308 = vpop.f32.mrb[0].mxu0
        %v5309 = vadd.f32 0.0, %v5308
        %v5310 = vpop.f32.mrb[0].mxu0
        %5311 = vmatprep.mubr.f32.mxu0 0.0
        %5312 = vmatmul.mubr.f32.gmra.mrb[0].mxu0 %v3777
        %v5313 = vpop.f32.mrb[0].mxu0
        %v5314 = vadd.f32 0.0, %v5313
        %v5315 = vpop.f32.mrb[0].mxu0
        %5316 = vdwg.mxu0
        %s5317 = scalar_lea.vmem %s8, 256
        %v5318 = vld [vmem:[%s5317] sm:$0xff]
        %v5319 = vld [vmem:[%s5317 + $0x8] sm:$0xff]
        %v5320 = vld [vmem:[%s5317 + $0x10] sm:$0xff]
        %v5321 = vld [vmem:[%s5317 + $0x18] sm:$0xff]
        %v5323 = vsel %vm3772, %v5318, 0
        %v5326 = vsel %vm3772, %v5319, 0
        %v5329 = vsel %vm3772, %v5320, 0
        %v5332 = vsel %vm3772, %v5321, 0
        %5334 = vmatprep.subr.mxu0 0.0
        %5335 = vmatpush1.msra.mxu0 %v5309
        %5336 = vmatprep.subr.mxu0 0.0
        %5337 = vmatpush1.msra.mxu0 %v5314
        %5338 = vmatprep.subr.mxu0 0.0
        %5339 = vmatpush1.msra.mxu0 0.0
        %5340 = vmatprep.subr.mxu0 0.0
        %5341 = vmatpush1.msra.mxu0 0.0
        %5342 = vmatprep.subr.mxu0 0.0
        %5343 = vmatpush1.msra.mxu0 0.0
        %5344 = vmatprep.subr.mxu0 0.0
        %5345 = vmatpush1.msra.mxu0 0.0
        %5346 = vmatprep.subr.mxu0 0.0
        %5347 = vmatpush1.msra.mxu0 0.0
        %5348 = vmatprep.subr.mxu0 0.0
        %5349 = vmatpush1.msra.mxu0 0.0
        %5350 = vmatprep.subr.mxu0 0.0
        %5351 = vmatpush1.msra.mxu0 0.0
        %5352 = vmatprep.subr.mxu0 0.0
        %5353 = vmatpush1.msra.mxu0 0.0
        %5354 = vmatprep.subr.mxu0 0.0
        %5355 = vmatpush1.msra.mxu0 0.0
        %5356 = vmatprep.subr.mxu0 0.0
        %5357 = vmatpush1.msra.mxu0 0.0
        %5358 = vmatprep.subr.mxu0 0.0
        %5359 = vmatpush1.msra.mxu0 0.0
        %5360 = vmatprep.subr.mxu0 0.0
        %5361 = vmatpush1.msra.mxu0 0.0
        %5362 = vmatprep.subr.mxu0 0.0
        %5363 = vmatpush1.msra.mxu0 0.0
        %5364 = vmatprep.subr.mxu0 0.0
        %5365 = vmatpush1.msra.mxu0 0.0
        %5366 = vmatprep.subr.mxu0 0.0
        %5367 = vmatpush1.msra.mxu0 0.0
        %5368 = vmatprep.subr.mxu0 0.0
        %5369 = vmatpush1.msra.mxu0 0.0
        %5370 = vmatprep.subr.mxu0 0.0
        %5371 = vmatpush1.msra.mxu0 0.0
        %5372 = vmatprep.subr.mxu0 0.0
        %5373 = vmatpush1.msra.mxu0 0.0
        %5374 = vmatprep.subr.mxu0 0.0
        %5375 = vmatpush1.msra.mxu0 0.0
        %5376 = vmatprep.subr.mxu0 0.0
        %5377 = vmatpush1.msra.mxu0 0.0
        %5378 = vmatprep.subr.mxu0 0.0
        %5379 = vmatpush1.msra.mxu0 0.0
        %5380 = vmatprep.subr.mxu0 0.0
        %5381 = vmatpush1.msra.mxu0 0.0
        %5382 = vmatprep.subr.mxu0 0.0
        %5383 = vmatpush1.msra.mxu0 0.0
        %5384 = vmatprep.subr.mxu0 0.0
        %5385 = vmatpush1.msra.mxu0 0.0
        %5386 = vmatprep.subr.mxu0 0.0
        %5387 = vmatpush1.msra.mxu0 0.0
        %5388 = vmatprep.subr.mxu0 0.0
        %5389 = vmatpush1.msra.mxu0 0.0
        %5390 = vmatprep.subr.mxu0 0.0
        %5391 = vmatpush1.msra.mxu0 0.0
        %5392 = vmatprep.subr.mxu0 0.0
        %5393 = vmatpush1.msra.mxu0 0.0
        %5394 = vmatprep.subr.mxu0 0.0
        %5395 = vmatpush1.msra.mxu0 0.0
        %5396 = vmatprep.subr.mxu0 0.0
        %5397 = vmatpush1.msra.mxu0 0.0
        %5398 = vmatprep.mubr.f32.mxu0 0.0
        %5399 = vmatmul.mubr.f32.gmra.mrb[0].mxu0 %v5323
        %v5400 = vpop.f32.mrb[0].mxu0
        %v5401 = vadd.f32 0.0, %v5400
        %v5402 = vpop.f32.mrb[0].mxu0
        %5403 = vmatprep.mubr.f32.mxu0 0.0
        %5404 = vmatmul.mubr.f32.gmra.mrb[0].mxu0 %v5326
        %v5405 = vpop.f32.mrb[0].mxu0
        %v5406 = vadd.f32 0.0, %v5405
        %v5407 = vpop.f32.mrb[0].mxu0
        %5408 = vmatprep.mubr.f32.mxu0 0.0
        %5409 = vmatmul.mubr.f32.gmra.mrb[0].mxu0 %v5329
        %v5410 = vpop.f32.mrb[0].mxu0
        %v5411 = vadd.f32 0.0, %v5410
        %v5412 = vpop.f32.mrb[0].mxu0
        %5413 = vmatprep.mubr.f32.mxu0 0.0
        %5414 = vmatmul.mubr.f32.gmra.mrb[0].mxu0 %v5332
        %v5415 = vpop.f32.mrb[0].mxu0
        %v5416 = vadd.f32 0.0, %v5415
        %v5417 = vpop.f32.mrb[0].mxu0
        %5418 = vdwg.mxu0
        %v5419 = vadd.f32 %v5235, %v5401
        %v5420 = vadd.f32 %v5236, %v5406
        %v5421 = vadd.f32 %v5237, %v5411
        %v5422 = vadd.f32 %v5238, %v5416
        %v5423 = vld [vmem:[%s9] sm:$0xff]
        %v5424 = vld [vmem:[%s9 + $0x8] sm:$0xff]
        %v5425 = vld [vmem:[%s9 + $0x10] sm:$0xff]
        %v5426 = vld [vmem:[%s9 + $0x18] sm:$0xff]
        %5428 = vset.pattern.permute.xlu0 0
        %5429 = vperm.xlu0 %5428, %v5423
        %v5430 = vpop.permute.xlu0 %5429
        %5433 = vset.pattern.permute.xlu0 0
        %5434 = vperm.xlu0 %5433, %v5424
        %v5435 = vpop.permute.xlu0 %5434
        %5438 = vset.pattern.permute.xlu0 0
        %5439 = vperm.xlu0 %5438, %v5425
        %v5440 = vpop.permute.xlu0 %5439
        %5443 = vset.pattern.permute.xlu0 0
        %5444 = vperm.xlu0 %5443, %v5426
        %v5445 = vpop.permute.xlu0 %5444
        %v5447 = vadd.f32 %v5419, %v5430
        %v5448 = vadd.f32 %v5420, %v5435
        %v5449 = vadd.f32 %v5421, %v5440
        %v5450 = vadd.f32 %v5422, %v5445
        %v5451 = vmax.f32 %v5447, 0.0
        %v5452 = vmax.f32 %v5448, 0.0
        %v5453 = vmax.f32 %v5449, 0.0
        %v5454 = vmax.f32 %v5450, 0.0
        %v5455 = vld [vmem:[#allocation7] sm:$0xff]
        %v5456 = vld [vmem:[#allocation7 + $0x8] sm:$0xff]
        %v5458 = vsel %vm3772, %v5451, 0
        %v5461 = vsel %vm3772, %v5452, 0
        %v5464 = vsel %vm3772, %v5453, 0
        %v5467 = vsel %vm3772, %v5454, 0
        %5469 = vmatprep.subr.mxu0 0.0
        %5470 = vmatpush1.msra.mxu0 %v5455
        %5471 = vmatprep.subr.mxu0 0.0
        %5472 = vmatpush1.msra.mxu0 %v5456
        %5473 = vmatprep.subr.mxu0 0.0
        %5474 = vmatpush1.msra.mxu0 0.0
        %5475 = vmatprep.subr.mxu0 0.0
        %5476 = vmatpush1.msra.mxu0 0.0
        %5477 = vmatprep.subr.mxu0 0.0
        %5478 = vmatpush1.msra.mxu0 0.0
        %5479 = vmatprep.subr.mxu0 0.0
        %5480 = vmatpush1.msra.mxu0 0.0
        %5481 = vmatprep.subr.mxu0 0.0
        %5482 = vmatpush1.msra.mxu0 0.0
        %5483 = vmatprep.subr.mxu0 0.0
        %5484 = vmatpush1.msra.mxu0 0.0
        %5485 = vmatprep.subr.mxu0 0.0
        %5486 = vmatpush1.msra.mxu0 0.0
        %5487 = vmatprep.subr.mxu0 0.0
        %5488 = vmatpush1.msra.mxu0 0.0
        %5489 = vmatprep.subr.mxu0 0.0
        %5490 = vmatpush1.msra.mxu0 0.0
        %5491 = vmatprep.subr.mxu0 0.0
        %5492 = vmatpush1.msra.mxu0 0.0
        %5493 = vmatprep.subr.mxu0 0.0
        %5494 = vmatpush1.msra.mxu0 0.0
        %5495 = vmatprep.subr.mxu0 0.0
        %5496 = vmatpush1.msra.mxu0 0.0
        %5497 = vmatprep.subr.mxu0 0.0
        %5498 = vmatpush1.msra.mxu0 0.0
        %5499 = vmatprep.subr.mxu0 0.0
        %5500 = vmatpush1.msra.mxu0 0.0
        %5501 = vmatprep.subr.mxu0 0.0
        %5502 = vmatpush1.msra.mxu0 0.0
        %5503 = vmatprep.subr.mxu0 0.0
        %5504 = vmatpush1.msra.mxu0 0.0
        %5505 = vmatprep.subr.mxu0 0.0
        %5506 = vmatpush1.msra.mxu0 0.0
        %5507 = vmatprep.subr.mxu0 0.0
        %5508 = vmatpush1.msra.mxu0 0.0
        %5509 = vmatprep.subr.mxu0 0.0
        %5510 = vmatpush1.msra.mxu0 0.0
        %5511 = vmatprep.subr.mxu0 0.0
        %5512 = vmatpush1.msra.mxu0 0.0
        %5513 = vmatprep.subr.mxu0 0.0
        %5514 = vmatpush1.msra.mxu0 0.0
        %5515 = vmatprep.subr.mxu0 0.0
        %5516 = vmatpush1.msra.mxu0 0.0
        %5517 = vmatprep.subr.mxu0 0.0
        %5518 = vmatpush1.msra.mxu0 0.0
        %5519 = vmatprep.subr.mxu0 0.0
        %5520 = vmatpush1.msra.mxu0 0.0
        %5521 = vmatprep.subr.mxu0 0.0
        %5522 = vmatpush1.msra.mxu0 0.0
        %5523 = vmatprep.subr.mxu0 0.0
        %5524 = vmatpush1.msra.mxu0 0.0
        %5525 = vmatprep.subr.mxu0 0.0
        %5526 = vmatpush1.msra.mxu0 0.0
        %5527 = vmatprep.subr.mxu0 0.0
        %5528 = vmatpush1.msra.mxu0 0.0
        %5529 = vmatprep.subr.mxu0 0.0
        %5530 = vmatpush1.msra.mxu0 0.0
        %5531 = vmatprep.subr.mxu0 0.0
        %5532 = vmatpush1.msra.mxu0 0.0
        %5533 = vmatprep.mubr.f32.mxu0 0.0
        %5534 = vmatmul.mubr.f32.gmra.mrb[0].mxu0 %v5458
        %v5535 = vpop.f32.mrb[0].mxu0
        %v5536 = vadd.f32 0.0, %v5535
        %v5537 = vpop.f32.mrb[0].mxu0
        %5538 = vmatprep.mubr.f32.mxu0 0.0
        %5539 = vmatmul.mubr.f32.gmra.mrb[0].mxu0 %v5461
        %v5540 = vpop.f32.mrb[0].mxu0
        %v5541 = vadd.f32 0.0, %v5540
        %v5542 = vpop.f32.mrb[0].mxu0
        %5543 = vmatprep.mubr.f32.mxu0 0.0
        %5544 = vmatmul.mubr.f32.gmra.mrb[0].mxu0 %v5464
        %v5545 = vpop.f32.mrb[0].mxu0
        %v5546 = vadd.f32 0.0, %v5545
        %v5547 = vpop.f32.mrb[0].mxu0
        %5548 = vmatprep.mubr.f32.mxu0 0.0
        %5549 = vmatmul.mubr.f32.gmra.mrb[0].mxu0 %v5467
        %v5550 = vpop.f32.mrb[0].mxu0
        %v5551 = vadd.f32 0.0, %v5550
        %v5552 = vpop.f32.mrb[0].mxu0
        %5553 = vdwg.mxu0
        %v5554 = vld [vmem:[#allocation9] sm:$0xff]
        %v5555 = vld [vmem:[#allocation9 + $0x8] sm:$0xff]
        %v5556 = vld [vmem:[#allocation9 + $0x10] sm:$0xff]
        %v5557 = vld [vmem:[#allocation9 + $0x18] sm:$0xff]
        %s5558 = scalar_lea.vmem [#allocation7], 16
        %v5559 = vld [vmem:[%s5558] sm:$0xff]
        %v5560 = vld [vmem:[%s5558 + $0x8] sm:$0xff]
        %5561 = vmatprep.subr.mxu0 0.0
        %5562 = vmatpush1.msra.mxu0 %v5559
        %5563 = vmatprep.subr.mxu0 0.0
        %5564 = vmatpush1.msra.mxu0 %v5560
        %5565 = vmatprep.subr.mxu0 0.0
        %5566 = vmatpush1.msra.mxu0 0.0
        %5567 = vmatprep.subr.mxu0 0.0
        %5568 = vmatpush1.msra.mxu0 0.0
        %5569 = vmatprep.subr.mxu0 0.0
        %5570 = vmatpush1.msra.mxu0 0.0
        %5571 = vmatprep.subr.mxu0 0.0
        %5572 = vmatpush1.msra.mxu0 0.0
        %5573 = vmatprep.subr.mxu0 0.0
        %5574 = vmatpush1.msra.mxu0 0.0
        %5575 = vmatprep.subr.mxu0 0.0
        %5576 = vmatpush1.msra.mxu0 0.0
        %5577 = vmatprep.subr.mxu0 0.0
        %5578 = vmatpush1.msra.mxu0 0.0
        %5579 = vmatprep.subr.mxu0 0.0
        %5580 = vmatpush1.msra.mxu0 0.0
        %5581 = vmatprep.subr.mxu0 0.0
        %5582 = vmatpush1.msra.mxu0 0.0
        %5583 = vmatprep.subr.mxu0 0.0
        %5584 = vmatpush1.msra.mxu0 0.0
        %5585 = vmatprep.subr.mxu0 0.0
        %5586 = vmatpush1.msra.mxu0 0.0
        %5587 = vmatprep.subr.mxu0 0.0
        %5588 = vmatpush1.msra.mxu0 0.0
        %5589 = vmatprep.subr.mxu0 0.0
        %5590 = vmatpush1.msra.mxu0 0.0
        %5591 = vmatprep.subr.mxu0 0.0
        %5592 = vmatpush1.msra.mxu0 0.0
        %5593 = vmatprep.subr.mxu0 0.0
        %5594 = vmatpush1.msra.mxu0 0.0
        %5595 = vmatprep.subr.mxu0 0.0
        %5596 = vmatpush1.msra.mxu0 0.0
        %5597 = vmatprep.subr.mxu0 0.0
        %5598 = vmatpush1.msra.mxu0 0.0
        %5599 = vmatprep.subr.mxu0 0.0
        %5600 = vmatpush1.msra.mxu0 0.0
        %5601 = vmatprep.subr.mxu0 0.0
        %5602 = vmatpush1.msra.mxu0 0.0
        %5603 = vmatprep.subr.mxu0 0.0
        %5604 = vmatpush1.msra.mxu0 0.0
        %5605 = vmatprep.subr.mxu0 0.0
        %5606 = vmatpush1.msra.mxu0 0.0
        %5607 = vmatprep.subr.mxu0 0.0
        %5608 = vmatpush1.msra.mxu0 0.0
        %5609 = vmatprep.subr.mxu0 0.0
        %5610 = vmatpush1.msra.mxu0 0.0
        %5611 = vmatprep.subr.mxu0 0.0
        %5612 = vmatpush1.msra.mxu0 0.0
        %5613 = vmatprep.subr.mxu0 0.0
        %5614 = vmatpush1.msra.mxu0 0.0
        %5615 = vmatprep.subr.mxu0 0.0
        %5616 = vmatpush1.msra.mxu0 0.0
        %5617 = vmatprep.subr.mxu0 0.0
        %5618 = vmatpush1.msra.mxu0 0.0
        %5619 = vmatprep.subr.mxu0 0.0
        %5620 = vmatpush1.msra.mxu0 0.0
        %5621 = vmatprep.subr.mxu0 0.0
        %5622 = vmatpush1.msra.mxu0 0.0
        %5623 = vmatprep.subr.mxu0 0.0
        %5624 = vmatpush1.msra.mxu0 0.0
        %5625 = vmatprep.mubr.f32.mxu0 0.0
        %5626 = vmatmul.mubr.f32.gmra.mrb[0].mxu0 %v5458
        %v5627 = vpop.f32.mrb[0].mxu0
        %v5628 = vadd.f32 0.0, %v5627
        %v5629 = vpop.f32.mrb[0].mxu0
        %5630 = vmatprep.mubr.f32.mxu0 0.0
        %5631 = vmatmul.mubr.f32.gmra.mrb[0].mxu0 %v5461
        %v5632 = vpop.f32.mrb[0].mxu0
        %v5633 = vadd.f32 0.0, %v5632
        %v5634 = vpop.f32.mrb[0].mxu0
        %5635 = vmatprep.mubr.f32.mxu0 0.0
        %5636 = vmatmul.mubr.f32.gmra.mrb[0].mxu0 %v5464
        %v5637 = vpop.f32.mrb[0].mxu0
        %v5638 = vadd.f32 0.0, %v5637
        %v5639 = vpop.f32.mrb[0].mxu0
        %5640 = vmatprep.mubr.f32.mxu0 0.0
        %5641 = vmatmul.mubr.f32.gmra.mrb[0].mxu0 %v5467
        %v5642 = vpop.f32.mrb[0].mxu0
        %v5643 = vadd.f32 0.0, %v5642
        %v5644 = vpop.f32.mrb[0].mxu0
        %5645 = vdwg.mxu0
        %s5646 = scalar_lea.vmem [#allocation9], 32
        %v5647 = vld [vmem:[%s5646] sm:$0xff]
        %v5648 = vld [vmem:[%s5646 + $0x8] sm:$0xff]
        %v5649 = vld [vmem:[%s5646 + $0x10] sm:$0xff]
        %v5650 = vld [vmem:[%s5646 + $0x18] sm:$0xff]
        %vm5651 = vcmask 261120
        %v5653 = vsel %vm5651, %v5647, 0
        %v5656 = vsel %vm5651, %v5648, 0
        %v5659 = vsel %vm5651, %v5649, 0
        %v5662 = vsel %vm5651, %v5650, 0
        %5664 = vmatprep.subr.mxu0 0.0
        %5665 = vmatpush1.msra.mxu0 %v5628
        %5666 = vmatprep.subr.mxu0 0.0
        %5667 = vmatpush1.msra.mxu0 %v5633
        %5668 = vmatprep.subr.mxu0 0.0
        %5669 = vmatpush1.msra.mxu0 %v5638
        %5670 = vmatprep.subr.mxu0 0.0
        %5671 = vmatpush1.msra.mxu0 %v5643
        %5672 = vmatprep.subr.mxu0 0.0
        %5673 = vmatpush1.msra.mxu0 0.0
        %5674 = vmatprep.subr.mxu0 0.0
        %5675 = vmatpush1.msra.mxu0 0.0
        %5676 = vmatprep.subr.mxu0 0.0
        %5677 = vmatpush1.msra.mxu0 0.0
        %5678 = vmatprep.subr.mxu0 0.0
        %5679 = vmatpush1.msra.mxu0 0.0
        %5680 = vmatprep.subr.mxu0 0.0
        %5681 = vmatpush1.msra.mxu0 0.0
        %5682 = vmatprep.subr.mxu0 0.0
        %5683 = vmatpush1.msra.mxu0 0.0
        %5684 = vmatprep.subr.mxu0 0.0
        %5685 = vmatpush1.msra.mxu0 0.0
        %5686 = vmatprep.subr.mxu0 0.0
        %5687 = vmatpush1.msra.mxu0 0.0
        %5688 = vmatprep.subr.mxu0 0.0
        %5689 = vmatpush1.msra.mxu0 0.0
        %5690 = vmatprep.subr.mxu0 0.0
        %5691 = vmatpush1.msra.mxu0 0.0
        %5692 = vmatprep.subr.mxu0 0.0
        %5693 = vmatpush1.msra.mxu0 0.0
        %5694 = vmatprep.subr.mxu0 0.0
        %5695 = vmatpush1.msra.mxu0 0.0
        %5696 = vmatprep.subr.mxu0 0.0
        %5697 = vmatpush1.msra.mxu0 0.0
        %5698 = vmatprep.subr.mxu0 0.0
        %5699 = vmatpush1.msra.mxu0 0.0
        %5700 = vmatprep.subr.mxu0 0.0
        %5701 = vmatpush1.msra.mxu0 0.0
        %5702 = vmatprep.subr.mxu0 0.0
        %5703 = vmatpush1.msra.mxu0 0.0
        %5704 = vmatprep.subr.mxu0 0.0
        %5705 = vmatpush1.msra.mxu0 0.0
        %5706 = vmatprep.subr.mxu0 0.0
        %5707 = vmatpush1.msra.mxu0 0.0
        %5708 = vmatprep.subr.mxu0 0.0
        %5709 = vmatpush1.msra.mxu0 0.0
        %5710 = vmatprep.subr.mxu0 0.0
        %5711 = vmatpush1.msra.mxu0 0.0
        %5712 = vmatprep.subr.mxu0 0.0
        %5713 = vmatpush1.msra.mxu0 0.0
        %5714 = vmatprep.subr.mxu0 0.0
        %5715 = vmatpush1.msra.mxu0 0.0
        %5716 = vmatprep.subr.mxu0 0.0
        %5717 = vmatpush1.msra.mxu0 0.0
        %5718 = vmatprep.subr.mxu0 0.0
        %5719 = vmatpush1.msra.mxu0 0.0
        %5720 = vmatprep.subr.mxu0 0.0
        %5721 = vmatpush1.msra.mxu0 0.0
        %5722 = vmatprep.subr.mxu0 0.0
        %5723 = vmatpush1.msra.mxu0 0.0
        %5724 = vmatprep.subr.mxu0 0.0
        %5725 = vmatpush1.msra.mxu0 0.0
        %5726 = vmatprep.subr.mxu0 0.0
        %5727 = vmatpush1.msra.mxu0 0.0
        %5728 = vmatprep.mubr.f32.mxu0 0.0
        %5729 = vmatmul.mubr.f32.gmra.mrb[0].mxu0 %v5653
        %v5730 = vpop.f32.mrb[0].mxu0
        %v5731 = vadd.f32 0.0, %v5730
        %v5732 = vpop.f32.mrb[0].mxu0
        %5733 = vmatprep.mubr.f32.mxu0 0.0
        %5734 = vmatmul.mubr.f32.gmra.mrb[0].mxu0 %v5656
        %v5735 = vpop.f32.mrb[0].mxu0
        %v5736 = vadd.f32 0.0, %v5735
        %v5737 = vpop.f32.mrb[0].mxu0
        %5738 = vmatprep.mubr.f32.mxu0 0.0
        %5739 = vmatmul.mubr.f32.gmra.mrb[0].mxu0 %v5659
        %v5740 = vpop.f32.mrb[0].mxu0
        %v5741 = vadd.f32 0.0, %v5740
        %v5742 = vpop.f32.mrb[0].mxu0
        %5743 = vmatprep.mubr.f32.mxu0 0.0
        %5744 = vmatmul.mubr.f32.gmra.mrb[0].mxu0 %v5662
        %v5745 = vpop.f32.mrb[0].mxu0
        %v5746 = vadd.f32 0.0, %v5745
        %v5747 = vpop.f32.mrb[0].mxu0
        %5748 = vdwg.mxu0
        %v5750 = vsel %vm5651, %v5554, 0
        %v5753 = vsel %vm5651, %v5555, 0
        %v5756 = vsel %vm5651, %v5556, 0
        %v5759 = vsel %vm5651, %v5557, 0
        %5761 = vmatprep.subr.mxu0 0.0
        %5762 = vmatpush1.msra.mxu0 %v5536
        %5763 = vmatprep.subr.mxu0 0.0
        %5764 = vmatpush1.msra.mxu0 %v5541
        %5765 = vmatprep.subr.mxu0 0.0
        %5766 = vmatpush1.msra.mxu0 %v5546
        %5767 = vmatprep.subr.mxu0 0.0
        %5768 = vmatpush1.msra.mxu0 %v5551
        %5769 = vmatprep.subr.mxu0 0.0
        %5770 = vmatpush1.msra.mxu0 0.0
        %5771 = vmatprep.subr.mxu0 0.0
        %5772 = vmatpush1.msra.mxu0 0.0
        %5773 = vmatprep.subr.mxu0 0.0
        %5774 = vmatpush1.msra.mxu0 0.0
        %5775 = vmatprep.subr.mxu0 0.0
        %5776 = vmatpush1.msra.mxu0 0.0
        %5777 = vmatprep.subr.mxu0 0.0
        %5778 = vmatpush1.msra.mxu0 0.0
        %5779 = vmatprep.subr.mxu0 0.0
        %5780 = vmatpush1.msra.mxu0 0.0
        %5781 = vmatprep.subr.mxu0 0.0
        %5782 = vmatpush1.msra.mxu0 0.0
        %5783 = vmatprep.subr.mxu0 0.0
        %5784 = vmatpush1.msra.mxu0 0.0
        %5785 = vmatprep.subr.mxu0 0.0
        %5786 = vmatpush1.msra.mxu0 0.0
        %5787 = vmatprep.subr.mxu0 0.0
        %5788 = vmatpush1.msra.mxu0 0.0
        %5789 = vmatprep.subr.mxu0 0.0
        %5790 = vmatpush1.msra.mxu0 0.0
        %5791 = vmatprep.subr.mxu0 0.0
        %5792 = vmatpush1.msra.mxu0 0.0
        %5793 = vmatprep.subr.mxu0 0.0
        %5794 = vmatpush1.msra.mxu0 0.0
        %5795 = vmatprep.subr.mxu0 0.0
        %5796 = vmatpush1.msra.mxu0 0.0
        %5797 = vmatprep.subr.mxu0 0.0
        %5798 = vmatpush1.msra.mxu0 0.0
        %5799 = vmatprep.subr.mxu0 0.0
        %5800 = vmatpush1.msra.mxu0 0.0
        %5801 = vmatprep.subr.mxu0 0.0
        %5802 = vmatpush1.msra.mxu0 0.0
        %5803 = vmatprep.subr.mxu0 0.0
        %5804 = vmatpush1.msra.mxu0 0.0
        %5805 = vmatprep.subr.mxu0 0.0
        %5806 = vmatpush1.msra.mxu0 0.0
        %5807 = vmatprep.subr.mxu0 0.0
        %5808 = vmatpush1.msra.mxu0 0.0
        %5809 = vmatprep.subr.mxu0 0.0
        %5810 = vmatpush1.msra.mxu0 0.0
        %5811 = vmatprep.subr.mxu0 0.0
        %5812 = vmatpush1.msra.mxu0 0.0
        %5813 = vmatprep.subr.mxu0 0.0
        %5814 = vmatpush1.msra.mxu0 0.0
        %5815 = vmatprep.subr.mxu0 0.0
        %5816 = vmatpush1.msra.mxu0 0.0
        %5817 = vmatprep.subr.mxu0 0.0
        %5818 = vmatpush1.msra.mxu0 0.0
        %5819 = vmatprep.subr.mxu0 0.0
        %5820 = vmatpush1.msra.mxu0 0.0
        %5821 = vmatprep.subr.mxu0 0.0
        %5822 = vmatpush1.msra.mxu0 0.0
        %5823 = vmatprep.subr.mxu0 0.0
        %5824 = vmatpush1.msra.mxu0 0.0
        %5825 = vmatprep.mubr.f32.mxu0 0.0
        %5826 = vmatmul.mubr.f32.gmra.mrb[0].mxu0 %v5750
        %v5827 = vpop.f32.mrb[0].mxu0
        %v5828 = vadd.f32 %v5731, %v5827
        %v5829 = vpop.f32.mrb[0].mxu0
        %5830 = vmatprep.mubr.f32.mxu0 0.0
        %5831 = vmatmul.mubr.f32.gmra.mrb[0].mxu0 %v5753
        %v5832 = vpop.f32.mrb[0].mxu0
        %v5833 = vadd.f32 %v5736, %v5832
        %v5834 = vpop.f32.mrb[0].mxu0
        %5835 = vmatprep.mubr.f32.mxu0 0.0
        %5836 = vmatmul.mubr.f32.gmra.mrb[0].mxu0 %v5756
        %v5837 = vpop.f32.mrb[0].mxu0
        %v5838 = vadd.f32 %v5741, %v5837
        %v5839 = vpop.f32.mrb[0].mxu0
        %5840 = vmatprep.mubr.f32.mxu0 0.0
        %5841 = vmatmul.mubr.f32.gmra.mrb[0].mxu0 %v5759
        %v5842 = vpop.f32.mrb[0].mxu0
        %v5843 = vadd.f32 %v5746, %v5842
        %v5844 = vpop.f32.mrb[0].mxu0
        %5845 = vdwg.mxu0
        %s5846 = scalar_lea.vmem [#allocation7], 32
        %v5847 = vld [vmem:[%s5846] sm:$0xff]
        %v5848 = vld [vmem:[%s5846 + $0x8] sm:$0xff]
        %5849 = vmatprep.subr.mxu0 0.0
        %5850 = vmatpush1.msra.mxu0 %v5847
        %5851 = vmatprep.subr.mxu0 0.0
        %5852 = vmatpush1.msra.mxu0 %v5848
        %5853 = vmatprep.subr.mxu0 0.0
        %5854 = vmatpush1.msra.mxu0 0.0
        %5855 = vmatprep.subr.mxu0 0.0
        %5856 = vmatpush1.msra.mxu0 0.0
        %5857 = vmatprep.subr.mxu0 0.0
        %5858 = vmatpush1.msra.mxu0 0.0
        %5859 = vmatprep.subr.mxu0 0.0
        %5860 = vmatpush1.msra.mxu0 0.0
        %5861 = vmatprep.subr.mxu0 0.0
        %5862 = vmatpush1.msra.mxu0 0.0
        %5863 = vmatprep.subr.mxu0 0.0
        %5864 = vmatpush1.msra.mxu0 0.0
        %5865 = vmatprep.subr.mxu0 0.0
        %5866 = vmatpush1.msra.mxu0 0.0
        %5867 = vmatprep.subr.mxu0 0.0
        %5868 = vmatpush1.msra.mxu0 0.0
        %5869 = vmatprep.subr.mxu0 0.0
        %5870 = vmatpush1.msra.mxu0 0.0
        %5871 = vmatprep.subr.mxu0 0.0
        %5872 = vmatpush1.msra.mxu0 0.0
        %5873 = vmatprep.subr.mxu0 0.0
        %5874 = vmatpush1.msra.mxu0 0.0
        %5875 = vmatprep.subr.mxu0 0.0
        %5876 = vmatpush1.msra.mxu0 0.0
        %5877 = vmatprep.subr.mxu0 0.0
        %5878 = vmatpush1.msra.mxu0 0.0
        %5879 = vmatprep.subr.mxu0 0.0
        %5880 = vmatpush1.msra.mxu0 0.0
        %5881 = vmatprep.subr.mxu0 0.0
        %5882 = vmatpush1.msra.mxu0 0.0
        %5883 = vmatprep.subr.mxu0 0.0
        %5884 = vmatpush1.msra.mxu0 0.0
        %5885 = vmatprep.subr.mxu0 0.0
        %5886 = vmatpush1.msra.mxu0 0.0
        %5887 = vmatprep.subr.mxu0 0.0
        %5888 = vmatpush1.msra.mxu0 0.0
        %5889 = vmatprep.subr.mxu0 0.0
        %5890 = vmatpush1.msra.mxu0 0.0
        %5891 = vmatprep.subr.mxu0 0.0
        %5892 = vmatpush1.msra.mxu0 0.0
        %5893 = vmatprep.subr.mxu0 0.0
        %5894 = vmatpush1.msra.mxu0 0.0
        %5895 = vmatprep.subr.mxu0 0.0
        %5896 = vmatpush1.msra.mxu0 0.0
        %5897 = vmatprep.subr.mxu0 0.0
        %5898 = vmatpush1.msra.mxu0 0.0
        %5899 = vmatprep.subr.mxu0 0.0
        %5900 = vmatpush1.msra.mxu0 0.0
        %5901 = vmatprep.subr.mxu0 0.0
        %5902 = vmatpush1.msra.mxu0 0.0
        %5903 = vmatprep.subr.mxu0 0.0
        %5904 = vmatpush1.msra.mxu0 0.0
        %5905 = vmatprep.subr.mxu0 0.0
        %5906 = vmatpush1.msra.mxu0 0.0
        %5907 = vmatprep.subr.mxu0 0.0
        %5908 = vmatpush1.msra.mxu0 0.0
        %5909 = vmatprep.subr.mxu0 0.0
        %5910 = vmatpush1.msra.mxu0 0.0
        %5911 = vmatprep.subr.mxu0 0.0
        %5912 = vmatpush1.msra.mxu0 0.0
        %5913 = vmatprep.mubr.f32.mxu0 0.0
        %5914 = vmatmul.mubr.f32.gmra.mrb[0].mxu0 %v5458
        %v5915 = vpop.f32.mrb[0].mxu0
        %v5916 = vadd.f32 0.0, %v5915
        %v5917 = vpop.f32.mrb[0].mxu0
        %5918 = vmatprep.mubr.f32.mxu0 0.0
        %5919 = vmatmul.mubr.f32.gmra.mrb[0].mxu0 %v5461
        %v5920 = vpop.f32.mrb[0].mxu0
        %v5921 = vadd.f32 0.0, %v5920
        %v5922 = vpop.f32.mrb[0].mxu0
        %5923 = vmatprep.mubr.f32.mxu0 0.0
        %5924 = vmatmul.mubr.f32.gmra.mrb[0].mxu0 %v5464
        %v5925 = vpop.f32.mrb[0].mxu0
        %v5926 = vadd.f32 0.0, %v5925
        %v5927 = vpop.f32.mrb[0].mxu0
        %5928 = vmatprep.mubr.f32.mxu0 0.0
        %5929 = vmatmul.mubr.f32.gmra.mrb[0].mxu0 %v5467
        %v5930 = vpop.f32.mrb[0].mxu0
        %v5931 = vadd.f32 0.0, %v5930
        %v5932 = vpop.f32.mrb[0].mxu0
        %5933 = vdwg.mxu0
        %s5934 = scalar_lea.vmem [#allocation9], 64
        %v5935 = vld [vmem:[%s5934] sm:$0xff]
        %v5936 = vld [vmem:[%s5934 + $0x8] sm:$0xff]
        %v5937 = vld [vmem:[%s5934 + $0x10] sm:$0xff]
        %v5938 = vld [vmem:[%s5934 + $0x18] sm:$0xff]
        %v5940 = vsel %vm5651, %v5935, 0
        %v5943 = vsel %vm5651, %v5936, 0
        %v5946 = vsel %vm5651, %v5937, 0
        %v5949 = vsel %vm5651, %v5938, 0
        %5951 = vmatprep.subr.mxu0 0.0
        %5952 = vmatpush1.msra.mxu0 %v5916
        %5953 = vmatprep.subr.mxu0 0.0
        %5954 = vmatpush1.msra.mxu0 %v5921
        %5955 = vmatprep.subr.mxu0 0.0
        %5956 = vmatpush1.msra.mxu0 %v5926
        %5957 = vmatprep.subr.mxu0 0.0
        %5958 = vmatpush1.msra.mxu0 %v5931
        %5959 = vmatprep.subr.mxu0 0.0
        %5960 = vmatpush1.msra.mxu0 0.0
        %5961 = vmatprep.subr.mxu0 0.0
        %5962 = vmatpush1.msra.mxu0 0.0
        %5963 = vmatprep.subr.mxu0 0.0
        %5964 = vmatpush1.msra.mxu0 0.0
        %5965 = vmatprep.subr.mxu0 0.0
        %5966 = vmatpush1.msra.mxu0 0.0
        %5967 = vmatprep.subr.mxu0 0.0
        %5968 = vmatpush1.msra.mxu0 0.0
        %5969 = vmatprep.subr.mxu0 0.0
        %5970 = vmatpush1.msra.mxu0 0.0
        %5971 = vmatprep.subr.mxu0 0.0
        %5972 = vmatpush1.msra.mxu0 0.0
        %5973 = vmatprep.subr.mxu0 0.0
        %5974 = vmatpush1.msra.mxu0 0.0
        %5975 = vmatprep.subr.mxu0 0.0
        %5976 = vmatpush1.msra.mxu0 0.0
        %5977 = vmatprep.subr.mxu0 0.0
        %5978 = vmatpush1.msra.mxu0 0.0
        %5979 = vmatprep.subr.mxu0 0.0
        %5980 = vmatpush1.msra.mxu0 0.0
        %5981 = vmatprep.subr.mxu0 0.0
        %5982 = vmatpush1.msra.mxu0 0.0
        %5983 = vmatprep.subr.mxu0 0.0
        %5984 = vmatpush1.msra.mxu0 0.0
        %5985 = vmatprep.subr.mxu0 0.0
        %5986 = vmatpush1.msra.mxu0 0.0
        %5987 = vmatprep.subr.mxu0 0.0
        %5988 = vmatpush1.msra.mxu0 0.0
        %5989 = vmatprep.subr.mxu0 0.0
        %5990 = vmatpush1.msra.mxu0 0.0
        %5991 = vmatprep.subr.mxu0 0.0
        %5992 = vmatpush1.msra.mxu0 0.0
        %5993 = vmatprep.subr.mxu0 0.0
        %5994 = vmatpush1.msra.mxu0 0.0
        %5995 = vmatprep.subr.mxu0 0.0
        %5996 = vmatpush1.msra.mxu0 0.0
        %5997 = vmatprep.subr.mxu0 0.0
        %5998 = vmatpush1.msra.mxu0 0.0
        %5999 = vmatprep.subr.mxu0 0.0
        %6000 = vmatpush1.msra.mxu0 0.0
        %6001 = vmatprep.subr.mxu0 0.0
        %6002 = vmatpush1.msra.mxu0 0.0
        %6003 = vmatprep.subr.mxu0 0.0
        %6004 = vmatpush1.msra.mxu0 0.0
        %6005 = vmatprep.subr.mxu0 0.0
        %6006 = vmatpush1.msra.mxu0 0.0
        %6007 = vmatprep.subr.mxu0 0.0
        %6008 = vmatpush1.msra.mxu0 0.0
        %6009 = vmatprep.subr.mxu0 0.0
        %6010 = vmatpush1.msra.mxu0 0.0
        %6011 = vmatprep.subr.mxu0 0.0
        %6012 = vmatpush1.msra.mxu0 0.0
        %6013 = vmatprep.subr.mxu0 0.0
        %6014 = vmatpush1.msra.mxu0 0.0
        %6015 = vmatprep.mubr.f32.mxu0 0.0
        %6016 = vmatmul.mubr.f32.gmra.mrb[0].mxu0 %v5940
        %v6017 = vpop.f32.mrb[0].mxu0
        %v6018 = vadd.f32 0.0, %v6017
        %v6019 = vpop.f32.mrb[0].mxu0
        %6020 = vmatprep.mubr.f32.mxu0 0.0
        %6021 = vmatmul.mubr.f32.gmra.mrb[0].mxu0 %v5943
        %v6022 = vpop.f32.mrb[0].mxu0
        %v6023 = vadd.f32 0.0, %v6022
        %v6024 = vpop.f32.mrb[0].mxu0
        %6025 = vmatprep.mubr.f32.mxu0 0.0
        %6026 = vmatmul.mubr.f32.gmra.mrb[0].mxu0 %v5946
        %v6027 = vpop.f32.mrb[0].mxu0
        %v6028 = vadd.f32 0.0, %v6027
        %v6029 = vpop.f32.mrb[0].mxu0
        %6030 = vmatprep.mubr.f32.mxu0 0.0
        %6031 = vmatmul.mubr.f32.gmra.mrb[0].mxu0 %v5949
        %v6032 = vpop.f32.mrb[0].mxu0
        %v6033 = vadd.f32 0.0, %v6032
        %v6034 = vpop.f32.mrb[0].mxu0
        %6035 = vdwg.mxu0
        %v6036 = vadd.f32 %v5828, %v6018
        %v6037 = vadd.f32 %v5833, %v6023
        %v6038 = vadd.f32 %v5838, %v6028
        %v6039 = vadd.f32 %v5843, %v6033
        %s6040 = scalar_lea.vmem [#allocation7], 48
        %v6041 = vld [vmem:[%s6040] sm:$0xff]
        %v6042 = vld [vmem:[%s6040 + $0x8] sm:$0xff]
        %6043 = vmatprep.subr.mxu0 0.0
        %6044 = vmatpush1.msra.mxu0 %v6041
        %6045 = vmatprep.subr.mxu0 0.0
        %6046 = vmatpush1.msra.mxu0 %v6042
        %6047 = vmatprep.subr.mxu0 0.0
        %6048 = vmatpush1.msra.mxu0 0.0
        %6049 = vmatprep.subr.mxu0 0.0
        %6050 = vmatpush1.msra.mxu0 0.0
        %6051 = vmatprep.subr.mxu0 0.0
        %6052 = vmatpush1.msra.mxu0 0.0
        %6053 = vmatprep.subr.mxu0 0.0
        %6054 = vmatpush1.msra.mxu0 0.0
        %6055 = vmatprep.subr.mxu0 0.0
        %6056 = vmatpush1.msra.mxu0 0.0
        %6057 = vmatprep.subr.mxu0 0.0
        %6058 = vmatpush1.msra.mxu0 0.0
        %6059 = vmatprep.subr.mxu0 0.0
        %6060 = vmatpush1.msra.mxu0 0.0
        %6061 = vmatprep.subr.mxu0 0.0
        %6062 = vmatpush1.msra.mxu0 0.0
        %6063 = vmatprep.subr.mxu0 0.0
        %6064 = vmatpush1.msra.mxu0 0.0
        %6065 = vmatprep.subr.mxu0 0.0
        %6066 = vmatpush1.msra.mxu0 0.0
        %6067 = vmatprep.subr.mxu0 0.0
        %6068 = vmatpush1.msra.mxu0 0.0
        %6069 = vmatprep.subr.mxu0 0.0
        %6070 = vmatpush1.msra.mxu0 0.0
        %6071 = vmatprep.subr.mxu0 0.0
        %6072 = vmatpush1.msra.mxu0 0.0
        %6073 = vmatprep.subr.mxu0 0.0
        %6074 = vmatpush1.msra.mxu0 0.0
        %6075 = vmatprep.subr.mxu0 0.0
        %6076 = vmatpush1.msra.mxu0 0.0
        %6077 = vmatprep.subr.mxu0 0.0
        %6078 = vmatpush1.msra.mxu0 0.0
        %6079 = vmatprep.subr.mxu0 0.0
        %6080 = vmatpush1.msra.mxu0 0.0
        %6081 = vmatprep.subr.mxu0 0.0
        %6082 = vmatpush1.msra.mxu0 0.0
        %6083 = vmatprep.subr.mxu0 0.0
        %6084 = vmatpush1.msra.mxu0 0.0
        %6085 = vmatprep.subr.mxu0 0.0
        %6086 = vmatpush1.msra.mxu0 0.0
        %6087 = vmatprep.subr.mxu0 0.0
        %6088 = vmatpush1.msra.mxu0 0.0
        %6089 = vmatprep.subr.mxu0 0.0
        %6090 = vmatpush1.msra.mxu0 0.0
        %6091 = vmatprep.subr.mxu0 0.0
        %6092 = vmatpush1.msra.mxu0 0.0
        %6093 = vmatprep.subr.mxu0 0.0
        %6094 = vmatpush1.msra.mxu0 0.0
        %6095 = vmatprep.subr.mxu0 0.0
        %6096 = vmatpush1.msra.mxu0 0.0
        %6097 = vmatprep.subr.mxu0 0.0
        %6098 = vmatpush1.msra.mxu0 0.0
        %6099 = vmatprep.subr.mxu0 0.0
        %6100 = vmatpush1.msra.mxu0 0.0
        %6101 = vmatprep.subr.mxu0 0.0
        %6102 = vmatpush1.msra.mxu0 0.0
        %6103 = vmatprep.subr.mxu0 0.0
        %6104 = vmatpush1.msra.mxu0 0.0
        %6105 = vmatprep.subr.mxu0 0.0
        %6106 = vmatpush1.msra.mxu0 0.0
        %6107 = vmatprep.mubr.f32.mxu0 0.0
        %6108 = vmatmul.mubr.f32.gmra.mrb[0].mxu0 %v5458
        %v6109 = vpop.f32.mrb[0].mxu0
        %v6110 = vadd.f32 0.0, %v6109
        %v6111 = vpop.f32.mrb[0].mxu0
        %6112 = vmatprep.mubr.f32.mxu0 0.0
        %6113 = vmatmul.mubr.f32.gmra.mrb[0].mxu0 %v5461
        %v6114 = vpop.f32.mrb[0].mxu0
        %v6115 = vadd.f32 0.0, %v6114
        %v6116 = vpop.f32.mrb[0].mxu0
        %6117 = vmatprep.mubr.f32.mxu0 0.0
        %6118 = vmatmul.mubr.f32.gmra.mrb[0].mxu0 %v5464
        %v6119 = vpop.f32.mrb[0].mxu0
        %v6120 = vadd.f32 0.0, %v6119
        %v6121 = vpop.f32.mrb[0].mxu0
        %6122 = vmatprep.mubr.f32.mxu0 0.0
        %6123 = vmatmul.mubr.f32.gmra.mrb[0].mxu0 %v5467
        %v6124 = vpop.f32.mrb[0].mxu0
        %v6125 = vadd.f32 0.0, %v6124
        %v6126 = vpop.f32.mrb[0].mxu0
        %6127 = vdwg.mxu0
        %s6128 = scalar_lea.vmem [#allocation9], 96
        %v6129 = vld [vmem:[%s6128] sm:$0xff]
        %v6130 = vld [vmem:[%s6128 + $0x8] sm:$0xff]
        %v6131 = vld [vmem:[%s6128 + $0x10] sm:$0xff]
        %v6132 = vld [vmem:[%s6128 + $0x18] sm:$0xff]
        %v6134 = vsel %vm5651, %v6129, 0
        %v6137 = vsel %vm5651, %v6130, 0
        %v6140 = vsel %vm5651, %v6131, 0
        %v6143 = vsel %vm5651, %v6132, 0
        %6145 = vmatprep.subr.mxu0 0.0
        %6146 = vmatpush1.msra.mxu0 %v6110
        %6147 = vmatprep.subr.mxu0 0.0
        %6148 = vmatpush1.msra.mxu0 %v6115
        %6149 = vmatprep.subr.mxu0 0.0
        %6150 = vmatpush1.msra.mxu0 %v6120
        %6151 = vmatprep.subr.mxu0 0.0
        %6152 = vmatpush1.msra.mxu0 %v6125
        %6153 = vmatprep.subr.mxu0 0.0
        %6154 = vmatpush1.msra.mxu0 0.0
        %6155 = vmatprep.subr.mxu0 0.0
        %6156 = vmatpush1.msra.mxu0 0.0
        %6157 = vmatprep.subr.mxu0 0.0
        %6158 = vmatpush1.msra.mxu0 0.0
        %6159 = vmatprep.subr.mxu0 0.0
        %6160 = vmatpush1.msra.mxu0 0.0
        %6161 = vmatprep.subr.mxu0 0.0
        %6162 = vmatpush1.msra.mxu0 0.0
        %6163 = vmatprep.subr.mxu0 0.0
        %6164 = vmatpush1.msra.mxu0 0.0
        %6165 = vmatprep.subr.mxu0 0.0
        %6166 = vmatpush1.msra.mxu0 0.0
        %6167 = vmatprep.subr.mxu0 0.0
        %6168 = vmatpush1.msra.mxu0 0.0
        %6169 = vmatprep.subr.mxu0 0.0
        %6170 = vmatpush1.msra.mxu0 0.0
        %6171 = vmatprep.subr.mxu0 0.0
        %6172 = vmatpush1.msra.mxu0 0.0
        %6173 = vmatprep.subr.mxu0 0.0
        %6174 = vmatpush1.msra.mxu0 0.0
        %6175 = vmatprep.subr.mxu0 0.0
        %6176 = vmatpush1.msra.mxu0 0.0
        %6177 = vmatprep.subr.mxu0 0.0
        %6178 = vmatpush1.msra.mxu0 0.0
        %6179 = vmatprep.subr.mxu0 0.0
        %6180 = vmatpush1.msra.mxu0 0.0
        %6181 = vmatprep.subr.mxu0 0.0
        %6182 = vmatpush1.msra.mxu0 0.0
        %6183 = vmatprep.subr.mxu0 0.0
        %6184 = vmatpush1.msra.mxu0 0.0
        %6185 = vmatprep.subr.mxu0 0.0
        %6186 = vmatpush1.msra.mxu0 0.0
        %6187 = vmatprep.subr.mxu0 0.0
        %6188 = vmatpush1.msra.mxu0 0.0
        %6189 = vmatprep.subr.mxu0 0.0
        %6190 = vmatpush1.msra.mxu0 0.0
        %6191 = vmatprep.subr.mxu0 0.0
        %6192 = vmatpush1.msra.mxu0 0.0
        %6193 = vmatprep.subr.mxu0 0.0
        %6194 = vmatpush1.msra.mxu0 0.0
        %6195 = vmatprep.subr.mxu0 0.0
        %6196 = vmatpush1.msra.mxu0 0.0
        %6197 = vmatprep.subr.mxu0 0.0
        %6198 = vmatpush1.msra.mxu0 0.0
        %6199 = vmatprep.subr.mxu0 0.0
        %6200 = vmatpush1.msra.mxu0 0.0
        %6201 = vmatprep.subr.mxu0 0.0
        %6202 = vmatpush1.msra.mxu0 0.0
        %6203 = vmatprep.subr.mxu0 0.0
        %6204 = vmatpush1.msra.mxu0 0.0
        %6205 = vmatprep.subr.mxu0 0.0
        %6206 = vmatpush1.msra.mxu0 0.0
        %6207 = vmatprep.subr.mxu0 0.0
        %6208 = vmatpush1.msra.mxu0 0.0
        %6209 = vmatprep.mubr.f32.mxu0 0.0
        %6210 = vmatmul.mubr.f32.gmra.mrb[0].mxu0 %v6134
        %v6211 = vpop.f32.mrb[0].mxu0
        %v6212 = vadd.f32 0.0, %v6211
        %v6213 = vpop.f32.mrb[0].mxu0
        %6214 = vmatprep.mubr.f32.mxu0 0.0
        %6215 = vmatmul.mubr.f32.gmra.mrb[0].mxu0 %v6137
        %v6216 = vpop.f32.mrb[0].mxu0
        %v6217 = vadd.f32 0.0, %v6216
        %v6218 = vpop.f32.mrb[0].mxu0
        %6219 = vmatprep.mubr.f32.mxu0 0.0
        %6220 = vmatmul.mubr.f32.gmra.mrb[0].mxu0 %v6140
        %v6221 = vpop.f32.mrb[0].mxu0
        %v6222 = vadd.f32 0.0, %v6221
        %v6223 = vpop.f32.mrb[0].mxu0
        %6224 = vmatprep.mubr.f32.mxu0 0.0
        %6225 = vmatmul.mubr.f32.gmra.mrb[0].mxu0 %v6143
        %v6226 = vpop.f32.mrb[0].mxu0
        %v6227 = vadd.f32 0.0, %v6226
        %v6228 = vpop.f32.mrb[0].mxu0
        %6229 = vdwg.mxu0
        %v6230 = vadd.f32 %v6036, %v6212
        %v6231 = vadd.f32 %v6037, %v6217
        %v6232 = vadd.f32 %v6038, %v6222
        %v6233 = vadd.f32 %v6039, %v6227
        %s6234 = scalar_lea.vmem [#allocation7], 64
        %v6235 = vld [vmem:[%s6234] sm:$0xff]
        %v6236 = vld [vmem:[%s6234 + $0x8] sm:$0xff]
        %6237 = vmatprep.subr.mxu0 0.0
        %6238 = vmatpush1.msra.mxu0 %v6235
        %6239 = vmatprep.subr.mxu0 0.0
        %6240 = vmatpush1.msra.mxu0 %v6236
        %6241 = vmatprep.subr.mxu0 0.0
        %6242 = vmatpush1.msra.mxu0 0.0
        %6243 = vmatprep.subr.mxu0 0.0
        %6244 = vmatpush1.msra.mxu0 0.0
        %6245 = vmatprep.subr.mxu0 0.0
        %6246 = vmatpush1.msra.mxu0 0.0
        %6247 = vmatprep.subr.mxu0 0.0
        %6248 = vmatpush1.msra.mxu0 0.0
        %6249 = vmatprep.subr.mxu0 0.0
        %6250 = vmatpush1.msra.mxu0 0.0
        %6251 = vmatprep.subr.mxu0 0.0
        %6252 = vmatpush1.msra.mxu0 0.0
        %6253 = vmatprep.subr.mxu0 0.0
        %6254 = vmatpush1.msra.mxu0 0.0
        %6255 = vmatprep.subr.mxu0 0.0
        %6256 = vmatpush1.msra.mxu0 0.0
        %6257 = vmatprep.subr.mxu0 0.0
        %6258 = vmatpush1.msra.mxu0 0.0
        %6259 = vmatprep.subr.mxu0 0.0
        %6260 = vmatpush1.msra.mxu0 0.0
        %6261 = vmatprep.subr.mxu0 0.0
        %6262 = vmatpush1.msra.mxu0 0.0
        %6263 = vmatprep.subr.mxu0 0.0
        %6264 = vmatpush1.msra.mxu0 0.0
        %6265 = vmatprep.subr.mxu0 0.0
        %6266 = vmatpush1.msra.mxu0 0.0
        %6267 = vmatprep.subr.mxu0 0.0
        %6268 = vmatpush1.msra.mxu0 0.0
        %6269 = vmatprep.subr.mxu0 0.0
        %6270 = vmatpush1.msra.mxu0 0.0
        %6271 = vmatprep.subr.mxu0 0.0
        %6272 = vmatpush1.msra.mxu0 0.0
        %6273 = vmatprep.subr.mxu0 0.0
        %6274 = vmatpush1.msra.mxu0 0.0
        %6275 = vmatprep.subr.mxu0 0.0
        %6276 = vmatpush1.msra.mxu0 0.0
        %6277 = vmatprep.subr.mxu0 0.0
        %6278 = vmatpush1.msra.mxu0 0.0
        %6279 = vmatprep.subr.mxu0 0.0
        %6280 = vmatpush1.msra.mxu0 0.0
        %6281 = vmatprep.subr.mxu0 0.0
        %6282 = vmatpush1.msra.mxu0 0.0
        %6283 = vmatprep.subr.mxu0 0.0
        %6284 = vmatpush1.msra.mxu0 0.0
        %6285 = vmatprep.subr.mxu0 0.0
        %6286 = vmatpush1.msra.mxu0 0.0
        %6287 = vmatprep.subr.mxu0 0.0
        %6288 = vmatpush1.msra.mxu0 0.0
        %6289 = vmatprep.subr.mxu0 0.0
        %6290 = vmatpush1.msra.mxu0 0.0
        %6291 = vmatprep.subr.mxu0 0.0
        %6292 = vmatpush1.msra.mxu0 0.0
        %6293 = vmatprep.subr.mxu0 0.0
        %6294 = vmatpush1.msra.mxu0 0.0
        %6295 = vmatprep.subr.mxu0 0.0
        %6296 = vmatpush1.msra.mxu0 0.0
        %6297 = vmatprep.subr.mxu0 0.0
        %6298 = vmatpush1.msra.mxu0 0.0
        %6299 = vmatprep.subr.mxu0 0.0
        %6300 = vmatpush1.msra.mxu0 0.0
        %6301 = vmatprep.mubr.f32.mxu0 0.0
        %6302 = vmatmul.mubr.f32.gmra.mrb[0].mxu0 %v5458
        %v6303 = vpop.f32.mrb[0].mxu0
        %v6304 = vadd.f32 0.0, %v6303
        %v6305 = vpop.f32.mrb[0].mxu0
        %6306 = vmatprep.mubr.f32.mxu0 0.0
        %6307 = vmatmul.mubr.f32.gmra.mrb[0].mxu0 %v5461
        %v6308 = vpop.f32.mrb[0].mxu0
        %v6309 = vadd.f32 0.0, %v6308
        %v6310 = vpop.f32.mrb[0].mxu0
        %6311 = vmatprep.mubr.f32.mxu0 0.0
        %6312 = vmatmul.mubr.f32.gmra.mrb[0].mxu0 %v5464
        %v6313 = vpop.f32.mrb[0].mxu0
        %v6314 = vadd.f32 0.0, %v6313
        %v6315 = vpop.f32.mrb[0].mxu0
        %6316 = vmatprep.mubr.f32.mxu0 0.0
        %6317 = vmatmul.mubr.f32.gmra.mrb[0].mxu0 %v5467
        %v6318 = vpop.f32.mrb[0].mxu0
        %v6319 = vadd.f32 0.0, %v6318
        %v6320 = vpop.f32.mrb[0].mxu0
        %6321 = vdwg.mxu0
        %s6322 = scalar_lea.vmem [#allocation9], 128
        %v6323 = vld [vmem:[%s6322] sm:$0xff]
        %v6324 = vld [vmem:[%s6322 + $0x8] sm:$0xff]
        %v6325 = vld [vmem:[%s6322 + $0x10] sm:$0xff]
        %v6326 = vld [vmem:[%s6322 + $0x18] sm:$0xff]
        %v6328 = vsel %vm5651, %v6323, 0
        %v6331 = vsel %vm5651, %v6324, 0
        %v6334 = vsel %vm5651, %v6325, 0
        %v6337 = vsel %vm5651, %v6326, 0
        %6339 = vmatprep.subr.mxu0 0.0
        %6340 = vmatpush1.msra.mxu0 %v6304
        %6341 = vmatprep.subr.mxu0 0.0
        %6342 = vmatpush1.msra.mxu0 %v6309
        %6343 = vmatprep.subr.mxu0 0.0
        %6344 = vmatpush1.msra.mxu0 %v6314
        %6345 = vmatprep.subr.mxu0 0.0
        %6346 = vmatpush1.msra.mxu0 %v6319
        %6347 = vmatprep.subr.mxu0 0.0
        %6348 = vmatpush1.msra.mxu0 0.0
        %6349 = vmatprep.subr.mxu0 0.0
        %6350 = vmatpush1.msra.mxu0 0.0
        %6351 = vmatprep.subr.mxu0 0.0
        %6352 = vmatpush1.msra.mxu0 0.0
        %6353 = vmatprep.subr.mxu0 0.0
        %6354 = vmatpush1.msra.mxu0 0.0
        %6355 = vmatprep.subr.mxu0 0.0
        %6356 = vmatpush1.msra.mxu0 0.0
        %6357 = vmatprep.subr.mxu0 0.0
        %6358 = vmatpush1.msra.mxu0 0.0
        %6359 = vmatprep.subr.mxu0 0.0
        %6360 = vmatpush1.msra.mxu0 0.0
        %6361 = vmatprep.subr.mxu0 0.0
        %6362 = vmatpush1.msra.mxu0 0.0
        %6363 = vmatprep.subr.mxu0 0.0
        %6364 = vmatpush1.msra.mxu0 0.0
        %6365 = vmatprep.subr.mxu0 0.0
        %6366 = vmatpush1.msra.mxu0 0.0
        %6367 = vmatprep.subr.mxu0 0.0
        %6368 = vmatpush1.msra.mxu0 0.0
        %6369 = vmatprep.subr.mxu0 0.0
        %6370 = vmatpush1.msra.mxu0 0.0
        %6371 = vmatprep.subr.mxu0 0.0
        %6372 = vmatpush1.msra.mxu0 0.0
        %6373 = vmatprep.subr.mxu0 0.0
        %6374 = vmatpush1.msra.mxu0 0.0
        %6375 = vmatprep.subr.mxu0 0.0
        %6376 = vmatpush1.msra.mxu0 0.0
        %6377 = vmatprep.subr.mxu0 0.0
        %6378 = vmatpush1.msra.mxu0 0.0
        %6379 = vmatprep.subr.mxu0 0.0
        %6380 = vmatpush1.msra.mxu0 0.0
        %6381 = vmatprep.subr.mxu0 0.0
        %6382 = vmatpush1.msra.mxu0 0.0
        %6383 = vmatprep.subr.mxu0 0.0
        %6384 = vmatpush1.msra.mxu0 0.0
        %6385 = vmatprep.subr.mxu0 0.0
        %6386 = vmatpush1.msra.mxu0 0.0
        %6387 = vmatprep.subr.mxu0 0.0
        %6388 = vmatpush1.msra.mxu0 0.0
        %6389 = vmatprep.subr.mxu0 0.0
        %6390 = vmatpush1.msra.mxu0 0.0
        %6391 = vmatprep.subr.mxu0 0.0
        %6392 = vmatpush1.msra.mxu0 0.0
        %6393 = vmatprep.subr.mxu0 0.0
        %6394 = vmatpush1.msra.mxu0 0.0
        %6395 = vmatprep.subr.mxu0 0.0
        %6396 = vmatpush1.msra.mxu0 0.0
        %6397 = vmatprep.subr.mxu0 0.0
        %6398 = vmatpush1.msra.mxu0 0.0
        %6399 = vmatprep.subr.mxu0 0.0
        %6400 = vmatpush1.msra.mxu0 0.0
        %6401 = vmatprep.subr.mxu0 0.0
        %6402 = vmatpush1.msra.mxu0 0.0
        %6403 = vmatprep.mubr.f32.mxu0 0.0
        %6404 = vmatmul.mubr.f32.gmra.mrb[0].mxu0 %v6328
        %v6405 = vpop.f32.mrb[0].mxu0
        %v6406 = vadd.f32 0.0, %v6405
        %v6407 = vpop.f32.mrb[0].mxu0
        %6408 = vmatprep.mubr.f32.mxu0 0.0
        %6409 = vmatmul.mubr.f32.gmra.mrb[0].mxu0 %v6331
        %v6410 = vpop.f32.mrb[0].mxu0
        %v6411 = vadd.f32 0.0, %v6410
        %v6412 = vpop.f32.mrb[0].mxu0
        %6413 = vmatprep.mubr.f32.mxu0 0.0
        %6414 = vmatmul.mubr.f32.gmra.mrb[0].mxu0 %v6334
        %v6415 = vpop.f32.mrb[0].mxu0
        %v6416 = vadd.f32 0.0, %v6415
        %v6417 = vpop.f32.mrb[0].mxu0
        %6418 = vmatprep.mubr.f32.mxu0 0.0
        %6419 = vmatmul.mubr.f32.gmra.mrb[0].mxu0 %v6337
        %v6420 = vpop.f32.mrb[0].mxu0
        %v6421 = vadd.f32 0.0, %v6420
        %v6422 = vpop.f32.mrb[0].mxu0
        %6423 = vdwg.mxu0
        %v6424 = vadd.f32 %v6230, %v6406
        %v6425 = vadd.f32 %v6231, %v6411
        %v6426 = vadd.f32 %v6232, %v6416
        %v6427 = vadd.f32 %v6233, %v6421
        %s6428 = scalar_lea.vmem [#allocation7], 80
        %v6429 = vld [vmem:[%s6428] sm:$0xff]
        %v6430 = vld [vmem:[%s6428 + $0x8] sm:$0xff]
        %6431 = vmatprep.subr.mxu0 0.0
        %6432 = vmatpush1.msra.mxu0 %v6429
        %6433 = vmatprep.subr.mxu0 0.0
        %6434 = vmatpush1.msra.mxu0 %v6430
        %6435 = vmatprep.subr.mxu0 0.0
        %6436 = vmatpush1.msra.mxu0 0.0
        %6437 = vmatprep.subr.mxu0 0.0
        %6438 = vmatpush1.msra.mxu0 0.0
        %6439 = vmatprep.subr.mxu0 0.0
        %6440 = vmatpush1.msra.mxu0 0.0
        %6441 = vmatprep.subr.mxu0 0.0
        %6442 = vmatpush1.msra.mxu0 0.0
        %6443 = vmatprep.subr.mxu0 0.0
        %6444 = vmatpush1.msra.mxu0 0.0
        %6445 = vmatprep.subr.mxu0 0.0
        %6446 = vmatpush1.msra.mxu0 0.0
        %6447 = vmatprep.subr.mxu0 0.0
        %6448 = vmatpush1.msra.mxu0 0.0
        %6449 = vmatprep.subr.mxu0 0.0
        %6450 = vmatpush1.msra.mxu0 0.0
        %6451 = vmatprep.subr.mxu0 0.0
        %6452 = vmatpush1.msra.mxu0 0.0
        %6453 = vmatprep.subr.mxu0 0.0
        %6454 = vmatpush1.msra.mxu0 0.0
        %6455 = vmatprep.subr.mxu0 0.0
        %6456 = vmatpush1.msra.mxu0 0.0
        %6457 = vmatprep.subr.mxu0 0.0
        %6458 = vmatpush1.msra.mxu0 0.0
        %6459 = vmatprep.subr.mxu0 0.0
        %6460 = vmatpush1.msra.mxu0 0.0
        %6461 = vmatprep.subr.mxu0 0.0
        %6462 = vmatpush1.msra.mxu0 0.0
        %6463 = vmatprep.subr.mxu0 0.0
        %6464 = vmatpush1.msra.mxu0 0.0
        %6465 = vmatprep.subr.mxu0 0.0
        %6466 = vmatpush1.msra.mxu0 0.0
        %6467 = vmatprep.subr.mxu0 0.0
        %6468 = vmatpush1.msra.mxu0 0.0
        %6469 = vmatprep.subr.mxu0 0.0
        %6470 = vmatpush1.msra.mxu0 0.0
        %6471 = vmatprep.subr.mxu0 0.0
        %6472 = vmatpush1.msra.mxu0 0.0
        %6473 = vmatprep.subr.mxu0 0.0
        %6474 = vmatpush1.msra.mxu0 0.0
        %6475 = vmatprep.subr.mxu0 0.0
        %6476 = vmatpush1.msra.mxu0 0.0
        %6477 = vmatprep.subr.mxu0 0.0
        %6478 = vmatpush1.msra.mxu0 0.0
        %6479 = vmatprep.subr.mxu0 0.0
        %6480 = vmatpush1.msra.mxu0 0.0
        %6481 = vmatprep.subr.mxu0 0.0
        %6482 = vmatpush1.msra.mxu0 0.0
        %6483 = vmatprep.subr.mxu0 0.0
        %6484 = vmatpush1.msra.mxu0 0.0
        %6485 = vmatprep.subr.mxu0 0.0
        %6486 = vmatpush1.msra.mxu0 0.0
        %6487 = vmatprep.subr.mxu0 0.0
        %6488 = vmatpush1.msra.mxu0 0.0
        %6489 = vmatprep.subr.mxu0 0.0
        %6490 = vmatpush1.msra.mxu0 0.0
        %6491 = vmatprep.subr.mxu0 0.0
        %6492 = vmatpush1.msra.mxu0 0.0
        %6493 = vmatprep.subr.mxu0 0.0
        %6494 = vmatpush1.msra.mxu0 0.0
        %6495 = vmatprep.mubr.f32.mxu0 0.0
        %6496 = vmatmul.mubr.f32.gmra.mrb[0].mxu0 %v5458
        %v6497 = vpop.f32.mrb[0].mxu0
        %v6498 = vadd.f32 0.0, %v6497
        %v6499 = vpop.f32.mrb[0].mxu0
        %6500 = vmatprep.mubr.f32.mxu0 0.0
        %6501 = vmatmul.mubr.f32.gmra.mrb[0].mxu0 %v5461
        %v6502 = vpop.f32.mrb[0].mxu0
        %v6503 = vadd.f32 0.0, %v6502
        %v6504 = vpop.f32.mrb[0].mxu0
        %6505 = vmatprep.mubr.f32.mxu0 0.0
        %6506 = vmatmul.mubr.f32.gmra.mrb[0].mxu0 %v5464
        %v6507 = vpop.f32.mrb[0].mxu0
        %v6508 = vadd.f32 0.0, %v6507
        %v6509 = vpop.f32.mrb[0].mxu0
        %6510 = vmatprep.mubr.f32.mxu0 0.0
        %6511 = vmatmul.mubr.f32.gmra.mrb[0].mxu0 %v5467
        %v6512 = vpop.f32.mrb[0].mxu0
        %v6513 = vadd.f32 0.0, %v6512
        %v6514 = vpop.f32.mrb[0].mxu0
        %6515 = vdwg.mxu0
        %s6516 = scalar_lea.vmem [#allocation9], 160
        %v6517 = vld [vmem:[%s6516] sm:$0xff]
        %v6518 = vld [vmem:[%s6516 + $0x8] sm:$0xff]
        %v6519 = vld [vmem:[%s6516 + $0x10] sm:$0xff]
        %v6520 = vld [vmem:[%s6516 + $0x18] sm:$0xff]
        %v6522 = vsel %vm5651, %v6517, 0
        %v6525 = vsel %vm5651, %v6518, 0
        %v6528 = vsel %vm5651, %v6519, 0
        %v6531 = vsel %vm5651, %v6520, 0
        %6533 = vmatprep.subr.mxu0 0.0
        %6534 = vmatpush1.msra.mxu0 %v6498
        %6535 = vmatprep.subr.mxu0 0.0
        %6536 = vmatpush1.msra.mxu0 %v6503
        %6537 = vmatprep.subr.mxu0 0.0
        %6538 = vmatpush1.msra.mxu0 %v6508
        %6539 = vmatprep.subr.mxu0 0.0
        %6540 = vmatpush1.msra.mxu0 %v6513
        %6541 = vmatprep.subr.mxu0 0.0
        %6542 = vmatpush1.msra.mxu0 0.0
        %6543 = vmatprep.subr.mxu0 0.0
        %6544 = vmatpush1.msra.mxu0 0.0
        %6545 = vmatprep.subr.mxu0 0.0
        %6546 = vmatpush1.msra.mxu0 0.0
        %6547 = vmatprep.subr.mxu0 0.0
        %6548 = vmatpush1.msra.mxu0 0.0
        %6549 = vmatprep.subr.mxu0 0.0
        %6550 = vmatpush1.msra.mxu0 0.0
        %6551 = vmatprep.subr.mxu0 0.0
        %6552 = vmatpush1.msra.mxu0 0.0
        %6553 = vmatprep.subr.mxu0 0.0
        %6554 = vmatpush1.msra.mxu0 0.0
        %6555 = vmatprep.subr.mxu0 0.0
        %6556 = vmatpush1.msra.mxu0 0.0
        %6557 = vmatprep.subr.mxu0 0.0
        %6558 = vmatpush1.msra.mxu0 0.0
        %6559 = vmatprep.subr.mxu0 0.0
        %6560 = vmatpush1.msra.mxu0 0.0
        %6561 = vmatprep.subr.mxu0 0.0
        %6562 = vmatpush1.msra.mxu0 0.0
        %6563 = vmatprep.subr.mxu0 0.0
        %6564 = vmatpush1.msra.mxu0 0.0
        %6565 = vmatprep.subr.mxu0 0.0
        %6566 = vmatpush1.msra.mxu0 0.0
        %6567 = vmatprep.subr.mxu0 0.0
        %6568 = vmatpush1.msra.mxu0 0.0
        %6569 = vmatprep.subr.mxu0 0.0
        %6570 = vmatpush1.msra.mxu0 0.0
        %6571 = vmatprep.subr.mxu0 0.0
        %6572 = vmatpush1.msra.mxu0 0.0
        %6573 = vmatprep.subr.mxu0 0.0
        %6574 = vmatpush1.msra.mxu0 0.0
        %6575 = vmatprep.subr.mxu0 0.0
        %6576 = vmatpush1.msra.mxu0 0.0
        %6577 = vmatprep.subr.mxu0 0.0
        %6578 = vmatpush1.msra.mxu0 0.0
        %6579 = vmatprep.subr.mxu0 0.0
        %6580 = vmatpush1.msra.mxu0 0.0
        %6581 = vmatprep.subr.mxu0 0.0
        %6582 = vmatpush1.msra.mxu0 0.0
        %6583 = vmatprep.subr.mxu0 0.0
        %6584 = vmatpush1.msra.mxu0 0.0
        %6585 = vmatprep.subr.mxu0 0.0
        %6586 = vmatpush1.msra.mxu0 0.0
        %6587 = vmatprep.subr.mxu0 0.0
        %6588 = vmatpush1.msra.mxu0 0.0
        %6589 = vmatprep.subr.mxu0 0.0
        %6590 = vmatpush1.msra.mxu0 0.0
        %6591 = vmatprep.subr.mxu0 0.0
        %6592 = vmatpush1.msra.mxu0 0.0
        %6593 = vmatprep.subr.mxu0 0.0
        %6594 = vmatpush1.msra.mxu0 0.0
        %6595 = vmatprep.subr.mxu0 0.0
        %6596 = vmatpush1.msra.mxu0 0.0
        %6597 = vmatprep.mubr.f32.mxu0 0.0
        %6598 = vmatmul.mubr.f32.gmra.mrb[0].mxu0 %v6522
        %v6599 = vpop.f32.mrb[0].mxu0
        %v6600 = vadd.f32 0.0, %v6599
        %v6601 = vpop.f32.mrb[0].mxu0
        %6602 = vmatprep.mubr.f32.mxu0 0.0
        %6603 = vmatmul.mubr.f32.gmra.mrb[0].mxu0 %v6525
        %v6604 = vpop.f32.mrb[0].mxu0
        %v6605 = vadd.f32 0.0, %v6604
        %v6606 = vpop.f32.mrb[0].mxu0
        %6607 = vmatprep.mubr.f32.mxu0 0.0
        %6608 = vmatmul.mubr.f32.gmra.mrb[0].mxu0 %v6528
        %v6609 = vpop.f32.mrb[0].mxu0
        %v6610 = vadd.f32 0.0, %v6609
        %v6611 = vpop.f32.mrb[0].mxu0
        %6612 = vmatprep.mubr.f32.mxu0 0.0
        %6613 = vmatmul.mubr.f32.gmra.mrb[0].mxu0 %v6531
        %v6614 = vpop.f32.mrb[0].mxu0
        %v6615 = vadd.f32 0.0, %v6614
        %v6616 = vpop.f32.mrb[0].mxu0
        %6617 = vdwg.mxu0
        %v6618 = vadd.f32 %v6424, %v6600
        %v6619 = vadd.f32 %v6425, %v6605
        %v6620 = vadd.f32 %v6426, %v6610
        %v6621 = vadd.f32 %v6427, %v6615
        %s6622 = scalar_lea.vmem [#allocation7], 96
        %v6623 = vld [vmem:[%s6622] sm:$0xff]
        %v6624 = vld [vmem:[%s6622 + $0x8] sm:$0xff]
        %6625 = vmatprep.subr.mxu0 0.0
        %6626 = vmatpush1.msra.mxu0 %v6623
        %6627 = vmatprep.subr.mxu0 0.0
        %6628 = vmatpush1.msra.mxu0 %v6624
        %6629 = vmatprep.subr.mxu0 0.0
        %6630 = vmatpush1.msra.mxu0 0.0
        %6631 = vmatprep.subr.mxu0 0.0
        %6632 = vmatpush1.msra.mxu0 0.0
        %6633 = vmatprep.subr.mxu0 0.0
        %6634 = vmatpush1.msra.mxu0 0.0
        %6635 = vmatprep.subr.mxu0 0.0
        %6636 = vmatpush1.msra.mxu0 0.0
        %6637 = vmatprep.subr.mxu0 0.0
        %6638 = vmatpush1.msra.mxu0 0.0
        %6639 = vmatprep.subr.mxu0 0.0
        %6640 = vmatpush1.msra.mxu0 0.0
        %6641 = vmatprep.subr.mxu0 0.0
        %6642 = vmatpush1.msra.mxu0 0.0
        %6643 = vmatprep.subr.mxu0 0.0
        %6644 = vmatpush1.msra.mxu0 0.0
        %6645 = vmatprep.subr.mxu0 0.0
        %6646 = vmatpush1.msra.mxu0 0.0
        %6647 = vmatprep.subr.mxu0 0.0
        %6648 = vmatpush1.msra.mxu0 0.0
        %6649 = vmatprep.subr.mxu0 0.0
        %6650 = vmatpush1.msra.mxu0 0.0
        %6651 = vmatprep.subr.mxu0 0.0
        %6652 = vmatpush1.msra.mxu0 0.0
        %6653 = vmatprep.subr.mxu0 0.0
        %6654 = vmatpush1.msra.mxu0 0.0
        %6655 = vmatprep.subr.mxu0 0.0
        %6656 = vmatpush1.msra.mxu0 0.0
        %6657 = vmatprep.subr.mxu0 0.0
        %6658 = vmatpush1.msra.mxu0 0.0
        %6659 = vmatprep.subr.mxu0 0.0
        %6660 = vmatpush1.msra.mxu0 0.0
        %6661 = vmatprep.subr.mxu0 0.0
        %6662 = vmatpush1.msra.mxu0 0.0
        %6663 = vmatprep.subr.mxu0 0.0
        %6664 = vmatpush1.msra.mxu0 0.0
        %6665 = vmatprep.subr.mxu0 0.0
        %6666 = vmatpush1.msra.mxu0 0.0
        %6667 = vmatprep.subr.mxu0 0.0
        %6668 = vmatpush1.msra.mxu0 0.0
        %6669 = vmatprep.subr.mxu0 0.0
        %6670 = vmatpush1.msra.mxu0 0.0
        %6671 = vmatprep.subr.mxu0 0.0
        %6672 = vmatpush1.msra.mxu0 0.0
        %6673 = vmatprep.subr.mxu0 0.0
        %6674 = vmatpush1.msra.mxu0 0.0
        %6675 = vmatprep.subr.mxu0 0.0
        %6676 = vmatpush1.msra.mxu0 0.0
        %6677 = vmatprep.subr.mxu0 0.0
        %6678 = vmatpush1.msra.mxu0 0.0
        %6679 = vmatprep.subr.mxu0 0.0
        %6680 = vmatpush1.msra.mxu0 0.0
        %6681 = vmatprep.subr.mxu0 0.0
        %6682 = vmatpush1.msra.mxu0 0.0
        %6683 = vmatprep.subr.mxu0 0.0
        %6684 = vmatpush1.msra.mxu0 0.0
        %6685 = vmatprep.subr.mxu0 0.0
        %6686 = vmatpush1.msra.mxu0 0.0
        %6687 = vmatprep.subr.mxu0 0.0
        %6688 = vmatpush1.msra.mxu0 0.0
        %6689 = vmatprep.mubr.f32.mxu0 0.0
        %6690 = vmatmul.mubr.f32.gmra.mrb[0].mxu0 %v5458
        %v6691 = vpop.f32.mrb[0].mxu0
        %v6692 = vadd.f32 0.0, %v6691
        %v6693 = vpop.f32.mrb[0].mxu0
        %6694 = vmatprep.mubr.f32.mxu0 0.0
        %6695 = vmatmul.mubr.f32.gmra.mrb[0].mxu0 %v5461
        %v6696 = vpop.f32.mrb[0].mxu0
        %v6697 = vadd.f32 0.0, %v6696
        %v6698 = vpop.f32.mrb[0].mxu0
        %6699 = vmatprep.mubr.f32.mxu0 0.0
        %6700 = vmatmul.mubr.f32.gmra.mrb[0].mxu0 %v5464
        %v6701 = vpop.f32.mrb[0].mxu0
        %v6702 = vadd.f32 0.0, %v6701
        %v6703 = vpop.f32.mrb[0].mxu0
        %6704 = vmatprep.mubr.f32.mxu0 0.0
        %6705 = vmatmul.mubr.f32.gmra.mrb[0].mxu0 %v5467
        %v6706 = vpop.f32.mrb[0].mxu0
        %v6707 = vadd.f32 0.0, %v6706
        %v6708 = vpop.f32.mrb[0].mxu0
        %6709 = vdwg.mxu0
        %s6710 = scalar_lea.vmem [#allocation9], 192
        %v6711 = vld [vmem:[%s6710] sm:$0xff]
        %v6712 = vld [vmem:[%s6710 + $0x8] sm:$0xff]
        %v6713 = vld [vmem:[%s6710 + $0x10] sm:$0xff]
        %v6714 = vld [vmem:[%s6710 + $0x18] sm:$0xff]
        %v6716 = vsel %vm5651, %v6711, 0
        %v6719 = vsel %vm5651, %v6712, 0
        %v6722 = vsel %vm5651, %v6713, 0
        %v6725 = vsel %vm5651, %v6714, 0
        %6727 = vmatprep.subr.mxu0 0.0
        %6728 = vmatpush1.msra.mxu0 %v6692
        %6729 = vmatprep.subr.mxu0 0.0
        %6730 = vmatpush1.msra.mxu0 %v6697
        %6731 = vmatprep.subr.mxu0 0.0
        %6732 = vmatpush1.msra.mxu0 %v6702
        %6733 = vmatprep.subr.mxu0 0.0
        %6734 = vmatpush1.msra.mxu0 %v6707
        %6735 = vmatprep.subr.mxu0 0.0
        %6736 = vmatpush1.msra.mxu0 0.0
        %6737 = vmatprep.subr.mxu0 0.0
        %6738 = vmatpush1.msra.mxu0 0.0
        %6739 = vmatprep.subr.mxu0 0.0
        %6740 = vmatpush1.msra.mxu0 0.0
        %6741 = vmatprep.subr.mxu0 0.0
        %6742 = vmatpush1.msra.mxu0 0.0
        %6743 = vmatprep.subr.mxu0 0.0
        %6744 = vmatpush1.msra.mxu0 0.0
        %6745 = vmatprep.subr.mxu0 0.0
        %6746 = vmatpush1.msra.mxu0 0.0
        %6747 = vmatprep.subr.mxu0 0.0
        %6748 = vmatpush1.msra.mxu0 0.0
        %6749 = vmatprep.subr.mxu0 0.0
        %6750 = vmatpush1.msra.mxu0 0.0
        %6751 = vmatprep.subr.mxu0 0.0
        %6752 = vmatpush1.msra.mxu0 0.0
        %6753 = vmatprep.subr.mxu0 0.0
        %6754 = vmatpush1.msra.mxu0 0.0
        %6755 = vmatprep.subr.mxu0 0.0
        %6756 = vmatpush1.msra.mxu0 0.0
        %6757 = vmatprep.subr.mxu0 0.0
        %6758 = vmatpush1.msra.mxu0 0.0
        %6759 = vmatprep.subr.mxu0 0.0
        %6760 = vmatpush1.msra.mxu0 0.0
        %6761 = vmatprep.subr.mxu0 0.0
        %6762 = vmatpush1.msra.mxu0 0.0
        %6763 = vmatprep.subr.mxu0 0.0
        %6764 = vmatpush1.msra.mxu0 0.0
        %6765 = vmatprep.subr.mxu0 0.0
        %6766 = vmatpush1.msra.mxu0 0.0
        %6767 = vmatprep.subr.mxu0 0.0
        %6768 = vmatpush1.msra.mxu0 0.0
        %6769 = vmatprep.subr.mxu0 0.0
        %6770 = vmatpush1.msra.mxu0 0.0
        %6771 = vmatprep.subr.mxu0 0.0
        %6772 = vmatpush1.msra.mxu0 0.0
        %6773 = vmatprep.subr.mxu0 0.0
        %6774 = vmatpush1.msra.mxu0 0.0
        %6775 = vmatprep.subr.mxu0 0.0
        %6776 = vmatpush1.msra.mxu0 0.0
        %6777 = vmatprep.subr.mxu0 0.0
        %6778 = vmatpush1.msra.mxu0 0.0
        %6779 = vmatprep.subr.mxu0 0.0
        %6780 = vmatpush1.msra.mxu0 0.0
        %6781 = vmatprep.subr.mxu0 0.0
        %6782 = vmatpush1.msra.mxu0 0.0
        %6783 = vmatprep.subr.mxu0 0.0
        %6784 = vmatpush1.msra.mxu0 0.0
        %6785 = vmatprep.subr.mxu0 0.0
        %6786 = vmatpush1.msra.mxu0 0.0
        %6787 = vmatprep.subr.mxu0 0.0
        %6788 = vmatpush1.msra.mxu0 0.0
        %6789 = vmatprep.subr.mxu0 0.0
        %6790 = vmatpush1.msra.mxu0 0.0
        %6791 = vmatprep.mubr.f32.mxu0 0.0
        %6792 = vmatmul.mubr.f32.gmra.mrb[0].mxu0 %v6716
        %v6793 = vpop.f32.mrb[0].mxu0
        %v6794 = vadd.f32 0.0, %v6793
        %v6795 = vpop.f32.mrb[0].mxu0
        %6796 = vmatprep.mubr.f32.mxu0 0.0
        %6797 = vmatmul.mubr.f32.gmra.mrb[0].mxu0 %v6719
        %v6798 = vpop.f32.mrb[0].mxu0
        %v6799 = vadd.f32 0.0, %v6798
        %v6800 = vpop.f32.mrb[0].mxu0
        %6801 = vmatprep.mubr.f32.mxu0 0.0
        %6802 = vmatmul.mubr.f32.gmra.mrb[0].mxu0 %v6722
        %v6803 = vpop.f32.mrb[0].mxu0
        %v6804 = vadd.f32 0.0, %v6803
        %v6805 = vpop.f32.mrb[0].mxu0
        %6806 = vmatprep.mubr.f32.mxu0 0.0
        %6807 = vmatmul.mubr.f32.gmra.mrb[0].mxu0 %v6725
        %v6808 = vpop.f32.mrb[0].mxu0
        %v6809 = vadd.f32 0.0, %v6808
        %v6810 = vpop.f32.mrb[0].mxu0
        %6811 = vdwg.mxu0
        %v6812 = vadd.f32 %v6618, %v6794
        %v6813 = vadd.f32 %v6619, %v6799
        %v6814 = vadd.f32 %v6620, %v6804
        %v6815 = vadd.f32 %v6621, %v6809
        %s6816 = scalar_lea.vmem [#allocation7], 112
        %v6817 = vld [vmem:[%s6816] sm:$0xff]
        %v6818 = vld [vmem:[%s6816 + $0x8] sm:$0xff]
        %6819 = vmatprep.subr.mxu0 0.0
        %6820 = vmatpush1.msra.mxu0 %v6817
        %6821 = vmatprep.subr.mxu0 0.0
        %6822 = vmatpush1.msra.mxu0 %v6818
        %6823 = vmatprep.subr.mxu0 0.0
        %6824 = vmatpush1.msra.mxu0 0.0
        %6825 = vmatprep.subr.mxu0 0.0
        %6826 = vmatpush1.msra.mxu0 0.0
        %6827 = vmatprep.subr.mxu0 0.0
        %6828 = vmatpush1.msra.mxu0 0.0
        %6829 = vmatprep.subr.mxu0 0.0
        %6830 = vmatpush1.msra.mxu0 0.0
        %6831 = vmatprep.subr.mxu0 0.0
        %6832 = vmatpush1.msra.mxu0 0.0
        %6833 = vmatprep.subr.mxu0 0.0
        %6834 = vmatpush1.msra.mxu0 0.0
        %6835 = vmatprep.subr.mxu0 0.0
        %6836 = vmatpush1.msra.mxu0 0.0
        %6837 = vmatprep.subr.mxu0 0.0
        %6838 = vmatpush1.msra.mxu0 0.0
        %6839 = vmatprep.subr.mxu0 0.0
        %6840 = vmatpush1.msra.mxu0 0.0
        %6841 = vmatprep.subr.mxu0 0.0
        %6842 = vmatpush1.msra.mxu0 0.0
        %6843 = vmatprep.subr.mxu0 0.0
        %6844 = vmatpush1.msra.mxu0 0.0
        %6845 = vmatprep.subr.mxu0 0.0
        %6846 = vmatpush1.msra.mxu0 0.0
        %6847 = vmatprep.subr.mxu0 0.0
        %6848 = vmatpush1.msra.mxu0 0.0
        %6849 = vmatprep.subr.mxu0 0.0
        %6850 = vmatpush1.msra.mxu0 0.0
        %6851 = vmatprep.subr.mxu0 0.0
        %6852 = vmatpush1.msra.mxu0 0.0
        %6853 = vmatprep.subr.mxu0 0.0
        %6854 = vmatpush1.msra.mxu0 0.0
        %6855 = vmatprep.subr.mxu0 0.0
        %6856 = vmatpush1.msra.mxu0 0.0
        %6857 = vmatprep.subr.mxu0 0.0
        %6858 = vmatpush1.msra.mxu0 0.0
        %6859 = vmatprep.subr.mxu0 0.0
        %6860 = vmatpush1.msra.mxu0 0.0
        %6861 = vmatprep.subr.mxu0 0.0
        %6862 = vmatpush1.msra.mxu0 0.0
        %6863 = vmatprep.subr.mxu0 0.0
        %6864 = vmatpush1.msra.mxu0 0.0
        %6865 = vmatprep.subr.mxu0 0.0
        %6866 = vmatpush1.msra.mxu0 0.0
        %6867 = vmatprep.subr.mxu0 0.0
        %6868 = vmatpush1.msra.mxu0 0.0
        %6869 = vmatprep.subr.mxu0 0.0
        %6870 = vmatpush1.msra.mxu0 0.0
        %6871 = vmatprep.subr.mxu0 0.0
        %6872 = vmatpush1.msra.mxu0 0.0
        %6873 = vmatprep.subr.mxu0 0.0
        %6874 = vmatpush1.msra.mxu0 0.0
        %6875 = vmatprep.subr.mxu0 0.0
        %6876 = vmatpush1.msra.mxu0 0.0
        %6877 = vmatprep.subr.mxu0 0.0
        %6878 = vmatpush1.msra.mxu0 0.0
        %6879 = vmatprep.subr.mxu0 0.0
        %6880 = vmatpush1.msra.mxu0 0.0
        %6881 = vmatprep.subr.mxu0 0.0
        %6882 = vmatpush1.msra.mxu0 0.0
        %6883 = vmatprep.mubr.f32.mxu0 0.0
        %6884 = vmatmul.mubr.f32.gmra.mrb[0].mxu0 %v5458
        %v6885 = vpop.f32.mrb[0].mxu0
        %v6886 = vadd.f32 0.0, %v6885
        %v6887 = vpop.f32.mrb[0].mxu0
        %6888 = vmatprep.mubr.f32.mxu0 0.0
        %6889 = vmatmul.mubr.f32.gmra.mrb[0].mxu0 %v5461
        %v6890 = vpop.f32.mrb[0].mxu0
        %v6891 = vadd.f32 0.0, %v6890
        %v6892 = vpop.f32.mrb[0].mxu0
        %6893 = vmatprep.mubr.f32.mxu0 0.0
        %6894 = vmatmul.mubr.f32.gmra.mrb[0].mxu0 %v5464
        %v6895 = vpop.f32.mrb[0].mxu0
        %v6896 = vadd.f32 0.0, %v6895
        %v6897 = vpop.f32.mrb[0].mxu0
        %6898 = vmatprep.mubr.f32.mxu0 0.0
        %6899 = vmatmul.mubr.f32.gmra.mrb[0].mxu0 %v5467
        %v6900 = vpop.f32.mrb[0].mxu0
        %v6901 = vadd.f32 0.0, %v6900
        %v6902 = vpop.f32.mrb[0].mxu0
        %6903 = vdwg.mxu0
        %s6904 = scalar_lea.vmem [#allocation9], 224
        %v6905 = vld [vmem:[%s6904] sm:$0xff]
        %v6906 = vld [vmem:[%s6904 + $0x8] sm:$0xff]
        %v6907 = vld [vmem:[%s6904 + $0x10] sm:$0xff]
        %v6908 = vld [vmem:[%s6904 + $0x18] sm:$0xff]
        %v6910 = vsel %vm5651, %v6905, 0
        %v6913 = vsel %vm5651, %v6906, 0
        %v6916 = vsel %vm5651, %v6907, 0
        %v6919 = vsel %vm5651, %v6908, 0
        %6921 = vmatprep.subr.mxu0 0.0
        %6922 = vmatpush1.msra.mxu0 %v6886
        %6923 = vmatprep.subr.mxu0 0.0
        %6924 = vmatpush1.msra.mxu0 %v6891
        %6925 = vmatprep.subr.mxu0 0.0
        %6926 = vmatpush1.msra.mxu0 %v6896
        %6927 = vmatprep.subr.mxu0 0.0
        %6928 = vmatpush1.msra.mxu0 %v6901
        %6929 = vmatprep.subr.mxu0 0.0
        %6930 = vmatpush1.msra.mxu0 0.0
        %6931 = vmatprep.subr.mxu0 0.0
        %6932 = vmatpush1.msra.mxu0 0.0
        %6933 = vmatprep.subr.mxu0 0.0
        %6934 = vmatpush1.msra.mxu0 0.0
        %6935 = vmatprep.subr.mxu0 0.0
        %6936 = vmatpush1.msra.mxu0 0.0
        %6937 = vmatprep.subr.mxu0 0.0
        %6938 = vmatpush1.msra.mxu0 0.0
        %6939 = vmatprep.subr.mxu0 0.0
        %6940 = vmatpush1.msra.mxu0 0.0
        %6941 = vmatprep.subr.mxu0 0.0
        %6942 = vmatpush1.msra.mxu0 0.0
        %6943 = vmatprep.subr.mxu0 0.0
        %6944 = vmatpush1.msra.mxu0 0.0
        %6945 = vmatprep.subr.mxu0 0.0
        %6946 = vmatpush1.msra.mxu0 0.0
        %6947 = vmatprep.subr.mxu0 0.0
        %6948 = vmatpush1.msra.mxu0 0.0
        %6949 = vmatprep.subr.mxu0 0.0
        %6950 = vmatpush1.msra.mxu0 0.0
        %6951 = vmatprep.subr.mxu0 0.0
        %6952 = vmatpush1.msra.mxu0 0.0
        %6953 = vmatprep.subr.mxu0 0.0
        %6954 = vmatpush1.msra.mxu0 0.0
        %6955 = vmatprep.subr.mxu0 0.0
        %6956 = vmatpush1.msra.mxu0 0.0
        %6957 = vmatprep.subr.mxu0 0.0
        %6958 = vmatpush1.msra.mxu0 0.0
        %6959 = vmatprep.subr.mxu0 0.0
        %6960 = vmatpush1.msra.mxu0 0.0
        %6961 = vmatprep.subr.mxu0 0.0
        %6962 = vmatpush1.msra.mxu0 0.0
        %6963 = vmatprep.subr.mxu0 0.0
        %6964 = vmatpush1.msra.mxu0 0.0
        %6965 = vmatprep.subr.mxu0 0.0
        %6966 = vmatpush1.msra.mxu0 0.0
        %6967 = vmatprep.subr.mxu0 0.0
        %6968 = vmatpush1.msra.mxu0 0.0
        %6969 = vmatprep.subr.mxu0 0.0
        %6970 = vmatpush1.msra.mxu0 0.0
        %6971 = vmatprep.subr.mxu0 0.0
        %6972 = vmatpush1.msra.mxu0 0.0
        %6973 = vmatprep.subr.mxu0 0.0
        %6974 = vmatpush1.msra.mxu0 0.0
        %6975 = vmatprep.subr.mxu0 0.0
        %6976 = vmatpush1.msra.mxu0 0.0
        %6977 = vmatprep.subr.mxu0 0.0
        %6978 = vmatpush1.msra.mxu0 0.0
        %6979 = vmatprep.subr.mxu0 0.0
        %6980 = vmatpush1.msra.mxu0 0.0
        %6981 = vmatprep.subr.mxu0 0.0
        %6982 = vmatpush1.msra.mxu0 0.0
        %6983 = vmatprep.subr.mxu0 0.0
        %6984 = vmatpush1.msra.mxu0 0.0
        %6985 = vmatprep.mubr.f32.mxu0 0.0
        %6986 = vmatmul.mubr.f32.gmra.mrb[0].mxu0 %v6910
        %v6987 = vpop.f32.mrb[0].mxu0
        %v6988 = vadd.f32 0.0, %v6987
        %v6989 = vpop.f32.mrb[0].mxu0
        %6990 = vmatprep.mubr.f32.mxu0 0.0
        %6991 = vmatmul.mubr.f32.gmra.mrb[0].mxu0 %v6913
        %v6992 = vpop.f32.mrb[0].mxu0
        %v6993 = vadd.f32 0.0, %v6992
        %v6994 = vpop.f32.mrb[0].mxu0
        %6995 = vmatprep.mubr.f32.mxu0 0.0
        %6996 = vmatmul.mubr.f32.gmra.mrb[0].mxu0 %v6916
        %v6997 = vpop.f32.mrb[0].mxu0
        %v6998 = vadd.f32 0.0, %v6997
        %v6999 = vpop.f32.mrb[0].mxu0
        %7000 = vmatprep.mubr.f32.mxu0 0.0
        %7001 = vmatmul.mubr.f32.gmra.mrb[0].mxu0 %v6919
        %v7002 = vpop.f32.mrb[0].mxu0
        %v7003 = vadd.f32 0.0, %v7002
        %v7004 = vpop.f32.mrb[0].mxu0
        %7005 = vdwg.mxu0
        %v7006 = vadd.f32 %v6812, %v6988
        %v7007 = vadd.f32 %v6813, %v6993
        %v7008 = vadd.f32 %v6814, %v6998
        %v7009 = vadd.f32 %v6815, %v7003
        %s7010 = scalar_lea.vmem [#allocation7], 128
        %v7011 = vld [vmem:[%s7010] sm:$0xff]
        %v7012 = vld [vmem:[%s7010 + $0x8] sm:$0xff]
        %7013 = vmatprep.subr.mxu0 0.0
        %7014 = vmatpush1.msra.mxu0 %v7011
        %7015 = vmatprep.subr.mxu0 0.0
        %7016 = vmatpush1.msra.mxu0 %v7012
        %7017 = vmatprep.subr.mxu0 0.0
        %7018 = vmatpush1.msra.mxu0 0.0
        %7019 = vmatprep.subr.mxu0 0.0
        %7020 = vmatpush1.msra.mxu0 0.0
        %7021 = vmatprep.subr.mxu0 0.0
        %7022 = vmatpush1.msra.mxu0 0.0
        %7023 = vmatprep.subr.mxu0 0.0
        %7024 = vmatpush1.msra.mxu0 0.0
        %7025 = vmatprep.subr.mxu0 0.0
        %7026 = vmatpush1.msra.mxu0 0.0
        %7027 = vmatprep.subr.mxu0 0.0
        %7028 = vmatpush1.msra.mxu0 0.0
        %7029 = vmatprep.subr.mxu0 0.0
        %7030 = vmatpush1.msra.mxu0 0.0
        %7031 = vmatprep.subr.mxu0 0.0
        %7032 = vmatpush1.msra.mxu0 0.0
        %7033 = vmatprep.subr.mxu0 0.0
        %7034 = vmatpush1.msra.mxu0 0.0
        %7035 = vmatprep.subr.mxu0 0.0
        %7036 = vmatpush1.msra.mxu0 0.0
        %7037 = vmatprep.subr.mxu0 0.0
        %7038 = vmatpush1.msra.mxu0 0.0
        %7039 = vmatprep.subr.mxu0 0.0
        %7040 = vmatpush1.msra.mxu0 0.0
        %7041 = vmatprep.subr.mxu0 0.0
        %7042 = vmatpush1.msra.mxu0 0.0
        %7043 = vmatprep.subr.mxu0 0.0
        %7044 = vmatpush1.msra.mxu0 0.0
        %7045 = vmatprep.subr.mxu0 0.0
        %7046 = vmatpush1.msra.mxu0 0.0
        %7047 = vmatprep.subr.mxu0 0.0
        %7048 = vmatpush1.msra.mxu0 0.0
        %7049 = vmatprep.subr.mxu0 0.0
        %7050 = vmatpush1.msra.mxu0 0.0
        %7051 = vmatprep.subr.mxu0 0.0
        %7052 = vmatpush1.msra.mxu0 0.0
        %7053 = vmatprep.subr.mxu0 0.0
        %7054 = vmatpush1.msra.mxu0 0.0
        %7055 = vmatprep.subr.mxu0 0.0
        %7056 = vmatpush1.msra.mxu0 0.0
        %7057 = vmatprep.subr.mxu0 0.0
        %7058 = vmatpush1.msra.mxu0 0.0
        %7059 = vmatprep.subr.mxu0 0.0
        %7060 = vmatpush1.msra.mxu0 0.0
        %7061 = vmatprep.subr.mxu0 0.0
        %7062 = vmatpush1.msra.mxu0 0.0
        %7063 = vmatprep.subr.mxu0 0.0
        %7064 = vmatpush1.msra.mxu0 0.0
        %7065 = vmatprep.subr.mxu0 0.0
        %7066 = vmatpush1.msra.mxu0 0.0
        %7067 = vmatprep.subr.mxu0 0.0
        %7068 = vmatpush1.msra.mxu0 0.0
        %7069 = vmatprep.subr.mxu0 0.0
        %7070 = vmatpush1.msra.mxu0 0.0
        %7071 = vmatprep.subr.mxu0 0.0
        %7072 = vmatpush1.msra.mxu0 0.0
        %7073 = vmatprep.subr.mxu0 0.0
        %7074 = vmatpush1.msra.mxu0 0.0
        %7075 = vmatprep.subr.mxu0 0.0
        %7076 = vmatpush1.msra.mxu0 0.0
        %7077 = vmatprep.mubr.f32.mxu0 0.0
        %7078 = vmatmul.mubr.f32.gmra.mrb[0].mxu0 %v5458
        %v7079 = vpop.f32.mrb[0].mxu0
        %v7080 = vadd.f32 0.0, %v7079
        %v7081 = vpop.f32.mrb[0].mxu0
        %7082 = vmatprep.mubr.f32.mxu0 0.0
        %7083 = vmatmul.mubr.f32.gmra.mrb[0].mxu0 %v5461
        %v7084 = vpop.f32.mrb[0].mxu0
        %v7085 = vadd.f32 0.0, %v7084
        %v7086 = vpop.f32.mrb[0].mxu0
        %7087 = vmatprep.mubr.f32.mxu0 0.0
        %7088 = vmatmul.mubr.f32.gmra.mrb[0].mxu0 %v5464
        %v7089 = vpop.f32.mrb[0].mxu0
        %v7090 = vadd.f32 0.0, %v7089
        %v7091 = vpop.f32.mrb[0].mxu0
        %7092 = vmatprep.mubr.f32.mxu0 0.0
        %7093 = vmatmul.mubr.f32.gmra.mrb[0].mxu0 %v5467
        %v7094 = vpop.f32.mrb[0].mxu0
        %v7095 = vadd.f32 0.0, %v7094
        %v7096 = vpop.f32.mrb[0].mxu0
        %7097 = vdwg.mxu0
        %s7098 = scalar_lea.vmem [#allocation9], 256
        %v7099 = vld [vmem:[%s7098] sm:$0xff]
        %v7100 = vld [vmem:[%s7098 + $0x8] sm:$0xff]
        %v7101 = vld [vmem:[%s7098 + $0x10] sm:$0xff]
        %v7102 = vld [vmem:[%s7098 + $0x18] sm:$0xff]
        %v7104 = vsel %vm5651, %v7099, 0
        %v7107 = vsel %vm5651, %v7100, 0
        %v7110 = vsel %vm5651, %v7101, 0
        %v7113 = vsel %vm5651, %v7102, 0
        %7115 = vmatprep.subr.mxu0 0.0
        %7116 = vmatpush1.msra.mxu0 %v7080
        %7117 = vmatprep.subr.mxu0 0.0
        %7118 = vmatpush1.msra.mxu0 %v7085
        %7119 = vmatprep.subr.mxu0 0.0
        %7120 = vmatpush1.msra.mxu0 %v7090
        %7121 = vmatprep.subr.mxu0 0.0
        %7122 = vmatpush1.msra.mxu0 %v7095
        %7123 = vmatprep.subr.mxu0 0.0
        %7124 = vmatpush1.msra.mxu0 0.0
        %7125 = vmatprep.subr.mxu0 0.0
        %7126 = vmatpush1.msra.mxu0 0.0
        %7127 = vmatprep.subr.mxu0 0.0
        %7128 = vmatpush1.msra.mxu0 0.0
        %7129 = vmatprep.subr.mxu0 0.0
        %7130 = vmatpush1.msra.mxu0 0.0
        %7131 = vmatprep.subr.mxu0 0.0
        %7132 = vmatpush1.msra.mxu0 0.0
        %7133 = vmatprep.subr.mxu0 0.0
        %7134 = vmatpush1.msra.mxu0 0.0
        %7135 = vmatprep.subr.mxu0 0.0
        %7136 = vmatpush1.msra.mxu0 0.0
        %7137 = vmatprep.subr.mxu0 0.0
        %7138 = vmatpush1.msra.mxu0 0.0
        %7139 = vmatprep.subr.mxu0 0.0
        %7140 = vmatpush1.msra.mxu0 0.0
        %7141 = vmatprep.subr.mxu0 0.0
        %7142 = vmatpush1.msra.mxu0 0.0
        %7143 = vmatprep.subr.mxu0 0.0
        %7144 = vmatpush1.msra.mxu0 0.0
        %7145 = vmatprep.subr.mxu0 0.0
        %7146 = vmatpush1.msra.mxu0 0.0
        %7147 = vmatprep.subr.mxu0 0.0
        %7148 = vmatpush1.msra.mxu0 0.0
        %7149 = vmatprep.subr.mxu0 0.0
        %7150 = vmatpush1.msra.mxu0 0.0
        %7151 = vmatprep.subr.mxu0 0.0
        %7152 = vmatpush1.msra.mxu0 0.0
        %7153 = vmatprep.subr.mxu0 0.0
        %7154 = vmatpush1.msra.mxu0 0.0
        %7155 = vmatprep.subr.mxu0 0.0
        %7156 = vmatpush1.msra.mxu0 0.0
        %7157 = vmatprep.subr.mxu0 0.0
        %7158 = vmatpush1.msra.mxu0 0.0
        %7159 = vmatprep.subr.mxu0 0.0
        %7160 = vmatpush1.msra.mxu0 0.0
        %7161 = vmatprep.subr.mxu0 0.0
        %7162 = vmatpush1.msra.mxu0 0.0
        %7163 = vmatprep.subr.mxu0 0.0
        %7164 = vmatpush1.msra.mxu0 0.0
        %7165 = vmatprep.subr.mxu0 0.0
        %7166 = vmatpush1.msra.mxu0 0.0
        %7167 = vmatprep.subr.mxu0 0.0
        %7168 = vmatpush1.msra.mxu0 0.0
        %7169 = vmatprep.subr.mxu0 0.0
        %7170 = vmatpush1.msra.mxu0 0.0
        %7171 = vmatprep.subr.mxu0 0.0
        %7172 = vmatpush1.msra.mxu0 0.0
        %7173 = vmatprep.subr.mxu0 0.0
        %7174 = vmatpush1.msra.mxu0 0.0
        %7175 = vmatprep.subr.mxu0 0.0
        %7176 = vmatpush1.msra.mxu0 0.0
        %7177 = vmatprep.subr.mxu0 0.0
        %7178 = vmatpush1.msra.mxu0 0.0
        %7179 = vmatprep.mubr.f32.mxu0 0.0
        %7180 = vmatmul.mubr.f32.gmra.mrb[0].mxu0 %v7104
        %v7181 = vpop.f32.mrb[0].mxu0
        %v7182 = vadd.f32 0.0, %v7181
        %v7183 = vpop.f32.mrb[0].mxu0
        %7184 = vmatprep.mubr.f32.mxu0 0.0
        %7185 = vmatmul.mubr.f32.gmra.mrb[0].mxu0 %v7107
        %v7186 = vpop.f32.mrb[0].mxu0
        %v7187 = vadd.f32 0.0, %v7186
        %v7188 = vpop.f32.mrb[0].mxu0
        %7189 = vmatprep.mubr.f32.mxu0 0.0
        %7190 = vmatmul.mubr.f32.gmra.mrb[0].mxu0 %v7110
        %v7191 = vpop.f32.mrb[0].mxu0
        %v7192 = vadd.f32 0.0, %v7191
        %v7193 = vpop.f32.mrb[0].mxu0
        %7194 = vmatprep.mubr.f32.mxu0 0.0
        %7195 = vmatmul.mubr.f32.gmra.mrb[0].mxu0 %v7113
        %v7196 = vpop.f32.mrb[0].mxu0
        %v7197 = vadd.f32 0.0, %v7196
        %v7198 = vpop.f32.mrb[0].mxu0
        %7199 = vdwg.mxu0
        %v7200 = vadd.f32 %v7006, %v7182
        %v7201 = vadd.f32 %v7007, %v7187
        %v7202 = vadd.f32 %v7008, %v7192
        %v7203 = vadd.f32 %v7009, %v7197
        %v7204 = vld [vmem:[%s12] sm:$0xff]
        %v7205 = vld [vmem:[%s12 + $0x8] sm:$0xff]
        %v7206 = vld [vmem:[%s12 + $0x10] sm:$0xff]
        %v7207 = vld [vmem:[%s12 + $0x18] sm:$0xff]
        %7209 = vset.pattern.permute.xlu0 0
        %7210 = vperm.xlu0 %7209, %v7204
        %v7211 = vpop.permute.xlu0 %7210
        %7214 = vset.pattern.permute.xlu0 0
        %7215 = vperm.xlu0 %7214, %v7205
        %v7216 = vpop.permute.xlu0 %7215
        %7219 = vset.pattern.permute.xlu0 0
        %7220 = vperm.xlu0 %7219, %v7206
        %v7221 = vpop.permute.xlu0 %7220
        %7224 = vset.pattern.permute.xlu0 0
        %7225 = vperm.xlu0 %7224, %v7207
        %v7226 = vpop.permute.xlu0 %7225
        %v7228 = vadd.f32 %v7200, %v7211
        %v7229 = vadd.f32 %v7201, %v7216
        %v7230 = vadd.f32 %v7202, %v7221
        %v7231 = vadd.f32 %v7203, %v7226
        %v7232 = vmax.f32 %v7228, 0.0
        %v7233 = vmax.f32 %v7229, 0.0
        %v7234 = vmax.f32 %v7230, 0.0
        %v7235 = vmax.f32 %v7231, 0.0
        %v7236 = vld [vmem:[#allocation10] sm:$0x3f]
        %v7237 = vld [vmem:[%s14] sm:$0x3f]
        %7239 = vset.pattern.permute.xlu0 0
        %7240 = vperm.xlu0 %7239, %v7237
        %v7241 = vpop.permute.xlu0 %7240
        %v7244 = vsel %vm5651, %v7236, 0
        %7246 = vmatprep.subr.mxu0 0.0
        %7247 = vmatpush1.msra.mxu0 %v7232
        %7248 = vmatprep.subr.mxu0 0.0
        %7249 = vmatpush1.msra.mxu0 %v7233
        %7250 = vmatprep.subr.mxu0 0.0
        %7251 = vmatpush1.msra.mxu0 %v7234
        %7252 = vmatprep.subr.mxu0 0.0
        %7253 = vmatpush1.msra.mxu0 %v7235
        %7254 = vmatprep.subr.mxu0 0.0
        %7255 = vmatpush1.msra.mxu0 0.0
        %7256 = vmatprep.subr.mxu0 0.0
        %7257 = vmatpush1.msra.mxu0 0.0
        %7258 = vmatprep.subr.mxu0 0.0
        %7259 = vmatpush1.msra.mxu0 0.0
        %7260 = vmatprep.subr.mxu0 0.0
        %7261 = vmatpush1.msra.mxu0 0.0
        %7262 = vmatprep.subr.mxu0 0.0
        %7263 = vmatpush1.msra.mxu0 0.0
        %7264 = vmatprep.subr.mxu0 0.0
        %7265 = vmatpush1.msra.mxu0 0.0
        %7266 = vmatprep.subr.mxu0 0.0
        %7267 = vmatpush1.msra.mxu0 0.0
        %7268 = vmatprep.subr.mxu0 0.0
        %7269 = vmatpush1.msra.mxu0 0.0
        %7270 = vmatprep.subr.mxu0 0.0
        %7271 = vmatpush1.msra.mxu0 0.0
        %7272 = vmatprep.subr.mxu0 0.0
        %7273 = vmatpush1.msra.mxu0 0.0
        %7274 = vmatprep.subr.mxu0 0.0
        %7275 = vmatpush1.msra.mxu0 0.0
        %7276 = vmatprep.subr.mxu0 0.0
        %7277 = vmatpush1.msra.mxu0 0.0
        %7278 = vmatprep.subr.mxu0 0.0
        %7279 = vmatpush1.msra.mxu0 0.0
        %7280 = vmatprep.subr.mxu0 0.0
        %7281 = vmatpush1.msra.mxu0 0.0
        %7282 = vmatprep.subr.mxu0 0.0
        %7283 = vmatpush1.msra.mxu0 0.0
        %7284 = vmatprep.subr.mxu0 0.0
        %7285 = vmatpush1.msra.mxu0 0.0
        %7286 = vmatprep.subr.mxu0 0.0
        %7287 = vmatpush1.msra.mxu0 0.0
        %7288 = vmatprep.subr.mxu0 0.0
        %7289 = vmatpush1.msra.mxu0 0.0
        %7290 = vmatprep.subr.mxu0 0.0
        %7291 = vmatpush1.msra.mxu0 0.0
        %7292 = vmatprep.subr.mxu0 0.0
        %7293 = vmatpush1.msra.mxu0 0.0
        %7294 = vmatprep.subr.mxu0 0.0
        %7295 = vmatpush1.msra.mxu0 0.0
        %7296 = vmatprep.subr.mxu0 0.0
        %7297 = vmatpush1.msra.mxu0 0.0
        %7298 = vmatprep.subr.mxu0 0.0
        %7299 = vmatpush1.msra.mxu0 0.0
        %7300 = vmatprep.subr.mxu0 0.0
        %7301 = vmatpush1.msra.mxu0 0.0
        %7302 = vmatprep.subr.mxu0 0.0
        %7303 = vmatpush1.msra.mxu0 0.0
        %7304 = vmatprep.subr.mxu0 0.0
        %7305 = vmatpush1.msra.mxu0 0.0
        %7306 = vmatprep.subr.mxu0 0.0
        %7307 = vmatpush1.msra.mxu0 0.0
        %7308 = vmatprep.subr.mxu0 0.0
        %7309 = vmatpush1.msra.mxu0 0.0
        %7310 = vmatprep.mubr.f32.mxu0 0.0
        %7311 = vmatmul.mubr.f32.gmra.mrb[0].mxu0 %v7244
        %v7312 = vpop.f32.mrb[0].mxu0
        %v7313 = vadd.f32 %v7241, %v7312
        %v7314 = vpop.f32.mrb[0].mxu0
        %7315 = vdwg.mxu0
        %v7316 = vld [vmem:[#allocation12] sm:$0xff]
        %v7317 = vld [vmem:[#allocation12 + $0x8] sm:$0xff]
        %v7318 = vld [vmem:[#allocation12 + $0x10] sm:$0xff]
        %v7319 = vld [vmem:[#allocation12 + $0x18] sm:$0xff]
        %v7321 = vsel %vm3772, %v7313, 0
        %7323 = vmatprep.subr.mxu0 %v7317
        %7324 = vmatpush1.msra.mxu0 %v7316
        %7325 = vmatprep.subr.mxu0 %v7319
        %7326 = vmatpush1.msra.mxu0 %v7318
        %7327 = vmatprep.subr.mxu0 0.0
        %7328 = vmatpush1.msra.mxu0 0.0
        %7329 = vmatprep.subr.mxu0 0.0
        %7330 = vmatpush1.msra.mxu0 0.0
        %7331 = vmatprep.subr.mxu0 0.0
        %7332 = vmatpush1.msra.mxu0 0.0
        %7333 = vmatprep.subr.mxu0 0.0
        %7334 = vmatpush1.msra.mxu0 0.0
        %7335 = vmatprep.subr.mxu0 0.0
        %7336 = vmatpush1.msra.mxu0 0.0
        %7337 = vmatprep.subr.mxu0 0.0
        %7338 = vmatpush1.msra.mxu0 0.0
        %7339 = vmatprep.subr.mxu0 0.0
        %7340 = vmatpush1.msra.mxu0 0.0
        %7341 = vmatprep.subr.mxu0 0.0
        %7342 = vmatpush1.msra.mxu0 0.0
        %7343 = vmatprep.subr.mxu0 0.0
        %7344 = vmatpush1.msra.mxu0 0.0
        %7345 = vmatprep.subr.mxu0 0.0
        %7346 = vmatpush1.msra.mxu0 0.0
        %7347 = vmatprep.subr.mxu0 0.0
        %7348 = vmatpush1.msra.mxu0 0.0
        %7349 = vmatprep.subr.mxu0 0.0
        %7350 = vmatpush1.msra.mxu0 0.0
        %7351 = vmatprep.subr.mxu0 0.0
        %7352 = vmatpush1.msra.mxu0 0.0
        %7353 = vmatprep.subr.mxu0 0.0
        %7354 = vmatpush1.msra.mxu0 0.0
        %7355 = vmatprep.subr.mxu0 0.0
        %7356 = vmatpush1.msra.mxu0 0.0
        %7357 = vmatprep.subr.mxu0 0.0
        %7358 = vmatpush1.msra.mxu0 0.0
        %7359 = vmatprep.subr.mxu0 0.0
        %7360 = vmatpush1.msra.mxu0 0.0
        %7361 = vmatprep.subr.mxu0 0.0
        %7362 = vmatpush1.msra.mxu0 0.0
        %7363 = vmatprep.subr.mxu0 0.0
        %7364 = vmatpush1.msra.mxu0 0.0
        %7365 = vmatprep.subr.mxu0 0.0
        %7366 = vmatpush1.msra.mxu0 0.0
        %7367 = vmatprep.subr.mxu0 0.0
        %7368 = vmatpush1.msra.mxu0 0.0
        %7369 = vmatprep.subr.mxu0 0.0
        %7370 = vmatpush1.msra.mxu0 0.0
        %7371 = vmatprep.subr.mxu0 0.0
        %7372 = vmatpush1.msra.mxu0 0.0
        %7373 = vmatprep.subr.mxu0 0.0
        %7374 = vmatpush1.msra.mxu0 0.0
        %7375 = vmatprep.subr.mxu0 0.0
        %7376 = vmatpush1.msra.mxu0 0.0
        %7377 = vmatprep.subr.mxu0 0.0
        %7378 = vmatpush1.msra.mxu0 0.0
        %7379 = vmatprep.subr.mxu0 0.0
        %7380 = vmatpush1.msra.mxu0 0.0
        %7381 = vmatprep.subr.mxu0 0.0
        %7382 = vmatpush1.msra.mxu0 0.0
        %7383 = vmatprep.subr.mxu0 0.0
        %7384 = vmatpush1.msra.mxu0 0.0
        %7385 = vmatprep.subr.mxu0 0.0
        %7386 = vmatpush1.msra.mxu0 0.0
        %7387 = vmatprep.mubr.f32.mxu0 0.0
        %7388 = vmatmul.mubr.f32.gmra.mrb[0].mxu0 %v7321
        %v7389 = vpop.f32.mrb[0].mxu0
        %v7390 = vadd.f32 0.0, %v7389
        %v7391 = vpop.f32.mrb[0].mxu0
        %v7392 = vadd.f32 0.0, %v7391
        %7393 = vdwg.mxu0
        %7394 = vst [vmem:[%s621] sm:$0x3f] %v7390
        %7395 = vst [vmem:[%s621 + $0x8] sm:$0x3f] %v7392
        %p7396 = scmp.lt.s32.totalorder %s31, 1
        %s7397 = scalar_select %p7396, %s31, 1
        %s7398 = smul.addr %s7397, 2
        %s7399 = smul.addr %s7398, 8
        %s7400 = scalar_lea.vmem %s16, %s7399
        // Predicated region
        $region113: #{deeplabv3_forward_pallas.1} parent=83 // pred_check
          %p7401 = pneg %p390
        $region114: #{deeplabv3_forward_pallas.1} parent=83 // pred_check_branch
          %7403 = sbr.rel (%p7401) target = $region116
        $region115: #{deeplabv3_forward_pallas.1} parent=83 // pred_region
          _
        $region116: #{deeplabv3_forward_pallas.1} parent=83 // pred_fallthru
          _
      $region84: #{deeplabv3_forward_pallas.1} parent=5 // pred_fallthru
        _
      %p7404 = scmp.le.s32.totalorder 2, %s26
      // Predicated region
      $region117: #{deeplabv3_forward_pallas.1} parent=5 // pred_check
        %p7405 = pneg %p7404
      $region118: #{deeplabv3_forward_pallas.1} parent=5 // pred_check_branch
        %7407 = sbr.rel (%p7405) target = $region120
      $region119: #{deeplabv3_forward_pallas.1} parent=5 // pred_region
        %s7408 = ssub.s32 %s26, 2
        // Predicated region
        $region121: #{deeplabv3_forward_pallas.1} parent=119 // pred_check
          %p7409 = pneg %p396
        $region122: #{deeplabv3_forward_pallas.1} parent=119 // pred_check_branch
          %7411 = sbr.rel (%p7409) target = $region124
        $region123: #{deeplabv3_forward_pallas.1} parent=119 // pred_region
          %p7412 = scmp.lt.s32.totalorder %s32, 1
          %s7413 = scalar_select %p7412, %s32, 1
          %s7414 = smul.addr %s7413, 2
          %s7415 = smul.addr %s7414, 8
          %s7416 = scalar_lea.vmem %s16, %s7415
        $region124: #{deeplabv3_forward_pallas.1} parent=119 // pred_fallthru
          _
      $region120: #{deeplabv3_forward_pallas.1} parent=5 // pred_fallthru
        _
    $region6: #{deeplabv3_forward_pallas.1} parent=1 // loop_footer
      %s30 = sadd.s32 1, %s26
    $region7: #{deeplabv3_forward_pallas.1} parent=1 // loop_footer_branch
      %25 = sbr.rel target = $region3
    $region8: #{deeplabv3_forward_pallas.1} parent=1 // loop_exit
      _
    %7417 = vsyncpa [#allocation3], 1
    %s7418 = scalar_lea.sflag [#allocation3], 1
    %7419 = vsyncpa %s7418, 1
    %7420 = vsyncpa [#allocation5], 1
    %7421 = vsyncpa [#allocation8], 1
    %7422 = vsyncpa [#allocation11], 1

</llo_original>
